<compile_context>
chip_gen: v6e
topology: v6e:2x2x1
jax: 0.10.0
libtpu: 0.0.40
codegen_flags: <defaults>
</compile_context>

<pallas_src>
import functools

import jax
import jax.numpy as jnp
from jax.experimental import pallas as pl
from jax.experimental.pallas import tpu as pltpu

OUT_PAD = 128  # lane-dense padded width for the 1-wide head output


def _leaky_relu(v, slope=0.2):
    # max(v, slope*v) == LeakyReLU(slope) for 0 < slope < 1 (mul + max: 2 VPU ops/vreg).
    return jnp.maximum(v, v * slope)


def _device_kind():
    try:
        return jax.devices()[0].device_kind.lower()
    except Exception:
        return ""


def default_epilogue_dtype(kind=None):
    kind = _device_kind() if kind is None else kind
    # v5e has f32-only VALUs: keep the bias-add / LeakyReLU epilogue in f32 there.
    return jnp.float32 if "v5" in kind else jnp.bfloat16


def default_num_batch_tiles(kind=None):
    kind = _device_kind() if kind is None else kind
    # v7x: 2 TensorCores/chip -> 2 parallel batch tiles. v5e/v6e: the grid is a
    # sequential loop on one TC, so a single full-batch tile avoids per-step overhead.
    return 2 if "v7" in kind else 1


def discriminator_kernel(x_ref,
                         w1_ref, b1_ref,
                         w2_ref, b2_ref,
                         w3_ref, b3_ref,
                         w4_ref, b4_ref,
                         o_ref, *, ep_dtype):
    # In-kernel bf16 cast of the activation tile (VPU work hidden under MXU slack;
    # avoids a separate un-fusable XLA convert over x in the wrapper).
    x = x_ref[...].astype(jnp.bfloat16)

    # Block 1: Linear(im_dim -> 4h) + LeakyReLU(0.2). bf16 MXU inputs, f32 accumulation.
    h = jnp.dot(x, w1_ref[...], preferred_element_type=jnp.float32)
    h = _leaky_relu(h.astype(ep_dtype) + b1_ref[...])
    # Block 2: Linear(4h -> 2h) + LeakyReLU(0.2)
    h = jnp.dot(h.astype(jnp.bfloat16), w2_ref[...], preferred_element_type=jnp.float32)
    h = _leaky_relu(h.astype(ep_dtype) + b2_ref[...])
    # Block 3: Linear(2h -> h) + LeakyReLU(0.2)
    h = jnp.dot(h.astype(jnp.bfloat16), w3_ref[...], preferred_element_type=jnp.float32)
    h = _leaky_relu(h.astype(ep_dtype) + b3_ref[...])
    # Head: Linear(h -> 1) padded to 128 lanes -> unmasked, lane-dense store; f32 epilogue.
    out = jnp.dot(h.astype(jnp.bfloat16), w4_ref[...], preferred_element_type=jnp.float32)
    o_ref[...] = (out + b4_ref[...]).astype(o_ref.dtype)


def prepare_params(params, epilogue_dtype=jnp.bfloat16):
    """One-time prep (init / optimizer-update time), hoisted out of the forward path:
    bf16 weight masters, epilogue-dtype biases, head padded to OUT_PAD output lanes.
    params: list of (W_t [in,out] f32, b [1,out] f32) matching nn.Linear's y = x@W.T + b."""
    (w1, b1), (w2, b2), (w3, b3), (w4, b4) = params
    w1b, w2b, w3b = (w.astype(jnp.bfloat16) for w in (w1, w2, w3))
    b1e, b2e, b3e = (b.astype(epilogue_dtype) for b in (b1, b2, b3))
    w4p = jnp.pad(w4.astype(jnp.bfloat16), ((0, 0), (0, OUT_PAD - w4.shape[1])))
    b4p = jnp.pad(b4.astype(jnp.float32), ((0, 0), (0, OUT_PAD - b4.shape[1])))
    return (w1b, b1e, w2b, b2e, w3b, b3e, w4p, b4p)


def discriminator_forward(x, prepped, *, epilogue_dtype=None, num_batch_tiles=None,
                          tile_b=None):
    """x: [B, im_dim] float32.  prepped: output of prepare_params()."""
    B, im_dim = x.shape
    kind = _device_kind()
    if epilogue_dtype is None:
        epilogue_dtype = default_epilogue_dtype(kind)
    if tile_b is None:
        if num_batch_tiles is None:
            num_batch_tiles = default_num_batch_tiles(kind)
        if num_batch_tiles <= 1 or B < 16:
            tile_b = B                                     # single full-batch tile
        else:
            tile_b = max(8, ((pl.cdiv(B, num_batch_tiles) + 7) // 8) * 8)
    tile_b = min(tile_b, B)
    grid = (pl.cdiv(B, tile_b),)

    w1b, b1e, w2b, b2e, w3b, b3e, w4p, b4p = prepped
    weights = (w1b, b1e, w2b, b2e, w3b, b3e, w4p, b4p)
    d1, d2, d3 = w1b.shape[1], w2b.shape[1], w3b.shape[1]

    def const_spec(a):
        zeros = (0,) * a.ndim
        return pl.BlockSpec(a.shape, lambda i, _z=zeros: _z)   # VMEM-resident across steps

    flops = 2 * B * (im_dim * d1 + d1 * d2 + d2 * d3 + d3 * OUT_PAD)
    bytes_accessed = (x.size * x.dtype.itemsize
                      + sum(a.size * a.dtype.itemsize for a in weights)
                      + B * OUT_PAD * 4)
    cost = pl.CostEstimate(flops=flops, transcendentals=0, bytes_accessed=bytes_accessed)

    kernel = functools.partial(discriminator_kernel, ep_dtype=epilogue_dtype)

    out_pad = pl.pallas_call(
        kernel,
        out_shape=jax.ShapeDtypeStruct((B, OUT_PAD), jnp.float32),
        grid=grid,
        in_specs=[pl.BlockSpec((tile_b, im_dim), lambda i: (i, 0))]
                 + [const_spec(a) for a in weights],
        out_specs=pl.BlockSpec((tile_b, OUT_PAD), lambda i: (i, 0)),
        compiler_params=pltpu.CompilerParams(
            dimension_semantics=("parallel",),   # v7x: shard batch tiles across 2 TCs
            vmem_limit_bytes=32 * 1024 * 1024,   # model uses <4 MiB even at tile_b=B
        ),
        cost_estimate=cost,
    )(x, *weights)

    # Slice the single real logit column back out (store inside the kernel is lane-dense).
    return out_pad[:, :1]


def init_params(key, im_dim, h_dim):
    """Deterministic init mimicking nn.Linear's U(-1/sqrt(fan_in), 1/sqrt(fan_in))."""
    dims = [(im_dim, h_dim * 4), (h_dim * 4, h_dim * 2), (h_dim * 2, h_dim), (h_dim, 1)]
    params = []
    for (fan_in, fan_out) in dims:
        key, kw, kb = jax.random.split(key, 3)
        bound = 1.0 / jnp.sqrt(jnp.float32(fan_in))
        w_t = jax.random.uniform(kw, (fan_in, fan_out), jnp.float32, -bound, bound)  # [in,out]
        b = jax.random.uniform(kb, (1, fan_out), jnp.float32, -bound, bound)
        params.append((w_t, b))
    return params


def reference_forward(x, prepped, epilogue_dtype):
    """Pure-JAX reference mirroring the kernel numerics (bf16 MXU, f32 accum,
    epilogue-dtype bias-add/LeakyReLU)."""
    w1, b1, w2, b2, w3, b3, w4p, b4p = prepped
    h = x.astype(jnp.bfloat16)
    for (w, b) in ((w1, b1), (w2, b2), (w3, b3)):
        a = jnp.dot(h, w, preferred_element_type=jnp.float32)
        v = a.astype(epilogue_dtype) + b
        h = jnp.maximum(v, v * 0.2).astype(jnp.bfloat16)
    out = jnp.dot(h, w4p, preferred_element_type=jnp.float32) + b4p
    return out[:, :1]


if __name__ == "__main__":
    # Module defaults (im_dim=784, h_dim=128) -> 512/256/128 hidden widths. B=512 gives
    # either one 512-row tile (v5e/v6e) or two 256-row parallel tiles (v7x).
    B, IM_DIM, H_DIM = 512, 784, 128

    key = jax.random.PRNGKey(0)
    key, kx = jax.random.split(key)
    x = jax.random.normal(kx, (B, IM_DIM), jnp.float32)
    params = init_params(key, IM_DIM, H_DIM)

    ep_dtype = default_epilogue_dtype()
    prepped = prepare_params(params, ep_dtype)   # hoisted: done once, not per forward

    fwd = jax.jit(functools.partial(discriminator_forward, epilogue_dtype=ep_dtype))
    out = jax.block_until_ready(fwd(x, prepped))

    ref = reference_forward(x, prepped, ep_dtype)
    assert out.shape == (B, 1)
    assert jnp.allclose(out, ref, atol=3e-2, rtol=3e-2), "mismatch vs reference"

    print("KERNEL_OK")
</pallas_src>

<mosaic_0001>
module attributes {stable_mosaic.version = 11 : i64} {
  func.func @discriminator_kernel(%arg0: i32, %arg1: memref<512x784xf32, #tpu.memory_space<vmem>>, %arg2: memref<784x512xbf16, #tpu.memory_space<vmem>>, %arg3: memref<1x512xbf16, #tpu.memory_space<vmem>>, %arg4: memref<512x256xbf16, #tpu.memory_space<vmem>>, %arg5: memref<1x256xbf16, #tpu.memory_space<vmem>>, %arg6: memref<256x128xbf16, #tpu.memory_space<vmem>>, %arg7: memref<1x128xbf16, #tpu.memory_space<vmem>>, %arg8: memref<128x128xbf16, #tpu.memory_space<vmem>>, %arg9: memref<1x128xf32, #tpu.memory_space<vmem>>, %arg10: memref<512x128xf32, #tpu.memory_space<vmem>>) attributes {dimension_semantics = [#tpu.dimension_semantics<parallel>], iteration_bounds = array<i64: 1>, scalar_prefetch = 0 : i64, scratch_operands = 0 : i64, tpu.core_type = #tpu.core_type<tc>, window_params = [{transform_indices = @transform_0, window_bounds = array<i64: 512, 784>}, {pipeline_mode = #tpu.pipeline_mode<synchronous>, transform_indices = @transform_1, window_bounds = array<i64: 784, 512>}, {pipeline_mode = #tpu.pipeline_mode<synchronous>, transform_indices = @transform_2, window_bounds = array<i64: 1, 512>}, {pipeline_mode = #tpu.pipeline_mode<synchronous>, transform_indices = @transform_3, window_bounds = array<i64: 512, 256>}, {pipeline_mode = #tpu.pipeline_mode<synchronous>, transform_indices = @transform_4, window_bounds = array<i64: 1, 256>}, {pipeline_mode = #tpu.pipeline_mode<synchronous>, transform_indices = @transform_5, window_bounds = array<i64: 256, 128>}, {pipeline_mode = #tpu.pipeline_mode<synchronous>, transform_indices = @transform_6, window_bounds = array<i64: 1, 128>}, {pipeline_mode = #tpu.pipeline_mode<synchronous>, transform_indices = @transform_7, window_bounds = array<i64: 128, 128>}, {pipeline_mode = #tpu.pipeline_mode<synchronous>, transform_indices = @transform_8, window_bounds = array<i64: 1, 128>}, {transform_indices = @transform_9, window_bounds = array<i64: 512, 128>}]} {
    %c0 = arith.constant 0 : index
    %c0_0 = arith.constant 0 : index
    %0 = vector.load %arg1[%c0, %c0_0] : memref<512x784xf32, #tpu.memory_space<vmem>>, vector<512x784xf32>
    %1 = arith.truncf %0 : vector<512x784xf32> to vector<512x784xbf16>
    %c0_1 = arith.constant 0 : index
    %c0_2 = arith.constant 0 : index
    %2 = vector.load %arg2[%c0_1, %c0_2] : memref<784x512xbf16, #tpu.memory_space<vmem>>, vector<784x512xbf16>
    %cst = arith.constant dense<0.000000e+00> : vector<512x512xf32>
    %3 = tpu.matmul %1, %2, %cst {dimension_numbers = #tpu.dot_dimension_numbers<[1], [0], [0], [1], [0, 0, 1, 1], [], []>} : vector<512x784xbf16>, vector<784x512xbf16>, vector<512x512xf32> -> vector<512x512xf32>
    %4 = arith.truncf %3 : vector<512x512xf32> to vector<512x512xbf16>
    %c0_3 = arith.constant 0 : index
    %c0_4 = arith.constant 0 : index
    %5 = vector.load %arg3[%c0_3, %c0_4] : memref<1x512xbf16, #tpu.memory_space<vmem>>, vector<1x512xbf16>
    %6 = vector.broadcast %5 : vector<1x512xbf16> to vector<512x512xbf16>
    %7 = arith.addf %4, %6 : vector<512x512xbf16>
    %cst_5 = arith.constant 2.001950e-01 : bf16
    %8 = vector.broadcast %cst_5 : bf16 to vector<512x512xbf16>
    %9 = arith.mulf %7, %8 : vector<512x512xbf16>
    %10 = arith.maximumf %7, %9 : vector<512x512xbf16>
    %c0_6 = arith.constant 0 : index
    %c0_7 = arith.constant 0 : index
    %11 = vector.load %arg4[%c0_6, %c0_7] : memref<512x256xbf16, #tpu.memory_space<vmem>>, vector<512x256xbf16>
    %cst_8 = arith.constant dense<0.000000e+00> : vector<512x256xf32>
    %12 = tpu.matmul %10, %11, %cst_8 {dimension_numbers = #tpu.dot_dimension_numbers<[1], [0], [0], [1], [0, 0, 1, 1], [], []>} : vector<512x512xbf16>, vector<512x256xbf16>, vector<512x256xf32> -> vector<512x256xf32>
    %13 = arith.truncf %12 : vector<512x256xf32> to vector<512x256xbf16>
    %c0_9 = arith.constant 0 : index
    %c0_10 = arith.constant 0 : index
    %14 = vector.load %arg5[%c0_9, %c0_10] : memref<1x256xbf16, #tpu.memory_space<vmem>>, vector<1x256xbf16>
    %15 = vector.broadcast %14 : vector<1x256xbf16> to vector<512x256xbf16>
    %16 = arith.addf %13, %15 : vector<512x256xbf16>
    %cst_11 = arith.constant 2.001950e-01 : bf16
    %17 = vector.broadcast %cst_11 : bf16 to vector<512x256xbf16>
    %18 = arith.mulf %16, %17 : vector<512x256xbf16>
    %19 = arith.maximumf %16, %18 : vector<512x256xbf16>
    %c0_12 = arith.constant 0 : index
    %c0_13 = arith.constant 0 : index
    %20 = vector.load %arg6[%c0_12, %c0_13] : memref<256x128xbf16, #tpu.memory_space<vmem>>, vector<256x128xbf16>
    %cst_14 = arith.constant dense<0.000000e+00> : vector<512x128xf32>
    %21 = tpu.matmul %19, %20, %cst_14 {dimension_numbers = #tpu.dot_dimension_numbers<[1], [0], [0], [1], [0, 0, 1, 1], [], []>} : vector<512x256xbf16>, vector<256x128xbf16>, vector<512x128xf32> -> vector<512x128xf32>
    %22 = arith.truncf %21 : vector<512x128xf32> to vector<512x128xbf16>
    %c0_15 = arith.constant 0 : index
    %c0_16 = arith.constant 0 : index
    %23 = vector.load %arg7[%c0_15, %c0_16] : memref<1x128xbf16, #tpu.memory_space<vmem>>, vector<1x128xbf16>
    %24 = vector.broadcast %23 : vector<1x128xbf16> to vector<512x128xbf16>
    %25 = arith.addf %22, %24 : vector<512x128xbf16>
    %cst_17 = arith.constant 2.001950e-01 : bf16
    %26 = vector.broadcast %cst_17 : bf16 to vector<512x128xbf16>
    %27 = arith.mulf %25, %26 : vector<512x128xbf16>
    %28 = arith.maximumf %25, %27 : vector<512x128xbf16>
    %c0_18 = arith.constant 0 : index
    %c0_19 = arith.constant 0 : index
    %29 = vector.load %arg8[%c0_18, %c0_19] : memref<128x128xbf16, #tpu.memory_space<vmem>>, vector<128x128xbf16>
    %cst_20 = arith.constant dense<0.000000e+00> : vector<512x128xf32>
    %30 = tpu.matmul %28, %29, %cst_20 {dimension_numbers = #tpu.dot_dimension_numbers<[1], [0], [0], [1], [0, 0, 1, 1], [], []>} : vector<512x128xbf16>, vector<128x128xbf16>, vector<512x128xf32> -> vector<512x128xf32>
    %c0_21 = arith.constant 0 : index
    %c0_22 = arith.constant 0 : index
    %31 = vector.load %arg9[%c0_21, %c0_22] : memref<1x128xf32, #tpu.memory_space<vmem>>, vector<1x128xf32>
    %32 = vector.broadcast %31 : vector<1x128xf32> to vector<512x128xf32>
    %33 = arith.addf %30, %32 : vector<512x128xf32>
    %c0_23 = arith.constant 0 : index
    %c0_24 = arith.constant 0 : index
    %34 = vector.load %arg10[%c0_23, %c0_24] : memref<512x128xf32, #tpu.memory_space<vmem>>, vector<512x128xf32>
    tpu.vector_store %arg10[%c0_23, %c0_24], %33 {strides = array<i32>} : memref<512x128xf32, #tpu.memory_space<vmem>>, vector<512x128xf32>,
    return
  }
  func.func @transform_0(%arg0: i32) -> (i32, i32) {
    %c0_i32 = arith.constant 0 : i32
    %c0_i32_0 = arith.constant 0 : i32
    return %arg0, %c0_i32 : i32, i32
  }
  func.func @transform_1(%arg0: i32) -> (i32, i32) {
    %c0_i32 = arith.constant 0 : i32
    %c0_i32_0 = arith.constant 0 : i32
    %c0_i32_1 = arith.constant 0 : i32
    return %c0_i32, %c0_i32_0 : i32, i32
  }
  func.func @transform_2(%arg0: i32) -> (i32, i32) {
    %c0_i32 = arith.constant 0 : i32
    %c0_i32_0 = arith.constant 0 : i32
    %c0_i32_1 = arith.constant 0 : i32
    return %c0_i32, %c0_i32_0 : i32, i32
  }
  func.func @transform_3(%arg0: i32) -> (i32, i32) {
    %c0_i32 = arith.constant 0 : i32
    %c0_i32_0 = arith.constant 0 : i32
    %c0_i32_1 = arith.constant 0 : i32
    return %c0_i32, %c0_i32_0 : i32, i32
  }
  func.func @transform_4(%arg0: i32) -> (i32, i32) {
    %c0_i32 = arith.constant 0 : i32
    %c0_i32_0 = arith.constant 0 : i32
    %c0_i32_1 = arith.constant 0 : i32
    return %c0_i32, %c0_i32_0 : i32, i32
  }
  func.func @transform_5(%arg0: i32) -> (i32, i32) {
    %c0_i32 = arith.constant 0 : i32
    %c0_i32_0 = arith.constant 0 : i32
    %c0_i32_1 = arith.constant 0 : i32
    return %c0_i32, %c0_i32_0 : i32, i32
  }
  func.func @transform_6(%arg0: i32) -> (i32, i32) {
    %c0_i32 = arith.constant 0 : i32
    %c0_i32_0 = arith.constant 0 : i32
    %c0_i32_1 = arith.constant 0 : i32
    return %c0_i32, %c0_i32_0 : i32, i32
  }
  func.func @transform_7(%arg0: i32) -> (i32, i32) {
    %c0_i32 = arith.constant 0 : i32
    %c0_i32_0 = arith.constant 0 : i32
    %c0_i32_1 = arith.constant 0 : i32
    return %c0_i32, %c0_i32_0 : i32, i32
  }
  func.func @transform_8(%arg0: i32) -> (i32, i32) {
    %c0_i32 = arith.constant 0 : i32
    %c0_i32_0 = arith.constant 0 : i32
    %c0_i32_1 = arith.constant 0 : i32
    return %c0_i32, %c0_i32_0 : i32, i32
  }
  func.func @transform_9(%arg0: i32) -> (i32, i32) {
    %c0_i32 = arith.constant 0 : i32
    %c0_i32_0 = arith.constant 0 : i32
    return %arg0, %c0_i32 : i32, i32
  }
}

</mosaic_0001>

<llo_original>
// kernel: discriminator_forward.1
$region0: #{discriminator_forward.1}
  #allocation0 [shape = 'u32[]', space=smem, size = 0x4, offset = 0x4, fixed_abs, tag = 'smem constant byte address 0x4 - core index']
  #allocation1 [shape = 'u32[144,128]{1,0:T(1,128)}', space=vmem, size = 0x12000, scoped, tag = 'internal scratch']
  %s0 = inlined_call_operand.vmem [shape: f32[512,784], index: 0, kind: input, shape index: {}]
  %s1 = inlined_call_operand.vmem [shape: bf16[784,512], index: 1, kind: input, shape index: {}]
  %s2 = inlined_call_operand.vmem [shape: bf16[1,512], index: 2, kind: input, shape index: {}]
  %s3 = inlined_call_operand.vmem [shape: bf16[512,256], index: 3, kind: input, shape index: {}]
  %s4 = inlined_call_operand.vmem [shape: bf16[1,256], index: 4, kind: input, shape index: {}]
  %s5 = inlined_call_operand.vmem [shape: bf16[256,128], index: 5, kind: input, shape index: {}]
  %s6 = inlined_call_operand.vmem [shape: bf16[1,128], index: 6, kind: input, shape index: {}]
  %s7 = inlined_call_operand.vmem [shape: bf16[128,128], index: 7, kind: input, shape index: {}]
  %s8 = inlined_call_operand.vmem [shape: f32[1,128], index: 8, kind: input, shape index: {}]
  %s9 = inlined_call_operand.vmem [shape: f32[512,128], index: 9, kind: output, shape index: {}]
  %s10 = sld [smem:[#allocation0]]
  $region46: #{discriminator_forward.1} parent=0
    _
  %s12 = ssub.s32 1, %s10
  %s13 = scalar_select 0, %s12, %s10
  // Predicated region
  $region2: #{discriminator_forward.1} parent=0 // pred_check
    _
  $region3: #{discriminator_forward.1} parent=0 // pred_check_branch
    %15 = sbr.rel (0) target = $region5
  $region4: #{discriminator_forward.1} parent=0 // pred_region
    _
  $region5: #{discriminator_forward.1} parent=0 // pred_fallthru
    _
  // Predicated region
  $region6: #{discriminator_forward.1} parent=0 // pred_check
    _
  $region7: #{discriminator_forward.1} parent=0 // pred_check_branch
    %17 = sbr.rel (0) target = $region9
  $region8: #{discriminator_forward.1} parent=0 // pred_region
    _
  $region9: #{discriminator_forward.1} parent=0 // pred_fallthru
    _
  // Predicated region
  $region10: #{discriminator_forward.1} parent=0 // pred_check
    _
  $region11: #{discriminator_forward.1} parent=0 // pred_check_branch
    %19 = sbr.rel (0) target = $region13
  $region12: #{discriminator_forward.1} parent=0 // pred_region
    _
  $region13: #{discriminator_forward.1} parent=0 // pred_fallthru
    _
  // Predicated region
  $region14: #{discriminator_forward.1} parent=0 // pred_check
    _
  $region15: #{discriminator_forward.1} parent=0 // pred_check_branch
    %21 = sbr.rel (0) target = $region17
  $region16: #{discriminator_forward.1} parent=0 // pred_region
    _
  $region17: #{discriminator_forward.1} parent=0 // pred_fallthru
    _
  // Predicated region
  $region18: #{discriminator_forward.1} parent=0 // pred_check
    _
  $region19: #{discriminator_forward.1} parent=0 // pred_check_branch
    %23 = sbr.rel (0) target = $region21
  $region20: #{discriminator_forward.1} parent=0 // pred_region
    _
  $region21: #{discriminator_forward.1} parent=0 // pred_fallthru
    _
  // Predicated region
  $region22: #{discriminator_forward.1} parent=0 // pred_check
    _
  $region23: #{discriminator_forward.1} parent=0 // pred_check_branch
    %25 = sbr.rel (0) target = $region25
  $region24: #{discriminator_forward.1} parent=0 // pred_region
    _
  $region25: #{discriminator_forward.1} parent=0 // pred_fallthru
    _
  // Predicated region
  $region26: #{discriminator_forward.1} parent=0 // pred_check
    _
  $region27: #{discriminator_forward.1} parent=0 // pred_check_branch
    %27 = sbr.rel (0) target = $region29
  $region28: #{discriminator_forward.1} parent=0 // pred_region
    _
  $region29: #{discriminator_forward.1} parent=0 // pred_fallthru
    _
  // Predicated region
  $region30: #{discriminator_forward.1} parent=0 // pred_check
    _
  $region31: #{discriminator_forward.1} parent=0 // pred_check_branch
    %29 = sbr.rel (0) target = $region33
  $region32: #{discriminator_forward.1} parent=0 // pred_region
    _
  $region33: #{discriminator_forward.1} parent=0 // pred_fallthru
    _
  // Predicated region
  $region34: #{discriminator_forward.1} parent=0 // pred_check
    _
  $region35: #{discriminator_forward.1} parent=0 // pred_check_branch
    %31 = sbr.rel (0) target = $region37
  $region36: #{discriminator_forward.1} parent=0 // pred_region
    _
  $region37: #{discriminator_forward.1} parent=0 // pred_fallthru
    _
  %v34 = vld [vmem:[%s0] sm:$0xff]
  %v35 = vld [vmem:[%s0 + $0x8] sm:$0xff]
  %v36 = vld [vmem:[%s0 + $0x10] sm:$0xff]
  %v37 = vld [vmem:[%s0 + $0x18] sm:$0xff]
  %v38 = vld [vmem:[%s0 + $0x20] sm:$0xff]
  %v39 = vld [vmem:[%s0 + $0x28] sm:$0xff]
  %v40 = vld [vmem:[%s0 + $0x30] sm:$0xff]
  %v41 = vld [vmem:[%s0 + $0x38] sm:$0xff]
  %v42 = vld [vmem:[%s0 + $0x40] sm:$0xff]
  %v43 = vld [vmem:[%s0 + $0x48] sm:$0xff]
  %v44 = vld [vmem:[%s0 + $0x50] sm:$0xff]
  %v45 = vld [vmem:[%s0 + $0x58] sm:$0xff]
  %v46 = vld [vmem:[%s0 + $0x60] sm:$0xff]
  %v47 = vld [vmem:[%s0 + $0x68] sm:$0xff]
  %v48 = vld [vmem:[%s0 + $0x70] sm:$0xff]
  %v49 = vld [vmem:[%s0 + $0x78] sm:$0xff]
  %v50 = vld [vmem:[%s0 + $0x80] sm:$0xff]
  %v51 = vld [vmem:[%s0 + $0x88] sm:$0xff]
  %v52 = vld [vmem:[%s0 + $0x90] sm:$0xff]
  %v53 = vld [vmem:[%s0 + $0x98] sm:$0xff]
  %v54 = vld [vmem:[%s0 + $0xa0] sm:$0xff]
  %v55 = vld [vmem:[%s0 + $0xa8] sm:$0xff]
  %v56 = vld [vmem:[%s0 + $0xb0] sm:$0xff]
  %v57 = vld [vmem:[%s0 + $0xb8] sm:$0xff]
  %v58 = vld [vmem:[%s0 + $0xc0] sm:$0xff]
  %v59 = vld [vmem:[%s0 + $0xc8] sm:$0xff]
  %v60 = vld [vmem:[%s0 + $0xd0] sm:$0xff]
  %v61 = vld [vmem:[%s0 + $0xd8] sm:$0xff]
  %v62 = vld [vmem:[%s0 + $0xe0] sm:$0xff]
  %v63 = vld [vmem:[%s0 + $0xe8] sm:$0xff]
  %v64 = vld [vmem:[%s0 + $0xf0] sm:$0xff]
  %v65 = vld [vmem:[%s0 + $0xf8] sm:$0xff]
  %v66 = vld [vmem:[%s0 + $0x100] sm:$0xff]
  %v67 = vld [vmem:[%s0 + $0x108] sm:$0xff]
  %v68 = vld [vmem:[%s0 + $0x110] sm:$0xff]
  %v69 = vld [vmem:[%s0 + $0x118] sm:$0xff]
  %v70 = vld [vmem:[%s0 + $0x120] sm:$0xff]
  %v71 = vld [vmem:[%s0 + $0x128] sm:$0xff]
  %v72 = vld [vmem:[%s0 + $0x130] sm:$0xff]
  %v73 = vld [vmem:[%s0 + $0x138] sm:$0xff]
  %v74 = vld [vmem:[%s0 + $0x140] sm:$0xff]
  %v75 = vld [vmem:[%s0 + $0x148] sm:$0xff]
  %v76 = vld [vmem:[%s0 + $0x150] sm:$0xff]
  %v77 = vld [vmem:[%s0 + $0x158] sm:$0xff]
  %v78 = vld [vmem:[%s0 + $0x160] sm:$0xff]
  %v79 = vld [vmem:[%s0 + $0x168] sm:$0xff]
  %v80 = vld [vmem:[%s0 + $0x170] sm:$0xff]
  %v81 = vld [vmem:[%s0 + $0x178] sm:$0xff]
  %v82 = vld [vmem:[%s0 + $0x180] sm:$0xff]
  %v83 = vld [vmem:[%s0 + $0x188] sm:$0xff]
  %v84 = vld [vmem:[%s0 + $0x190] sm:$0xff]
  %v85 = vld [vmem:[%s0 + $0x198] sm:$0xff]
  %v86 = vld [vmem:[%s0 + $0x1a0] sm:$0xff]
  %v87 = vld [vmem:[%s0 + $0x1a8] sm:$0xff]
  %v88 = vld [vmem:[%s0 + $0x1b0] sm:$0xff]
  %v89 = vld [vmem:[%s0 + $0x1b8] sm:$0xff]
  %v90 = vld [vmem:[%s0 + $0x1c0] sm:$0xff]
  %v91 = vld [vmem:[%s0 + $0x1c8] sm:$0xff]
  %v92 = vld [vmem:[%s0 + $0x1d0] sm:$0xff]
  %v93 = vld [vmem:[%s0 + $0x1d8] sm:$0xff]
  %v94 = vld [vmem:[%s0 + $0x1e0] sm:$0xff]
  %v95 = vld [vmem:[%s0 + $0x1e8] sm:$0xff]
  %v96 = vld [vmem:[%s0 + $0x1f0] sm:$0xff]
  %v97 = vld [vmem:[%s0 + $0x1f8] sm:$0xff]
  %v98 = vld [vmem:[%s0 + $0x200] sm:$0xff]
  %v99 = vld [vmem:[%s0 + $0x208] sm:$0xff]
  %v100 = vld [vmem:[%s0 + $0x210] sm:$0xff]
  %v101 = vld [vmem:[%s0 + $0x218] sm:$0xff]
  %v102 = vld [vmem:[%s0 + $0x220] sm:$0xff]
  %v103 = vld [vmem:[%s0 + $0x228] sm:$0xff]
  %v104 = vld [vmem:[%s0 + $0x230] sm:$0xff]
  %v105 = vld [vmem:[%s0 + $0x238] sm:$0xff]
  %v106 = vld [vmem:[%s0 + $0x240] sm:$0xff]
  %v107 = vld [vmem:[%s0 + $0x248] sm:$0xff]
  %v108 = vld [vmem:[%s0 + $0x250] sm:$0xff]
  %v109 = vld [vmem:[%s0 + $0x258] sm:$0xff]
  %v110 = vld [vmem:[%s0 + $0x260] sm:$0xff]
  %v111 = vld [vmem:[%s0 + $0x268] sm:$0xff]
  %v112 = vld [vmem:[%s0 + $0x270] sm:$0xff]
  %v113 = vld [vmem:[%s0 + $0x278] sm:$0xff]
  %v114 = vld [vmem:[%s0 + $0x280] sm:$0xff]
  %v115 = vld [vmem:[%s0 + $0x288] sm:$0xff]
  %v116 = vld [vmem:[%s0 + $0x290] sm:$0xff]
  %v117 = vld [vmem:[%s0 + $0x298] sm:$0xff]
  %v118 = vld [vmem:[%s0 + $0x2a0] sm:$0xff]
  %v119 = vld [vmem:[%s0 + $0x2a8] sm:$0xff]
  %v120 = vld [vmem:[%s0 + $0x2b0] sm:$0xff]
  %v121 = vld [vmem:[%s0 + $0x2b8] sm:$0xff]
  %v122 = vld [vmem:[%s0 + $0x2c0] sm:$0xff]
  %v123 = vld [vmem:[%s0 + $0x2c8] sm:$0xff]
  %v124 = vld [vmem:[%s0 + $0x2d0] sm:$0xff]
  %v125 = vld [vmem:[%s0 + $0x2d8] sm:$0xff]
  %v126 = vld [vmem:[%s0 + $0x2e0] sm:$0xff]
  %v127 = vld [vmem:[%s0 + $0x2e8] sm:$0xff]
  %v128 = vld [vmem:[%s0 + $0x2f0] sm:$0xff]
  %v129 = vld [vmem:[%s0 + $0x2f8] sm:$0xff]
  %v130 = vld [vmem:[%s0 + $0x300] sm:$0xff]
  %v131 = vld [vmem:[%s0 + $0x308] sm:$0xff]
  %v132 = vld [vmem:[%s0 + $0x310] sm:$0xff]
  %v133 = vld [vmem:[%s0 + $0x318] sm:$0xff]
  %v134 = vld [vmem:[%s0 + $0x320] sm:$0xff]
  %v135 = vld [vmem:[%s0 + $0x328] sm:$0xff]
  %v136 = vld [vmem:[%s0 + $0x330] sm:$0xff]
  %v137 = vld [vmem:[%s0 + $0x338] sm:$0xff]
  %v138 = vld [vmem:[%s0 + $0x340] sm:$0xff]
  %v139 = vld [vmem:[%s0 + $0x348] sm:$0xff]
  %v140 = vld [vmem:[%s0 + $0x350] sm:$0xff]
  %v141 = vld [vmem:[%s0 + $0x358] sm:$0xff]
  %v142 = vld [vmem:[%s0 + $0x360] sm:$0xff]
  %v143 = vld [vmem:[%s0 + $0x368] sm:$0xff]
  %v144 = vld [vmem:[%s0 + $0x370] sm:$0xff]
  %v145 = vld [vmem:[%s0 + $0x378] sm:$0xff]
  %v146 = vld [vmem:[%s0 + $0x380] sm:$0xff]
  %v147 = vld [vmem:[%s0 + $0x388] sm:$0xff]
  %v148 = vld [vmem:[%s0 + $0x390] sm:$0xff]
  %v149 = vld [vmem:[%s0 + $0x398] sm:$0xff]
  %v150 = vld [vmem:[%s0 + $0x3a0] sm:$0xff]
  %v151 = vld [vmem:[%s0 + $0x3a8] sm:$0xff]
  %v152 = vld [vmem:[%s0 + $0x3b0] sm:$0xff]
  %v153 = vld [vmem:[%s0 + $0x3b8] sm:$0xff]
  %v154 = vld [vmem:[%s0 + $0x3c0] sm:$0xff]
  %v155 = vld [vmem:[%s0 + $0x3c8] sm:$0xff]
  %v156 = vld [vmem:[%s0 + $0x3d0] sm:$0xff]
  %v157 = vld [vmem:[%s0 + $0x3d8] sm:$0xff]
  %v158 = vld [vmem:[%s0 + $0x3e0] sm:$0xff]
  %v159 = vld [vmem:[%s0 + $0x3e8] sm:$0xff]
  %v160 = vld [vmem:[%s0 + $0x3f0] sm:$0xff]
  %v161 = vld [vmem:[%s0 + $0x3f8] sm:$0xff]
  %v162 = vld [vmem:[%s0 + $0x400] sm:$0xff]
  %v163 = vld [vmem:[%s0 + $0x408] sm:$0xff]
  %v164 = vld [vmem:[%s0 + $0x410] sm:$0xff]
  %v165 = vld [vmem:[%s0 + $0x418] sm:$0xff]
  %v166 = vld [vmem:[%s0 + $0x420] sm:$0xff]
  %v167 = vld [vmem:[%s0 + $0x428] sm:$0xff]
  %v168 = vld [vmem:[%s0 + $0x430] sm:$0xff]
  %v169 = vld [vmem:[%s0 + $0x438] sm:$0xff]
  %v170 = vld [vmem:[%s0 + $0x440] sm:$0xff]
  %v171 = vld [vmem:[%s0 + $0x448] sm:$0xff]
  %v172 = vld [vmem:[%s0 + $0x450] sm:$0xff]
  %v173 = vld [vmem:[%s0 + $0x458] sm:$0xff]
  %v174 = vld [vmem:[%s0 + $0x460] sm:$0xff]
  %v175 = vld [vmem:[%s0 + $0x468] sm:$0xff]
  %v176 = vld [vmem:[%s0 + $0x470] sm:$0xff]
  %v177 = vld [vmem:[%s0 + $0x478] sm:$0xff]
  %v178 = vld [vmem:[%s0 + $0x480] sm:$0xff]
  %v179 = vld [vmem:[%s0 + $0x488] sm:$0xff]
  %v180 = vld [vmem:[%s0 + $0x490] sm:$0xff]
  %v181 = vld [vmem:[%s0 + $0x498] sm:$0xff]
  %v182 = vld [vmem:[%s0 + $0x4a0] sm:$0xff]
  %v183 = vld [vmem:[%s0 + $0x4a8] sm:$0xff]
  %v184 = vld [vmem:[%s0 + $0x4b0] sm:$0xff]
  %v185 = vld [vmem:[%s0 + $0x4b8] sm:$0xff]
  %v186 = vld [vmem:[%s0 + $0x4c0] sm:$0xff]
  %v187 = vld [vmem:[%s0 + $0x4c8] sm:$0xff]
  %v188 = vld [vmem:[%s0 + $0x4d0] sm:$0xff]
  %v189 = vld [vmem:[%s0 + $0x4d8] sm:$0xff]
  %v190 = vld [vmem:[%s0 + $0x4e0] sm:$0xff]
  %v191 = vld [vmem:[%s0 + $0x4e8] sm:$0xff]
  %v192 = vld [vmem:[%s0 + $0x4f0] sm:$0xff]
  %v193 = vld [vmem:[%s0 + $0x4f8] sm:$0xff]
  %v194 = vld [vmem:[%s0 + $0x500] sm:$0xff]
  %v195 = vld [vmem:[%s0 + $0x508] sm:$0xff]
  %v196 = vld [vmem:[%s0 + $0x510] sm:$0xff]
  %v197 = vld [vmem:[%s0 + $0x518] sm:$0xff]
  %v198 = vld [vmem:[%s0 + $0x520] sm:$0xff]
  %v199 = vld [vmem:[%s0 + $0x528] sm:$0xff]
  %v200 = vld [vmem:[%s0 + $0x530] sm:$0xff]
  %v201 = vld [vmem:[%s0 + $0x538] sm:$0xff]
  %v202 = vld [vmem:[%s0 + $0x540] sm:$0xff]
  %v203 = vld [vmem:[%s0 + $0x548] sm:$0xff]
  %v204 = vld [vmem:[%s0 + $0x550] sm:$0xff]
  %v205 = vld [vmem:[%s0 + $0x558] sm:$0xff]
  %v206 = vld [vmem:[%s0 + $0x560] sm:$0xff]
  %v207 = vld [vmem:[%s0 + $0x568] sm:$0xff]
  %v208 = vld [vmem:[%s0 + $0x570] sm:$0xff]
  %v209 = vld [vmem:[%s0 + $0x578] sm:$0xff]
  %v210 = vld [vmem:[%s0 + $0x580] sm:$0xff]
  %v211 = vld [vmem:[%s0 + $0x588] sm:$0xff]
  %v212 = vld [vmem:[%s0 + $0x590] sm:$0xff]
  %v213 = vld [vmem:[%s0 + $0x598] sm:$0xff]
  %v214 = vld [vmem:[%s0 + $0x5a0] sm:$0xff]
  %v215 = vld [vmem:[%s0 + $0x5a8] sm:$0xff]
  %v216 = vld [vmem:[%s0 + $0x5b0] sm:$0xff]
  %v217 = vld [vmem:[%s0 + $0x5b8] sm:$0xff]
  %v218 = vld [vmem:[%s0 + $0x5c0] sm:$0xff]
  %v219 = vld [vmem:[%s0 + $0x5c8] sm:$0xff]
  %v220 = vld [vmem:[%s0 + $0x5d0] sm:$0xff]
  %v221 = vld [vmem:[%s0 + $0x5d8] sm:$0xff]
  %v222 = vld [vmem:[%s0 + $0x5e0] sm:$0xff]
  %v223 = vld [vmem:[%s0 + $0x5e8] sm:$0xff]
  %v224 = vld [vmem:[%s0 + $0x5f0] sm:$0xff]
  %v225 = vld [vmem:[%s0 + $0x5f8] sm:$0xff]
  %v226 = vld [vmem:[%s0 + $0x600] sm:$0xff]
  %v227 = vld [vmem:[%s0 + $0x608] sm:$0xff]
  %v228 = vld [vmem:[%s0 + $0x610] sm:$0xff]
  %v229 = vld [vmem:[%s0 + $0x618] sm:$0xff]
  %v230 = vld [vmem:[%s0 + $0x620] sm:$0xff]
  %v231 = vld [vmem:[%s0 + $0x628] sm:$0xff]
  %v232 = vld [vmem:[%s0 + $0x630] sm:$0xff]
  %v233 = vld [vmem:[%s0 + $0x638] sm:$0xff]
  %v234 = vld [vmem:[%s0 + $0x640] sm:$0xff]
  %v235 = vld [vmem:[%s0 + $0x648] sm:$0xff]
  %v236 = vld [vmem:[%s0 + $0x650] sm:$0xff]
  %v237 = vld [vmem:[%s0 + $0x658] sm:$0xff]
  %v238 = vld [vmem:[%s0 + $0x660] sm:$0xff]
  %v239 = vld [vmem:[%s0 + $0x668] sm:$0xff]
  %v240 = vld [vmem:[%s0 + $0x670] sm:$0xff]
  %v241 = vld [vmem:[%s0 + $0x678] sm:$0xff]
  %v242 = vld [vmem:[%s0 + $0x680] sm:$0xff]
  %v243 = vld [vmem:[%s0 + $0x688] sm:$0xff]
  %v244 = vld [vmem:[%s0 + $0x690] sm:$0xff]
  %v245 = vld [vmem:[%s0 + $0x698] sm:$0xff]
  %v246 = vld [vmem:[%s0 + $0x6a0] sm:$0xff]
  %v247 = vld [vmem:[%s0 + $0x6a8] sm:$0xff]
  %v248 = vld [vmem:[%s0 + $0x6b0] sm:$0xff]
  %v249 = vld [vmem:[%s0 + $0x6b8] sm:$0xff]
  %v250 = vld [vmem:[%s0 + $0x6c0] sm:$0xff]
  %v251 = vld [vmem:[%s0 + $0x6c8] sm:$0xff]
  %v252 = vld [vmem:[%s0 + $0x6d0] sm:$0xff]
  %v253 = vld [vmem:[%s0 + $0x6d8] sm:$0xff]
  %v254 = vld [vmem:[%s0 + $0x6e0] sm:$0xff]
  %v255 = vld [vmem:[%s0 + $0x6e8] sm:$0xff]
  %v256 = vld [vmem:[%s0 + $0x6f0] sm:$0xff]
  %v257 = vld [vmem:[%s0 + $0x6f8] sm:$0xff]
  %v258 = vld [vmem:[%s0 + $0x700] sm:$0xff]
  %v259 = vld [vmem:[%s0 + $0x708] sm:$0xff]
  %v260 = vld [vmem:[%s0 + $0x710] sm:$0xff]
  %v261 = vld [vmem:[%s0 + $0x718] sm:$0xff]
  %v262 = vld [vmem:[%s0 + $0x720] sm:$0xff]
  %v263 = vld [vmem:[%s0 + $0x728] sm:$0xff]
  %v264 = vld [vmem:[%s0 + $0x730] sm:$0xff]
  %v265 = vld [vmem:[%s0 + $0x738] sm:$0xff]
  %v266 = vld [vmem:[%s0 + $0x740] sm:$0xff]
  %v267 = vld [vmem:[%s0 + $0x748] sm:$0xff]
  %v268 = vld [vmem:[%s0 + $0x750] sm:$0xff]
  %v269 = vld [vmem:[%s0 + $0x758] sm:$0xff]
  %v270 = vld [vmem:[%s0 + $0x760] sm:$0xff]
  %v271 = vld [vmem:[%s0 + $0x768] sm:$0xff]
  %v272 = vld [vmem:[%s0 + $0x770] sm:$0xff]
  %v273 = vld [vmem:[%s0 + $0x778] sm:$0xff]
  %v274 = vld [vmem:[%s0 + $0x780] sm:$0xff]
  %v275 = vld [vmem:[%s0 + $0x788] sm:$0xff]
  %v276 = vld [vmem:[%s0 + $0x790] sm:$0xff]
  %v277 = vld [vmem:[%s0 + $0x798] sm:$0xff]
  %v278 = vld [vmem:[%s0 + $0x7a0] sm:$0xff]
  %v279 = vld [vmem:[%s0 + $0x7a8] sm:$0xff]
  %v280 = vld [vmem:[%s0 + $0x7b0] sm:$0xff]
  %v281 = vld [vmem:[%s0 + $0x7b8] sm:$0xff]
  %v282 = vld [vmem:[%s0 + $0x7c0] sm:$0xff]
  %v283 = vld [vmem:[%s0 + $0x7c8] sm:$0xff]
  %v284 = vld [vmem:[%s0 + $0x7d0] sm:$0xff]
  %v285 = vld [vmem:[%s0 + $0x7d8] sm:$0xff]
  %v286 = vld [vmem:[%s0 + $0x7e0] sm:$0xff]
  %v287 = vld [vmem:[%s0 + $0x7e8] sm:$0xff]
  %v288 = vld [vmem:[%s0 + $0x7f0] sm:$0xff]
  %v289 = vld [vmem:[%s0 + $0x7f8] sm:$0xff]
  %v290 = vld [vmem:[%s0 + $0x800] sm:$0xff]
  %v291 = vld [vmem:[%s0 + $0x808] sm:$0xff]
  %v292 = vld [vmem:[%s0 + $0x810] sm:$0xff]
  %v293 = vld [vmem:[%s0 + $0x818] sm:$0xff]
  %v294 = vld [vmem:[%s0 + $0x820] sm:$0xff]
  %v295 = vld [vmem:[%s0 + $0x828] sm:$0xff]
  %v296 = vld [vmem:[%s0 + $0x830] sm:$0xff]
  %v297 = vld [vmem:[%s0 + $0x838] sm:$0xff]
  %v298 = vld [vmem:[%s0 + $0x840] sm:$0xff]
  %v299 = vld [vmem:[%s0 + $0x848] sm:$0xff]
  %v300 = vld [vmem:[%s0 + $0x850] sm:$0xff]
  %v301 = vld [vmem:[%s0 + $0x858] sm:$0xff]
  %v302 = vld [vmem:[%s0 + $0x860] sm:$0xff]
  %v303 = vld [vmem:[%s0 + $0x868] sm:$0xff]
  %v304 = vld [vmem:[%s0 + $0x870] sm:$0xff]
  %v305 = vld [vmem:[%s0 + $0x878] sm:$0xff]
  %v306 = vld [vmem:[%s0 + $0x880] sm:$0xff]
  %v307 = vld [vmem:[%s0 + $0x888] sm:$0xff]
  %v308 = vld [vmem:[%s0 + $0x890] sm:$0xff]
  %v309 = vld [vmem:[%s0 + $0x898] sm:$0xff]
  %v310 = vld [vmem:[%s0 + $0x8a0] sm:$0xff]
  %v311 = vld [vmem:[%s0 + $0x8a8] sm:$0xff]
  %v312 = vld [vmem:[%s0 + $0x8b0] sm:$0xff]
  %v313 = vld [vmem:[%s0 + $0x8b8] sm:$0xff]
  %v314 = vld [vmem:[%s0 + $0x8c0] sm:$0xff]
  %v315 = vld [vmem:[%s0 + $0x8c8] sm:$0xff]
  %v316 = vld [vmem:[%s0 + $0x8d0] sm:$0xff]
  %v317 = vld [vmem:[%s0 + $0x8d8] sm:$0xff]
  %v318 = vld [vmem:[%s0 + $0x8e0] sm:$0xff]
  %v319 = vld [vmem:[%s0 + $0x8e8] sm:$0xff]
  %v320 = vld [vmem:[%s0 + $0x8f0] sm:$0xff]
  %v321 = vld [vmem:[%s0 + $0x8f8] sm:$0xff]
  %v322 = vld [vmem:[%s0 + $0x900] sm:$0xff]
  %v323 = vld [vmem:[%s0 + $0x908] sm:$0xff]
  %v324 = vld [vmem:[%s0 + $0x910] sm:$0xff]
  %v325 = vld [vmem:[%s0 + $0x918] sm:$0xff]
  %v326 = vld [vmem:[%s0 + $0x920] sm:$0xff]
  %v327 = vld [vmem:[%s0 + $0x928] sm:$0xff]
  %v328 = vld [vmem:[%s0 + $0x930] sm:$0xff]
  %v329 = vld [vmem:[%s0 + $0x938] sm:$0xff]
  %v330 = vld [vmem:[%s0 + $0x940] sm:$0xff]
  %v331 = vld [vmem:[%s0 + $0x948] sm:$0xff]
  %v332 = vld [vmem:[%s0 + $0x950] sm:$0xff]
  %v333 = vld [vmem:[%s0 + $0x958] sm:$0xff]
  %v334 = vld [vmem:[%s0 + $0x960] sm:$0xff]
  %v335 = vld [vmem:[%s0 + $0x968] sm:$0xff]
  %v336 = vld [vmem:[%s0 + $0x970] sm:$0xff]
  %v337 = vld [vmem:[%s0 + $0x978] sm:$0xff]
  %v338 = vld [vmem:[%s0 + $0x980] sm:$0xff]
  %v339 = vld [vmem:[%s0 + $0x988] sm:$0xff]
  %v340 = vld [vmem:[%s0 + $0x990] sm:$0xff]
  %v341 = vld [vmem:[%s0 + $0x998] sm:$0xff]
  %v342 = vld [vmem:[%s0 + $0x9a0] sm:$0xff]
  %v343 = vld [vmem:[%s0 + $0x9a8] sm:$0xff]
  %v344 = vld [vmem:[%s0 + $0x9b0] sm:$0xff]
  %v345 = vld [vmem:[%s0 + $0x9b8] sm:$0xff]
  %v346 = vld [vmem:[%s0 + $0x9c0] sm:$0xff]
  %v347 = vld [vmem:[%s0 + $0x9c8] sm:$0xff]
  %v348 = vld [vmem:[%s0 + $0x9d0] sm:$0xff]
  %v349 = vld [vmem:[%s0 + $0x9d8] sm:$0xff]
  %v350 = vld [vmem:[%s0 + $0x9e0] sm:$0xff]
  %v351 = vld [vmem:[%s0 + $0x9e8] sm:$0xff]
  %v352 = vld [vmem:[%s0 + $0x9f0] sm:$0xff]
  %v353 = vld [vmem:[%s0 + $0x9f8] sm:$0xff]
  %v354 = vld [vmem:[%s0 + $0xa00] sm:$0xff]
  %v355 = vld [vmem:[%s0 + $0xa08] sm:$0xff]
  %v356 = vld [vmem:[%s0 + $0xa10] sm:$0xff]
  %v357 = vld [vmem:[%s0 + $0xa18] sm:$0xff]
  %v358 = vld [vmem:[%s0 + $0xa20] sm:$0xff]
  %v359 = vld [vmem:[%s0 + $0xa28] sm:$0xff]
  %v360 = vld [vmem:[%s0 + $0xa30] sm:$0xff]
  %v361 = vld [vmem:[%s0 + $0xa38] sm:$0xff]
  %v362 = vld [vmem:[%s0 + $0xa40] sm:$0xff]
  %v363 = vld [vmem:[%s0 + $0xa48] sm:$0xff]
  %v364 = vld [vmem:[%s0 + $0xa50] sm:$0xff]
  %v365 = vld [vmem:[%s0 + $0xa58] sm:$0xff]
  %v366 = vld [vmem:[%s0 + $0xa60] sm:$0xff]
  %v367 = vld [vmem:[%s0 + $0xa68] sm:$0xff]
  %v368 = vld [vmem:[%s0 + $0xa70] sm:$0xff]
  %v369 = vld [vmem:[%s0 + $0xa78] sm:$0xff]
  %v370 = vld [vmem:[%s0 + $0xa80] sm:$0xff]
  %v371 = vld [vmem:[%s0 + $0xa88] sm:$0xff]
  %v372 = vld [vmem:[%s0 + $0xa90] sm:$0xff]
  %v373 = vld [vmem:[%s0 + $0xa98] sm:$0xff]
  %v374 = vld [vmem:[%s0 + $0xaa0] sm:$0xff]
  %v375 = vld [vmem:[%s0 + $0xaa8] sm:$0xff]
  %v376 = vld [vmem:[%s0 + $0xab0] sm:$0xff]
  %v377 = vld [vmem:[%s0 + $0xab8] sm:$0xff]
  %v378 = vld [vmem:[%s0 + $0xac0] sm:$0xff]
  %v379 = vld [vmem:[%s0 + $0xac8] sm:$0xff]
  %v380 = vld [vmem:[%s0 + $0xad0] sm:$0xff]
  %v381 = vld [vmem:[%s0 + $0xad8] sm:$0xff]
  %v382 = vld [vmem:[%s0 + $0xae0] sm:$0xff]
  %v383 = vld [vmem:[%s0 + $0xae8] sm:$0xff]
  %v384 = vld [vmem:[%s0 + $0xaf0] sm:$0xff]
  %v385 = vld [vmem:[%s0 + $0xaf8] sm:$0xff]
  %v386 = vld [vmem:[%s0 + $0xb00] sm:$0xff]
  %v387 = vld [vmem:[%s0 + $0xb08] sm:$0xff]
  %v388 = vld [vmem:[%s0 + $0xb10] sm:$0xff]
  %v389 = vld [vmem:[%s0 + $0xb18] sm:$0xff]
  %v390 = vld [vmem:[%s0 + $0xb20] sm:$0xff]
  %v391 = vld [vmem:[%s0 + $0xb28] sm:$0xff]
  %v392 = vld [vmem:[%s0 + $0xb30] sm:$0xff]
  %v393 = vld [vmem:[%s0 + $0xb38] sm:$0xff]
  %v394 = vld [vmem:[%s0 + $0xb40] sm:$0xff]
  %v395 = vld [vmem:[%s0 + $0xb48] sm:$0xff]
  %v396 = vld [vmem:[%s0 + $0xb50] sm:$0xff]
  %v397 = vld [vmem:[%s0 + $0xb58] sm:$0xff]
  %v398 = vld [vmem:[%s0 + $0xb60] sm:$0xff]
  %v399 = vld [vmem:[%s0 + $0xb68] sm:$0xff]
  %v400 = vld [vmem:[%s0 + $0xb70] sm:$0xff]
  %v401 = vld [vmem:[%s0 + $0xb78] sm:$0xff]
  %v402 = vld [vmem:[%s0 + $0xb80] sm:$0xff]
  %v403 = vld [vmem:[%s0 + $0xb88] sm:$0xff]
  %v404 = vld [vmem:[%s0 + $0xb90] sm:$0xff]
  %v405 = vld [vmem:[%s0 + $0xb98] sm:$0xff]
  %v406 = vld [vmem:[%s0 + $0xba0] sm:$0xff]
  %v407 = vld [vmem:[%s0 + $0xba8] sm:$0xff]
  %v408 = vld [vmem:[%s0 + $0xbb0] sm:$0xff]
  %v409 = vld [vmem:[%s0 + $0xbb8] sm:$0xff]
  %v410 = vld [vmem:[%s0 + $0xbc0] sm:$0xff]
  %v411 = vld [vmem:[%s0 + $0xbc8] sm:$0xff]
  %v412 = vld [vmem:[%s0 + $0xbd0] sm:$0xff]
  %v413 = vld [vmem:[%s0 + $0xbd8] sm:$0xff]
  %v414 = vld [vmem:[%s0 + $0xbe0] sm:$0xff]
  %v415 = vld [vmem:[%s0 + $0xbe8] sm:$0xff]
  %v416 = vld [vmem:[%s0 + $0xbf0] sm:$0xff]
  %v417 = vld [vmem:[%s0 + $0xbf8] sm:$0xff]
  %v418 = vld [vmem:[%s0 + $0xc00] sm:$0xff]
  %v419 = vld [vmem:[%s0 + $0xc08] sm:$0xff]
  %v420 = vld [vmem:[%s0 + $0xc10] sm:$0xff]
  %v421 = vld [vmem:[%s0 + $0xc18] sm:$0xff]
  %v422 = vld [vmem:[%s0 + $0xc20] sm:$0xff]
  %v423 = vld [vmem:[%s0 + $0xc28] sm:$0xff]
  %v424 = vld [vmem:[%s0 + $0xc30] sm:$0xff]
  %v425 = vld [vmem:[%s0 + $0xc38] sm:$0xff]
  %v426 = vld [vmem:[%s0 + $0xc40] sm:$0xff]
  %v427 = vld [vmem:[%s0 + $0xc48] sm:$0xff]
  %v428 = vld [vmem:[%s0 + $0xc50] sm:$0xff]
  %v429 = vld [vmem:[%s0 + $0xc58] sm:$0xff]
  %v430 = vld [vmem:[%s0 + $0xc60] sm:$0xff]
  %v431 = vld [vmem:[%s0 + $0xc68] sm:$0xff]
  %v432 = vld [vmem:[%s0 + $0xc70] sm:$0xff]
  %v433 = vld [vmem:[%s0 + $0xc78] sm:$0xff]
  %v434 = vld [vmem:[%s0 + $0xc80] sm:$0xff]
  %v435 = vld [vmem:[%s0 + $0xc88] sm:$0xff]
  %v436 = vld [vmem:[%s0 + $0xc90] sm:$0xff]
  %v437 = vld [vmem:[%s0 + $0xc98] sm:$0xff]
  %v438 = vld [vmem:[%s0 + $0xca0] sm:$0xff]
  %v439 = vld [vmem:[%s0 + $0xca8] sm:$0xff]
  %v440 = vld [vmem:[%s0 + $0xcb0] sm:$0xff]
  %v441 = vld [vmem:[%s0 + $0xcb8] sm:$0xff]
  %v442 = vld [vmem:[%s0 + $0xcc0] sm:$0xff]
  %v443 = vld [vmem:[%s0 + $0xcc8] sm:$0xff]
  %v444 = vld [vmem:[%s0 + $0xcd0] sm:$0xff]
  %v445 = vld [vmem:[%s0 + $0xcd8] sm:$0xff]
  %v446 = vld [vmem:[%s0 + $0xce0] sm:$0xff]
  %v447 = vld [vmem:[%s0 + $0xce8] sm:$0xff]
  %v448 = vld [vmem:[%s0 + $0xcf0] sm:$0xff]
  %v449 = vld [vmem:[%s0 + $0xcf8] sm:$0xff]
  %v450 = vld [vmem:[%s0 + $0xd00] sm:$0xff]
  %v451 = vld [vmem:[%s0 + $0xd08] sm:$0xff]
  %v452 = vld [vmem:[%s0 + $0xd10] sm:$0xff]
  %v453 = vld [vmem:[%s0 + $0xd18] sm:$0xff]
  %v454 = vld [vmem:[%s0 + $0xd20] sm:$0xff]
  %v455 = vld [vmem:[%s0 + $0xd28] sm:$0xff]
  %v456 = vld [vmem:[%s0 + $0xd30] sm:$0xff]
  %v457 = vld [vmem:[%s0 + $0xd38] sm:$0xff]
  %v458 = vld [vmem:[%s0 + $0xd40] sm:$0xff]
  %v459 = vld [vmem:[%s0 + $0xd48] sm:$0xff]
  %v460 = vld [vmem:[%s0 + $0xd50] sm:$0xff]
  %v461 = vld [vmem:[%s0 + $0xd58] sm:$0xff]
  %v462 = vld [vmem:[%s0 + $0xd60] sm:$0xff]
  %v463 = vld [vmem:[%s0 + $0xd68] sm:$0xff]
  %v464 = vld [vmem:[%s0 + $0xd70] sm:$0xff]
  %v465 = vld [vmem:[%s0 + $0xd78] sm:$0xff]
  %v466 = vld [vmem:[%s0 + $0xd80] sm:$0xff]
  %v467 = vld [vmem:[%s0 + $0xd88] sm:$0xff]
  %v468 = vld [vmem:[%s0 + $0xd90] sm:$0xff]
  %v469 = vld [vmem:[%s0 + $0xd98] sm:$0xff]
  %v470 = vld [vmem:[%s0 + $0xda0] sm:$0xff]
  %v471 = vld [vmem:[%s0 + $0xda8] sm:$0xff]
  %v472 = vld [vmem:[%s0 + $0xdb0] sm:$0xff]
  %v473 = vld [vmem:[%s0 + $0xdb8] sm:$0xff]
  %v474 = vld [vmem:[%s0 + $0xdc0] sm:$0xff]
  %v475 = vld [vmem:[%s0 + $0xdc8] sm:$0xff]
  %v476 = vld [vmem:[%s0 + $0xdd0] sm:$0xff]
  %v477 = vld [vmem:[%s0 + $0xdd8] sm:$0xff]
  %v478 = vld [vmem:[%s0 + $0xde0] sm:$0xff]
  %v479 = vld [vmem:[%s0 + $0xde8] sm:$0xff]
  %v480 = vld [vmem:[%s0 + $0xdf0] sm:$0xff]
  %v481 = vld [vmem:[%s0 + $0xdf8] sm:$0xff]
  %v482 = vpack.c.bf16 %v41, %v34
  %v483 = vpack.c.bf16 %v42, %v35
  %v484 = vpack.c.bf16 %v43, %v36
  %v485 = vpack.c.bf16 %v44, %v37
  %v486 = vpack.c.bf16 %v45, %v38
  %v487 = vpack.c.bf16 %v46, %v39
  %v488 = vpack.c.bf16 %v47, %v40
  %v489 = vpack.c.bf16 %v55, %v48
  %v490 = vpack.c.bf16 %v56, %v49
  %v491 = vpack.c.bf16 %v57, %v50
  %v492 = vpack.c.bf16 %v58, %v51
  %v493 = vpack.c.bf16 %v59, %v52
  %v494 = vpack.c.bf16 %v60, %v53
  %v495 = vpack.c.bf16 %v61, %v54
  %v496 = vpack.c.bf16 %v69, %v62
  %v497 = vpack.c.bf16 %v70, %v63
  %v498 = vpack.c.bf16 %v71, %v64
  %v499 = vpack.c.bf16 %v72, %v65
  %v500 = vpack.c.bf16 %v73, %v66
  %v501 = vpack.c.bf16 %v74, %v67
  %v502 = vpack.c.bf16 %v75, %v68
  %v503 = vpack.c.bf16 %v83, %v76
  %v504 = vpack.c.bf16 %v84, %v77
  %v505 = vpack.c.bf16 %v85, %v78
  %v506 = vpack.c.bf16 %v86, %v79
  %v507 = vpack.c.bf16 %v87, %v80
  %v508 = vpack.c.bf16 %v88, %v81
  %v509 = vpack.c.bf16 %v89, %v82
  %v510 = vpack.c.bf16 %v97, %v90
  %v511 = vpack.c.bf16 %v98, %v91
  %v512 = vpack.c.bf16 %v99, %v92
  %v513 = vpack.c.bf16 %v100, %v93
  %v514 = vpack.c.bf16 %v101, %v94
  %v515 = vpack.c.bf16 %v102, %v95
  %v516 = vpack.c.bf16 %v103, %v96
  %v517 = vpack.c.bf16 %v111, %v104
  %v518 = vpack.c.bf16 %v112, %v105
  %v519 = vpack.c.bf16 %v113, %v106
  %v520 = vpack.c.bf16 %v114, %v107
  %v521 = vpack.c.bf16 %v115, %v108
  %v522 = vpack.c.bf16 %v116, %v109
  %v523 = vpack.c.bf16 %v117, %v110
  %v524 = vpack.c.bf16 %v125, %v118
  %v525 = vpack.c.bf16 %v126, %v119
  %v526 = vpack.c.bf16 %v127, %v120
  %v527 = vpack.c.bf16 %v128, %v121
  %v528 = vpack.c.bf16 %v129, %v122
  %v529 = vpack.c.bf16 %v130, %v123
  %v530 = vpack.c.bf16 %v131, %v124
  %v531 = vpack.c.bf16 %v139, %v132
  %v532 = vpack.c.bf16 %v140, %v133
  %v533 = vpack.c.bf16 %v141, %v134
  %v534 = vpack.c.bf16 %v142, %v135
  %v535 = vpack.c.bf16 %v143, %v136
  %v536 = vpack.c.bf16 %v144, %v137
  %v537 = vpack.c.bf16 %v145, %v138
  %v538 = vpack.c.bf16 %v153, %v146
  %v539 = vpack.c.bf16 %v154, %v147
  %v540 = vpack.c.bf16 %v155, %v148
  %v541 = vpack.c.bf16 %v156, %v149
  %v542 = vpack.c.bf16 %v157, %v150
  %v543 = vpack.c.bf16 %v158, %v151
  %v544 = vpack.c.bf16 %v159, %v152
  %v545 = vpack.c.bf16 %v167, %v160
  %v546 = vpack.c.bf16 %v168, %v161
  %v547 = vpack.c.bf16 %v169, %v162
  %v548 = vpack.c.bf16 %v170, %v163
  %v549 = vpack.c.bf16 %v171, %v164
  %v550 = vpack.c.bf16 %v172, %v165
  %v551 = vpack.c.bf16 %v173, %v166
  %v552 = vpack.c.bf16 %v181, %v174
  %v553 = vpack.c.bf16 %v182, %v175
  %v554 = vpack.c.bf16 %v183, %v176
  %v555 = vpack.c.bf16 %v184, %v177
  %v556 = vpack.c.bf16 %v185, %v178
  %v557 = vpack.c.bf16 %v186, %v179
  %v558 = vpack.c.bf16 %v187, %v180
  %v559 = vpack.c.bf16 %v195, %v188
  %v560 = vpack.c.bf16 %v196, %v189
  %v561 = vpack.c.bf16 %v197, %v190
  %v562 = vpack.c.bf16 %v198, %v191
  %v563 = vpack.c.bf16 %v199, %v192
  %v564 = vpack.c.bf16 %v200, %v193
  %v565 = vpack.c.bf16 %v201, %v194
  %v566 = vpack.c.bf16 %v209, %v202
  %v567 = vpack.c.bf16 %v210, %v203
  %v568 = vpack.c.bf16 %v211, %v204
  %v569 = vpack.c.bf16 %v212, %v205
  %v570 = vpack.c.bf16 %v213, %v206
  %v571 = vpack.c.bf16 %v214, %v207
  %v572 = vpack.c.bf16 %v215, %v208
  %v573 = vpack.c.bf16 %v223, %v216
  %v574 = vpack.c.bf16 %v224, %v217
  %v575 = vpack.c.bf16 %v225, %v218
  %v576 = vpack.c.bf16 %v226, %v219
  %v577 = vpack.c.bf16 %v227, %v220
  %v578 = vpack.c.bf16 %v228, %v221
  %v579 = vpack.c.bf16 %v229, %v222
  %v580 = vpack.c.bf16 %v237, %v230
  %v581 = vpack.c.bf16 %v238, %v231
  %v582 = vpack.c.bf16 %v239, %v232
  %v583 = vpack.c.bf16 %v240, %v233
  %v584 = vpack.c.bf16 %v241, %v234
  %v585 = vpack.c.bf16 %v242, %v235
  %v586 = vpack.c.bf16 %v243, %v236
  %v587 = vpack.c.bf16 %v251, %v244
  %v588 = vpack.c.bf16 %v252, %v245
  %v589 = vpack.c.bf16 %v253, %v246
  %v590 = vpack.c.bf16 %v254, %v247
  %v591 = vpack.c.bf16 %v255, %v248
  %v592 = vpack.c.bf16 %v256, %v249
  %v593 = vpack.c.bf16 %v257, %v250
  %v594 = vpack.c.bf16 %v265, %v258
  %v595 = vpack.c.bf16 %v266, %v259
  %v596 = vpack.c.bf16 %v267, %v260
  %v597 = vpack.c.bf16 %v268, %v261
  %v598 = vpack.c.bf16 %v269, %v262
  %v599 = vpack.c.bf16 %v270, %v263
  %v600 = vpack.c.bf16 %v271, %v264
  %v601 = vpack.c.bf16 %v279, %v272
  %v602 = vpack.c.bf16 %v280, %v273
  %v603 = vpack.c.bf16 %v281, %v274
  %v604 = vpack.c.bf16 %v282, %v275
  %v605 = vpack.c.bf16 %v283, %v276
  %v606 = vpack.c.bf16 %v284, %v277
  %v607 = vpack.c.bf16 %v285, %v278
  %v608 = vpack.c.bf16 %v293, %v286
  %v609 = vpack.c.bf16 %v294, %v287
  %v610 = vpack.c.bf16 %v295, %v288
  %v611 = vpack.c.bf16 %v296, %v289
  %v612 = vpack.c.bf16 %v297, %v290
  %v613 = vpack.c.bf16 %v298, %v291
  %v614 = vpack.c.bf16 %v299, %v292
  %v615 = vpack.c.bf16 %v307, %v300
  %v616 = vpack.c.bf16 %v308, %v301
  %v617 = vpack.c.bf16 %v309, %v302
  %v618 = vpack.c.bf16 %v310, %v303
  %v619 = vpack.c.bf16 %v311, %v304
  %v620 = vpack.c.bf16 %v312, %v305
  %v621 = vpack.c.bf16 %v313, %v306
  %v622 = vpack.c.bf16 %v321, %v314
  %v623 = vpack.c.bf16 %v322, %v315
  %v624 = vpack.c.bf16 %v323, %v316
  %v625 = vpack.c.bf16 %v324, %v317
  %v626 = vpack.c.bf16 %v325, %v318
  %v627 = vpack.c.bf16 %v326, %v319
  %v628 = vpack.c.bf16 %v327, %v320
  %v629 = vpack.c.bf16 %v335, %v328
  %v630 = vpack.c.bf16 %v336, %v329
  %v631 = vpack.c.bf16 %v337, %v330
  %v632 = vpack.c.bf16 %v338, %v331
  %v633 = vpack.c.bf16 %v339, %v332
  %v634 = vpack.c.bf16 %v340, %v333
  %v635 = vpack.c.bf16 %v341, %v334
  %v636 = vpack.c.bf16 %v349, %v342
  %v637 = vpack.c.bf16 %v350, %v343
  %v638 = vpack.c.bf16 %v351, %v344
  %v639 = vpack.c.bf16 %v352, %v345
  %v640 = vpack.c.bf16 %v353, %v346
  %v641 = vpack.c.bf16 %v354, %v347
  %v642 = vpack.c.bf16 %v355, %v348
  %v643 = vpack.c.bf16 %v363, %v356
  %v644 = vpack.c.bf16 %v364, %v357
  %v645 = vpack.c.bf16 %v365, %v358
  %v646 = vpack.c.bf16 %v366, %v359
  %v647 = vpack.c.bf16 %v367, %v360
  %v648 = vpack.c.bf16 %v368, %v361
  %v649 = vpack.c.bf16 %v369, %v362
  %v650 = vpack.c.bf16 %v377, %v370
  %v651 = vpack.c.bf16 %v378, %v371
  %v652 = vpack.c.bf16 %v379, %v372
  %v653 = vpack.c.bf16 %v380, %v373
  %v654 = vpack.c.bf16 %v381, %v374
  %v655 = vpack.c.bf16 %v382, %v375
  %v656 = vpack.c.bf16 %v383, %v376
  %v657 = vpack.c.bf16 %v391, %v384
  %v658 = vpack.c.bf16 %v392, %v385
  %v659 = vpack.c.bf16 %v393, %v386
  %v660 = vpack.c.bf16 %v394, %v387
  %v661 = vpack.c.bf16 %v395, %v388
  %v662 = vpack.c.bf16 %v396, %v389
  %v663 = vpack.c.bf16 %v397, %v390
  %v664 = vpack.c.bf16 %v405, %v398
  %v665 = vpack.c.bf16 %v406, %v399
  %v666 = vpack.c.bf16 %v407, %v400
  %v667 = vpack.c.bf16 %v408, %v401
  %v668 = vpack.c.bf16 %v409, %v402
  %v669 = vpack.c.bf16 %v410, %v403
  %v670 = vpack.c.bf16 %v411, %v404
  %v671 = vpack.c.bf16 %v419, %v412
  %v672 = vpack.c.bf16 %v420, %v413
  %v673 = vpack.c.bf16 %v421, %v414
  %v674 = vpack.c.bf16 %v422, %v415
  %v675 = vpack.c.bf16 %v423, %v416
  %v676 = vpack.c.bf16 %v424, %v417
  %v677 = vpack.c.bf16 %v425, %v418
  %v678 = vpack.c.bf16 %v433, %v426
  %v679 = vpack.c.bf16 %v434, %v427
  %v680 = vpack.c.bf16 %v435, %v428
  %v681 = vpack.c.bf16 %v436, %v429
  %v682 = vpack.c.bf16 %v437, %v430
  %v683 = vpack.c.bf16 %v438, %v431
  %v684 = vpack.c.bf16 %v439, %v432
  %v685 = vpack.c.bf16 %v447, %v440
  %v686 = vpack.c.bf16 %v448, %v441
  %v687 = vpack.c.bf16 %v449, %v442
  %v688 = vpack.c.bf16 %v450, %v443
  %v689 = vpack.c.bf16 %v451, %v444
  %v690 = vpack.c.bf16 %v452, %v445
  %v691 = vpack.c.bf16 %v453, %v446
  %v692 = vpack.c.bf16 %v461, %v454
  %v693 = vpack.c.bf16 %v462, %v455
  %v694 = vpack.c.bf16 %v463, %v456
  %v695 = vpack.c.bf16 %v464, %v457
  %v696 = vpack.c.bf16 %v465, %v458
  %v697 = vpack.c.bf16 %v466, %v459
  %v698 = vpack.c.bf16 %v467, %v460
  %v699 = vpack.c.bf16 %v475, %v468
  %v700 = vpack.c.bf16 %v476, %v469
  %v701 = vpack.c.bf16 %v477, %v470
  %v702 = vpack.c.bf16 %v478, %v471
  %v703 = vpack.c.bf16 %v479, %v472
  %v704 = vpack.c.bf16 %v480, %v473
  %v705 = vpack.c.bf16 %v481, %v474
  %v706 = vld [vmem:[%s1] sm:$0xff]
  %v707 = vld [vmem:[%s1 + $0x8] sm:$0xff]
  %v708 = vld [vmem:[%s1 + $0x10] sm:$0xff]
  %v709 = vld [vmem:[%s1 + $0x18] sm:$0xff]
  %v710 = vld [vmem:[%s1 + $0x20] sm:$0xff]
  %v711 = vld [vmem:[%s1 + $0x28] sm:$0xff]
  %v712 = vld [vmem:[%s1 + $0x30] sm:$0xff]
  %v713 = vld [vmem:[%s1 + $0x38] sm:$0xff]
  %v714 = vld [vmem:[%s1 + $0x40] sm:$0xff]
  %v715 = vld [vmem:[%s1 + $0x48] sm:$0xff]
  %v716 = vld [vmem:[%s1 + $0x50] sm:$0xff]
  %v717 = vld [vmem:[%s1 + $0x58] sm:$0xff]
  %v718 = vld [vmem:[%s1 + $0x60] sm:$0xff]
  %v719 = vld [vmem:[%s1 + $0x68] sm:$0xff]
  %v720 = vld [vmem:[%s1 + $0x70] sm:$0xff]
  %v721 = vld [vmem:[%s1 + $0x78] sm:$0xff]
  %v722 = vld [vmem:[%s1 + $0x80] sm:$0xff]
  %v723 = vld [vmem:[%s1 + $0x88] sm:$0xff]
  %v724 = vld [vmem:[%s1 + $0x90] sm:$0xff]
  %v725 = vld [vmem:[%s1 + $0x98] sm:$0xff]
  %v726 = vld [vmem:[%s1 + $0xa0] sm:$0xff]
  %v727 = vld [vmem:[%s1 + $0xa8] sm:$0xff]
  %v728 = vld [vmem:[%s1 + $0xb0] sm:$0xff]
  %v729 = vld [vmem:[%s1 + $0xb8] sm:$0xff]
  %v730 = vld [vmem:[%s1 + $0xc0] sm:$0xff]
  %v731 = vld [vmem:[%s1 + $0xc8] sm:$0xff]
  %v732 = vld [vmem:[%s1 + $0xd0] sm:$0xff]
  %v733 = vld [vmem:[%s1 + $0xd8] sm:$0xff]
  %v734 = vld [vmem:[%s1 + $0xe0] sm:$0xff]
  %v735 = vld [vmem:[%s1 + $0xe8] sm:$0xff]
  %v736 = vld [vmem:[%s1 + $0xf0] sm:$0xff]
  %v737 = vld [vmem:[%s1 + $0xf8] sm:$0xff]
  %v738 = vld [vmem:[%s1 + $0x100] sm:$0xff]
  %v739 = vld [vmem:[%s1 + $0x108] sm:$0xff]
  %v740 = vld [vmem:[%s1 + $0x110] sm:$0xff]
  %v741 = vld [vmem:[%s1 + $0x118] sm:$0xff]
  %v742 = vld [vmem:[%s1 + $0x120] sm:$0xff]
  %v743 = vld [vmem:[%s1 + $0x128] sm:$0xff]
  %v744 = vld [vmem:[%s1 + $0x130] sm:$0xff]
  %v745 = vld [vmem:[%s1 + $0x138] sm:$0xff]
  %v746 = vld [vmem:[%s1 + $0x140] sm:$0xff]
  %v747 = vld [vmem:[%s1 + $0x148] sm:$0xff]
  %v748 = vld [vmem:[%s1 + $0x150] sm:$0xff]
  %v749 = vld [vmem:[%s1 + $0x158] sm:$0xff]
  %v750 = vld [vmem:[%s1 + $0x160] sm:$0xff]
  %v751 = vld [vmem:[%s1 + $0x168] sm:$0xff]
  %v752 = vld [vmem:[%s1 + $0x170] sm:$0xff]
  %v753 = vld [vmem:[%s1 + $0x178] sm:$0xff]
  %v754 = vld [vmem:[%s1 + $0x180] sm:$0xff]
  %v755 = vld [vmem:[%s1 + $0x188] sm:$0xff]
  %v756 = vld [vmem:[%s1 + $0x190] sm:$0xff]
  %v757 = vld [vmem:[%s1 + $0x198] sm:$0xff]
  %v758 = vld [vmem:[%s1 + $0x1a0] sm:$0xff]
  %v759 = vld [vmem:[%s1 + $0x1a8] sm:$0xff]
  %v760 = vld [vmem:[%s1 + $0x1b0] sm:$0xff]
  %v761 = vld [vmem:[%s1 + $0x1b8] sm:$0xff]
  %v762 = vld [vmem:[%s1 + $0x1c0] sm:$0xff]
  %v763 = vld [vmem:[%s1 + $0x1c8] sm:$0xff]
  %v764 = vld [vmem:[%s1 + $0x1d0] sm:$0xff]
  %v765 = vld [vmem:[%s1 + $0x1d8] sm:$0xff]
  %v766 = vld [vmem:[%s1 + $0x1e0] sm:$0xff]
  %v767 = vld [vmem:[%s1 + $0x1e8] sm:$0xff]
  %v768 = vld [vmem:[%s1 + $0x1f0] sm:$0xff]
  %v769 = vld [vmem:[%s1 + $0x1f8] sm:$0xff]
  %v770 = vld [vmem:[%s1 + $0x200] sm:$0xff]
  %v771 = vld [vmem:[%s1 + $0x208] sm:$0xff]
  %v772 = vld [vmem:[%s1 + $0x210] sm:$0xff]
  %v773 = vld [vmem:[%s1 + $0x218] sm:$0xff]
  %v774 = vld [vmem:[%s1 + $0x220] sm:$0xff]
  %v775 = vld [vmem:[%s1 + $0x228] sm:$0xff]
  %v776 = vld [vmem:[%s1 + $0x230] sm:$0xff]
  %v777 = vld [vmem:[%s1 + $0x238] sm:$0xff]
  %v778 = vld [vmem:[%s1 + $0x240] sm:$0xff]
  %v779 = vld [vmem:[%s1 + $0x248] sm:$0xff]
  %v780 = vld [vmem:[%s1 + $0x250] sm:$0xff]
  %v781 = vld [vmem:[%s1 + $0x258] sm:$0xff]
  %v782 = vld [vmem:[%s1 + $0x260] sm:$0xff]
  %v783 = vld [vmem:[%s1 + $0x268] sm:$0xff]
  %v784 = vld [vmem:[%s1 + $0x270] sm:$0xff]
  %v785 = vld [vmem:[%s1 + $0x278] sm:$0xff]
  %v786 = vld [vmem:[%s1 + $0x280] sm:$0xff]
  %v787 = vld [vmem:[%s1 + $0x288] sm:$0xff]
  %v788 = vld [vmem:[%s1 + $0x290] sm:$0xff]
  %v789 = vld [vmem:[%s1 + $0x298] sm:$0xff]
  %v790 = vld [vmem:[%s1 + $0x2a0] sm:$0xff]
  %v791 = vld [vmem:[%s1 + $0x2a8] sm:$0xff]
  %v792 = vld [vmem:[%s1 + $0x2b0] sm:$0xff]
  %v793 = vld [vmem:[%s1 + $0x2b8] sm:$0xff]
  %v794 = vld [vmem:[%s1 + $0x2c0] sm:$0xff]
  %v795 = vld [vmem:[%s1 + $0x2c8] sm:$0xff]
  %v796 = vld [vmem:[%s1 + $0x2d0] sm:$0xff]
  %v797 = vld [vmem:[%s1 + $0x2d8] sm:$0xff]
  %v798 = vld [vmem:[%s1 + $0x2e0] sm:$0xff]
  %v799 = vld [vmem:[%s1 + $0x2e8] sm:$0xff]
  %v800 = vld [vmem:[%s1 + $0x2f0] sm:$0xff]
  %v801 = vld [vmem:[%s1 + $0x2f8] sm:$0xff]
  %v802 = vld [vmem:[%s1 + $0x300] sm:$0xff]
  %v803 = vld [vmem:[%s1 + $0x308] sm:$0xff]
  %v804 = vld [vmem:[%s1 + $0x310] sm:$0xff]
  %v805 = vld [vmem:[%s1 + $0x318] sm:$0xff]
  %v806 = vld [vmem:[%s1 + $0x320] sm:$0xff]
  %v807 = vld [vmem:[%s1 + $0x328] sm:$0xff]
  %v808 = vld [vmem:[%s1 + $0x330] sm:$0xff]
  %v809 = vld [vmem:[%s1 + $0x338] sm:$0xff]
  %v810 = vld [vmem:[%s1 + $0x340] sm:$0xff]
  %v811 = vld [vmem:[%s1 + $0x348] sm:$0xff]
  %v812 = vld [vmem:[%s1 + $0x350] sm:$0xff]
  %v813 = vld [vmem:[%s1 + $0x358] sm:$0xff]
  %v814 = vld [vmem:[%s1 + $0x360] sm:$0xff]
  %v815 = vld [vmem:[%s1 + $0x368] sm:$0xff]
  %v816 = vld [vmem:[%s1 + $0x370] sm:$0xff]
  %v817 = vld [vmem:[%s1 + $0x378] sm:$0xff]
  %v818 = vld [vmem:[%s1 + $0x380] sm:$0xff]
  %v819 = vld [vmem:[%s1 + $0x388] sm:$0xff]
  %v820 = vld [vmem:[%s1 + $0x390] sm:$0xff]
  %v821 = vld [vmem:[%s1 + $0x398] sm:$0xff]
  %v822 = vld [vmem:[%s1 + $0x3a0] sm:$0xff]
  %v823 = vld [vmem:[%s1 + $0x3a8] sm:$0xff]
  %v824 = vld [vmem:[%s1 + $0x3b0] sm:$0xff]
  %v825 = vld [vmem:[%s1 + $0x3b8] sm:$0xff]
  %v826 = vld [vmem:[%s1 + $0x3c0] sm:$0xff]
  %v827 = vld [vmem:[%s1 + $0x3c8] sm:$0xff]
  %v828 = vld [vmem:[%s1 + $0x3d0] sm:$0xff]
  %v829 = vld [vmem:[%s1 + $0x3d8] sm:$0xff]
  %v830 = vld [vmem:[%s1 + $0x3e0] sm:$0xff]
  %v831 = vld [vmem:[%s1 + $0x3e8] sm:$0xff]
  %v832 = vld [vmem:[%s1 + $0x3f0] sm:$0xff]
  %v833 = vld [vmem:[%s1 + $0x3f8] sm:$0xff]
  %v834 = vld [vmem:[%s1 + $0x400] sm:$0xff]
  %v835 = vld [vmem:[%s1 + $0x408] sm:$0xff]
  %v836 = vld [vmem:[%s1 + $0x410] sm:$0xff]
  %v837 = vld [vmem:[%s1 + $0x418] sm:$0xff]
  %v838 = vld [vmem:[%s1 + $0x420] sm:$0xff]
  %v839 = vld [vmem:[%s1 + $0x428] sm:$0xff]
  %v840 = vld [vmem:[%s1 + $0x430] sm:$0xff]
  %v841 = vld [vmem:[%s1 + $0x438] sm:$0xff]
  %v842 = vld [vmem:[%s1 + $0x440] sm:$0xff]
  %v843 = vld [vmem:[%s1 + $0x448] sm:$0xff]
  %v844 = vld [vmem:[%s1 + $0x450] sm:$0xff]
  %v845 = vld [vmem:[%s1 + $0x458] sm:$0xff]
  %v846 = vld [vmem:[%s1 + $0x460] sm:$0xff]
  %v847 = vld [vmem:[%s1 + $0x468] sm:$0xff]
  %v848 = vld [vmem:[%s1 + $0x470] sm:$0xff]
  %v849 = vld [vmem:[%s1 + $0x478] sm:$0xff]
  %v850 = vld [vmem:[%s1 + $0x480] sm:$0xff]
  %v851 = vld [vmem:[%s1 + $0x488] sm:$0xff]
  %v852 = vld [vmem:[%s1 + $0x490] sm:$0xff]
  %v853 = vld [vmem:[%s1 + $0x498] sm:$0xff]
  %v854 = vld [vmem:[%s1 + $0x4a0] sm:$0xff]
  %v855 = vld [vmem:[%s1 + $0x4a8] sm:$0xff]
  %v856 = vld [vmem:[%s1 + $0x4b0] sm:$0xff]
  %v857 = vld [vmem:[%s1 + $0x4b8] sm:$0xff]
  %v858 = vld [vmem:[%s1 + $0x4c0] sm:$0xff]
  %v859 = vld [vmem:[%s1 + $0x4c8] sm:$0xff]
  %v860 = vld [vmem:[%s1 + $0x4d0] sm:$0xff]
  %v861 = vld [vmem:[%s1 + $0x4d8] sm:$0xff]
  %v862 = vld [vmem:[%s1 + $0x4e0] sm:$0xff]
  %v863 = vld [vmem:[%s1 + $0x4e8] sm:$0xff]
  %v864 = vld [vmem:[%s1 + $0x4f0] sm:$0xff]
  %v865 = vld [vmem:[%s1 + $0x4f8] sm:$0xff]
  %v866 = vld [vmem:[%s1 + $0x500] sm:$0xff]
  %v867 = vld [vmem:[%s1 + $0x508] sm:$0xff]
  %v868 = vld [vmem:[%s1 + $0x510] sm:$0xff]
  %v869 = vld [vmem:[%s1 + $0x518] sm:$0xff]
  %v870 = vld [vmem:[%s1 + $0x520] sm:$0xff]
  %v871 = vld [vmem:[%s1 + $0x528] sm:$0xff]
  %v872 = vld [vmem:[%s1 + $0x530] sm:$0xff]
  %v873 = vld [vmem:[%s1 + $0x538] sm:$0xff]
  %v874 = vld [vmem:[%s1 + $0x540] sm:$0xff]
  %v875 = vld [vmem:[%s1 + $0x548] sm:$0xff]
  %v876 = vld [vmem:[%s1 + $0x550] sm:$0xff]
  %v877 = vld [vmem:[%s1 + $0x558] sm:$0xff]
  %v878 = vld [vmem:[%s1 + $0x560] sm:$0xff]
  %v879 = vld [vmem:[%s1 + $0x568] sm:$0xff]
  %v880 = vld [vmem:[%s1 + $0x570] sm:$0xff]
  %v881 = vld [vmem:[%s1 + $0x578] sm:$0xff]
  %v882 = vld [vmem:[%s1 + $0x580] sm:$0xff]
  %v883 = vld [vmem:[%s1 + $0x588] sm:$0xff]
  %v884 = vld [vmem:[%s1 + $0x590] sm:$0xff]
  %v885 = vld [vmem:[%s1 + $0x598] sm:$0xff]
  %v886 = vld [vmem:[%s1 + $0x5a0] sm:$0xff]
  %v887 = vld [vmem:[%s1 + $0x5a8] sm:$0xff]
  %v888 = vld [vmem:[%s1 + $0x5b0] sm:$0xff]
  %v889 = vld [vmem:[%s1 + $0x5b8] sm:$0xff]
  %v890 = vld [vmem:[%s1 + $0x5c0] sm:$0xff]
  %v891 = vld [vmem:[%s1 + $0x5c8] sm:$0xff]
  %v892 = vld [vmem:[%s1 + $0x5d0] sm:$0xff]
  %v893 = vld [vmem:[%s1 + $0x5d8] sm:$0xff]
  %v894 = vld [vmem:[%s1 + $0x5e0] sm:$0xff]
  %v895 = vld [vmem:[%s1 + $0x5e8] sm:$0xff]
  %v896 = vld [vmem:[%s1 + $0x5f0] sm:$0xff]
  %v897 = vld [vmem:[%s1 + $0x5f8] sm:$0xff]
  %v898 = vld [vmem:[%s1 + $0x600] sm:$0xff]
  %v899 = vld [vmem:[%s1 + $0x608] sm:$0xff]
  %v900 = vld [vmem:[%s1 + $0x610] sm:$0xff]
  %v901 = vld [vmem:[%s1 + $0x618] sm:$0xff]
  %v1098 = vunpack.c.l.b16 %v706
  %v1099 = vunpack.c.h.b16 %v706
  %v1100 = vunpack.c.l.b16 %v707
  %v1101 = vunpack.c.h.b16 %v707
  %v1102 = vunpack.c.l.b16 %v708
  %v1103 = vunpack.c.h.b16 %v708
  %v1104 = vunpack.c.l.b16 %v709
  %v1105 = vunpack.c.h.b16 %v709
  %v1106 = vunpack.c.l.b16 %v710
  %v1107 = vunpack.c.h.b16 %v710
  %v1108 = vunpack.c.l.b16 %v711
  %v1109 = vunpack.c.h.b16 %v711
  %v1110 = vunpack.c.l.b16 %v712
  %v1111 = vunpack.c.h.b16 %v712
  %v1112 = vunpack.c.l.b16 %v713
  %v1113 = vunpack.c.h.b16 %v713
  %v1114 = vunpack.c.l.b16 %v714
  %v1115 = vunpack.c.h.b16 %v714
  %v1116 = vunpack.c.l.b16 %v715
  %v1117 = vunpack.c.h.b16 %v715
  %v1118 = vunpack.c.l.b16 %v716
  %v1119 = vunpack.c.h.b16 %v716
  %v1120 = vunpack.c.l.b16 %v717
  %v1121 = vunpack.c.h.b16 %v717
  %v1122 = vunpack.c.l.b16 %v718
  %v1123 = vunpack.c.h.b16 %v718
  %v1124 = vunpack.c.l.b16 %v719
  %v1125 = vunpack.c.h.b16 %v719
  %v1126 = vunpack.c.l.b16 %v720
  %v1127 = vunpack.c.h.b16 %v720
  %v1128 = vunpack.c.l.b16 %v721
  %v1129 = vunpack.c.h.b16 %v721
  %v1130 = vunpack.c.l.b16 %v722
  %v1131 = vunpack.c.h.b16 %v722
  %v1132 = vunpack.c.l.b16 %v723
  %v1133 = vunpack.c.h.b16 %v723
  %v1134 = vunpack.c.l.b16 %v724
  %v1135 = vunpack.c.h.b16 %v724
  %v1136 = vunpack.c.l.b16 %v725
  %v1137 = vunpack.c.h.b16 %v725
  %v1138 = vunpack.c.l.b16 %v726
  %v1139 = vunpack.c.h.b16 %v726
  %v1140 = vunpack.c.l.b16 %v727
  %v1141 = vunpack.c.h.b16 %v727
  %v1142 = vunpack.c.l.b16 %v728
  %v1143 = vunpack.c.h.b16 %v728
  %v1144 = vunpack.c.l.b16 %v729
  %v1145 = vunpack.c.h.b16 %v729
  %v1146 = vunpack.c.l.b16 %v730
  %v1147 = vunpack.c.h.b16 %v730
  %v1148 = vunpack.c.l.b16 %v731
  %v1149 = vunpack.c.h.b16 %v731
  %v1150 = vunpack.c.l.b16 %v732
  %v1151 = vunpack.c.h.b16 %v732
  %v1152 = vunpack.c.l.b16 %v733
  %v1153 = vunpack.c.h.b16 %v733
  %v1154 = vunpack.c.l.b16 %v734
  %v1155 = vunpack.c.h.b16 %v734
  %v1156 = vunpack.c.l.b16 %v735
  %v1157 = vunpack.c.h.b16 %v735
  %v1158 = vunpack.c.l.b16 %v736
  %v1159 = vunpack.c.h.b16 %v736
  %v1160 = vunpack.c.l.b16 %v737
  %v1161 = vunpack.c.h.b16 %v737
  %v1162 = vunpack.c.l.b16 %v738
  %v1163 = vunpack.c.h.b16 %v738
  %v1164 = vunpack.c.l.b16 %v739
  %v1165 = vunpack.c.h.b16 %v739
  %v1166 = vunpack.c.l.b16 %v740
  %v1167 = vunpack.c.h.b16 %v740
  %v1168 = vunpack.c.l.b16 %v741
  %v1169 = vunpack.c.h.b16 %v741
  %v1170 = vunpack.c.l.b16 %v742
  %v1171 = vunpack.c.h.b16 %v742
  %v1172 = vunpack.c.l.b16 %v743
  %v1173 = vunpack.c.h.b16 %v743
  %v1174 = vunpack.c.l.b16 %v744
  %v1175 = vunpack.c.h.b16 %v744
  %v1176 = vunpack.c.l.b16 %v745
  %v1177 = vunpack.c.h.b16 %v745
  %v1178 = vunpack.c.l.b16 %v746
  %v1179 = vunpack.c.h.b16 %v746
  %v1180 = vunpack.c.l.b16 %v747
  %v1181 = vunpack.c.h.b16 %v747
  %v1182 = vunpack.c.l.b16 %v748
  %v1183 = vunpack.c.h.b16 %v748
  %v1184 = vunpack.c.l.b16 %v749
  %v1185 = vunpack.c.h.b16 %v749
  %v1186 = vunpack.c.l.b16 %v750
  %v1187 = vunpack.c.h.b16 %v750
  %v1188 = vunpack.c.l.b16 %v751
  %v1189 = vunpack.c.h.b16 %v751
  %v1190 = vunpack.c.l.b16 %v752
  %v1191 = vunpack.c.h.b16 %v752
  %v1192 = vunpack.c.l.b16 %v753
  %v1193 = vunpack.c.h.b16 %v753
  %v1194 = vunpack.c.l.b16 %v754
  %v1195 = vunpack.c.h.b16 %v754
  %v1196 = vunpack.c.l.b16 %v755
  %v1197 = vunpack.c.h.b16 %v755
  %v1198 = vunpack.c.l.b16 %v756
  %v1199 = vunpack.c.h.b16 %v756
  %v1200 = vunpack.c.l.b16 %v757
  %v1201 = vunpack.c.h.b16 %v757
  %v1202 = vunpack.c.l.b16 %v758
  %v1203 = vunpack.c.h.b16 %v758
  %v1204 = vunpack.c.l.b16 %v759
  %v1205 = vunpack.c.h.b16 %v759
  %v1206 = vunpack.c.l.b16 %v760
  %v1207 = vunpack.c.h.b16 %v760
  %v1208 = vunpack.c.l.b16 %v761
  %v1209 = vunpack.c.h.b16 %v761
  %v1210 = vunpack.c.l.b16 %v762
  %v1211 = vunpack.c.h.b16 %v762
  %v1212 = vunpack.c.l.b16 %v763
  %v1213 = vunpack.c.h.b16 %v763
  %v1214 = vunpack.c.l.b16 %v764
  %v1215 = vunpack.c.h.b16 %v764
  %v1216 = vunpack.c.l.b16 %v765
  %v1217 = vunpack.c.h.b16 %v765
  %v1218 = vunpack.c.l.b16 %v766
  %v1219 = vunpack.c.h.b16 %v766
  %v1220 = vunpack.c.l.b16 %v767
  %v1221 = vunpack.c.h.b16 %v767
  %v1222 = vunpack.c.l.b16 %v768
  %v1223 = vunpack.c.h.b16 %v768
  %v1224 = vunpack.c.l.b16 %v769
  %v1225 = vunpack.c.h.b16 %v769
  %v1226 = vunpack.c.l.b16 %v770
  %v1227 = vunpack.c.h.b16 %v770
  %v1228 = vunpack.c.l.b16 %v771
  %v1229 = vunpack.c.h.b16 %v771
  %v1230 = vunpack.c.l.b16 %v772
  %v1231 = vunpack.c.h.b16 %v772
  %v1232 = vunpack.c.l.b16 %v773
  %v1233 = vunpack.c.h.b16 %v773
  %v1234 = vunpack.c.l.b16 %v774
  %v1235 = vunpack.c.h.b16 %v774
  %v1236 = vunpack.c.l.b16 %v775
  %v1237 = vunpack.c.h.b16 %v775
  %v1238 = vunpack.c.l.b16 %v776
  %v1239 = vunpack.c.h.b16 %v776
  %v1240 = vunpack.c.l.b16 %v777
  %v1241 = vunpack.c.h.b16 %v777
  %v1242 = vunpack.c.l.b16 %v778
  %v1243 = vunpack.c.h.b16 %v778
  %v1244 = vunpack.c.l.b16 %v779
  %v1245 = vunpack.c.h.b16 %v779
  %v1246 = vunpack.c.l.b16 %v780
  %v1247 = vunpack.c.h.b16 %v780
  %v1248 = vunpack.c.l.b16 %v781
  %v1249 = vunpack.c.h.b16 %v781
  %v1250 = vunpack.c.l.b16 %v782
  %v1251 = vunpack.c.h.b16 %v782
  %v1252 = vunpack.c.l.b16 %v783
  %v1253 = vunpack.c.h.b16 %v783
  %v1254 = vunpack.c.l.b16 %v784
  %v1255 = vunpack.c.h.b16 %v784
  %v1256 = vunpack.c.l.b16 %v785
  %v1257 = vunpack.c.h.b16 %v785
  %v1258 = vunpack.c.l.b16 %v786
  %v1259 = vunpack.c.h.b16 %v786
  %v1260 = vunpack.c.l.b16 %v787
  %v1261 = vunpack.c.h.b16 %v787
  %v1262 = vunpack.c.l.b16 %v788
  %v1263 = vunpack.c.h.b16 %v788
  %v1264 = vunpack.c.l.b16 %v789
  %v1265 = vunpack.c.h.b16 %v789
  %v1266 = vunpack.c.l.b16 %v790
  %v1267 = vunpack.c.h.b16 %v790
  %v1268 = vunpack.c.l.b16 %v791
  %v1269 = vunpack.c.h.b16 %v791
  %v1270 = vunpack.c.l.b16 %v792
  %v1271 = vunpack.c.h.b16 %v792
  %v1272 = vunpack.c.l.b16 %v793
  %v1273 = vunpack.c.h.b16 %v793
  %v1274 = vunpack.c.l.b16 %v794
  %v1275 = vunpack.c.h.b16 %v794
  %v1276 = vunpack.c.l.b16 %v795
  %v1277 = vunpack.c.h.b16 %v795
  %v1278 = vunpack.c.l.b16 %v796
  %v1279 = vunpack.c.h.b16 %v796
  %v1280 = vunpack.c.l.b16 %v797
  %v1281 = vunpack.c.h.b16 %v797
  %v1282 = vunpack.c.l.b16 %v798
  %v1283 = vunpack.c.h.b16 %v798
  %v1284 = vunpack.c.l.b16 %v799
  %v1285 = vunpack.c.h.b16 %v799
  %v1286 = vunpack.c.l.b16 %v800
  %v1287 = vunpack.c.h.b16 %v800
  %v1288 = vunpack.c.l.b16 %v801
  %v1289 = vunpack.c.h.b16 %v801
  %v1290 = vunpack.c.l.b16 %v802
  %v1291 = vunpack.c.h.b16 %v802
  %v1292 = vunpack.c.l.b16 %v803
  %v1293 = vunpack.c.h.b16 %v803
  %v1294 = vunpack.c.l.b16 %v804
  %v1295 = vunpack.c.h.b16 %v804
  %v1296 = vunpack.c.l.b16 %v805
  %v1297 = vunpack.c.h.b16 %v805
  %v1298 = vunpack.c.l.b16 %v806
  %v1299 = vunpack.c.h.b16 %v806
  %v1300 = vunpack.c.l.b16 %v807
  %v1301 = vunpack.c.h.b16 %v807
  %v1302 = vunpack.c.l.b16 %v808
  %v1303 = vunpack.c.h.b16 %v808
  %v1304 = vunpack.c.l.b16 %v809
  %v1305 = vunpack.c.h.b16 %v809
  %v1306 = vunpack.c.l.b16 %v810
  %v1307 = vunpack.c.h.b16 %v810
  %v1308 = vunpack.c.l.b16 %v811
  %v1309 = vunpack.c.h.b16 %v811
  %v1310 = vunpack.c.l.b16 %v812
  %v1311 = vunpack.c.h.b16 %v812
  %v1312 = vunpack.c.l.b16 %v813
  %v1313 = vunpack.c.h.b16 %v813
  %v1314 = vunpack.c.l.b16 %v814
  %v1315 = vunpack.c.h.b16 %v814
  %v1316 = vunpack.c.l.b16 %v815
  %v1317 = vunpack.c.h.b16 %v815
  %v1318 = vunpack.c.l.b16 %v816
  %v1319 = vunpack.c.h.b16 %v816
  %v1320 = vunpack.c.l.b16 %v817
  %v1321 = vunpack.c.h.b16 %v817
  %v1322 = vunpack.c.l.b16 %v818
  %v1323 = vunpack.c.h.b16 %v818
  %v1324 = vunpack.c.l.b16 %v819
  %v1325 = vunpack.c.h.b16 %v819
  %v1326 = vunpack.c.l.b16 %v820
  %v1327 = vunpack.c.h.b16 %v820
  %v1328 = vunpack.c.l.b16 %v821
  %v1329 = vunpack.c.h.b16 %v821
  %v1330 = vunpack.c.l.b16 %v822
  %v1331 = vunpack.c.h.b16 %v822
  %v1332 = vunpack.c.l.b16 %v823
  %v1333 = vunpack.c.h.b16 %v823
  %v1334 = vunpack.c.l.b16 %v824
  %v1335 = vunpack.c.h.b16 %v824
  %v1336 = vunpack.c.l.b16 %v825
  %v1337 = vunpack.c.h.b16 %v825
  %v1338 = vunpack.c.l.b16 %v826
  %v1339 = vunpack.c.h.b16 %v826
  %v1340 = vunpack.c.l.b16 %v827
  %v1341 = vunpack.c.h.b16 %v827
  %v1342 = vunpack.c.l.b16 %v828
  %v1343 = vunpack.c.h.b16 %v828
  %v1344 = vunpack.c.l.b16 %v829
  %v1345 = vunpack.c.h.b16 %v829
  %v1346 = vunpack.c.l.b16 %v830
  %v1347 = vunpack.c.h.b16 %v830
  %v1348 = vunpack.c.l.b16 %v831
  %v1349 = vunpack.c.h.b16 %v831
  %v1350 = vunpack.c.l.b16 %v832
  %v1351 = vunpack.c.h.b16 %v832
  %v1352 = vunpack.c.l.b16 %v833
  %v1353 = vunpack.c.h.b16 %v833
  %v1354 = vunpack.c.l.b16 %v834
  %v1355 = vunpack.c.h.b16 %v834
  %v1356 = vunpack.c.l.b16 %v835
  %v1357 = vunpack.c.h.b16 %v835
  %v1358 = vunpack.c.l.b16 %v836
  %v1359 = vunpack.c.h.b16 %v836
  %v1360 = vunpack.c.l.b16 %v837
  %v1361 = vunpack.c.h.b16 %v837
  %v1362 = vunpack.c.l.b16 %v838
  %v1363 = vunpack.c.h.b16 %v838
  %v1364 = vunpack.c.l.b16 %v839
  %v1365 = vunpack.c.h.b16 %v839
  %v1366 = vunpack.c.l.b16 %v840
  %v1367 = vunpack.c.h.b16 %v840
  %v1368 = vunpack.c.l.b16 %v841
  %v1369 = vunpack.c.h.b16 %v841
  %v1370 = vunpack.c.l.b16 %v842
  %v1371 = vunpack.c.h.b16 %v842
  %v1372 = vunpack.c.l.b16 %v843
  %v1373 = vunpack.c.h.b16 %v843
  %v1374 = vunpack.c.l.b16 %v844
  %v1375 = vunpack.c.h.b16 %v844
  %v1376 = vunpack.c.l.b16 %v845
  %v1377 = vunpack.c.h.b16 %v845
  %v1378 = vunpack.c.l.b16 %v846
  %v1379 = vunpack.c.h.b16 %v846
  %v1380 = vunpack.c.l.b16 %v847
  %v1381 = vunpack.c.h.b16 %v847
  %v1382 = vunpack.c.l.b16 %v848
  %v1383 = vunpack.c.h.b16 %v848
  %v1384 = vunpack.c.l.b16 %v849
  %v1385 = vunpack.c.h.b16 %v849
  %v1386 = vunpack.c.l.b16 %v850
  %v1387 = vunpack.c.h.b16 %v850
  %v1388 = vunpack.c.l.b16 %v851
  %v1389 = vunpack.c.h.b16 %v851
  %v1390 = vunpack.c.l.b16 %v852
  %v1391 = vunpack.c.h.b16 %v852
  %v1392 = vunpack.c.l.b16 %v853
  %v1393 = vunpack.c.h.b16 %v853
  %v1394 = vunpack.c.l.b16 %v854
  %v1395 = vunpack.c.h.b16 %v854
  %v1396 = vunpack.c.l.b16 %v855
  %v1397 = vunpack.c.h.b16 %v855
  %v1398 = vunpack.c.l.b16 %v856
  %v1399 = vunpack.c.h.b16 %v856
  %v1400 = vunpack.c.l.b16 %v857
  %v1401 = vunpack.c.h.b16 %v857
  %v1402 = vunpack.c.l.b16 %v858
  %v1403 = vunpack.c.h.b16 %v858
  %v1404 = vunpack.c.l.b16 %v859
  %v1405 = vunpack.c.h.b16 %v859
  %v1406 = vunpack.c.l.b16 %v860
  %v1407 = vunpack.c.h.b16 %v860
  %v1408 = vunpack.c.l.b16 %v861
  %v1409 = vunpack.c.h.b16 %v861
  %v1410 = vunpack.c.l.b16 %v862
  %v1411 = vunpack.c.h.b16 %v862
  %v1412 = vunpack.c.l.b16 %v863
  %v1413 = vunpack.c.h.b16 %v863
  %v1414 = vunpack.c.l.b16 %v864
  %v1415 = vunpack.c.h.b16 %v864
  %v1416 = vunpack.c.l.b16 %v865
  %v1417 = vunpack.c.h.b16 %v865
  %v1418 = vunpack.c.l.b16 %v866
  %v1419 = vunpack.c.h.b16 %v866
  %v1420 = vunpack.c.l.b16 %v867
  %v1421 = vunpack.c.h.b16 %v867
  %v1422 = vunpack.c.l.b16 %v868
  %v1423 = vunpack.c.h.b16 %v868
  %v1424 = vunpack.c.l.b16 %v869
  %v1425 = vunpack.c.h.b16 %v869
  %v1426 = vunpack.c.l.b16 %v870
  %v1427 = vunpack.c.h.b16 %v870
  %v1428 = vunpack.c.l.b16 %v871
  %v1429 = vunpack.c.h.b16 %v871
  %v1430 = vunpack.c.l.b16 %v872
  %v1431 = vunpack.c.h.b16 %v872
  %v1432 = vunpack.c.l.b16 %v873
  %v1433 = vunpack.c.h.b16 %v873
  %v1434 = vunpack.c.l.b16 %v874
  %v1435 = vunpack.c.h.b16 %v874
  %v1436 = vunpack.c.l.b16 %v875
  %v1437 = vunpack.c.h.b16 %v875
  %v1438 = vunpack.c.l.b16 %v876
  %v1439 = vunpack.c.h.b16 %v876
  %v1440 = vunpack.c.l.b16 %v877
  %v1441 = vunpack.c.h.b16 %v877
  %v1442 = vunpack.c.l.b16 %v878
  %v1443 = vunpack.c.h.b16 %v878
  %v1444 = vunpack.c.l.b16 %v879
  %v1445 = vunpack.c.h.b16 %v879
  %v1446 = vunpack.c.l.b16 %v880
  %v1447 = vunpack.c.h.b16 %v880
  %v1448 = vunpack.c.l.b16 %v881
  %v1449 = vunpack.c.h.b16 %v881
  %v1450 = vunpack.c.l.b16 %v882
  %v1451 = vunpack.c.h.b16 %v882
  %v1452 = vunpack.c.l.b16 %v883
  %v1453 = vunpack.c.h.b16 %v883
  %v1454 = vunpack.c.l.b16 %v884
  %v1455 = vunpack.c.h.b16 %v884
  %v1456 = vunpack.c.l.b16 %v885
  %v1457 = vunpack.c.h.b16 %v885
  %v1458 = vunpack.c.l.b16 %v886
  %v1459 = vunpack.c.h.b16 %v886
  %v1460 = vunpack.c.l.b16 %v887
  %v1461 = vunpack.c.h.b16 %v887
  %v1462 = vunpack.c.l.b16 %v888
  %v1463 = vunpack.c.h.b16 %v888
  %v1464 = vunpack.c.l.b16 %v889
  %v1465 = vunpack.c.h.b16 %v889
  %v1466 = vunpack.c.l.b16 %v890
  %v1467 = vunpack.c.h.b16 %v890
  %v1468 = vunpack.c.l.b16 %v891
  %v1469 = vunpack.c.h.b16 %v891
  %v1470 = vunpack.c.l.b16 %v892
  %v1471 = vunpack.c.h.b16 %v892
  %v1472 = vunpack.c.l.b16 %v893
  %v1473 = vunpack.c.h.b16 %v893
  %v1474 = vunpack.c.l.b16 %v894
  %v1475 = vunpack.c.h.b16 %v894
  %v1476 = vunpack.c.l.b16 %v895
  %v1477 = vunpack.c.h.b16 %v895
  %v1478 = vunpack.c.l.b16 %v896
  %v1479 = vunpack.c.h.b16 %v896
  %v1480 = vunpack.c.l.b16 %v897
  %v1481 = vunpack.c.h.b16 %v897
  %v1482 = vunpack.c.l.b16 %v898
  %v1483 = vunpack.c.h.b16 %v898
  %v1484 = vunpack.c.l.b16 %v899
  %v1485 = vunpack.c.h.b16 %v899
  %v1486 = vunpack.c.l.b16 %v900
  %v1487 = vunpack.c.h.b16 %v900
  %v1488 = vunpack.c.l.b16 %v901
  %v1489 = vunpack.c.h.b16 %v901
  %v1490 = vpack.c.b16 %v1102, %v1098
  %v1491 = vpack.c.b16 %v1103, %v1099
  %v1492 = vpack.c.b16 %v1104, %v1100
  %v1493 = vpack.c.b16 %v1105, %v1101
  %v1494 = vpack.c.b16 %v1110, %v1106
  %v1495 = vpack.c.b16 %v1111, %v1107
  %v1496 = vpack.c.b16 %v1112, %v1108
  %v1497 = vpack.c.b16 %v1113, %v1109
  %v1498 = vpack.c.b16 %v1118, %v1114
  %v1499 = vpack.c.b16 %v1119, %v1115
  %v1500 = vpack.c.b16 %v1120, %v1116
  %v1501 = vpack.c.b16 %v1121, %v1117
  %v1502 = vpack.c.b16 %v1126, %v1122
  %v1503 = vpack.c.b16 %v1127, %v1123
  %v1504 = vpack.c.b16 %v1128, %v1124
  %v1505 = vpack.c.b16 %v1129, %v1125
  %v1506 = vpack.c.b16 %v1134, %v1130
  %v1507 = vpack.c.b16 %v1135, %v1131
  %v1508 = vpack.c.b16 %v1136, %v1132
  %v1509 = vpack.c.b16 %v1137, %v1133
  %v1510 = vpack.c.b16 %v1142, %v1138
  %v1511 = vpack.c.b16 %v1143, %v1139
  %v1512 = vpack.c.b16 %v1144, %v1140
  %v1513 = vpack.c.b16 %v1145, %v1141
  %v1514 = vpack.c.b16 %v1150, %v1146
  %v1515 = vpack.c.b16 %v1151, %v1147
  %v1516 = vpack.c.b16 %v1152, %v1148
  %v1517 = vpack.c.b16 %v1153, %v1149
  %v1518 = vpack.c.b16 %v1158, %v1154
  %v1519 = vpack.c.b16 %v1159, %v1155
  %v1520 = vpack.c.b16 %v1160, %v1156
  %v1521 = vpack.c.b16 %v1161, %v1157
  %v1522 = vpack.c.b16 %v1166, %v1162
  %v1523 = vpack.c.b16 %v1167, %v1163
  %v1524 = vpack.c.b16 %v1168, %v1164
  %v1525 = vpack.c.b16 %v1169, %v1165
  %v1526 = vpack.c.b16 %v1174, %v1170
  %v1527 = vpack.c.b16 %v1175, %v1171
  %v1528 = vpack.c.b16 %v1176, %v1172
  %v1529 = vpack.c.b16 %v1177, %v1173
  %v1530 = vpack.c.b16 %v1182, %v1178
  %v1531 = vpack.c.b16 %v1183, %v1179
  %v1532 = vpack.c.b16 %v1184, %v1180
  %v1533 = vpack.c.b16 %v1185, %v1181
  %v1534 = vpack.c.b16 %v1190, %v1186
  %v1535 = vpack.c.b16 %v1191, %v1187
  %v1536 = vpack.c.b16 %v1192, %v1188
  %v1537 = vpack.c.b16 %v1193, %v1189
  %v1538 = vpack.c.b16 %v1198, %v1194
  %v1539 = vpack.c.b16 %v1199, %v1195
  %v1540 = vpack.c.b16 %v1200, %v1196
  %v1541 = vpack.c.b16 %v1201, %v1197
  %v1542 = vpack.c.b16 %v1206, %v1202
  %v1543 = vpack.c.b16 %v1207, %v1203
  %v1544 = vpack.c.b16 %v1208, %v1204
  %v1545 = vpack.c.b16 %v1209, %v1205
  %v1546 = vpack.c.b16 %v1214, %v1210
  %v1547 = vpack.c.b16 %v1215, %v1211
  %v1548 = vpack.c.b16 %v1216, %v1212
  %v1549 = vpack.c.b16 %v1217, %v1213
  %v1550 = vpack.c.b16 %v1222, %v1218
  %v1551 = vpack.c.b16 %v1223, %v1219
  %v1552 = vpack.c.b16 %v1224, %v1220
  %v1553 = vpack.c.b16 %v1225, %v1221
  %v1554 = vpack.c.b16 %v1230, %v1226
  %v1555 = vpack.c.b16 %v1231, %v1227
  %v1556 = vpack.c.b16 %v1232, %v1228
  %v1557 = vpack.c.b16 %v1233, %v1229
  %v1558 = vpack.c.b16 %v1238, %v1234
  %v1559 = vpack.c.b16 %v1239, %v1235
  %v1560 = vpack.c.b16 %v1240, %v1236
  %v1561 = vpack.c.b16 %v1241, %v1237
  %v1562 = vpack.c.b16 %v1246, %v1242
  %v1563 = vpack.c.b16 %v1247, %v1243
  %v1564 = vpack.c.b16 %v1248, %v1244
  %v1565 = vpack.c.b16 %v1249, %v1245
  %v1566 = vpack.c.b16 %v1254, %v1250
  %v1567 = vpack.c.b16 %v1255, %v1251
  %v1568 = vpack.c.b16 %v1256, %v1252
  %v1569 = vpack.c.b16 %v1257, %v1253
  %v1570 = vpack.c.b16 %v1262, %v1258
  %v1571 = vpack.c.b16 %v1263, %v1259
  %v1572 = vpack.c.b16 %v1264, %v1260
  %v1573 = vpack.c.b16 %v1265, %v1261
  %v1574 = vpack.c.b16 %v1270, %v1266
  %v1575 = vpack.c.b16 %v1271, %v1267
  %v1576 = vpack.c.b16 %v1272, %v1268
  %v1577 = vpack.c.b16 %v1273, %v1269
  %v1578 = vpack.c.b16 %v1278, %v1274
  %v1579 = vpack.c.b16 %v1279, %v1275
  %v1580 = vpack.c.b16 %v1280, %v1276
  %v1581 = vpack.c.b16 %v1281, %v1277
  %v1582 = vpack.c.b16 %v1286, %v1282
  %v1583 = vpack.c.b16 %v1287, %v1283
  %v1584 = vpack.c.b16 %v1288, %v1284
  %v1585 = vpack.c.b16 %v1289, %v1285
  %v1586 = vpack.c.b16 %v1294, %v1290
  %v1587 = vpack.c.b16 %v1295, %v1291
  %v1588 = vpack.c.b16 %v1296, %v1292
  %v1589 = vpack.c.b16 %v1297, %v1293
  %v1590 = vpack.c.b16 %v1302, %v1298
  %v1591 = vpack.c.b16 %v1303, %v1299
  %v1592 = vpack.c.b16 %v1304, %v1300
  %v1593 = vpack.c.b16 %v1305, %v1301
  %v1594 = vpack.c.b16 %v1310, %v1306
  %v1595 = vpack.c.b16 %v1311, %v1307
  %v1596 = vpack.c.b16 %v1312, %v1308
  %v1597 = vpack.c.b16 %v1313, %v1309
  %v1598 = vpack.c.b16 %v1318, %v1314
  %v1599 = vpack.c.b16 %v1319, %v1315
  %v1600 = vpack.c.b16 %v1320, %v1316
  %v1601 = vpack.c.b16 %v1321, %v1317
  %v1602 = vpack.c.b16 %v1326, %v1322
  %v1603 = vpack.c.b16 %v1327, %v1323
  %v1604 = vpack.c.b16 %v1328, %v1324
  %v1605 = vpack.c.b16 %v1329, %v1325
  %v1606 = vpack.c.b16 %v1334, %v1330
  %v1607 = vpack.c.b16 %v1335, %v1331
  %v1608 = vpack.c.b16 %v1336, %v1332
  %v1609 = vpack.c.b16 %v1337, %v1333
  %v1610 = vpack.c.b16 %v1342, %v1338
  %v1611 = vpack.c.b16 %v1343, %v1339
  %v1612 = vpack.c.b16 %v1344, %v1340
  %v1613 = vpack.c.b16 %v1345, %v1341
  %v1614 = vpack.c.b16 %v1350, %v1346
  %v1615 = vpack.c.b16 %v1351, %v1347
  %v1616 = vpack.c.b16 %v1352, %v1348
  %v1617 = vpack.c.b16 %v1353, %v1349
  %v1618 = vpack.c.b16 %v1358, %v1354
  %v1619 = vpack.c.b16 %v1359, %v1355
  %v1620 = vpack.c.b16 %v1360, %v1356
  %v1621 = vpack.c.b16 %v1361, %v1357
  %v1622 = vpack.c.b16 %v1366, %v1362
  %v1623 = vpack.c.b16 %v1367, %v1363
  %v1624 = vpack.c.b16 %v1368, %v1364
  %v1625 = vpack.c.b16 %v1369, %v1365
  %v1626 = vpack.c.b16 %v1374, %v1370
  %v1627 = vpack.c.b16 %v1375, %v1371
  %v1628 = vpack.c.b16 %v1376, %v1372
  %v1629 = vpack.c.b16 %v1377, %v1373
  %v1630 = vpack.c.b16 %v1382, %v1378
  %v1631 = vpack.c.b16 %v1383, %v1379
  %v1632 = vpack.c.b16 %v1384, %v1380
  %v1633 = vpack.c.b16 %v1385, %v1381
  %v1634 = vpack.c.b16 %v1390, %v1386
  %v1635 = vpack.c.b16 %v1391, %v1387
  %v1636 = vpack.c.b16 %v1392, %v1388
  %v1637 = vpack.c.b16 %v1393, %v1389
  %v1638 = vpack.c.b16 %v1398, %v1394
  %v1639 = vpack.c.b16 %v1399, %v1395
  %v1640 = vpack.c.b16 %v1400, %v1396
  %v1641 = vpack.c.b16 %v1401, %v1397
  %v1642 = vpack.c.b16 %v1406, %v1402
  %v1643 = vpack.c.b16 %v1407, %v1403
  %v1644 = vpack.c.b16 %v1408, %v1404
  %v1645 = vpack.c.b16 %v1409, %v1405
  %v1646 = vpack.c.b16 %v1414, %v1410
  %v1647 = vpack.c.b16 %v1415, %v1411
  %v1648 = vpack.c.b16 %v1416, %v1412
  %v1649 = vpack.c.b16 %v1417, %v1413
  %v1650 = vpack.c.b16 %v1422, %v1418
  %v1651 = vpack.c.b16 %v1423, %v1419
  %v1652 = vpack.c.b16 %v1424, %v1420
  %v1653 = vpack.c.b16 %v1425, %v1421
  %v1654 = vpack.c.b16 %v1430, %v1426
  %v1655 = vpack.c.b16 %v1431, %v1427
  %v1656 = vpack.c.b16 %v1432, %v1428
  %v1657 = vpack.c.b16 %v1433, %v1429
  %v1658 = vpack.c.b16 %v1438, %v1434
  %v1659 = vpack.c.b16 %v1439, %v1435
  %v1660 = vpack.c.b16 %v1440, %v1436
  %v1661 = vpack.c.b16 %v1441, %v1437
  %v1662 = vpack.c.b16 %v1446, %v1442
  %v1663 = vpack.c.b16 %v1447, %v1443
  %v1664 = vpack.c.b16 %v1448, %v1444
  %v1665 = vpack.c.b16 %v1449, %v1445
  %v1666 = vpack.c.b16 %v1454, %v1450
  %v1667 = vpack.c.b16 %v1455, %v1451
  %v1668 = vpack.c.b16 %v1456, %v1452
  %v1669 = vpack.c.b16 %v1457, %v1453
  %v1670 = vpack.c.b16 %v1462, %v1458
  %v1671 = vpack.c.b16 %v1463, %v1459
  %v1672 = vpack.c.b16 %v1464, %v1460
  %v1673 = vpack.c.b16 %v1465, %v1461
  %v1674 = vpack.c.b16 %v1470, %v1466
  %v1675 = vpack.c.b16 %v1471, %v1467
  %v1676 = vpack.c.b16 %v1472, %v1468
  %v1677 = vpack.c.b16 %v1473, %v1469
  %v1678 = vpack.c.b16 %v1478, %v1474
  %v1679 = vpack.c.b16 %v1479, %v1475
  %v1680 = vpack.c.b16 %v1480, %v1476
  %v1681 = vpack.c.b16 %v1481, %v1477
  %v1682 = vpack.c.b16 %v1486, %v1482
  %v1683 = vpack.c.b16 %v1487, %v1483
  %v1684 = vpack.c.b16 %v1488, %v1484
  %v1685 = vpack.c.b16 %v1489, %v1485
  %vm1882 = vcmask 130048
  %v1884 = vsel %vm1882, %v488, 0
  %v1887 = vsel %vm1882, %v495, 0
  %v1890 = vsel %vm1882, %v502, 0
  %v1893 = vsel %vm1882, %v509, 0
  %v1896 = vsel %vm1882, %v516, 0
  %v1899 = vsel %vm1882, %v523, 0
  %v1902 = vsel %vm1882, %v530, 0
  %v1905 = vsel %vm1882, %v537, 0
  %v1908 = vsel %vm1882, %v544, 0
  %v1911 = vsel %vm1882, %v551, 0
  %v1914 = vsel %vm1882, %v558, 0
  %v1917 = vsel %vm1882, %v565, 0
  %v1920 = vsel %vm1882, %v572, 0
  %v1923 = vsel %vm1882, %v579, 0
  %v1926 = vsel %vm1882, %v586, 0
  %v1929 = vsel %vm1882, %v593, 0
  %v1932 = vsel %vm1882, %v600, 0
  %v1935 = vsel %vm1882, %v607, 0
  %v1938 = vsel %vm1882, %v614, 0
  %v1941 = vsel %vm1882, %v621, 0
  %v1944 = vsel %vm1882, %v628, 0
  %v1947 = vsel %vm1882, %v635, 0
  %v1950 = vsel %vm1882, %v642, 0
  %v1953 = vsel %vm1882, %v649, 0
  %v1956 = vsel %vm1882, %v656, 0
  %v1959 = vsel %vm1882, %v663, 0
  %v1962 = vsel %vm1882, %v670, 0
  %v1965 = vsel %vm1882, %v677, 0
  %v1968 = vsel %vm1882, %v684, 0
  %v1971 = vsel %vm1882, %v691, 0
  %v1974 = vsel %vm1882, %v698, 0
  %v1977 = vsel %vm1882, %v705, 0
  %1979 = vmatprep.subr.bf16.mxu0 %v1519
  %1980 = vmatpush1.bf16.msra.mxu0 %v1518
  %1981 = vmatprep.subr.bf16.mxu0 %v1515
  %1982 = vmatpush1.bf16.msra.mxu0 %v1514
  %1983 = vmatprep.subr.bf16.mxu0 %v1511
  %1984 = vmatpush1.bf16.msra.mxu0 %v1510
  %1985 = vmatprep.subr.bf16.mxu0 %v1507
  %1986 = vmatpush1.bf16.msra.mxu0 %v1506
  %1987 = vmatprep.subr.bf16.mxu0 %v1503
  %1988 = vmatpush1.bf16.msra.mxu0 %v1502
  %1989 = vmatprep.subr.bf16.mxu0 %v1499
  %1990 = vmatpush1.bf16.msra.mxu0 %v1498
  %1991 = vmatprep.subr.bf16.mxu0 %v1495
  %1992 = vmatpush1.bf16.msra.mxu0 %v1494
  %1993 = vmatprep.subr.bf16.mxu0 %v1491
  %1994 = vmatpush1.bf16.msra.mxu0 %v1490
  %1995 = vmatprep.subr.bf16.mxu0 %v1551
  %1996 = vmatpush2.bf16.msra.mxu0 %v1550
  %1997 = vmatprep.subr.bf16.mxu0 %v1547
  %1998 = vmatpush2.bf16.msra.mxu0 %v1546
  %1999 = vmatprep.subr.bf16.mxu0 %v1543
  %2000 = vmatpush2.bf16.msra.mxu0 %v1542
  %2001 = vmatprep.subr.bf16.mxu0 %v1539
  %2002 = vmatpush2.bf16.msra.mxu0 %v1538
  %2003 = vmatprep.subr.bf16.mxu0 %v1535
  %2004 = vmatpush2.bf16.msra.mxu0 %v1534
  %2005 = vmatprep.subr.bf16.mxu0 %v1531
  %2006 = vmatpush2.bf16.msra.mxu0 %v1530
  %2007 = vmatprep.subr.bf16.mxu0 %v1527
  %2008 = vmatpush2.bf16.msra.mxu0 %v1526
  %2009 = vmatprep.subr.bf16.mxu0 %v1523
  %2010 = vmatpush2.bf16.msra.mxu0 %v1522
  %2011 = vmatprep.mubr.bf16.mxu0 %v483
  %2012 = vmatmul.mubr.bf16.gmra.mxu0 %v482
  %v2013 = vpop.f32.mrf.mxu0
  %v2014 = vadd.f32 0.0, %v2013
  %v2015 = vpop.f32.mrf.mxu0
  %v2016 = vadd.f32 0.0, %v2015
  %v2017 = vpop.f32.mrf.mxu0
  %v2018 = vadd.f32 0.0, %v2017
  %v2019 = vpop.f32.mrf.mxu0
  %v2020 = vadd.f32 0.0, %v2019
  %2021 = vmatprep.mubr.bf16.mxu0 %v490
  %2022 = vmatmul.mubr.bf16.gmra.mxu0 %v489
  %v2023 = vpop.f32.mrf.mxu0
  %v2024 = vadd.f32 0.0, %v2023
  %v2025 = vpop.f32.mrf.mxu0
  %v2026 = vadd.f32 0.0, %v2025
  %v2027 = vpop.f32.mrf.mxu0
  %v2028 = vadd.f32 0.0, %v2027
  %v2029 = vpop.f32.mrf.mxu0
  %v2030 = vadd.f32 0.0, %v2029
  %2031 = vmatprep.mubr.bf16.mxu0 %v497
  %2032 = vmatmul.mubr.bf16.gmra.mxu0 %v496
  %v2033 = vpop.f32.mrf.mxu0
  %v2034 = vadd.f32 0.0, %v2033
  %v2035 = vpop.f32.mrf.mxu0
  %v2036 = vadd.f32 0.0, %v2035
  %v2037 = vpop.f32.mrf.mxu0
  %v2038 = vadd.f32 0.0, %v2037
  %v2039 = vpop.f32.mrf.mxu0
  %v2040 = vadd.f32 0.0, %v2039
  %2041 = vmatprep.mubr.bf16.mxu0 %v504
  %2042 = vmatmul.mubr.bf16.gmra.mxu0 %v503
  %v2043 = vpop.f32.mrf.mxu0
  %v2044 = vadd.f32 0.0, %v2043
  %v2045 = vpop.f32.mrf.mxu0
  %v2046 = vadd.f32 0.0, %v2045
  %v2047 = vpop.f32.mrf.mxu0
  %v2048 = vadd.f32 0.0, %v2047
  %v2049 = vpop.f32.mrf.mxu0
  %v2050 = vadd.f32 0.0, %v2049
  %2051 = vmatprep.mubr.bf16.mxu0 %v511
  %2052 = vmatmul.mubr.bf16.gmra.mxu0 %v510
  %v2053 = vpop.f32.mrf.mxu0
  %v2054 = vadd.f32 0.0, %v2053
  %v2055 = vpop.f32.mrf.mxu0
  %v2056 = vadd.f32 0.0, %v2055
  %v2057 = vpop.f32.mrf.mxu0
  %v2058 = vadd.f32 0.0, %v2057
  %v2059 = vpop.f32.mrf.mxu0
  %v2060 = vadd.f32 0.0, %v2059
  %2061 = vmatprep.mubr.bf16.mxu0 %v518
  %2062 = vmatmul.mubr.bf16.gmra.mxu0 %v517
  %v2063 = vpop.f32.mrf.mxu0
  %v2064 = vadd.f32 0.0, %v2063
  %v2065 = vpop.f32.mrf.mxu0
  %v2066 = vadd.f32 0.0, %v2065
  %v2067 = vpop.f32.mrf.mxu0
  %v2068 = vadd.f32 0.0, %v2067
  %v2069 = vpop.f32.mrf.mxu0
  %v2070 = vadd.f32 0.0, %v2069
  %2071 = vmatprep.mubr.bf16.mxu0 %v525
  %2072 = vmatmul.mubr.bf16.gmra.mxu0 %v524
  %v2073 = vpop.f32.mrf.mxu0
  %v2074 = vadd.f32 0.0, %v2073
  %v2075 = vpop.f32.mrf.mxu0
  %v2076 = vadd.f32 0.0, %v2075
  %v2077 = vpop.f32.mrf.mxu0
  %v2078 = vadd.f32 0.0, %v2077
  %v2079 = vpop.f32.mrf.mxu0
  %v2080 = vadd.f32 0.0, %v2079
  %2081 = vmatprep.mubr.bf16.mxu0 %v532
  %2082 = vmatmul.mubr.bf16.gmra.mxu0 %v531
  %v2083 = vpop.f32.mrf.mxu0
  %v2084 = vadd.f32 0.0, %v2083
  %v2085 = vpop.f32.mrf.mxu0
  %v2086 = vadd.f32 0.0, %v2085
  %v2087 = vpop.f32.mrf.mxu0
  %v2088 = vadd.f32 0.0, %v2087
  %v2089 = vpop.f32.mrf.mxu0
  %v2090 = vadd.f32 0.0, %v2089
  %2091 = vmatprep.mubr.bf16.mxu0 %v539
  %2092 = vmatmul.mubr.bf16.gmra.mxu0 %v538
  %v2093 = vpop.f32.mrf.mxu0
  %v2094 = vadd.f32 0.0, %v2093
  %v2095 = vpop.f32.mrf.mxu0
  %v2096 = vadd.f32 0.0, %v2095
  %v2097 = vpop.f32.mrf.mxu0
  %v2098 = vadd.f32 0.0, %v2097
  %v2099 = vpop.f32.mrf.mxu0
  %v2100 = vadd.f32 0.0, %v2099
  %2101 = vmatprep.mubr.bf16.mxu0 %v546
  %2102 = vmatmul.mubr.bf16.gmra.mxu0 %v545
  %v2103 = vpop.f32.mrf.mxu0
  %v2104 = vadd.f32 0.0, %v2103
  %v2105 = vpop.f32.mrf.mxu0
  %v2106 = vadd.f32 0.0, %v2105
  %v2107 = vpop.f32.mrf.mxu0
  %v2108 = vadd.f32 0.0, %v2107
  %v2109 = vpop.f32.mrf.mxu0
  %v2110 = vadd.f32 0.0, %v2109
  %2111 = vmatprep.mubr.bf16.mxu0 %v553
  %2112 = vmatmul.mubr.bf16.gmra.mxu0 %v552
  %v2113 = vpop.f32.mrf.mxu0
  %v2114 = vadd.f32 0.0, %v2113
  %v2115 = vpop.f32.mrf.mxu0
  %v2116 = vadd.f32 0.0, %v2115
  %v2117 = vpop.f32.mrf.mxu0
  %v2118 = vadd.f32 0.0, %v2117
  %v2119 = vpop.f32.mrf.mxu0
  %v2120 = vadd.f32 0.0, %v2119
  %2121 = vmatprep.mubr.bf16.mxu0 %v560
  %2122 = vmatmul.mubr.bf16.gmra.mxu0 %v559
  %v2123 = vpop.f32.mrf.mxu0
  %v2124 = vadd.f32 0.0, %v2123
  %v2125 = vpop.f32.mrf.mxu0
  %v2126 = vadd.f32 0.0, %v2125
  %v2127 = vpop.f32.mrf.mxu0
  %v2128 = vadd.f32 0.0, %v2127
  %v2129 = vpop.f32.mrf.mxu0
  %v2130 = vadd.f32 0.0, %v2129
  %2131 = vmatprep.mubr.bf16.mxu0 %v567
  %2132 = vmatmul.mubr.bf16.gmra.mxu0 %v566
  %v2133 = vpop.f32.mrf.mxu0
  %v2134 = vadd.f32 0.0, %v2133
  %v2135 = vpop.f32.mrf.mxu0
  %v2136 = vadd.f32 0.0, %v2135
  %v2137 = vpop.f32.mrf.mxu0
  %v2138 = vadd.f32 0.0, %v2137
  %v2139 = vpop.f32.mrf.mxu0
  %v2140 = vadd.f32 0.0, %v2139
  %2141 = vmatprep.mubr.bf16.mxu0 %v574
  %2142 = vmatmul.mubr.bf16.gmra.mxu0 %v573
  %v2143 = vpop.f32.mrf.mxu0
  %v2144 = vadd.f32 0.0, %v2143
  %v2145 = vpop.f32.mrf.mxu0
  %v2146 = vadd.f32 0.0, %v2145
  %v2147 = vpop.f32.mrf.mxu0
  %v2148 = vadd.f32 0.0, %v2147
  %v2149 = vpop.f32.mrf.mxu0
  %v2150 = vadd.f32 0.0, %v2149
  %2151 = vmatprep.mubr.bf16.mxu0 %v581
  %2152 = vmatmul.mubr.bf16.gmra.mxu0 %v580
  %v2153 = vpop.f32.mrf.mxu0
  %v2154 = vadd.f32 0.0, %v2153
  %v2155 = vpop.f32.mrf.mxu0
  %v2156 = vadd.f32 0.0, %v2155
  %v2157 = vpop.f32.mrf.mxu0
  %v2158 = vadd.f32 0.0, %v2157
  %v2159 = vpop.f32.mrf.mxu0
  %v2160 = vadd.f32 0.0, %v2159
  %2161 = vmatprep.mubr.bf16.mxu0 %v588
  %2162 = vmatmul.mubr.bf16.gmra.mxu0 %v587
  %v2163 = vpop.f32.mrf.mxu0
  %v2164 = vadd.f32 0.0, %v2163
  %v2165 = vpop.f32.mrf.mxu0
  %v2166 = vadd.f32 0.0, %v2165
  %v2167 = vpop.f32.mrf.mxu0
  %v2168 = vadd.f32 0.0, %v2167
  %v2169 = vpop.f32.mrf.mxu0
  %v2170 = vadd.f32 0.0, %v2169
  %2171 = vmatprep.mubr.bf16.mxu0 %v595
  %2172 = vmatmul.mubr.bf16.gmra.mxu0 %v594
  %v2173 = vpop.f32.mrf.mxu0
  %v2174 = vadd.f32 0.0, %v2173
  %v2175 = vpop.f32.mrf.mxu0
  %v2176 = vadd.f32 0.0, %v2175
  %v2177 = vpop.f32.mrf.mxu0
  %v2178 = vadd.f32 0.0, %v2177
  %v2179 = vpop.f32.mrf.mxu0
  %v2180 = vadd.f32 0.0, %v2179
  %2181 = vmatprep.mubr.bf16.mxu0 %v602
  %2182 = vmatmul.mubr.bf16.gmra.mxu0 %v601
  %v2183 = vpop.f32.mrf.mxu0
  %v2184 = vadd.f32 0.0, %v2183
  %v2185 = vpop.f32.mrf.mxu0
  %v2186 = vadd.f32 0.0, %v2185
  %v2187 = vpop.f32.mrf.mxu0
  %v2188 = vadd.f32 0.0, %v2187
  %v2189 = vpop.f32.mrf.mxu0
  %v2190 = vadd.f32 0.0, %v2189
  %2191 = vmatprep.mubr.bf16.mxu0 %v609
  %2192 = vmatmul.mubr.bf16.gmra.mxu0 %v608
  %v2193 = vpop.f32.mrf.mxu0
  %v2194 = vadd.f32 0.0, %v2193
  %v2195 = vpop.f32.mrf.mxu0
  %v2196 = vadd.f32 0.0, %v2195
  %v2197 = vpop.f32.mrf.mxu0
  %v2198 = vadd.f32 0.0, %v2197
  %v2199 = vpop.f32.mrf.mxu0
  %v2200 = vadd.f32 0.0, %v2199
  %2201 = vmatprep.mubr.bf16.mxu0 %v616
  %2202 = vmatmul.mubr.bf16.gmra.mxu0 %v615
  %v2203 = vpop.f32.mrf.mxu0
  %v2204 = vadd.f32 0.0, %v2203
  %v2205 = vpop.f32.mrf.mxu0
  %v2206 = vadd.f32 0.0, %v2205
  %v2207 = vpop.f32.mrf.mxu0
  %v2208 = vadd.f32 0.0, %v2207
  %v2209 = vpop.f32.mrf.mxu0
  %v2210 = vadd.f32 0.0, %v2209
  %2211 = vmatprep.mubr.bf16.mxu0 %v623
  %2212 = vmatmul.mubr.bf16.gmra.mxu0 %v622
  %v2213 = vpop.f32.mrf.mxu0
  %v2214 = vadd.f32 0.0, %v2213
  %v2215 = vpop.f32.mrf.mxu0
  %v2216 = vadd.f32 0.0, %v2215
  %v2217 = vpop.f32.mrf.mxu0
  %v2218 = vadd.f32 0.0, %v2217
  %v2219 = vpop.f32.mrf.mxu0
  %v2220 = vadd.f32 0.0, %v2219
  %2221 = vmatprep.mubr.bf16.mxu0 %v630
  %2222 = vmatmul.mubr.bf16.gmra.mxu0 %v629
  %v2223 = vpop.f32.mrf.mxu0
  %v2224 = vadd.f32 0.0, %v2223
  %v2225 = vpop.f32.mrf.mxu0
  %v2226 = vadd.f32 0.0, %v2225
  %v2227 = vpop.f32.mrf.mxu0
  %v2228 = vadd.f32 0.0, %v2227
  %v2229 = vpop.f32.mrf.mxu0
  %v2230 = vadd.f32 0.0, %v2229
  %2231 = vmatprep.mubr.bf16.mxu0 %v637
  %2232 = vmatmul.mubr.bf16.gmra.mxu0 %v636
  %v2233 = vpop.f32.mrf.mxu0
  %v2234 = vadd.f32 0.0, %v2233
  %v2235 = vpop.f32.mrf.mxu0
  %v2236 = vadd.f32 0.0, %v2235
  %v2237 = vpop.f32.mrf.mxu0
  %v2238 = vadd.f32 0.0, %v2237
  %v2239 = vpop.f32.mrf.mxu0
  %v2240 = vadd.f32 0.0, %v2239
  %2241 = vmatprep.mubr.bf16.mxu0 %v644
  %2242 = vmatmul.mubr.bf16.gmra.mxu0 %v643
  %v2243 = vpop.f32.mrf.mxu0
  %v2244 = vadd.f32 0.0, %v2243
  %v2245 = vpop.f32.mrf.mxu0
  %v2246 = vadd.f32 0.0, %v2245
  %v2247 = vpop.f32.mrf.mxu0
  %v2248 = vadd.f32 0.0, %v2247
  %v2249 = vpop.f32.mrf.mxu0
  %v2250 = vadd.f32 0.0, %v2249
  %2251 = vmatprep.mubr.bf16.mxu0 %v651
  %2252 = vmatmul.mubr.bf16.gmra.mxu0 %v650
  %v2253 = vpop.f32.mrf.mxu0
  %v2254 = vadd.f32 0.0, %v2253
  %v2255 = vpop.f32.mrf.mxu0
  %v2256 = vadd.f32 0.0, %v2255
  %v2257 = vpop.f32.mrf.mxu0
  %v2258 = vadd.f32 0.0, %v2257
  %v2259 = vpop.f32.mrf.mxu0
  %v2260 = vadd.f32 0.0, %v2259
  %2261 = vmatprep.mubr.bf16.mxu0 %v658
  %2262 = vmatmul.mubr.bf16.gmra.mxu0 %v657
  %v2263 = vpop.f32.mrf.mxu0
  %v2264 = vadd.f32 0.0, %v2263
  %v2265 = vpop.f32.mrf.mxu0
  %v2266 = vadd.f32 0.0, %v2265
  %v2267 = vpop.f32.mrf.mxu0
  %v2268 = vadd.f32 0.0, %v2267
  %v2269 = vpop.f32.mrf.mxu0
  %v2270 = vadd.f32 0.0, %v2269
  %2271 = vmatprep.mubr.bf16.mxu0 %v665
  %2272 = vmatmul.mubr.bf16.gmra.mxu0 %v664
  %v2273 = vpop.f32.mrf.mxu0
  %v2274 = vadd.f32 0.0, %v2273
  %v2275 = vpop.f32.mrf.mxu0
  %v2276 = vadd.f32 0.0, %v2275
  %v2277 = vpop.f32.mrf.mxu0
  %v2278 = vadd.f32 0.0, %v2277
  %v2279 = vpop.f32.mrf.mxu0
  %v2280 = vadd.f32 0.0, %v2279
  %2281 = vmatprep.mubr.bf16.mxu0 %v672
  %2282 = vmatmul.mubr.bf16.gmra.mxu0 %v671
  %v2283 = vpop.f32.mrf.mxu0
  %v2284 = vadd.f32 0.0, %v2283
  %v2285 = vpop.f32.mrf.mxu0
  %v2286 = vadd.f32 0.0, %v2285
  %v2287 = vpop.f32.mrf.mxu0
  %v2288 = vadd.f32 0.0, %v2287
  %v2289 = vpop.f32.mrf.mxu0
  %v2290 = vadd.f32 0.0, %v2289
  %2291 = vmatprep.mubr.bf16.mxu0 %v679
  %2292 = vmatmul.mubr.bf16.gmra.mxu0 %v678
  %v2293 = vpop.f32.mrf.mxu0
  %v2294 = vadd.f32 0.0, %v2293
  %v2295 = vpop.f32.mrf.mxu0
  %v2296 = vadd.f32 0.0, %v2295
  %v2297 = vpop.f32.mrf.mxu0
  %v2298 = vadd.f32 0.0, %v2297
  %v2299 = vpop.f32.mrf.mxu0
  %v2300 = vadd.f32 0.0, %v2299
  %2301 = vmatprep.mubr.bf16.mxu0 %v686
  %2302 = vmatmul.mubr.bf16.gmra.mxu0 %v685
  %v2303 = vpop.f32.mrf.mxu0
  %v2304 = vadd.f32 0.0, %v2303
  %v2305 = vpop.f32.mrf.mxu0
  %v2306 = vadd.f32 0.0, %v2305
  %v2307 = vpop.f32.mrf.mxu0
  %v2308 = vadd.f32 0.0, %v2307
  %v2309 = vpop.f32.mrf.mxu0
  %v2310 = vadd.f32 0.0, %v2309
  %2311 = vmatprep.mubr.bf16.mxu0 %v693
  %2312 = vmatmul.mubr.bf16.gmra.mxu0 %v692
  %v2313 = vpop.f32.mrf.mxu0
  %v2314 = vadd.f32 0.0, %v2313
  %v2315 = vpop.f32.mrf.mxu0
  %v2316 = vadd.f32 0.0, %v2315
  %v2317 = vpop.f32.mrf.mxu0
  %v2318 = vadd.f32 0.0, %v2317
  %v2319 = vpop.f32.mrf.mxu0
  %v2320 = vadd.f32 0.0, %v2319
  %2321 = vmatprep.mubr.bf16.mxu0 %v700
  %2322 = vmatmul.mubr.bf16.gmra.mxu0 %v699
  %v2323 = vpop.f32.mrf.mxu0
  %v2324 = vadd.f32 0.0, %v2323
  %v2325 = vpop.f32.mrf.mxu0
  %v2326 = vadd.f32 0.0, %v2325
  %v2327 = vpop.f32.mrf.mxu0
  %v2328 = vadd.f32 0.0, %v2327
  %v2329 = vpop.f32.mrf.mxu0
  %v2330 = vadd.f32 0.0, %v2329
  %2331 = vdwg.mxu0
  %2332 = vmatprep.subr.bf16.mxu0 %v1583
  %2333 = vmatpush1.bf16.msra.mxu0 %v1582
  %2334 = vmatprep.subr.bf16.mxu0 %v1579
  %2335 = vmatpush1.bf16.msra.mxu0 %v1578
  %2336 = vmatprep.subr.bf16.mxu0 %v1575
  %2337 = vmatpush1.bf16.msra.mxu0 %v1574
  %2338 = vmatprep.subr.bf16.mxu0 %v1571
  %2339 = vmatpush1.bf16.msra.mxu0 %v1570
  %2340 = vmatprep.subr.bf16.mxu0 %v1567
  %2341 = vmatpush1.bf16.msra.mxu0 %v1566
  %2342 = vmatprep.subr.bf16.mxu0 %v1563
  %2343 = vmatpush1.bf16.msra.mxu0 %v1562
  %2344 = vmatprep.subr.bf16.mxu0 %v1559
  %2345 = vmatpush1.bf16.msra.mxu0 %v1558
  %2346 = vmatprep.subr.bf16.mxu0 %v1555
  %2347 = vmatpush1.bf16.msra.mxu0 %v1554
  %2348 = vmatprep.subr.bf16.mxu0 %v1615
  %2349 = vmatpush2.bf16.msra.mxu0 %v1614
  %2350 = vmatprep.subr.bf16.mxu0 %v1611
  %2351 = vmatpush2.bf16.msra.mxu0 %v1610
  %2352 = vmatprep.subr.bf16.mxu0 %v1607
  %2353 = vmatpush2.bf16.msra.mxu0 %v1606
  %2354 = vmatprep.subr.bf16.mxu0 %v1603
  %2355 = vmatpush2.bf16.msra.mxu0 %v1602
  %2356 = vmatprep.subr.bf16.mxu0 %v1599
  %2357 = vmatpush2.bf16.msra.mxu0 %v1598
  %2358 = vmatprep.subr.bf16.mxu0 %v1595
  %2359 = vmatpush2.bf16.msra.mxu0 %v1594
  %2360 = vmatprep.subr.bf16.mxu0 %v1591
  %2361 = vmatpush2.bf16.msra.mxu0 %v1590
  %2362 = vmatprep.subr.bf16.mxu0 %v1587
  %2363 = vmatpush2.bf16.msra.mxu0 %v1586
  %2364 = vmatprep.mubr.bf16.mxu0 %v485
  %2365 = vmatmul.mubr.bf16.gmra.mxu0 %v484
  %v2366 = vpop.f32.mrf.mxu0
  %v2367 = vadd.f32 %v2014, %v2366
  %v2368 = vpop.f32.mrf.mxu0
  %v2369 = vadd.f32 %v2016, %v2368
  %v2370 = vpop.f32.mrf.mxu0
  %v2371 = vadd.f32 %v2018, %v2370
  %v2372 = vpop.f32.mrf.mxu0
  %v2373 = vadd.f32 %v2020, %v2372
  %2374 = vmatprep.mubr.bf16.mxu0 %v492
  %2375 = vmatmul.mubr.bf16.gmra.mxu0 %v491
  %v2376 = vpop.f32.mrf.mxu0
  %v2377 = vadd.f32 %v2024, %v2376
  %v2378 = vpop.f32.mrf.mxu0
  %v2379 = vadd.f32 %v2026, %v2378
  %v2380 = vpop.f32.mrf.mxu0
  %v2381 = vadd.f32 %v2028, %v2380
  %v2382 = vpop.f32.mrf.mxu0
  %v2383 = vadd.f32 %v2030, %v2382
  %2384 = vmatprep.mubr.bf16.mxu0 %v499
  %2385 = vmatmul.mubr.bf16.gmra.mxu0 %v498
  %v2386 = vpop.f32.mrf.mxu0
  %v2387 = vadd.f32 %v2034, %v2386
  %v2388 = vpop.f32.mrf.mxu0
  %v2389 = vadd.f32 %v2036, %v2388
  %v2390 = vpop.f32.mrf.mxu0
  %v2391 = vadd.f32 %v2038, %v2390
  %v2392 = vpop.f32.mrf.mxu0
  %v2393 = vadd.f32 %v2040, %v2392
  %2394 = vmatprep.mubr.bf16.mxu0 %v506
  %2395 = vmatmul.mubr.bf16.gmra.mxu0 %v505
  %v2396 = vpop.f32.mrf.mxu0
  %v2397 = vadd.f32 %v2044, %v2396
  %v2398 = vpop.f32.mrf.mxu0
  %v2399 = vadd.f32 %v2046, %v2398
  %v2400 = vpop.f32.mrf.mxu0
  %v2401 = vadd.f32 %v2048, %v2400
  %v2402 = vpop.f32.mrf.mxu0
  %v2403 = vadd.f32 %v2050, %v2402
  %2404 = vmatprep.mubr.bf16.mxu0 %v513
  %2405 = vmatmul.mubr.bf16.gmra.mxu0 %v512
  %v2406 = vpop.f32.mrf.mxu0
  %v2407 = vadd.f32 %v2054, %v2406
  %v2408 = vpop.f32.mrf.mxu0
  %v2409 = vadd.f32 %v2056, %v2408
  %v2410 = vpop.f32.mrf.mxu0
  %v2411 = vadd.f32 %v2058, %v2410
  %v2412 = vpop.f32.mrf.mxu0
  %v2413 = vadd.f32 %v2060, %v2412
  %2414 = vmatprep.mubr.bf16.mxu0 %v520
  %2415 = vmatmul.mubr.bf16.gmra.mxu0 %v519
  %v2416 = vpop.f32.mrf.mxu0
  %v2417 = vadd.f32 %v2064, %v2416
  %v2418 = vpop.f32.mrf.mxu0
  %v2419 = vadd.f32 %v2066, %v2418
  %v2420 = vpop.f32.mrf.mxu0
  %v2421 = vadd.f32 %v2068, %v2420
  %v2422 = vpop.f32.mrf.mxu0
  %v2423 = vadd.f32 %v2070, %v2422
  %2424 = vmatprep.mubr.bf16.mxu0 %v527
  %2425 = vmatmul.mubr.bf16.gmra.mxu0 %v526
  %v2426 = vpop.f32.mrf.mxu0
  %v2427 = vadd.f32 %v2074, %v2426
  %v2428 = vpop.f32.mrf.mxu0
  %v2429 = vadd.f32 %v2076, %v2428
  %v2430 = vpop.f32.mrf.mxu0
  %v2431 = vadd.f32 %v2078, %v2430
  %v2432 = vpop.f32.mrf.mxu0
  %v2433 = vadd.f32 %v2080, %v2432
  %2434 = vmatprep.mubr.bf16.mxu0 %v534
  %2435 = vmatmul.mubr.bf16.gmra.mxu0 %v533
  %v2436 = vpop.f32.mrf.mxu0
  %v2437 = vadd.f32 %v2084, %v2436
  %v2438 = vpop.f32.mrf.mxu0
  %v2439 = vadd.f32 %v2086, %v2438
  %v2440 = vpop.f32.mrf.mxu0
  %v2441 = vadd.f32 %v2088, %v2440
  %v2442 = vpop.f32.mrf.mxu0
  %v2443 = vadd.f32 %v2090, %v2442
  %2444 = vmatprep.mubr.bf16.mxu0 %v541
  %2445 = vmatmul.mubr.bf16.gmra.mxu0 %v540
  %v2446 = vpop.f32.mrf.mxu0
  %v2447 = vadd.f32 %v2094, %v2446
  %v2448 = vpop.f32.mrf.mxu0
  %v2449 = vadd.f32 %v2096, %v2448
  %v2450 = vpop.f32.mrf.mxu0
  %v2451 = vadd.f32 %v2098, %v2450
  %v2452 = vpop.f32.mrf.mxu0
  %v2453 = vadd.f32 %v2100, %v2452
  %2454 = vmatprep.mubr.bf16.mxu0 %v548
  %2455 = vmatmul.mubr.bf16.gmra.mxu0 %v547
  %v2456 = vpop.f32.mrf.mxu0
  %v2457 = vadd.f32 %v2104, %v2456
  %v2458 = vpop.f32.mrf.mxu0
  %v2459 = vadd.f32 %v2106, %v2458
  %v2460 = vpop.f32.mrf.mxu0
  %v2461 = vadd.f32 %v2108, %v2460
  %v2462 = vpop.f32.mrf.mxu0
  %v2463 = vadd.f32 %v2110, %v2462
  %2464 = vmatprep.mubr.bf16.mxu0 %v555
  %2465 = vmatmul.mubr.bf16.gmra.mxu0 %v554
  %v2466 = vpop.f32.mrf.mxu0
  %v2467 = vadd.f32 %v2114, %v2466
  %v2468 = vpop.f32.mrf.mxu0
  %v2469 = vadd.f32 %v2116, %v2468
  %v2470 = vpop.f32.mrf.mxu0
  %v2471 = vadd.f32 %v2118, %v2470
  %v2472 = vpop.f32.mrf.mxu0
  %v2473 = vadd.f32 %v2120, %v2472
  %2474 = vmatprep.mubr.bf16.mxu0 %v562
  %2475 = vmatmul.mubr.bf16.gmra.mxu0 %v561
  %v2476 = vpop.f32.mrf.mxu0
  %v2477 = vadd.f32 %v2124, %v2476
  %v2478 = vpop.f32.mrf.mxu0
  %v2479 = vadd.f32 %v2126, %v2478
  %v2480 = vpop.f32.mrf.mxu0
  %v2481 = vadd.f32 %v2128, %v2480
  %v2482 = vpop.f32.mrf.mxu0
  %v2483 = vadd.f32 %v2130, %v2482
  %2484 = vmatprep.mubr.bf16.mxu0 %v569
  %2485 = vmatmul.mubr.bf16.gmra.mxu0 %v568
  %v2486 = vpop.f32.mrf.mxu0
  %v2487 = vadd.f32 %v2134, %v2486
  %v2488 = vpop.f32.mrf.mxu0
  %v2489 = vadd.f32 %v2136, %v2488
  %v2490 = vpop.f32.mrf.mxu0
  %v2491 = vadd.f32 %v2138, %v2490
  %v2492 = vpop.f32.mrf.mxu0
  %v2493 = vadd.f32 %v2140, %v2492
  %2494 = vmatprep.mubr.bf16.mxu0 %v576
  %2495 = vmatmul.mubr.bf16.gmra.mxu0 %v575
  %v2496 = vpop.f32.mrf.mxu0
  %v2497 = vadd.f32 %v2144, %v2496
  %v2498 = vpop.f32.mrf.mxu0
  %v2499 = vadd.f32 %v2146, %v2498
  %v2500 = vpop.f32.mrf.mxu0
  %v2501 = vadd.f32 %v2148, %v2500
  %v2502 = vpop.f32.mrf.mxu0
  %v2503 = vadd.f32 %v2150, %v2502
  %2504 = vmatprep.mubr.bf16.mxu0 %v583
  %2505 = vmatmul.mubr.bf16.gmra.mxu0 %v582
  %v2506 = vpop.f32.mrf.mxu0
  %v2507 = vadd.f32 %v2154, %v2506
  %v2508 = vpop.f32.mrf.mxu0
  %v2509 = vadd.f32 %v2156, %v2508
  %v2510 = vpop.f32.mrf.mxu0
  %v2511 = vadd.f32 %v2158, %v2510
  %v2512 = vpop.f32.mrf.mxu0
  %v2513 = vadd.f32 %v2160, %v2512
  %2514 = vmatprep.mubr.bf16.mxu0 %v590
  %2515 = vmatmul.mubr.bf16.gmra.mxu0 %v589
  %v2516 = vpop.f32.mrf.mxu0
  %v2517 = vadd.f32 %v2164, %v2516
  %v2518 = vpop.f32.mrf.mxu0
  %v2519 = vadd.f32 %v2166, %v2518
  %v2520 = vpop.f32.mrf.mxu0
  %v2521 = vadd.f32 %v2168, %v2520
  %v2522 = vpop.f32.mrf.mxu0
  %v2523 = vadd.f32 %v2170, %v2522
  %2524 = vmatprep.mubr.bf16.mxu0 %v597
  %2525 = vmatmul.mubr.bf16.gmra.mxu0 %v596
  %v2526 = vpop.f32.mrf.mxu0
  %v2527 = vadd.f32 %v2174, %v2526
  %v2528 = vpop.f32.mrf.mxu0
  %v2529 = vadd.f32 %v2176, %v2528
  %v2530 = vpop.f32.mrf.mxu0
  %v2531 = vadd.f32 %v2178, %v2530
  %v2532 = vpop.f32.mrf.mxu0
  %v2533 = vadd.f32 %v2180, %v2532
  %2534 = vmatprep.mubr.bf16.mxu0 %v604
  %2535 = vmatmul.mubr.bf16.gmra.mxu0 %v603
  %v2536 = vpop.f32.mrf.mxu0
  %v2537 = vadd.f32 %v2184, %v2536
  %v2538 = vpop.f32.mrf.mxu0
  %v2539 = vadd.f32 %v2186, %v2538
  %v2540 = vpop.f32.mrf.mxu0
  %v2541 = vadd.f32 %v2188, %v2540
  %v2542 = vpop.f32.mrf.mxu0
  %v2543 = vadd.f32 %v2190, %v2542
  %2544 = vmatprep.mubr.bf16.mxu0 %v611
  %2545 = vmatmul.mubr.bf16.gmra.mxu0 %v610
  %v2546 = vpop.f32.mrf.mxu0
  %v2547 = vadd.f32 %v2194, %v2546
  %v2548 = vpop.f32.mrf.mxu0
  %v2549 = vadd.f32 %v2196, %v2548
  %v2550 = vpop.f32.mrf.mxu0
  %v2551 = vadd.f32 %v2198, %v2550
  %v2552 = vpop.f32.mrf.mxu0
  %v2553 = vadd.f32 %v2200, %v2552
  %2554 = vmatprep.mubr.bf16.mxu0 %v618
  %2555 = vmatmul.mubr.bf16.gmra.mxu0 %v617
  %v2556 = vpop.f32.mrf.mxu0
  %v2557 = vadd.f32 %v2204, %v2556
  %v2558 = vpop.f32.mrf.mxu0
  %v2559 = vadd.f32 %v2206, %v2558
  %v2560 = vpop.f32.mrf.mxu0
  %v2561 = vadd.f32 %v2208, %v2560
  %v2562 = vpop.f32.mrf.mxu0
  %v2563 = vadd.f32 %v2210, %v2562
  %2564 = vmatprep.mubr.bf16.mxu0 %v625
  %2565 = vmatmul.mubr.bf16.gmra.mxu0 %v624
  %v2566 = vpop.f32.mrf.mxu0
  %v2567 = vadd.f32 %v2214, %v2566
  %v2568 = vpop.f32.mrf.mxu0
  %v2569 = vadd.f32 %v2216, %v2568
  %v2570 = vpop.f32.mrf.mxu0
  %v2571 = vadd.f32 %v2218, %v2570
  %v2572 = vpop.f32.mrf.mxu0
  %v2573 = vadd.f32 %v2220, %v2572
  %2574 = vmatprep.mubr.bf16.mxu0 %v632
  %2575 = vmatmul.mubr.bf16.gmra.mxu0 %v631
  %v2576 = vpop.f32.mrf.mxu0
  %v2577 = vadd.f32 %v2224, %v2576
  %v2578 = vpop.f32.mrf.mxu0
  %v2579 = vadd.f32 %v2226, %v2578
  %v2580 = vpop.f32.mrf.mxu0
  %v2581 = vadd.f32 %v2228, %v2580
  %v2582 = vpop.f32.mrf.mxu0
  %v2583 = vadd.f32 %v2230, %v2582
  %2584 = vmatprep.mubr.bf16.mxu0 %v639
  %2585 = vmatmul.mubr.bf16.gmra.mxu0 %v638
  %v2586 = vpop.f32.mrf.mxu0
  %v2587 = vadd.f32 %v2234, %v2586
  %v2588 = vpop.f32.mrf.mxu0
  %v2589 = vadd.f32 %v2236, %v2588
  %v2590 = vpop.f32.mrf.mxu0
  %v2591 = vadd.f32 %v2238, %v2590
  %v2592 = vpop.f32.mrf.mxu0
  %v2593 = vadd.f32 %v2240, %v2592
  %2594 = vmatprep.mubr.bf16.mxu0 %v646
  %2595 = vmatmul.mubr.bf16.gmra.mxu0 %v645
  %v2596 = vpop.f32.mrf.mxu0
  %v2597 = vadd.f32 %v2244, %v2596
  %v2598 = vpop.f32.mrf.mxu0
  %v2599 = vadd.f32 %v2246, %v2598
  %v2600 = vpop.f32.mrf.mxu0
  %v2601 = vadd.f32 %v2248, %v2600
  %v2602 = vpop.f32.mrf.mxu0
  %v2603 = vadd.f32 %v2250, %v2602
  %2604 = vmatprep.mubr.bf16.mxu0 %v653
  %2605 = vmatmul.mubr.bf16.gmra.mxu0 %v652
  %v2606 = vpop.f32.mrf.mxu0
  %v2607 = vadd.f32 %v2254, %v2606
  %v2608 = vpop.f32.mrf.mxu0
  %v2609 = vadd.f32 %v2256, %v2608
  %v2610 = vpop.f32.mrf.mxu0
  %v2611 = vadd.f32 %v2258, %v2610
  %v2612 = vpop.f32.mrf.mxu0
  %v2613 = vadd.f32 %v2260, %v2612
  %2614 = vmatprep.mubr.bf16.mxu0 %v660
  %2615 = vmatmul.mubr.bf16.gmra.mxu0 %v659
  %v2616 = vpop.f32.mrf.mxu0
  %v2617 = vadd.f32 %v2264, %v2616
  %v2618 = vpop.f32.mrf.mxu0
  %v2619 = vadd.f32 %v2266, %v2618
  %v2620 = vpop.f32.mrf.mxu0
  %v2621 = vadd.f32 %v2268, %v2620
  %v2622 = vpop.f32.mrf.mxu0
  %v2623 = vadd.f32 %v2270, %v2622
  %2624 = vmatprep.mubr.bf16.mxu0 %v667
  %2625 = vmatmul.mubr.bf16.gmra.mxu0 %v666
  %v2626 = vpop.f32.mrf.mxu0
  %v2627 = vadd.f32 %v2274, %v2626
  %v2628 = vpop.f32.mrf.mxu0
  %v2629 = vadd.f32 %v2276, %v2628
  %v2630 = vpop.f32.mrf.mxu0
  %v2631 = vadd.f32 %v2278, %v2630
  %v2632 = vpop.f32.mrf.mxu0
  %v2633 = vadd.f32 %v2280, %v2632
  %2634 = vmatprep.mubr.bf16.mxu0 %v674
  %2635 = vmatmul.mubr.bf16.gmra.mxu0 %v673
  %v2636 = vpop.f32.mrf.mxu0
  %v2637 = vadd.f32 %v2284, %v2636
  %v2638 = vpop.f32.mrf.mxu0
  %v2639 = vadd.f32 %v2286, %v2638
  %v2640 = vpop.f32.mrf.mxu0
  %v2641 = vadd.f32 %v2288, %v2640
  %v2642 = vpop.f32.mrf.mxu0
  %v2643 = vadd.f32 %v2290, %v2642
  %2644 = vmatprep.mubr.bf16.mxu0 %v681
  %2645 = vmatmul.mubr.bf16.gmra.mxu0 %v680
  %v2646 = vpop.f32.mrf.mxu0
  %v2647 = vadd.f32 %v2294, %v2646
  %v2648 = vpop.f32.mrf.mxu0
  %v2649 = vadd.f32 %v2296, %v2648
  %v2650 = vpop.f32.mrf.mxu0
  %v2651 = vadd.f32 %v2298, %v2650
  %v2652 = vpop.f32.mrf.mxu0
  %v2653 = vadd.f32 %v2300, %v2652
  %2654 = vmatprep.mubr.bf16.mxu0 %v688
  %2655 = vmatmul.mubr.bf16.gmra.mxu0 %v687
  %v2656 = vpop.f32.mrf.mxu0
  %v2657 = vadd.f32 %v2304, %v2656
  %v2658 = vpop.f32.mrf.mxu0
  %v2659 = vadd.f32 %v2306, %v2658
  %v2660 = vpop.f32.mrf.mxu0
  %v2661 = vadd.f32 %v2308, %v2660
  %v2662 = vpop.f32.mrf.mxu0
  %v2663 = vadd.f32 %v2310, %v2662
  %2664 = vmatprep.mubr.bf16.mxu0 %v695
  %2665 = vmatmul.mubr.bf16.gmra.mxu0 %v694
  %v2666 = vpop.f32.mrf.mxu0
  %v2667 = vadd.f32 %v2314, %v2666
  %v2668 = vpop.f32.mrf.mxu0
  %v2669 = vadd.f32 %v2316, %v2668
  %v2670 = vpop.f32.mrf.mxu0
  %v2671 = vadd.f32 %v2318, %v2670
  %v2672 = vpop.f32.mrf.mxu0
  %v2673 = vadd.f32 %v2320, %v2672
  %2674 = vmatprep.mubr.bf16.mxu0 %v702
  %2675 = vmatmul.mubr.bf16.gmra.mxu0 %v701
  %v2676 = vpop.f32.mrf.mxu0
  %v2677 = vadd.f32 %v2324, %v2676
  %v2678 = vpop.f32.mrf.mxu0
  %v2679 = vadd.f32 %v2326, %v2678
  %v2680 = vpop.f32.mrf.mxu0
  %v2681 = vadd.f32 %v2328, %v2680
  %v2682 = vpop.f32.mrf.mxu0
  %v2683 = vadd.f32 %v2330, %v2682
  %2684 = vdwg.mxu0
  %2685 = vmatprep.subr.bf16.mxu0 %v1647
  %2686 = vmatpush1.bf16.msra.mxu0 %v1646
  %2687 = vmatprep.subr.bf16.mxu0 %v1643
  %2688 = vmatpush1.bf16.msra.mxu0 %v1642
  %2689 = vmatprep.subr.bf16.mxu0 %v1639
  %2690 = vmatpush1.bf16.msra.mxu0 %v1638
  %2691 = vmatprep.subr.bf16.mxu0 %v1635
  %2692 = vmatpush1.bf16.msra.mxu0 %v1634
  %2693 = vmatprep.subr.bf16.mxu0 %v1631
  %2694 = vmatpush1.bf16.msra.mxu0 %v1630
  %2695 = vmatprep.subr.bf16.mxu0 %v1627
  %2696 = vmatpush1.bf16.msra.mxu0 %v1626
  %2697 = vmatprep.subr.bf16.mxu0 %v1623
  %2698 = vmatpush1.bf16.msra.mxu0 %v1622
  %2699 = vmatprep.subr.bf16.mxu0 %v1619
  %2700 = vmatpush1.bf16.msra.mxu0 %v1618
  %2701 = vmatprep.subr.bf16.mxu0 %v1679
  %2702 = vmatpush2.bf16.msra.mxu0 %v1678
  %2703 = vmatprep.subr.bf16.mxu0 %v1675
  %2704 = vmatpush2.bf16.msra.mxu0 %v1674
  %2705 = vmatprep.subr.bf16.mxu0 %v1671
  %2706 = vmatpush2.bf16.msra.mxu0 %v1670
  %2707 = vmatprep.subr.bf16.mxu0 %v1667
  %2708 = vmatpush2.bf16.msra.mxu0 %v1666
  %2709 = vmatprep.subr.bf16.mxu0 %v1663
  %2710 = vmatpush2.bf16.msra.mxu0 %v1662
  %2711 = vmatprep.subr.bf16.mxu0 %v1659
  %2712 = vmatpush2.bf16.msra.mxu0 %v1658
  %2713 = vmatprep.subr.bf16.mxu0 %v1655
  %2714 = vmatpush2.bf16.msra.mxu0 %v1654
  %2715 = vmatprep.subr.bf16.mxu0 %v1651
  %2716 = vmatpush2.bf16.msra.mxu0 %v1650
  %2717 = vmatprep.mubr.bf16.mxu0 %v487
  %2718 = vmatmul.mubr.bf16.gmra.mxu0 %v486
  %v2719 = vpop.f32.mrf.mxu0
  %v2720 = vadd.f32 %v2367, %v2719
  %v2721 = vpop.f32.mrf.mxu0
  %v2722 = vadd.f32 %v2369, %v2721
  %v2723 = vpop.f32.mrf.mxu0
  %v2724 = vadd.f32 %v2371, %v2723
  %v2725 = vpop.f32.mrf.mxu0
  %v2726 = vadd.f32 %v2373, %v2725
  %2727 = vmatprep.mubr.bf16.mxu0 %v494
  %2728 = vmatmul.mubr.bf16.gmra.mxu0 %v493
  %v2729 = vpop.f32.mrf.mxu0
  %v2730 = vadd.f32 %v2377, %v2729
  %v2731 = vpop.f32.mrf.mxu0
  %v2732 = vadd.f32 %v2379, %v2731
  %v2733 = vpop.f32.mrf.mxu0
  %v2734 = vadd.f32 %v2381, %v2733
  %v2735 = vpop.f32.mrf.mxu0
  %v2736 = vadd.f32 %v2383, %v2735
  %2737 = vmatprep.mubr.bf16.mxu0 %v501
  %2738 = vmatmul.mubr.bf16.gmra.mxu0 %v500
  %v2739 = vpop.f32.mrf.mxu0
  %v2740 = vadd.f32 %v2387, %v2739
  %v2741 = vpop.f32.mrf.mxu0
  %v2742 = vadd.f32 %v2389, %v2741
  %v2743 = vpop.f32.mrf.mxu0
  %v2744 = vadd.f32 %v2391, %v2743
  %v2745 = vpop.f32.mrf.mxu0
  %v2746 = vadd.f32 %v2393, %v2745
  %2747 = vmatprep.mubr.bf16.mxu0 %v508
  %2748 = vmatmul.mubr.bf16.gmra.mxu0 %v507
  %v2749 = vpop.f32.mrf.mxu0
  %v2750 = vadd.f32 %v2397, %v2749
  %v2751 = vpop.f32.mrf.mxu0
  %v2752 = vadd.f32 %v2399, %v2751
  %v2753 = vpop.f32.mrf.mxu0
  %v2754 = vadd.f32 %v2401, %v2753
  %v2755 = vpop.f32.mrf.mxu0
  %v2756 = vadd.f32 %v2403, %v2755
  %2757 = vmatprep.mubr.bf16.mxu0 %v515
  %2758 = vmatmul.mubr.bf16.gmra.mxu0 %v514
  %v2759 = vpop.f32.mrf.mxu0
  %v2760 = vadd.f32 %v2407, %v2759
  %v2761 = vpop.f32.mrf.mxu0
  %v2762 = vadd.f32 %v2409, %v2761
  %v2763 = vpop.f32.mrf.mxu0
  %v2764 = vadd.f32 %v2411, %v2763
  %v2765 = vpop.f32.mrf.mxu0
  %v2766 = vadd.f32 %v2413, %v2765
  %2767 = vmatprep.mubr.bf16.mxu0 %v522
  %2768 = vmatmul.mubr.bf16.gmra.mxu0 %v521
  %v2769 = vpop.f32.mrf.mxu0
  %v2770 = vadd.f32 %v2417, %v2769
  %v2771 = vpop.f32.mrf.mxu0
  %v2772 = vadd.f32 %v2419, %v2771
  %v2773 = vpop.f32.mrf.mxu0
  %v2774 = vadd.f32 %v2421, %v2773
  %v2775 = vpop.f32.mrf.mxu0
  %v2776 = vadd.f32 %v2423, %v2775
  %2777 = vmatprep.mubr.bf16.mxu0 %v529
  %2778 = vmatmul.mubr.bf16.gmra.mxu0 %v528
  %v2779 = vpop.f32.mrf.mxu0
  %v2780 = vadd.f32 %v2427, %v2779
  %v2781 = vpop.f32.mrf.mxu0
  %v2782 = vadd.f32 %v2429, %v2781
  %v2783 = vpop.f32.mrf.mxu0
  %v2784 = vadd.f32 %v2431, %v2783
  %v2785 = vpop.f32.mrf.mxu0
  %v2786 = vadd.f32 %v2433, %v2785
  %2787 = vmatprep.mubr.bf16.mxu0 %v536
  %2788 = vmatmul.mubr.bf16.gmra.mxu0 %v535
  %v2789 = vpop.f32.mrf.mxu0
  %v2790 = vadd.f32 %v2437, %v2789
  %v2791 = vpop.f32.mrf.mxu0
  %v2792 = vadd.f32 %v2439, %v2791
  %v2793 = vpop.f32.mrf.mxu0
  %v2794 = vadd.f32 %v2441, %v2793
  %v2795 = vpop.f32.mrf.mxu0
  %v2796 = vadd.f32 %v2443, %v2795
  %2797 = vmatprep.mubr.bf16.mxu0 %v543
  %2798 = vmatmul.mubr.bf16.gmra.mxu0 %v542
  %v2799 = vpop.f32.mrf.mxu0
  %v2800 = vadd.f32 %v2447, %v2799
  %v2801 = vpop.f32.mrf.mxu0
  %v2802 = vadd.f32 %v2449, %v2801
  %v2803 = vpop.f32.mrf.mxu0
  %v2804 = vadd.f32 %v2451, %v2803
  %v2805 = vpop.f32.mrf.mxu0
  %v2806 = vadd.f32 %v2453, %v2805
  %2807 = vmatprep.mubr.bf16.mxu0 %v550
  %2808 = vmatmul.mubr.bf16.gmra.mxu0 %v549
  %v2809 = vpop.f32.mrf.mxu0
  %v2810 = vadd.f32 %v2457, %v2809
  %v2811 = vpop.f32.mrf.mxu0
  %v2812 = vadd.f32 %v2459, %v2811
  %v2813 = vpop.f32.mrf.mxu0
  %v2814 = vadd.f32 %v2461, %v2813
  %v2815 = vpop.f32.mrf.mxu0
  %v2816 = vadd.f32 %v2463, %v2815
  %2817 = vmatprep.mubr.bf16.mxu0 %v557
  %2818 = vmatmul.mubr.bf16.gmra.mxu0 %v556
  %v2819 = vpop.f32.mrf.mxu0
  %v2820 = vadd.f32 %v2467, %v2819
  %v2821 = vpop.f32.mrf.mxu0
  %v2822 = vadd.f32 %v2469, %v2821
  %v2823 = vpop.f32.mrf.mxu0
  %v2824 = vadd.f32 %v2471, %v2823
  %v2825 = vpop.f32.mrf.mxu0
  %v2826 = vadd.f32 %v2473, %v2825
  %2827 = vmatprep.mubr.bf16.mxu0 %v564
  %2828 = vmatmul.mubr.bf16.gmra.mxu0 %v563
  %v2829 = vpop.f32.mrf.mxu0
  %v2830 = vadd.f32 %v2477, %v2829
  %v2831 = vpop.f32.mrf.mxu0
  %v2832 = vadd.f32 %v2479, %v2831
  %v2833 = vpop.f32.mrf.mxu0
  %v2834 = vadd.f32 %v2481, %v2833
  %v2835 = vpop.f32.mrf.mxu0
  %v2836 = vadd.f32 %v2483, %v2835
  %2837 = vmatprep.mubr.bf16.mxu0 %v571
  %2838 = vmatmul.mubr.bf16.gmra.mxu0 %v570
  %v2839 = vpop.f32.mrf.mxu0
  %v2840 = vadd.f32 %v2487, %v2839
  %v2841 = vpop.f32.mrf.mxu0
  %v2842 = vadd.f32 %v2489, %v2841
  %v2843 = vpop.f32.mrf.mxu0
  %v2844 = vadd.f32 %v2491, %v2843
  %v2845 = vpop.f32.mrf.mxu0
  %v2846 = vadd.f32 %v2493, %v2845
  %2847 = vmatprep.mubr.bf16.mxu0 %v578
  %2848 = vmatmul.mubr.bf16.gmra.mxu0 %v577
  %v2849 = vpop.f32.mrf.mxu0
  %v2850 = vadd.f32 %v2497, %v2849
  %v2851 = vpop.f32.mrf.mxu0
  %v2852 = vadd.f32 %v2499, %v2851
  %v2853 = vpop.f32.mrf.mxu0
  %v2854 = vadd.f32 %v2501, %v2853
  %v2855 = vpop.f32.mrf.mxu0
  %v2856 = vadd.f32 %v2503, %v2855
  %2857 = vmatprep.mubr.bf16.mxu0 %v585
  %2858 = vmatmul.mubr.bf16.gmra.mxu0 %v584
  %v2859 = vpop.f32.mrf.mxu0
  %v2860 = vadd.f32 %v2507, %v2859
  %v2861 = vpop.f32.mrf.mxu0
  %v2862 = vadd.f32 %v2509, %v2861
  %v2863 = vpop.f32.mrf.mxu0
  %v2864 = vadd.f32 %v2511, %v2863
  %v2865 = vpop.f32.mrf.mxu0
  %v2866 = vadd.f32 %v2513, %v2865
  %2867 = vmatprep.mubr.bf16.mxu0 %v592
  %2868 = vmatmul.mubr.bf16.gmra.mxu0 %v591
  %v2869 = vpop.f32.mrf.mxu0
  %v2870 = vadd.f32 %v2517, %v2869
  %v2871 = vpop.f32.mrf.mxu0
  %v2872 = vadd.f32 %v2519, %v2871
  %v2873 = vpop.f32.mrf.mxu0
  %v2874 = vadd.f32 %v2521, %v2873
  %v2875 = vpop.f32.mrf.mxu0
  %v2876 = vadd.f32 %v2523, %v2875
  %2877 = vmatprep.mubr.bf16.mxu0 %v599
  %2878 = vmatmul.mubr.bf16.gmra.mxu0 %v598
  %v2879 = vpop.f32.mrf.mxu0
  %v2880 = vadd.f32 %v2527, %v2879
  %v2881 = vpop.f32.mrf.mxu0
  %v2882 = vadd.f32 %v2529, %v2881
  %v2883 = vpop.f32.mrf.mxu0
  %v2884 = vadd.f32 %v2531, %v2883
  %v2885 = vpop.f32.mrf.mxu0
  %v2886 = vadd.f32 %v2533, %v2885
  %2887 = vmatprep.mubr.bf16.mxu0 %v606
  %2888 = vmatmul.mubr.bf16.gmra.mxu0 %v605
  %v2889 = vpop.f32.mrf.mxu0
  %v2890 = vadd.f32 %v2537, %v2889
  %v2891 = vpop.f32.mrf.mxu0
  %v2892 = vadd.f32 %v2539, %v2891
  %v2893 = vpop.f32.mrf.mxu0
  %v2894 = vadd.f32 %v2541, %v2893
  %v2895 = vpop.f32.mrf.mxu0
  %v2896 = vadd.f32 %v2543, %v2895
  %2897 = vmatprep.mubr.bf16.mxu0 %v613
  %2898 = vmatmul.mubr.bf16.gmra.mxu0 %v612
  %v2899 = vpop.f32.mrf.mxu0
  %v2900 = vadd.f32 %v2547, %v2899
  %v2901 = vpop.f32.mrf.mxu0
  %v2902 = vadd.f32 %v2549, %v2901
  %v2903 = vpop.f32.mrf.mxu0
  %v2904 = vadd.f32 %v2551, %v2903
  %v2905 = vpop.f32.mrf.mxu0
  %v2906 = vadd.f32 %v2553, %v2905
  %2907 = vmatprep.mubr.bf16.mxu0 %v620
  %2908 = vmatmul.mubr.bf16.gmra.mxu0 %v619
  %v2909 = vpop.f32.mrf.mxu0
  %v2910 = vadd.f32 %v2557, %v2909
  %v2911 = vpop.f32.mrf.mxu0
  %v2912 = vadd.f32 %v2559, %v2911
  %v2913 = vpop.f32.mrf.mxu0
  %v2914 = vadd.f32 %v2561, %v2913
  %v2915 = vpop.f32.mrf.mxu0
  %v2916 = vadd.f32 %v2563, %v2915
  %2917 = vmatprep.mubr.bf16.mxu0 %v627
  %2918 = vmatmul.mubr.bf16.gmra.mxu0 %v626
  %v2919 = vpop.f32.mrf.mxu0
  %v2920 = vadd.f32 %v2567, %v2919
  %v2921 = vpop.f32.mrf.mxu0
  %v2922 = vadd.f32 %v2569, %v2921
  %v2923 = vpop.f32.mrf.mxu0
  %v2924 = vadd.f32 %v2571, %v2923
  %v2925 = vpop.f32.mrf.mxu0
  %v2926 = vadd.f32 %v2573, %v2925
  %2927 = vmatprep.mubr.bf16.mxu0 %v634
  %2928 = vmatmul.mubr.bf16.gmra.mxu0 %v633
  %v2929 = vpop.f32.mrf.mxu0
  %v2930 = vadd.f32 %v2577, %v2929
  %v2931 = vpop.f32.mrf.mxu0
  %v2932 = vadd.f32 %v2579, %v2931
  %v2933 = vpop.f32.mrf.mxu0
  %v2934 = vadd.f32 %v2581, %v2933
  %v2935 = vpop.f32.mrf.mxu0
  %v2936 = vadd.f32 %v2583, %v2935
  %2937 = vmatprep.mubr.bf16.mxu0 %v641
  %2938 = vmatmul.mubr.bf16.gmra.mxu0 %v640
  %v2939 = vpop.f32.mrf.mxu0
  %v2940 = vadd.f32 %v2587, %v2939
  %v2941 = vpop.f32.mrf.mxu0
  %v2942 = vadd.f32 %v2589, %v2941
  %v2943 = vpop.f32.mrf.mxu0
  %v2944 = vadd.f32 %v2591, %v2943
  %v2945 = vpop.f32.mrf.mxu0
  %v2946 = vadd.f32 %v2593, %v2945
  %2947 = vmatprep.mubr.bf16.mxu0 %v648
  %2948 = vmatmul.mubr.bf16.gmra.mxu0 %v647
  %v2949 = vpop.f32.mrf.mxu0
  %v2950 = vadd.f32 %v2597, %v2949
  %v2951 = vpop.f32.mrf.mxu0
  %v2952 = vadd.f32 %v2599, %v2951
  %v2953 = vpop.f32.mrf.mxu0
  %v2954 = vadd.f32 %v2601, %v2953
  %v2955 = vpop.f32.mrf.mxu0
  %v2956 = vadd.f32 %v2603, %v2955
  %2957 = vmatprep.mubr.bf16.mxu0 %v655
  %2958 = vmatmul.mubr.bf16.gmra.mxu0 %v654
  %v2959 = vpop.f32.mrf.mxu0
  %v2960 = vadd.f32 %v2607, %v2959
  %v2961 = vpop.f32.mrf.mxu0
  %v2962 = vadd.f32 %v2609, %v2961
  %v2963 = vpop.f32.mrf.mxu0
  %v2964 = vadd.f32 %v2611, %v2963
  %v2965 = vpop.f32.mrf.mxu0
  %v2966 = vadd.f32 %v2613, %v2965
  %2967 = vmatprep.mubr.bf16.mxu0 %v662
  %2968 = vmatmul.mubr.bf16.gmra.mxu0 %v661
  %v2969 = vpop.f32.mrf.mxu0
  %v2970 = vadd.f32 %v2617, %v2969
  %v2971 = vpop.f32.mrf.mxu0
  %v2972 = vadd.f32 %v2619, %v2971
  %v2973 = vpop.f32.mrf.mxu0
  %v2974 = vadd.f32 %v2621, %v2973
  %v2975 = vpop.f32.mrf.mxu0
  %v2976 = vadd.f32 %v2623, %v2975
  %2977 = vmatprep.mubr.bf16.mxu0 %v669
  %2978 = vmatmul.mubr.bf16.gmra.mxu0 %v668
  %v2979 = vpop.f32.mrf.mxu0
  %v2980 = vadd.f32 %v2627, %v2979
  %v2981 = vpop.f32.mrf.mxu0
  %v2982 = vadd.f32 %v2629, %v2981
  %v2983 = vpop.f32.mrf.mxu0
  %v2984 = vadd.f32 %v2631, %v2983
  %v2985 = vpop.f32.mrf.mxu0
  %v2986 = vadd.f32 %v2633, %v2985
  %2987 = vmatprep.mubr.bf16.mxu0 %v676
  %2988 = vmatmul.mubr.bf16.gmra.mxu0 %v675
  %v2989 = vpop.f32.mrf.mxu0
  %v2990 = vadd.f32 %v2637, %v2989
  %v2991 = vpop.f32.mrf.mxu0
  %v2992 = vadd.f32 %v2639, %v2991
  %v2993 = vpop.f32.mrf.mxu0
  %v2994 = vadd.f32 %v2641, %v2993
  %v2995 = vpop.f32.mrf.mxu0
  %v2996 = vadd.f32 %v2643, %v2995
  %2997 = vmatprep.mubr.bf16.mxu0 %v683
  %2998 = vmatmul.mubr.bf16.gmra.mxu0 %v682
  %v2999 = vpop.f32.mrf.mxu0
  %v3000 = vadd.f32 %v2647, %v2999
  %v3001 = vpop.f32.mrf.mxu0
  %v3002 = vadd.f32 %v2649, %v3001
  %v3003 = vpop.f32.mrf.mxu0
  %v3004 = vadd.f32 %v2651, %v3003
  %v3005 = vpop.f32.mrf.mxu0
  %v3006 = vadd.f32 %v2653, %v3005
  %3007 = vmatprep.mubr.bf16.mxu0 %v690
  %3008 = vmatmul.mubr.bf16.gmra.mxu0 %v689
  %v3009 = vpop.f32.mrf.mxu0
  %v3010 = vadd.f32 %v2657, %v3009
  %v3011 = vpop.f32.mrf.mxu0
  %v3012 = vadd.f32 %v2659, %v3011
  %v3013 = vpop.f32.mrf.mxu0
  %v3014 = vadd.f32 %v2661, %v3013
  %v3015 = vpop.f32.mrf.mxu0
  %v3016 = vadd.f32 %v2663, %v3015
  %3017 = vmatprep.mubr.bf16.mxu0 %v697
  %3018 = vmatmul.mubr.bf16.gmra.mxu0 %v696
  %v3019 = vpop.f32.mrf.mxu0
  %v3020 = vadd.f32 %v2667, %v3019
  %v3021 = vpop.f32.mrf.mxu0
  %v3022 = vadd.f32 %v2669, %v3021
  %v3023 = vpop.f32.mrf.mxu0
  %v3024 = vadd.f32 %v2671, %v3023
  %v3025 = vpop.f32.mrf.mxu0
  %v3026 = vadd.f32 %v2673, %v3025
  %3027 = vmatprep.mubr.bf16.mxu0 %v704
  %3028 = vmatmul.mubr.bf16.gmra.mxu0 %v703
  %v3029 = vpop.f32.mrf.mxu0
  %v3030 = vadd.f32 %v2677, %v3029
  %v3031 = vpop.f32.mrf.mxu0
  %v3032 = vadd.f32 %v2679, %v3031
  %v3033 = vpop.f32.mrf.mxu0
  %v3034 = vadd.f32 %v2681, %v3033
  %v3035 = vpop.f32.mrf.mxu0
  %v3036 = vadd.f32 %v2683, %v3035
  %3037 = vdwg.mxu0
  %3038 = vmatprep.subr.bf16.mxu0 0
  %3039 = vmatpush1.bf16.msra.mxu0 0
  %3040 = vmatprep.subr.bf16.mxu0 0
  %3041 = vmatpush1.bf16.msra.mxu0 0
  %3042 = vmatprep.subr.bf16.mxu0 0
  %3043 = vmatpush1.bf16.msra.mxu0 0
  %3044 = vmatprep.subr.bf16.mxu0 0
  %3045 = vmatpush1.bf16.msra.mxu0 0
  %3046 = vmatprep.subr.bf16.mxu0 0
  %3047 = vmatpush1.bf16.msra.mxu0 0
  %3048 = vmatprep.subr.bf16.mxu0 0
  %3049 = vmatpush1.bf16.msra.mxu0 0
  %3050 = vmatprep.subr.bf16.mxu0 0
  %3051 = vmatpush1.bf16.msra.mxu0 0
  %3052 = vmatprep.subr.bf16.mxu0 %v1683
  %3053 = vmatpush1.bf16.msra.mxu0 %v1682
  %3054 = vmatprep.subr.bf16.mxu0 0
  %3055 = vmatpush2.bf16.msra.mxu0 0
  %3056 = vmatprep.subr.bf16.mxu0 0
  %3057 = vmatpush2.bf16.msra.mxu0 0
  %3058 = vmatprep.subr.bf16.mxu0 0
  %3059 = vmatpush2.bf16.msra.mxu0 0
  %3060 = vmatprep.subr.bf16.mxu0 0
  %3061 = vmatpush2.bf16.msra.mxu0 0
  %3062 = vmatprep.subr.bf16.mxu0 0
  %3063 = vmatpush2.bf16.msra.mxu0 0
  %3064 = vmatprep.subr.bf16.mxu0 0
  %3065 = vmatpush2.bf16.msra.mxu0 0
  %3066 = vmatprep.subr.bf16.mxu0 0
  %3067 = vmatpush2.bf16.msra.mxu0 0
  %3068 = vmatprep.subr.bf16.mxu0 0
  %3069 = vmatpush2.bf16.msra.mxu0 0
  %3070 = vmatprep.mubr.bf16.mxu0 0
  %3071 = vmatmul.mubr.bf16.gmra.mxu0 %v1884
  %v3072 = vpop.f32.mrf.mxu0
  %v3073 = vadd.f32 %v2720, %v3072
  %v3074 = vpop.f32.mrf.mxu0
  %v3075 = vadd.f32 %v2722, %v3074
  %v3076 = vpop.f32.mrf.mxu0
  %v3077 = vadd.f32 %v2724, %v3076
  %v3078 = vpop.f32.mrf.mxu0
  %v3079 = vadd.f32 %v2726, %v3078
  %3080 = vmatprep.mubr.bf16.mxu0 0
  %3081 = vmatmul.mubr.bf16.gmra.mxu0 %v1887
  %v3082 = vpop.f32.mrf.mxu0
  %v3083 = vadd.f32 %v2730, %v3082
  %v3084 = vpop.f32.mrf.mxu0
  %v3085 = vadd.f32 %v2732, %v3084
  %v3086 = vpop.f32.mrf.mxu0
  %v3087 = vadd.f32 %v2734, %v3086
  %v3088 = vpop.f32.mrf.mxu0
  %v3089 = vadd.f32 %v2736, %v3088
  %3090 = vmatprep.mubr.bf16.mxu0 0
  %3091 = vmatmul.mubr.bf16.gmra.mxu0 %v1890
  %v3092 = vpop.f32.mrf.mxu0
  %v3093 = vadd.f32 %v2740, %v3092
  %v3094 = vpop.f32.mrf.mxu0
  %v3095 = vadd.f32 %v2742, %v3094
  %v3096 = vpop.f32.mrf.mxu0
  %v3097 = vadd.f32 %v2744, %v3096
  %v3098 = vpop.f32.mrf.mxu0
  %v3099 = vadd.f32 %v2746, %v3098
  %3100 = vmatprep.mubr.bf16.mxu0 0
  %3101 = vmatmul.mubr.bf16.gmra.mxu0 %v1893
  %v3102 = vpop.f32.mrf.mxu0
  %v3103 = vadd.f32 %v2750, %v3102
  %v3104 = vpop.f32.mrf.mxu0
  %v3105 = vadd.f32 %v2752, %v3104
  %v3106 = vpop.f32.mrf.mxu0
  %v3107 = vadd.f32 %v2754, %v3106
  %v3108 = vpop.f32.mrf.mxu0
  %v3109 = vadd.f32 %v2756, %v3108
  %3110 = vmatprep.mubr.bf16.mxu0 0
  %3111 = vmatmul.mubr.bf16.gmra.mxu0 %v1896
  %v3112 = vpop.f32.mrf.mxu0
  %v3113 = vadd.f32 %v2760, %v3112
  %v3114 = vpop.f32.mrf.mxu0
  %v3115 = vadd.f32 %v2762, %v3114
  %v3116 = vpop.f32.mrf.mxu0
  %v3117 = vadd.f32 %v2764, %v3116
  %v3118 = vpop.f32.mrf.mxu0
  %v3119 = vadd.f32 %v2766, %v3118
  %3120 = vmatprep.mubr.bf16.mxu0 0
  %3121 = vmatmul.mubr.bf16.gmra.mxu0 %v1899
  %v3122 = vpop.f32.mrf.mxu0
  %v3123 = vadd.f32 %v2770, %v3122
  %v3124 = vpop.f32.mrf.mxu0
  %v3125 = vadd.f32 %v2772, %v3124
  %v3126 = vpop.f32.mrf.mxu0
  %v3127 = vadd.f32 %v2774, %v3126
  %v3128 = vpop.f32.mrf.mxu0
  %v3129 = vadd.f32 %v2776, %v3128
  %3130 = vmatprep.mubr.bf16.mxu0 0
  %3131 = vmatmul.mubr.bf16.gmra.mxu0 %v1902
  %v3132 = vpop.f32.mrf.mxu0
  %v3133 = vadd.f32 %v2780, %v3132
  %v3134 = vpop.f32.mrf.mxu0
  %v3135 = vadd.f32 %v2782, %v3134
  %v3136 = vpop.f32.mrf.mxu0
  %v3137 = vadd.f32 %v2784, %v3136
  %v3138 = vpop.f32.mrf.mxu0
  %v3139 = vadd.f32 %v2786, %v3138
  %3140 = vmatprep.mubr.bf16.mxu0 0
  %3141 = vmatmul.mubr.bf16.gmra.mxu0 %v1905
  %v3142 = vpop.f32.mrf.mxu0
  %v3143 = vadd.f32 %v2790, %v3142
  %v3144 = vpop.f32.mrf.mxu0
  %v3145 = vadd.f32 %v2792, %v3144
  %v3146 = vpop.f32.mrf.mxu0
  %v3147 = vadd.f32 %v2794, %v3146
  %v3148 = vpop.f32.mrf.mxu0
  %v3149 = vadd.f32 %v2796, %v3148
  %3150 = vmatprep.mubr.bf16.mxu0 0
  %3151 = vmatmul.mubr.bf16.gmra.mxu0 %v1908
  %v3152 = vpop.f32.mrf.mxu0
  %v3153 = vadd.f32 %v2800, %v3152
  %v3154 = vpop.f32.mrf.mxu0
  %v3155 = vadd.f32 %v2802, %v3154
  %v3156 = vpop.f32.mrf.mxu0
  %v3157 = vadd.f32 %v2804, %v3156
  %v3158 = vpop.f32.mrf.mxu0
  %v3159 = vadd.f32 %v2806, %v3158
  %3160 = vmatprep.mubr.bf16.mxu0 0
  %3161 = vmatmul.mubr.bf16.gmra.mxu0 %v1911
  %v3162 = vpop.f32.mrf.mxu0
  %v3163 = vadd.f32 %v2810, %v3162
  %v3164 = vpop.f32.mrf.mxu0
  %v3165 = vadd.f32 %v2812, %v3164
  %v3166 = vpop.f32.mrf.mxu0
  %v3167 = vadd.f32 %v2814, %v3166
  %v3168 = vpop.f32.mrf.mxu0
  %v3169 = vadd.f32 %v2816, %v3168
  %3170 = vmatprep.mubr.bf16.mxu0 0
  %3171 = vmatmul.mubr.bf16.gmra.mxu0 %v1914
  %v3172 = vpop.f32.mrf.mxu0
  %v3173 = vadd.f32 %v2820, %v3172
  %v3174 = vpop.f32.mrf.mxu0
  %v3175 = vadd.f32 %v2822, %v3174
  %v3176 = vpop.f32.mrf.mxu0
  %v3177 = vadd.f32 %v2824, %v3176
  %v3178 = vpop.f32.mrf.mxu0
  %v3179 = vadd.f32 %v2826, %v3178
  %3180 = vmatprep.mubr.bf16.mxu0 0
  %3181 = vmatmul.mubr.bf16.gmra.mxu0 %v1917
  %v3182 = vpop.f32.mrf.mxu0
  %v3183 = vadd.f32 %v2830, %v3182
  %v3184 = vpop.f32.mrf.mxu0
  %v3185 = vadd.f32 %v2832, %v3184
  %v3186 = vpop.f32.mrf.mxu0
  %v3187 = vadd.f32 %v2834, %v3186
  %v3188 = vpop.f32.mrf.mxu0
  %v3189 = vadd.f32 %v2836, %v3188
  %3190 = vmatprep.mubr.bf16.mxu0 0
  %3191 = vmatmul.mubr.bf16.gmra.mxu0 %v1920
  %v3192 = vpop.f32.mrf.mxu0
  %v3193 = vadd.f32 %v2840, %v3192
  %v3194 = vpop.f32.mrf.mxu0
  %v3195 = vadd.f32 %v2842, %v3194
  %v3196 = vpop.f32.mrf.mxu0
  %v3197 = vadd.f32 %v2844, %v3196
  %v3198 = vpop.f32.mrf.mxu0
  %v3199 = vadd.f32 %v2846, %v3198
  %3200 = vmatprep.mubr.bf16.mxu0 0
  %3201 = vmatmul.mubr.bf16.gmra.mxu0 %v1923
  %v3202 = vpop.f32.mrf.mxu0
  %v3203 = vadd.f32 %v2850, %v3202
  %v3204 = vpop.f32.mrf.mxu0
  %v3205 = vadd.f32 %v2852, %v3204
  %v3206 = vpop.f32.mrf.mxu0
  %v3207 = vadd.f32 %v2854, %v3206
  %v3208 = vpop.f32.mrf.mxu0
  %v3209 = vadd.f32 %v2856, %v3208
  %3210 = vmatprep.mubr.bf16.mxu0 0
  %3211 = vmatmul.mubr.bf16.gmra.mxu0 %v1926
  %v3212 = vpop.f32.mrf.mxu0
  %v3213 = vadd.f32 %v2860, %v3212
  %v3214 = vpop.f32.mrf.mxu0
  %v3215 = vadd.f32 %v2862, %v3214
  %v3216 = vpop.f32.mrf.mxu0
  %v3217 = vadd.f32 %v2864, %v3216
  %v3218 = vpop.f32.mrf.mxu0
  %v3219 = vadd.f32 %v2866, %v3218
  %3220 = vmatprep.mubr.bf16.mxu0 0
  %3221 = vmatmul.mubr.bf16.gmra.mxu0 %v1929
  %v3222 = vpop.f32.mrf.mxu0
  %v3223 = vadd.f32 %v2870, %v3222
  %v3224 = vpop.f32.mrf.mxu0
  %v3225 = vadd.f32 %v2872, %v3224
  %v3226 = vpop.f32.mrf.mxu0
  %v3227 = vadd.f32 %v2874, %v3226
  %v3228 = vpop.f32.mrf.mxu0
  %v3229 = vadd.f32 %v2876, %v3228
  %3230 = vmatprep.mubr.bf16.mxu0 0
  %3231 = vmatmul.mubr.bf16.gmra.mxu0 %v1932
  %v3232 = vpop.f32.mrf.mxu0
  %v3233 = vadd.f32 %v2880, %v3232
  %v3234 = vpop.f32.mrf.mxu0
  %v3235 = vadd.f32 %v2882, %v3234
  %v3236 = vpop.f32.mrf.mxu0
  %v3237 = vadd.f32 %v2884, %v3236
  %v3238 = vpop.f32.mrf.mxu0
  %v3239 = vadd.f32 %v2886, %v3238
  %3240 = vmatprep.mubr.bf16.mxu0 0
  %3241 = vmatmul.mubr.bf16.gmra.mxu0 %v1935
  %v3242 = vpop.f32.mrf.mxu0
  %v3243 = vadd.f32 %v2890, %v3242
  %v3244 = vpop.f32.mrf.mxu0
  %v3245 = vadd.f32 %v2892, %v3244
  %v3246 = vpop.f32.mrf.mxu0
  %v3247 = vadd.f32 %v2894, %v3246
  %v3248 = vpop.f32.mrf.mxu0
  %v3249 = vadd.f32 %v2896, %v3248
  %3250 = vmatprep.mubr.bf16.mxu0 0
  %3251 = vmatmul.mubr.bf16.gmra.mxu0 %v1938
  %v3252 = vpop.f32.mrf.mxu0
  %v3253 = vadd.f32 %v2900, %v3252
  %v3254 = vpop.f32.mrf.mxu0
  %v3255 = vadd.f32 %v2902, %v3254
  %v3256 = vpop.f32.mrf.mxu0
  %v3257 = vadd.f32 %v2904, %v3256
  %v3258 = vpop.f32.mrf.mxu0
  %v3259 = vadd.f32 %v2906, %v3258
  %3260 = vmatprep.mubr.bf16.mxu0 0
  %3261 = vmatmul.mubr.bf16.gmra.mxu0 %v1941
  %v3262 = vpop.f32.mrf.mxu0
  %v3263 = vadd.f32 %v2910, %v3262
  %v3264 = vpop.f32.mrf.mxu0
  %v3265 = vadd.f32 %v2912, %v3264
  %v3266 = vpop.f32.mrf.mxu0
  %v3267 = vadd.f32 %v2914, %v3266
  %v3268 = vpop.f32.mrf.mxu0
  %v3269 = vadd.f32 %v2916, %v3268
  %3270 = vmatprep.mubr.bf16.mxu0 0
  %3271 = vmatmul.mubr.bf16.gmra.mxu0 %v1944
  %v3272 = vpop.f32.mrf.mxu0
  %v3273 = vadd.f32 %v2920, %v3272
  %v3274 = vpop.f32.mrf.mxu0
  %v3275 = vadd.f32 %v2922, %v3274
  %v3276 = vpop.f32.mrf.mxu0
  %v3277 = vadd.f32 %v2924, %v3276
  %v3278 = vpop.f32.mrf.mxu0
  %v3279 = vadd.f32 %v2926, %v3278
  %3280 = vmatprep.mubr.bf16.mxu0 0
  %3281 = vmatmul.mubr.bf16.gmra.mxu0 %v1947
  %v3282 = vpop.f32.mrf.mxu0
  %v3283 = vadd.f32 %v2930, %v3282
  %v3284 = vpop.f32.mrf.mxu0
  %v3285 = vadd.f32 %v2932, %v3284
  %v3286 = vpop.f32.mrf.mxu0
  %v3287 = vadd.f32 %v2934, %v3286
  %v3288 = vpop.f32.mrf.mxu0
  %v3289 = vadd.f32 %v2936, %v3288
  %3290 = vmatprep.mubr.bf16.mxu0 0
  %3291 = vmatmul.mubr.bf16.gmra.mxu0 %v1950
  %v3292 = vpop.f32.mrf.mxu0
  %v3293 = vadd.f32 %v2940, %v3292
  %v3294 = vpop.f32.mrf.mxu0
  %v3295 = vadd.f32 %v2942, %v3294
  %v3296 = vpop.f32.mrf.mxu0
  %v3297 = vadd.f32 %v2944, %v3296
  %v3298 = vpop.f32.mrf.mxu0
  %v3299 = vadd.f32 %v2946, %v3298
  %3300 = vmatprep.mubr.bf16.mxu0 0
  %3301 = vmatmul.mubr.bf16.gmra.mxu0 %v1953
  %v3302 = vpop.f32.mrf.mxu0
  %v3303 = vadd.f32 %v2950, %v3302
  %v3304 = vpop.f32.mrf.mxu0
  %v3305 = vadd.f32 %v2952, %v3304
  %v3306 = vpop.f32.mrf.mxu0
  %v3307 = vadd.f32 %v2954, %v3306
  %v3308 = vpop.f32.mrf.mxu0
  %v3309 = vadd.f32 %v2956, %v3308
  %3310 = vmatprep.mubr.bf16.mxu0 0
  %3311 = vmatmul.mubr.bf16.gmra.mxu0 %v1956
  %v3312 = vpop.f32.mrf.mxu0
  %v3313 = vadd.f32 %v2960, %v3312
  %v3314 = vpop.f32.mrf.mxu0
  %v3315 = vadd.f32 %v2962, %v3314
  %v3316 = vpop.f32.mrf.mxu0
  %v3317 = vadd.f32 %v2964, %v3316
  %v3318 = vpop.f32.mrf.mxu0
  %v3319 = vadd.f32 %v2966, %v3318
  %3320 = vmatprep.mubr.bf16.mxu0 0
  %3321 = vmatmul.mubr.bf16.gmra.mxu0 %v1959
  %v3322 = vpop.f32.mrf.mxu0
  %v3323 = vadd.f32 %v2970, %v3322
  %v3324 = vpop.f32.mrf.mxu0
  %v3325 = vadd.f32 %v2972, %v3324
  %v3326 = vpop.f32.mrf.mxu0
  %v3327 = vadd.f32 %v2974, %v3326
  %v3328 = vpop.f32.mrf.mxu0
  %v3329 = vadd.f32 %v2976, %v3328
  %3330 = vmatprep.mubr.bf16.mxu0 0
  %3331 = vmatmul.mubr.bf16.gmra.mxu0 %v1962
  %v3332 = vpop.f32.mrf.mxu0
  %v3333 = vadd.f32 %v2980, %v3332
  %v3334 = vpop.f32.mrf.mxu0
  %v3335 = vadd.f32 %v2982, %v3334
  %v3336 = vpop.f32.mrf.mxu0
  %v3337 = vadd.f32 %v2984, %v3336
  %v3338 = vpop.f32.mrf.mxu0
  %v3339 = vadd.f32 %v2986, %v3338
  %3340 = vmatprep.mubr.bf16.mxu0 0
  %3341 = vmatmul.mubr.bf16.gmra.mxu0 %v1965
  %v3342 = vpop.f32.mrf.mxu0
  %v3343 = vadd.f32 %v2990, %v3342
  %v3344 = vpop.f32.mrf.mxu0
  %v3345 = vadd.f32 %v2992, %v3344
  %v3346 = vpop.f32.mrf.mxu0
  %v3347 = vadd.f32 %v2994, %v3346
  %v3348 = vpop.f32.mrf.mxu0
  %v3349 = vadd.f32 %v2996, %v3348
  %3350 = vmatprep.mubr.bf16.mxu0 0
  %3351 = vmatmul.mubr.bf16.gmra.mxu0 %v1968
  %v3352 = vpop.f32.mrf.mxu0
  %v3353 = vadd.f32 %v3000, %v3352
  %v3354 = vpop.f32.mrf.mxu0
  %v3355 = vadd.f32 %v3002, %v3354
  %v3356 = vpop.f32.mrf.mxu0
  %v3357 = vadd.f32 %v3004, %v3356
  %v3358 = vpop.f32.mrf.mxu0
  %v3359 = vadd.f32 %v3006, %v3358
  %3360 = vmatprep.mubr.bf16.mxu0 0
  %3361 = vmatmul.mubr.bf16.gmra.mxu0 %v1971
  %v3362 = vpop.f32.mrf.mxu0
  %v3363 = vadd.f32 %v3010, %v3362
  %v3364 = vpop.f32.mrf.mxu0
  %v3365 = vadd.f32 %v3012, %v3364
  %v3366 = vpop.f32.mrf.mxu0
  %v3367 = vadd.f32 %v3014, %v3366
  %v3368 = vpop.f32.mrf.mxu0
  %v3369 = vadd.f32 %v3016, %v3368
  %3370 = vmatprep.mubr.bf16.mxu0 0
  %3371 = vmatmul.mubr.bf16.gmra.mxu0 %v1974
  %v3372 = vpop.f32.mrf.mxu0
  %v3373 = vadd.f32 %v3020, %v3372
  %v3374 = vpop.f32.mrf.mxu0
  %v3375 = vadd.f32 %v3022, %v3374
  %v3376 = vpop.f32.mrf.mxu0
  %v3377 = vadd.f32 %v3024, %v3376
  %v3378 = vpop.f32.mrf.mxu0
  %v3379 = vadd.f32 %v3026, %v3378
  %3380 = vmatprep.mubr.bf16.mxu0 0
  %3381 = vmatmul.mubr.bf16.gmra.mxu0 %v1977
  %v3382 = vpop.f32.mrf.mxu0
  %v3383 = vadd.f32 %v3030, %v3382
  %v3384 = vpop.f32.mrf.mxu0
  %v3385 = vadd.f32 %v3032, %v3384
  %v3386 = vpop.f32.mrf.mxu0
  %v3387 = vadd.f32 %v3034, %v3386
  %v3388 = vpop.f32.mrf.mxu0
  %v3389 = vadd.f32 %v3036, %v3388
  %3390 = vdwg.mxu0
  %3391 = vmatprep.subr.bf16.mxu0 %v1521
  %3392 = vmatpush1.bf16.msra.mxu0 %v1520
  %3393 = vmatprep.subr.bf16.mxu0 %v1517
  %3394 = vmatpush1.bf16.msra.mxu0 %v1516
  %3395 = vmatprep.subr.bf16.mxu0 %v1513
  %3396 = vmatpush1.bf16.msra.mxu0 %v1512
  %3397 = vmatprep.subr.bf16.mxu0 %v1509
  %3398 = vmatpush1.bf16.msra.mxu0 %v1508
  %3399 = vmatprep.subr.bf16.mxu0 %v1505
  %3400 = vmatpush1.bf16.msra.mxu0 %v1504
  %3401 = vmatprep.subr.bf16.mxu0 %v1501
  %3402 = vmatpush1.bf16.msra.mxu0 %v1500
  %3403 = vmatprep.subr.bf16.mxu0 %v1497
  %3404 = vmatpush1.bf16.msra.mxu0 %v1496
  %3405 = vmatprep.subr.bf16.mxu0 %v1493
  %3406 = vmatpush1.bf16.msra.mxu0 %v1492
  %3407 = vmatprep.subr.bf16.mxu0 %v1553
  %3408 = vmatpush2.bf16.msra.mxu0 %v1552
  %3409 = vmatprep.subr.bf16.mxu0 %v1549
  %3410 = vmatpush2.bf16.msra.mxu0 %v1548
  %3411 = vmatprep.subr.bf16.mxu0 %v1545
  %3412 = vmatpush2.bf16.msra.mxu0 %v1544
  %3413 = vmatprep.subr.bf16.mxu0 %v1541
  %3414 = vmatpush2.bf16.msra.mxu0 %v1540
  %3415 = vmatprep.subr.bf16.mxu0 %v1537
  %3416 = vmatpush2.bf16.msra.mxu0 %v1536
  %3417 = vmatprep.subr.bf16.mxu0 %v1533
  %3418 = vmatpush2.bf16.msra.mxu0 %v1532
  %3419 = vmatprep.subr.bf16.mxu0 %v1529
  %3420 = vmatpush2.bf16.msra.mxu0 %v1528
  %3421 = vmatprep.subr.bf16.mxu0 %v1525
  %3422 = vmatpush2.bf16.msra.mxu0 %v1524
  %3423 = vmatprep.mubr.bf16.mxu0 %v483
  %3424 = vmatmul.mubr.bf16.gmra.mxu0 %v482
  %v3425 = vpop.f32.mrf.mxu0
  %v3426 = vadd.f32 0.0, %v3425
  %v3427 = vpop.f32.mrf.mxu0
  %v3428 = vadd.f32 0.0, %v3427
  %v3429 = vpop.f32.mrf.mxu0
  %v3430 = vadd.f32 0.0, %v3429
  %v3431 = vpop.f32.mrf.mxu0
  %v3432 = vadd.f32 0.0, %v3431
  %3433 = vmatprep.mubr.bf16.mxu0 %v490
  %3434 = vmatmul.mubr.bf16.gmra.mxu0 %v489
  %v3435 = vpop.f32.mrf.mxu0
  %v3436 = vadd.f32 0.0, %v3435
  %v3437 = vpop.f32.mrf.mxu0
  %v3438 = vadd.f32 0.0, %v3437
  %v3439 = vpop.f32.mrf.mxu0
  %v3440 = vadd.f32 0.0, %v3439
  %v3441 = vpop.f32.mrf.mxu0
  %v3442 = vadd.f32 0.0, %v3441
  %3443 = vmatprep.mubr.bf16.mxu0 %v497
  %3444 = vmatmul.mubr.bf16.gmra.mxu0 %v496
  %v3445 = vpop.f32.mrf.mxu0
  %v3446 = vadd.f32 0.0, %v3445
  %v3447 = vpop.f32.mrf.mxu0
  %v3448 = vadd.f32 0.0, %v3447
  %v3449 = vpop.f32.mrf.mxu0
  %v3450 = vadd.f32 0.0, %v3449
  %v3451 = vpop.f32.mrf.mxu0
  %v3452 = vadd.f32 0.0, %v3451
  %3453 = vmatprep.mubr.bf16.mxu0 %v504
  %3454 = vmatmul.mubr.bf16.gmra.mxu0 %v503
  %v3455 = vpop.f32.mrf.mxu0
  %v3456 = vadd.f32 0.0, %v3455
  %v3457 = vpop.f32.mrf.mxu0
  %v3458 = vadd.f32 0.0, %v3457
  %v3459 = vpop.f32.mrf.mxu0
  %v3460 = vadd.f32 0.0, %v3459
  %v3461 = vpop.f32.mrf.mxu0
  %v3462 = vadd.f32 0.0, %v3461
  %3463 = vmatprep.mubr.bf16.mxu0 %v511
  %3464 = vmatmul.mubr.bf16.gmra.mxu0 %v510
  %v3465 = vpop.f32.mrf.mxu0
  %v3466 = vadd.f32 0.0, %v3465
  %v3467 = vpop.f32.mrf.mxu0
  %v3468 = vadd.f32 0.0, %v3467
  %v3469 = vpop.f32.mrf.mxu0
  %v3470 = vadd.f32 0.0, %v3469
  %v3471 = vpop.f32.mrf.mxu0
  %v3472 = vadd.f32 0.0, %v3471
  %3473 = vmatprep.mubr.bf16.mxu0 %v518
  %3474 = vmatmul.mubr.bf16.gmra.mxu0 %v517
  %v3475 = vpop.f32.mrf.mxu0
  %v3476 = vadd.f32 0.0, %v3475
  %v3477 = vpop.f32.mrf.mxu0
  %v3478 = vadd.f32 0.0, %v3477
  %v3479 = vpop.f32.mrf.mxu0
  %v3480 = vadd.f32 0.0, %v3479
  %v3481 = vpop.f32.mrf.mxu0
  %v3482 = vadd.f32 0.0, %v3481
  %3483 = vmatprep.mubr.bf16.mxu0 %v525
  %3484 = vmatmul.mubr.bf16.gmra.mxu0 %v524
  %v3485 = vpop.f32.mrf.mxu0
  %v3486 = vadd.f32 0.0, %v3485
  %v3487 = vpop.f32.mrf.mxu0
  %v3488 = vadd.f32 0.0, %v3487
  %v3489 = vpop.f32.mrf.mxu0
  %v3490 = vadd.f32 0.0, %v3489
  %v3491 = vpop.f32.mrf.mxu0
  %v3492 = vadd.f32 0.0, %v3491
  %3493 = vmatprep.mubr.bf16.mxu0 %v532
  %3494 = vmatmul.mubr.bf16.gmra.mxu0 %v531
  %v3495 = vpop.f32.mrf.mxu0
  %v3496 = vadd.f32 0.0, %v3495
  %v3497 = vpop.f32.mrf.mxu0
  %v3498 = vadd.f32 0.0, %v3497
  %v3499 = vpop.f32.mrf.mxu0
  %v3500 = vadd.f32 0.0, %v3499
  %v3501 = vpop.f32.mrf.mxu0
  %v3502 = vadd.f32 0.0, %v3501
  %3503 = vmatprep.mubr.bf16.mxu0 %v539
  %3504 = vmatmul.mubr.bf16.gmra.mxu0 %v538
  %v3505 = vpop.f32.mrf.mxu0
  %v3506 = vadd.f32 0.0, %v3505
  %v3507 = vpop.f32.mrf.mxu0
  %v3508 = vadd.f32 0.0, %v3507
  %v3509 = vpop.f32.mrf.mxu0
  %v3510 = vadd.f32 0.0, %v3509
  %v3511 = vpop.f32.mrf.mxu0
  %v3512 = vadd.f32 0.0, %v3511
  %3513 = vmatprep.mubr.bf16.mxu0 %v546
  %3514 = vmatmul.mubr.bf16.gmra.mxu0 %v545
  %v3515 = vpop.f32.mrf.mxu0
  %v3516 = vadd.f32 0.0, %v3515
  %v3517 = vpop.f32.mrf.mxu0
  %v3518 = vadd.f32 0.0, %v3517
  %v3519 = vpop.f32.mrf.mxu0
  %v3520 = vadd.f32 0.0, %v3519
  %v3521 = vpop.f32.mrf.mxu0
  %v3522 = vadd.f32 0.0, %v3521
  %3523 = vmatprep.mubr.bf16.mxu0 %v553
  %3524 = vmatmul.mubr.bf16.gmra.mxu0 %v552
  %v3525 = vpop.f32.mrf.mxu0
  %v3526 = vadd.f32 0.0, %v3525
  %v3527 = vpop.f32.mrf.mxu0
  %v3528 = vadd.f32 0.0, %v3527
  %v3529 = vpop.f32.mrf.mxu0
  %v3530 = vadd.f32 0.0, %v3529
  %v3531 = vpop.f32.mrf.mxu0
  %v3532 = vadd.f32 0.0, %v3531
  %3533 = vmatprep.mubr.bf16.mxu0 %v560
  %3534 = vmatmul.mubr.bf16.gmra.mxu0 %v559
  %v3535 = vpop.f32.mrf.mxu0
  %v3536 = vadd.f32 0.0, %v3535
  %v3537 = vpop.f32.mrf.mxu0
  %v3538 = vadd.f32 0.0, %v3537
  %v3539 = vpop.f32.mrf.mxu0
  %v3540 = vadd.f32 0.0, %v3539
  %v3541 = vpop.f32.mrf.mxu0
  %v3542 = vadd.f32 0.0, %v3541
  %3543 = vmatprep.mubr.bf16.mxu0 %v567
  %3544 = vmatmul.mubr.bf16.gmra.mxu0 %v566
  %v3545 = vpop.f32.mrf.mxu0
  %v3546 = vadd.f32 0.0, %v3545
  %v3547 = vpop.f32.mrf.mxu0
  %v3548 = vadd.f32 0.0, %v3547
  %v3549 = vpop.f32.mrf.mxu0
  %v3550 = vadd.f32 0.0, %v3549
  %v3551 = vpop.f32.mrf.mxu0
  %v3552 = vadd.f32 0.0, %v3551
  %3553 = vmatprep.mubr.bf16.mxu0 %v574
  %3554 = vmatmul.mubr.bf16.gmra.mxu0 %v573
  %v3555 = vpop.f32.mrf.mxu0
  %v3556 = vadd.f32 0.0, %v3555
  %v3557 = vpop.f32.mrf.mxu0
  %v3558 = vadd.f32 0.0, %v3557
  %v3559 = vpop.f32.mrf.mxu0
  %v3560 = vadd.f32 0.0, %v3559
  %v3561 = vpop.f32.mrf.mxu0
  %v3562 = vadd.f32 0.0, %v3561
  %3563 = vmatprep.mubr.bf16.mxu0 %v581
  %3564 = vmatmul.mubr.bf16.gmra.mxu0 %v580
  %v3565 = vpop.f32.mrf.mxu0
  %v3566 = vadd.f32 0.0, %v3565
  %v3567 = vpop.f32.mrf.mxu0
  %v3568 = vadd.f32 0.0, %v3567
  %v3569 = vpop.f32.mrf.mxu0
  %v3570 = vadd.f32 0.0, %v3569
  %v3571 = vpop.f32.mrf.mxu0
  %v3572 = vadd.f32 0.0, %v3571
  %3573 = vmatprep.mubr.bf16.mxu0 %v588
  %3574 = vmatmul.mubr.bf16.gmra.mxu0 %v587
  %v3575 = vpop.f32.mrf.mxu0
  %v3576 = vadd.f32 0.0, %v3575
  %v3577 = vpop.f32.mrf.mxu0
  %v3578 = vadd.f32 0.0, %v3577
  %v3579 = vpop.f32.mrf.mxu0
  %v3580 = vadd.f32 0.0, %v3579
  %v3581 = vpop.f32.mrf.mxu0
  %v3582 = vadd.f32 0.0, %v3581
  %3583 = vmatprep.mubr.bf16.mxu0 %v595
  %3584 = vmatmul.mubr.bf16.gmra.mxu0 %v594
  %v3585 = vpop.f32.mrf.mxu0
  %v3586 = vadd.f32 0.0, %v3585
  %v3587 = vpop.f32.mrf.mxu0
  %v3588 = vadd.f32 0.0, %v3587
  %v3589 = vpop.f32.mrf.mxu0
  %v3590 = vadd.f32 0.0, %v3589
  %v3591 = vpop.f32.mrf.mxu0
  %v3592 = vadd.f32 0.0, %v3591
  %3593 = vmatprep.mubr.bf16.mxu0 %v602
  %3594 = vmatmul.mubr.bf16.gmra.mxu0 %v601
  %v3595 = vpop.f32.mrf.mxu0
  %v3596 = vadd.f32 0.0, %v3595
  %v3597 = vpop.f32.mrf.mxu0
  %v3598 = vadd.f32 0.0, %v3597
  %v3599 = vpop.f32.mrf.mxu0
  %v3600 = vadd.f32 0.0, %v3599
  %v3601 = vpop.f32.mrf.mxu0
  %v3602 = vadd.f32 0.0, %v3601
  %3603 = vmatprep.mubr.bf16.mxu0 %v609
  %3604 = vmatmul.mubr.bf16.gmra.mxu0 %v608
  %v3605 = vpop.f32.mrf.mxu0
  %v3606 = vadd.f32 0.0, %v3605
  %v3607 = vpop.f32.mrf.mxu0
  %v3608 = vadd.f32 0.0, %v3607
  %v3609 = vpop.f32.mrf.mxu0
  %v3610 = vadd.f32 0.0, %v3609
  %v3611 = vpop.f32.mrf.mxu0
  %v3612 = vadd.f32 0.0, %v3611
  %3613 = vmatprep.mubr.bf16.mxu0 %v616
  %3614 = vmatmul.mubr.bf16.gmra.mxu0 %v615
  %v3615 = vpop.f32.mrf.mxu0
  %v3616 = vadd.f32 0.0, %v3615
  %v3617 = vpop.f32.mrf.mxu0
  %v3618 = vadd.f32 0.0, %v3617
  %v3619 = vpop.f32.mrf.mxu0
  %v3620 = vadd.f32 0.0, %v3619
  %v3621 = vpop.f32.mrf.mxu0
  %v3622 = vadd.f32 0.0, %v3621
  %3623 = vmatprep.mubr.bf16.mxu0 %v623
  %3624 = vmatmul.mubr.bf16.gmra.mxu0 %v622
  %v3625 = vpop.f32.mrf.mxu0
  %v3626 = vadd.f32 0.0, %v3625
  %v3627 = vpop.f32.mrf.mxu0
  %v3628 = vadd.f32 0.0, %v3627
  %v3629 = vpop.f32.mrf.mxu0
  %v3630 = vadd.f32 0.0, %v3629
  %v3631 = vpop.f32.mrf.mxu0
  %v3632 = vadd.f32 0.0, %v3631
  %3633 = vmatprep.mubr.bf16.mxu0 %v630
  %3634 = vmatmul.mubr.bf16.gmra.mxu0 %v629
  %v3635 = vpop.f32.mrf.mxu0
  %v3636 = vadd.f32 0.0, %v3635
  %v3637 = vpop.f32.mrf.mxu0
  %v3638 = vadd.f32 0.0, %v3637
  %v3639 = vpop.f32.mrf.mxu0
  %v3640 = vadd.f32 0.0, %v3639
  %v3641 = vpop.f32.mrf.mxu0
  %v3642 = vadd.f32 0.0, %v3641
  %3643 = vmatprep.mubr.bf16.mxu0 %v637
  %3644 = vmatmul.mubr.bf16.gmra.mxu0 %v636
  %v3645 = vpop.f32.mrf.mxu0
  %v3646 = vadd.f32 0.0, %v3645
  %v3647 = vpop.f32.mrf.mxu0
  %v3648 = vadd.f32 0.0, %v3647
  %v3649 = vpop.f32.mrf.mxu0
  %v3650 = vadd.f32 0.0, %v3649
  %v3651 = vpop.f32.mrf.mxu0
  %v3652 = vadd.f32 0.0, %v3651
  %3653 = vmatprep.mubr.bf16.mxu0 %v644
  %3654 = vmatmul.mubr.bf16.gmra.mxu0 %v643
  %v3655 = vpop.f32.mrf.mxu0
  %v3656 = vadd.f32 0.0, %v3655
  %v3657 = vpop.f32.mrf.mxu0
  %v3658 = vadd.f32 0.0, %v3657
  %v3659 = vpop.f32.mrf.mxu0
  %v3660 = vadd.f32 0.0, %v3659
  %v3661 = vpop.f32.mrf.mxu0
  %v3662 = vadd.f32 0.0, %v3661
  %3663 = vmatprep.mubr.bf16.mxu0 %v651
  %3664 = vmatmul.mubr.bf16.gmra.mxu0 %v650
  %v3665 = vpop.f32.mrf.mxu0
  %v3666 = vadd.f32 0.0, %v3665
  %v3667 = vpop.f32.mrf.mxu0
  %v3668 = vadd.f32 0.0, %v3667
  %v3669 = vpop.f32.mrf.mxu0
  %v3670 = vadd.f32 0.0, %v3669
  %v3671 = vpop.f32.mrf.mxu0
  %v3672 = vadd.f32 0.0, %v3671
  %3673 = vmatprep.mubr.bf16.mxu0 %v658
  %3674 = vmatmul.mubr.bf16.gmra.mxu0 %v657
  %v3675 = vpop.f32.mrf.mxu0
  %v3676 = vadd.f32 0.0, %v3675
  %v3677 = vpop.f32.mrf.mxu0
  %v3678 = vadd.f32 0.0, %v3677
  %v3679 = vpop.f32.mrf.mxu0
  %v3680 = vadd.f32 0.0, %v3679
  %v3681 = vpop.f32.mrf.mxu0
  %v3682 = vadd.f32 0.0, %v3681
  %3683 = vmatprep.mubr.bf16.mxu0 %v665
  %3684 = vmatmul.mubr.bf16.gmra.mxu0 %v664
  %v3685 = vpop.f32.mrf.mxu0
  %v3686 = vadd.f32 0.0, %v3685
  %v3687 = vpop.f32.mrf.mxu0
  %v3688 = vadd.f32 0.0, %v3687
  %v3689 = vpop.f32.mrf.mxu0
  %v3690 = vadd.f32 0.0, %v3689
  %v3691 = vpop.f32.mrf.mxu0
  %v3692 = vadd.f32 0.0, %v3691
  %3693 = vmatprep.mubr.bf16.mxu0 %v672
  %3694 = vmatmul.mubr.bf16.gmra.mxu0 %v671
  %v3695 = vpop.f32.mrf.mxu0
  %v3696 = vadd.f32 0.0, %v3695
  %v3697 = vpop.f32.mrf.mxu0
  %v3698 = vadd.f32 0.0, %v3697
  %v3699 = vpop.f32.mrf.mxu0
  %v3700 = vadd.f32 0.0, %v3699
  %v3701 = vpop.f32.mrf.mxu0
  %v3702 = vadd.f32 0.0, %v3701
  %3703 = vmatprep.mubr.bf16.mxu0 %v679
  %3704 = vmatmul.mubr.bf16.gmra.mxu0 %v678
  %v3705 = vpop.f32.mrf.mxu0
  %v3706 = vadd.f32 0.0, %v3705
  %v3707 = vpop.f32.mrf.mxu0
  %v3708 = vadd.f32 0.0, %v3707
  %v3709 = vpop.f32.mrf.mxu0
  %v3710 = vadd.f32 0.0, %v3709
  %v3711 = vpop.f32.mrf.mxu0
  %v3712 = vadd.f32 0.0, %v3711
  %3713 = vmatprep.mubr.bf16.mxu0 %v686
  %3714 = vmatmul.mubr.bf16.gmra.mxu0 %v685
  %v3715 = vpop.f32.mrf.mxu0
  %v3716 = vadd.f32 0.0, %v3715
  %v3717 = vpop.f32.mrf.mxu0
  %v3718 = vadd.f32 0.0, %v3717
  %v3719 = vpop.f32.mrf.mxu0
  %v3720 = vadd.f32 0.0, %v3719
  %v3721 = vpop.f32.mrf.mxu0
  %v3722 = vadd.f32 0.0, %v3721
  %3723 = vmatprep.mubr.bf16.mxu0 %v693
  %3724 = vmatmul.mubr.bf16.gmra.mxu0 %v692
  %v3725 = vpop.f32.mrf.mxu0
  %v3726 = vadd.f32 0.0, %v3725
  %v3727 = vpop.f32.mrf.mxu0
  %v3728 = vadd.f32 0.0, %v3727
  %v3729 = vpop.f32.mrf.mxu0
  %v3730 = vadd.f32 0.0, %v3729
  %v3731 = vpop.f32.mrf.mxu0
  %v3732 = vadd.f32 0.0, %v3731
  %3733 = vmatprep.mubr.bf16.mxu0 %v700
  %3734 = vmatmul.mubr.bf16.gmra.mxu0 %v699
  %v3735 = vpop.f32.mrf.mxu0
  %v3736 = vadd.f32 0.0, %v3735
  %v3737 = vpop.f32.mrf.mxu0
  %v3738 = vadd.f32 0.0, %v3737
  %v3739 = vpop.f32.mrf.mxu0
  %v3740 = vadd.f32 0.0, %v3739
  %v3741 = vpop.f32.mrf.mxu0
  %v3742 = vadd.f32 0.0, %v3741
  %3743 = vdwg.mxu0
  %3744 = vmatprep.subr.bf16.mxu0 %v1585
  %3745 = vmatpush1.bf16.msra.mxu0 %v1584
  %3746 = vmatprep.subr.bf16.mxu0 %v1581
  %3747 = vmatpush1.bf16.msra.mxu0 %v1580
  %3748 = vmatprep.subr.bf16.mxu0 %v1577
  %3749 = vmatpush1.bf16.msra.mxu0 %v1576
  %3750 = vmatprep.subr.bf16.mxu0 %v1573
  %3751 = vmatpush1.bf16.msra.mxu0 %v1572
  %3752 = vmatprep.subr.bf16.mxu0 %v1569
  %3753 = vmatpush1.bf16.msra.mxu0 %v1568
  %3754 = vmatprep.subr.bf16.mxu0 %v1565
  %3755 = vmatpush1.bf16.msra.mxu0 %v1564
  %3756 = vmatprep.subr.bf16.mxu0 %v1561
  %3757 = vmatpush1.bf16.msra.mxu0 %v1560
  %3758 = vmatprep.subr.bf16.mxu0 %v1557
  %3759 = vmatpush1.bf16.msra.mxu0 %v1556
  %3760 = vmatprep.subr.bf16.mxu0 %v1617
  %3761 = vmatpush2.bf16.msra.mxu0 %v1616
  %3762 = vmatprep.subr.bf16.mxu0 %v1613
  %3763 = vmatpush2.bf16.msra.mxu0 %v1612
  %3764 = vmatprep.subr.bf16.mxu0 %v1609
  %3765 = vmatpush2.bf16.msra.mxu0 %v1608
  %3766 = vmatprep.subr.bf16.mxu0 %v1605
  %3767 = vmatpush2.bf16.msra.mxu0 %v1604
  %3768 = vmatprep.subr.bf16.mxu0 %v1601
  %3769 = vmatpush2.bf16.msra.mxu0 %v1600
  %3770 = vmatprep.subr.bf16.mxu0 %v1597
  %3771 = vmatpush2.bf16.msra.mxu0 %v1596
  %3772 = vmatprep.subr.bf16.mxu0 %v1593
  %3773 = vmatpush2.bf16.msra.mxu0 %v1592
  %3774 = vmatprep.subr.bf16.mxu0 %v1589
  %3775 = vmatpush2.bf16.msra.mxu0 %v1588
  %3776 = vmatprep.mubr.bf16.mxu0 %v485
  %3777 = vmatmul.mubr.bf16.gmra.mxu0 %v484
  %v3778 = vpop.f32.mrf.mxu0
  %v3779 = vadd.f32 %v3426, %v3778
  %v3780 = vpop.f32.mrf.mxu0
  %v3781 = vadd.f32 %v3428, %v3780
  %v3782 = vpop.f32.mrf.mxu0
  %v3783 = vadd.f32 %v3430, %v3782
  %v3784 = vpop.f32.mrf.mxu0
  %v3785 = vadd.f32 %v3432, %v3784
  %3786 = vmatprep.mubr.bf16.mxu0 %v492
  %3787 = vmatmul.mubr.bf16.gmra.mxu0 %v491
  %v3788 = vpop.f32.mrf.mxu0
  %v3789 = vadd.f32 %v3436, %v3788
  %v3790 = vpop.f32.mrf.mxu0
  %v3791 = vadd.f32 %v3438, %v3790
  %v3792 = vpop.f32.mrf.mxu0
  %v3793 = vadd.f32 %v3440, %v3792
  %v3794 = vpop.f32.mrf.mxu0
  %v3795 = vadd.f32 %v3442, %v3794
  %3796 = vmatprep.mubr.bf16.mxu0 %v499
  %3797 = vmatmul.mubr.bf16.gmra.mxu0 %v498
  %v3798 = vpop.f32.mrf.mxu0
  %v3799 = vadd.f32 %v3446, %v3798
  %v3800 = vpop.f32.mrf.mxu0
  %v3801 = vadd.f32 %v3448, %v3800
  %v3802 = vpop.f32.mrf.mxu0
  %v3803 = vadd.f32 %v3450, %v3802
  %v3804 = vpop.f32.mrf.mxu0
  %v3805 = vadd.f32 %v3452, %v3804
  %3806 = vmatprep.mubr.bf16.mxu0 %v506
  %3807 = vmatmul.mubr.bf16.gmra.mxu0 %v505
  %v3808 = vpop.f32.mrf.mxu0
  %v3809 = vadd.f32 %v3456, %v3808
  %v3810 = vpop.f32.mrf.mxu0
  %v3811 = vadd.f32 %v3458, %v3810
  %v3812 = vpop.f32.mrf.mxu0
  %v3813 = vadd.f32 %v3460, %v3812
  %v3814 = vpop.f32.mrf.mxu0
  %v3815 = vadd.f32 %v3462, %v3814
  %3816 = vmatprep.mubr.bf16.mxu0 %v513
  %3817 = vmatmul.mubr.bf16.gmra.mxu0 %v512
  %v3818 = vpop.f32.mrf.mxu0
  %v3819 = vadd.f32 %v3466, %v3818
  %v3820 = vpop.f32.mrf.mxu0
  %v3821 = vadd.f32 %v3468, %v3820
  %v3822 = vpop.f32.mrf.mxu0
  %v3823 = vadd.f32 %v3470, %v3822
  %v3824 = vpop.f32.mrf.mxu0
  %v3825 = vadd.f32 %v3472, %v3824
  %3826 = vmatprep.mubr.bf16.mxu0 %v520
  %3827 = vmatmul.mubr.bf16.gmra.mxu0 %v519
  %v3828 = vpop.f32.mrf.mxu0
  %v3829 = vadd.f32 %v3476, %v3828
  %v3830 = vpop.f32.mrf.mxu0
  %v3831 = vadd.f32 %v3478, %v3830
  %v3832 = vpop.f32.mrf.mxu0
  %v3833 = vadd.f32 %v3480, %v3832
  %v3834 = vpop.f32.mrf.mxu0
  %v3835 = vadd.f32 %v3482, %v3834
  %3836 = vmatprep.mubr.bf16.mxu0 %v527
  %3837 = vmatmul.mubr.bf16.gmra.mxu0 %v526
  %v3838 = vpop.f32.mrf.mxu0
  %v3839 = vadd.f32 %v3486, %v3838
  %v3840 = vpop.f32.mrf.mxu0
  %v3841 = vadd.f32 %v3488, %v3840
  %v3842 = vpop.f32.mrf.mxu0
  %v3843 = vadd.f32 %v3490, %v3842
  %v3844 = vpop.f32.mrf.mxu0
  %v3845 = vadd.f32 %v3492, %v3844
  %3846 = vmatprep.mubr.bf16.mxu0 %v534
  %3847 = vmatmul.mubr.bf16.gmra.mxu0 %v533
  %v3848 = vpop.f32.mrf.mxu0
  %v3849 = vadd.f32 %v3496, %v3848
  %v3850 = vpop.f32.mrf.mxu0
  %v3851 = vadd.f32 %v3498, %v3850
  %v3852 = vpop.f32.mrf.mxu0
  %v3853 = vadd.f32 %v3500, %v3852
  %v3854 = vpop.f32.mrf.mxu0
  %v3855 = vadd.f32 %v3502, %v3854
  %3856 = vmatprep.mubr.bf16.mxu0 %v541
  %3857 = vmatmul.mubr.bf16.gmra.mxu0 %v540
  %v3858 = vpop.f32.mrf.mxu0
  %v3859 = vadd.f32 %v3506, %v3858
  %v3860 = vpop.f32.mrf.mxu0
  %v3861 = vadd.f32 %v3508, %v3860
  %v3862 = vpop.f32.mrf.mxu0
  %v3863 = vadd.f32 %v3510, %v3862
  %v3864 = vpop.f32.mrf.mxu0
  %v3865 = vadd.f32 %v3512, %v3864
  %3866 = vmatprep.mubr.bf16.mxu0 %v548
  %3867 = vmatmul.mubr.bf16.gmra.mxu0 %v547
  %v3868 = vpop.f32.mrf.mxu0
  %v3869 = vadd.f32 %v3516, %v3868
  %v3870 = vpop.f32.mrf.mxu0
  %v3871 = vadd.f32 %v3518, %v3870
  %v3872 = vpop.f32.mrf.mxu0
  %v3873 = vadd.f32 %v3520, %v3872
  %v3874 = vpop.f32.mrf.mxu0
  %v3875 = vadd.f32 %v3522, %v3874
  %3876 = vmatprep.mubr.bf16.mxu0 %v555
  %3877 = vmatmul.mubr.bf16.gmra.mxu0 %v554
  %v3878 = vpop.f32.mrf.mxu0
  %v3879 = vadd.f32 %v3526, %v3878
  %v3880 = vpop.f32.mrf.mxu0
  %v3881 = vadd.f32 %v3528, %v3880
  %v3882 = vpop.f32.mrf.mxu0
  %v3883 = vadd.f32 %v3530, %v3882
  %v3884 = vpop.f32.mrf.mxu0
  %v3885 = vadd.f32 %v3532, %v3884
  %3886 = vmatprep.mubr.bf16.mxu0 %v562
  %3887 = vmatmul.mubr.bf16.gmra.mxu0 %v561
  %v3888 = vpop.f32.mrf.mxu0
  %v3889 = vadd.f32 %v3536, %v3888
  %v3890 = vpop.f32.mrf.mxu0
  %v3891 = vadd.f32 %v3538, %v3890
  %v3892 = vpop.f32.mrf.mxu0
  %v3893 = vadd.f32 %v3540, %v3892
  %v3894 = vpop.f32.mrf.mxu0
  %v3895 = vadd.f32 %v3542, %v3894
  %3896 = vmatprep.mubr.bf16.mxu0 %v569
  %3897 = vmatmul.mubr.bf16.gmra.mxu0 %v568
  %v3898 = vpop.f32.mrf.mxu0
  %v3899 = vadd.f32 %v3546, %v3898
  %v3900 = vpop.f32.mrf.mxu0
  %v3901 = vadd.f32 %v3548, %v3900
  %v3902 = vpop.f32.mrf.mxu0
  %v3903 = vadd.f32 %v3550, %v3902
  %v3904 = vpop.f32.mrf.mxu0
  %v3905 = vadd.f32 %v3552, %v3904
  %3906 = vmatprep.mubr.bf16.mxu0 %v576
  %3907 = vmatmul.mubr.bf16.gmra.mxu0 %v575
  %v3908 = vpop.f32.mrf.mxu0
  %v3909 = vadd.f32 %v3556, %v3908
  %v3910 = vpop.f32.mrf.mxu0
  %v3911 = vadd.f32 %v3558, %v3910
  %v3912 = vpop.f32.mrf.mxu0
  %v3913 = vadd.f32 %v3560, %v3912
  %v3914 = vpop.f32.mrf.mxu0
  %v3915 = vadd.f32 %v3562, %v3914
  %3916 = vmatprep.mubr.bf16.mxu0 %v583
  %3917 = vmatmul.mubr.bf16.gmra.mxu0 %v582
  %v3918 = vpop.f32.mrf.mxu0
  %v3919 = vadd.f32 %v3566, %v3918
  %v3920 = vpop.f32.mrf.mxu0
  %v3921 = vadd.f32 %v3568, %v3920
  %v3922 = vpop.f32.mrf.mxu0
  %v3923 = vadd.f32 %v3570, %v3922
  %v3924 = vpop.f32.mrf.mxu0
  %v3925 = vadd.f32 %v3572, %v3924
  %3926 = vmatprep.mubr.bf16.mxu0 %v590
  %3927 = vmatmul.mubr.bf16.gmra.mxu0 %v589
  %v3928 = vpop.f32.mrf.mxu0
  %v3929 = vadd.f32 %v3576, %v3928
  %v3930 = vpop.f32.mrf.mxu0
  %v3931 = vadd.f32 %v3578, %v3930
  %v3932 = vpop.f32.mrf.mxu0
  %v3933 = vadd.f32 %v3580, %v3932
  %v3934 = vpop.f32.mrf.mxu0
  %v3935 = vadd.f32 %v3582, %v3934
  %3936 = vmatprep.mubr.bf16.mxu0 %v597
  %3937 = vmatmul.mubr.bf16.gmra.mxu0 %v596
  %v3938 = vpop.f32.mrf.mxu0
  %v3939 = vadd.f32 %v3586, %v3938
  %v3940 = vpop.f32.mrf.mxu0
  %v3941 = vadd.f32 %v3588, %v3940
  %v3942 = vpop.f32.mrf.mxu0
  %v3943 = vadd.f32 %v3590, %v3942
  %v3944 = vpop.f32.mrf.mxu0
  %v3945 = vadd.f32 %v3592, %v3944
  %3946 = vmatprep.mubr.bf16.mxu0 %v604
  %3947 = vmatmul.mubr.bf16.gmra.mxu0 %v603
  %v3948 = vpop.f32.mrf.mxu0
  %v3949 = vadd.f32 %v3596, %v3948
  %v3950 = vpop.f32.mrf.mxu0
  %v3951 = vadd.f32 %v3598, %v3950
  %v3952 = vpop.f32.mrf.mxu0
  %v3953 = vadd.f32 %v3600, %v3952
  %v3954 = vpop.f32.mrf.mxu0
  %v3955 = vadd.f32 %v3602, %v3954
  %3956 = vmatprep.mubr.bf16.mxu0 %v611
  %3957 = vmatmul.mubr.bf16.gmra.mxu0 %v610
  %v3958 = vpop.f32.mrf.mxu0
  %v3959 = vadd.f32 %v3606, %v3958
  %v3960 = vpop.f32.mrf.mxu0
  %v3961 = vadd.f32 %v3608, %v3960
  %v3962 = vpop.f32.mrf.mxu0
  %v3963 = vadd.f32 %v3610, %v3962
  %v3964 = vpop.f32.mrf.mxu0
  %v3965 = vadd.f32 %v3612, %v3964
  %3966 = vmatprep.mubr.bf16.mxu0 %v618
  %3967 = vmatmul.mubr.bf16.gmra.mxu0 %v617
  %v3968 = vpop.f32.mrf.mxu0
  %v3969 = vadd.f32 %v3616, %v3968
  %v3970 = vpop.f32.mrf.mxu0
  %v3971 = vadd.f32 %v3618, %v3970
  %v3972 = vpop.f32.mrf.mxu0
  %v3973 = vadd.f32 %v3620, %v3972
  %v3974 = vpop.f32.mrf.mxu0
  %v3975 = vadd.f32 %v3622, %v3974
  %3976 = vmatprep.mubr.bf16.mxu0 %v625
  %3977 = vmatmul.mubr.bf16.gmra.mxu0 %v624
  %v3978 = vpop.f32.mrf.mxu0
  %v3979 = vadd.f32 %v3626, %v3978
  %v3980 = vpop.f32.mrf.mxu0
  %v3981 = vadd.f32 %v3628, %v3980
  %v3982 = vpop.f32.mrf.mxu0
  %v3983 = vadd.f32 %v3630, %v3982
  %v3984 = vpop.f32.mrf.mxu0
  %v3985 = vadd.f32 %v3632, %v3984
  %3986 = vmatprep.mubr.bf16.mxu0 %v632
  %3987 = vmatmul.mubr.bf16.gmra.mxu0 %v631
  %v3988 = vpop.f32.mrf.mxu0
  %v3989 = vadd.f32 %v3636, %v3988
  %v3990 = vpop.f32.mrf.mxu0
  %v3991 = vadd.f32 %v3638, %v3990
  %v3992 = vpop.f32.mrf.mxu0
  %v3993 = vadd.f32 %v3640, %v3992
  %v3994 = vpop.f32.mrf.mxu0
  %v3995 = vadd.f32 %v3642, %v3994
  %3996 = vmatprep.mubr.bf16.mxu0 %v639
  %3997 = vmatmul.mubr.bf16.gmra.mxu0 %v638
  %v3998 = vpop.f32.mrf.mxu0
  %v3999 = vadd.f32 %v3646, %v3998
  %v4000 = vpop.f32.mrf.mxu0
  %v4001 = vadd.f32 %v3648, %v4000
  %v4002 = vpop.f32.mrf.mxu0
  %v4003 = vadd.f32 %v3650, %v4002
  %v4004 = vpop.f32.mrf.mxu0
  %v4005 = vadd.f32 %v3652, %v4004
  %4006 = vmatprep.mubr.bf16.mxu0 %v646
  %4007 = vmatmul.mubr.bf16.gmra.mxu0 %v645
  %v4008 = vpop.f32.mrf.mxu0
  %v4009 = vadd.f32 %v3656, %v4008
  %v4010 = vpop.f32.mrf.mxu0
  %v4011 = vadd.f32 %v3658, %v4010
  %v4012 = vpop.f32.mrf.mxu0
  %v4013 = vadd.f32 %v3660, %v4012
  %v4014 = vpop.f32.mrf.mxu0
  %v4015 = vadd.f32 %v3662, %v4014
  %4016 = vmatprep.mubr.bf16.mxu0 %v653
  %4017 = vmatmul.mubr.bf16.gmra.mxu0 %v652
  %v4018 = vpop.f32.mrf.mxu0
  %v4019 = vadd.f32 %v3666, %v4018
  %v4020 = vpop.f32.mrf.mxu0
  %v4021 = vadd.f32 %v3668, %v4020
  %v4022 = vpop.f32.mrf.mxu0
  %v4023 = vadd.f32 %v3670, %v4022
  %v4024 = vpop.f32.mrf.mxu0
  %v4025 = vadd.f32 %v3672, %v4024
  %4026 = vmatprep.mubr.bf16.mxu0 %v660
  %4027 = vmatmul.mubr.bf16.gmra.mxu0 %v659
  %v4028 = vpop.f32.mrf.mxu0
  %v4029 = vadd.f32 %v3676, %v4028
  %v4030 = vpop.f32.mrf.mxu0
  %v4031 = vadd.f32 %v3678, %v4030
  %v4032 = vpop.f32.mrf.mxu0
  %v4033 = vadd.f32 %v3680, %v4032
  %v4034 = vpop.f32.mrf.mxu0
  %v4035 = vadd.f32 %v3682, %v4034
  %4036 = vmatprep.mubr.bf16.mxu0 %v667
  %4037 = vmatmul.mubr.bf16.gmra.mxu0 %v666
  %v4038 = vpop.f32.mrf.mxu0
  %v4039 = vadd.f32 %v3686, %v4038
  %v4040 = vpop.f32.mrf.mxu0
  %v4041 = vadd.f32 %v3688, %v4040
  %v4042 = vpop.f32.mrf.mxu0
  %v4043 = vadd.f32 %v3690, %v4042
  %v4044 = vpop.f32.mrf.mxu0
  %v4045 = vadd.f32 %v3692, %v4044
  %4046 = vmatprep.mubr.bf16.mxu0 %v674
  %4047 = vmatmul.mubr.bf16.gmra.mxu0 %v673
  %v4048 = vpop.f32.mrf.mxu0
  %v4049 = vadd.f32 %v3696, %v4048
  %v4050 = vpop.f32.mrf.mxu0
  %v4051 = vadd.f32 %v3698, %v4050
  %v4052 = vpop.f32.mrf.mxu0
  %v4053 = vadd.f32 %v3700, %v4052
  %v4054 = vpop.f32.mrf.mxu0
  %v4055 = vadd.f32 %v3702, %v4054
  %4056 = vmatprep.mubr.bf16.mxu0 %v681
  %4057 = vmatmul.mubr.bf16.gmra.mxu0 %v680
  %v4058 = vpop.f32.mrf.mxu0
  %v4059 = vadd.f32 %v3706, %v4058
  %v4060 = vpop.f32.mrf.mxu0
  %v4061 = vadd.f32 %v3708, %v4060
  %v4062 = vpop.f32.mrf.mxu0
  %v4063 = vadd.f32 %v3710, %v4062
  %v4064 = vpop.f32.mrf.mxu0
  %v4065 = vadd.f32 %v3712, %v4064
  %4066 = vmatprep.mubr.bf16.mxu0 %v688
  %4067 = vmatmul.mubr.bf16.gmra.mxu0 %v687
  %v4068 = vpop.f32.mrf.mxu0
  %v4069 = vadd.f32 %v3716, %v4068
  %v4070 = vpop.f32.mrf.mxu0
  %v4071 = vadd.f32 %v3718, %v4070
  %v4072 = vpop.f32.mrf.mxu0
  %v4073 = vadd.f32 %v3720, %v4072
  %v4074 = vpop.f32.mrf.mxu0
  %v4075 = vadd.f32 %v3722, %v4074
  %4076 = vmatprep.mubr.bf16.mxu0 %v695
  %4077 = vmatmul.mubr.bf16.gmra.mxu0 %v694
  %v4078 = vpop.f32.mrf.mxu0
  %v4079 = vadd.f32 %v3726, %v4078
  %v4080 = vpop.f32.mrf.mxu0
  %v4081 = vadd.f32 %v3728, %v4080
  %v4082 = vpop.f32.mrf.mxu0
  %v4083 = vadd.f32 %v3730, %v4082
  %v4084 = vpop.f32.mrf.mxu0
  %v4085 = vadd.f32 %v3732, %v4084
  %4086 = vmatprep.mubr.bf16.mxu0 %v702
  %4087 = vmatmul.mubr.bf16.gmra.mxu0 %v701
  %v4088 = vpop.f32.mrf.mxu0
  %v4089 = vadd.f32 %v3736, %v4088
  %v4090 = vpop.f32.mrf.mxu0
  %v4091 = vadd.f32 %v3738, %v4090
  %v4092 = vpop.f32.mrf.mxu0
  %v4093 = vadd.f32 %v3740, %v4092
  %v4094 = vpop.f32.mrf.mxu0
  %v4095 = vadd.f32 %v3742, %v4094
  %4096 = vdwg.mxu0
  %4097 = vmatprep.subr.bf16.mxu0 %v1649
  %4098 = vmatpush1.bf16.msra.mxu0 %v1648
  %4099 = vmatprep.subr.bf16.mxu0 %v1645
  %4100 = vmatpush1.bf16.msra.mxu0 %v1644
  %4101 = vmatprep.subr.bf16.mxu0 %v1641
  %4102 = vmatpush1.bf16.msra.mxu0 %v1640
  %4103 = vmatprep.subr.bf16.mxu0 %v1637
  %4104 = vmatpush1.bf16.msra.mxu0 %v1636
  %4105 = vmatprep.subr.bf16.mxu0 %v1633
  %4106 = vmatpush1.bf16.msra.mxu0 %v1632
  %4107 = vmatprep.subr.bf16.mxu0 %v1629
  %4108 = vmatpush1.bf16.msra.mxu0 %v1628
  %4109 = vmatprep.subr.bf16.mxu0 %v1625
  %4110 = vmatpush1.bf16.msra.mxu0 %v1624
  %4111 = vmatprep.subr.bf16.mxu0 %v1621
  %4112 = vmatpush1.bf16.msra.mxu0 %v1620
  %4113 = vmatprep.subr.bf16.mxu0 %v1681
  %4114 = vmatpush2.bf16.msra.mxu0 %v1680
  %4115 = vmatprep.subr.bf16.mxu0 %v1677
  %4116 = vmatpush2.bf16.msra.mxu0 %v1676
  %4117 = vmatprep.subr.bf16.mxu0 %v1673
  %4118 = vmatpush2.bf16.msra.mxu0 %v1672
  %4119 = vmatprep.subr.bf16.mxu0 %v1669
  %4120 = vmatpush2.bf16.msra.mxu0 %v1668
  %4121 = vmatprep.subr.bf16.mxu0 %v1665
  %4122 = vmatpush2.bf16.msra.mxu0 %v1664
  %4123 = vmatprep.subr.bf16.mxu0 %v1661
  %4124 = vmatpush2.bf16.msra.mxu0 %v1660
  %4125 = vmatprep.subr.bf16.mxu0 %v1657
  %4126 = vmatpush2.bf16.msra.mxu0 %v1656
  %4127 = vmatprep.subr.bf16.mxu0 %v1653
  %4128 = vmatpush2.bf16.msra.mxu0 %v1652
  %4129 = vmatprep.mubr.bf16.mxu0 %v487
  %4130 = vmatmul.mubr.bf16.gmra.mxu0 %v486
  %v4131 = vpop.f32.mrf.mxu0
  %v4132 = vadd.f32 %v3779, %v4131
  %v4133 = vpop.f32.mrf.mxu0
  %v4134 = vadd.f32 %v3781, %v4133
  %v4135 = vpop.f32.mrf.mxu0
  %v4136 = vadd.f32 %v3783, %v4135
  %v4137 = vpop.f32.mrf.mxu0
  %v4138 = vadd.f32 %v3785, %v4137
  %4139 = vmatprep.mubr.bf16.mxu0 %v494
  %4140 = vmatmul.mubr.bf16.gmra.mxu0 %v493
  %v4141 = vpop.f32.mrf.mxu0
  %v4142 = vadd.f32 %v3789, %v4141
  %v4143 = vpop.f32.mrf.mxu0
  %v4144 = vadd.f32 %v3791, %v4143
  %v4145 = vpop.f32.mrf.mxu0
  %v4146 = vadd.f32 %v3793, %v4145
  %v4147 = vpop.f32.mrf.mxu0
  %v4148 = vadd.f32 %v3795, %v4147
  %4149 = vmatprep.mubr.bf16.mxu0 %v501
  %4150 = vmatmul.mubr.bf16.gmra.mxu0 %v500
  %v4151 = vpop.f32.mrf.mxu0
  %v4152 = vadd.f32 %v3799, %v4151
  %v4153 = vpop.f32.mrf.mxu0
  %v4154 = vadd.f32 %v3801, %v4153
  %v4155 = vpop.f32.mrf.mxu0
  %v4156 = vadd.f32 %v3803, %v4155
  %v4157 = vpop.f32.mrf.mxu0
  %v4158 = vadd.f32 %v3805, %v4157
  %4159 = vmatprep.mubr.bf16.mxu0 %v508
  %4160 = vmatmul.mubr.bf16.gmra.mxu0 %v507
  %v4161 = vpop.f32.mrf.mxu0
  %v4162 = vadd.f32 %v3809, %v4161
  %v4163 = vpop.f32.mrf.mxu0
  %v4164 = vadd.f32 %v3811, %v4163
  %v4165 = vpop.f32.mrf.mxu0
  %v4166 = vadd.f32 %v3813, %v4165
  %v4167 = vpop.f32.mrf.mxu0
  %v4168 = vadd.f32 %v3815, %v4167
  %4169 = vmatprep.mubr.bf16.mxu0 %v515
  %4170 = vmatmul.mubr.bf16.gmra.mxu0 %v514
  %v4171 = vpop.f32.mrf.mxu0
  %v4172 = vadd.f32 %v3819, %v4171
  %v4173 = vpop.f32.mrf.mxu0
  %v4174 = vadd.f32 %v3821, %v4173
  %v4175 = vpop.f32.mrf.mxu0
  %v4176 = vadd.f32 %v3823, %v4175
  %v4177 = vpop.f32.mrf.mxu0
  %v4178 = vadd.f32 %v3825, %v4177
  %4179 = vmatprep.mubr.bf16.mxu0 %v522
  %4180 = vmatmul.mubr.bf16.gmra.mxu0 %v521
  %v4181 = vpop.f32.mrf.mxu0
  %v4182 = vadd.f32 %v3829, %v4181
  %v4183 = vpop.f32.mrf.mxu0
  %v4184 = vadd.f32 %v3831, %v4183
  %v4185 = vpop.f32.mrf.mxu0
  %v4186 = vadd.f32 %v3833, %v4185
  %v4187 = vpop.f32.mrf.mxu0
  %v4188 = vadd.f32 %v3835, %v4187
  %4189 = vmatprep.mubr.bf16.mxu0 %v529
  %4190 = vmatmul.mubr.bf16.gmra.mxu0 %v528
  %v4191 = vpop.f32.mrf.mxu0
  %v4192 = vadd.f32 %v3839, %v4191
  %v4193 = vpop.f32.mrf.mxu0
  %v4194 = vadd.f32 %v3841, %v4193
  %v4195 = vpop.f32.mrf.mxu0
  %v4196 = vadd.f32 %v3843, %v4195
  %v4197 = vpop.f32.mrf.mxu0
  %v4198 = vadd.f32 %v3845, %v4197
  %4199 = vmatprep.mubr.bf16.mxu0 %v536
  %4200 = vmatmul.mubr.bf16.gmra.mxu0 %v535
  %v4201 = vpop.f32.mrf.mxu0
  %v4202 = vadd.f32 %v3849, %v4201
  %v4203 = vpop.f32.mrf.mxu0
  %v4204 = vadd.f32 %v3851, %v4203
  %v4205 = vpop.f32.mrf.mxu0
  %v4206 = vadd.f32 %v3853, %v4205
  %v4207 = vpop.f32.mrf.mxu0
  %v4208 = vadd.f32 %v3855, %v4207
  %4209 = vmatprep.mubr.bf16.mxu0 %v543
  %4210 = vmatmul.mubr.bf16.gmra.mxu0 %v542
  %v4211 = vpop.f32.mrf.mxu0
  %v4212 = vadd.f32 %v3859, %v4211
  %v4213 = vpop.f32.mrf.mxu0
  %v4214 = vadd.f32 %v3861, %v4213
  %v4215 = vpop.f32.mrf.mxu0
  %v4216 = vadd.f32 %v3863, %v4215
  %v4217 = vpop.f32.mrf.mxu0
  %v4218 = vadd.f32 %v3865, %v4217
  %4219 = vmatprep.mubr.bf16.mxu0 %v550
  %4220 = vmatmul.mubr.bf16.gmra.mxu0 %v549
  %v4221 = vpop.f32.mrf.mxu0
  %v4222 = vadd.f32 %v3869, %v4221
  %v4223 = vpop.f32.mrf.mxu0
  %v4224 = vadd.f32 %v3871, %v4223
  %v4225 = vpop.f32.mrf.mxu0
  %v4226 = vadd.f32 %v3873, %v4225
  %v4227 = vpop.f32.mrf.mxu0
  %v4228 = vadd.f32 %v3875, %v4227
  %4229 = vmatprep.mubr.bf16.mxu0 %v557
  %4230 = vmatmul.mubr.bf16.gmra.mxu0 %v556
  %v4231 = vpop.f32.mrf.mxu0
  %v4232 = vadd.f32 %v3879, %v4231
  %v4233 = vpop.f32.mrf.mxu0
  %v4234 = vadd.f32 %v3881, %v4233
  %v4235 = vpop.f32.mrf.mxu0
  %v4236 = vadd.f32 %v3883, %v4235
  %v4237 = vpop.f32.mrf.mxu0
  %v4238 = vadd.f32 %v3885, %v4237
  %4239 = vmatprep.mubr.bf16.mxu0 %v564
  %4240 = vmatmul.mubr.bf16.gmra.mxu0 %v563
  %v4241 = vpop.f32.mrf.mxu0
  %v4242 = vadd.f32 %v3889, %v4241
  %v4243 = vpop.f32.mrf.mxu0
  %v4244 = vadd.f32 %v3891, %v4243
  %v4245 = vpop.f32.mrf.mxu0
  %v4246 = vadd.f32 %v3893, %v4245
  %v4247 = vpop.f32.mrf.mxu0
  %v4248 = vadd.f32 %v3895, %v4247
  %4249 = vmatprep.mubr.bf16.mxu0 %v571
  %4250 = vmatmul.mubr.bf16.gmra.mxu0 %v570
  %v4251 = vpop.f32.mrf.mxu0
  %v4252 = vadd.f32 %v3899, %v4251
  %v4253 = vpop.f32.mrf.mxu0
  %v4254 = vadd.f32 %v3901, %v4253
  %v4255 = vpop.f32.mrf.mxu0
  %v4256 = vadd.f32 %v3903, %v4255
  %v4257 = vpop.f32.mrf.mxu0
  %v4258 = vadd.f32 %v3905, %v4257
  %4259 = vmatprep.mubr.bf16.mxu0 %v578
  %4260 = vmatmul.mubr.bf16.gmra.mxu0 %v577
  %v4261 = vpop.f32.mrf.mxu0
  %v4262 = vadd.f32 %v3909, %v4261
  %v4263 = vpop.f32.mrf.mxu0
  %v4264 = vadd.f32 %v3911, %v4263
  %v4265 = vpop.f32.mrf.mxu0
  %v4266 = vadd.f32 %v3913, %v4265
  %v4267 = vpop.f32.mrf.mxu0
  %v4268 = vadd.f32 %v3915, %v4267
  %4269 = vmatprep.mubr.bf16.mxu0 %v585
  %4270 = vmatmul.mubr.bf16.gmra.mxu0 %v584
  %v4271 = vpop.f32.mrf.mxu0
  %v4272 = vadd.f32 %v3919, %v4271
  %v4273 = vpop.f32.mrf.mxu0
  %v4274 = vadd.f32 %v3921, %v4273
  %v4275 = vpop.f32.mrf.mxu0
  %v4276 = vadd.f32 %v3923, %v4275
  %v4277 = vpop.f32.mrf.mxu0
  %v4278 = vadd.f32 %v3925, %v4277
  %4279 = vmatprep.mubr.bf16.mxu0 %v592
  %4280 = vmatmul.mubr.bf16.gmra.mxu0 %v591
  %v4281 = vpop.f32.mrf.mxu0
  %v4282 = vadd.f32 %v3929, %v4281
  %v4283 = vpop.f32.mrf.mxu0
  %v4284 = vadd.f32 %v3931, %v4283
  %v4285 = vpop.f32.mrf.mxu0
  %v4286 = vadd.f32 %v3933, %v4285
  %v4287 = vpop.f32.mrf.mxu0
  %v4288 = vadd.f32 %v3935, %v4287
  %4289 = vmatprep.mubr.bf16.mxu0 %v599
  %4290 = vmatmul.mubr.bf16.gmra.mxu0 %v598
  %v4291 = vpop.f32.mrf.mxu0
  %v4292 = vadd.f32 %v3939, %v4291
  %v4293 = vpop.f32.mrf.mxu0
  %v4294 = vadd.f32 %v3941, %v4293
  %v4295 = vpop.f32.mrf.mxu0
  %v4296 = vadd.f32 %v3943, %v4295
  %v4297 = vpop.f32.mrf.mxu0
  %v4298 = vadd.f32 %v3945, %v4297
  %4299 = vmatprep.mubr.bf16.mxu0 %v606
  %4300 = vmatmul.mubr.bf16.gmra.mxu0 %v605
  %v4301 = vpop.f32.mrf.mxu0
  %v4302 = vadd.f32 %v3949, %v4301
  %v4303 = vpop.f32.mrf.mxu0
  %v4304 = vadd.f32 %v3951, %v4303
  %v4305 = vpop.f32.mrf.mxu0
  %v4306 = vadd.f32 %v3953, %v4305
  %v4307 = vpop.f32.mrf.mxu0
  %v4308 = vadd.f32 %v3955, %v4307
  %4309 = vmatprep.mubr.bf16.mxu0 %v613
  %4310 = vmatmul.mubr.bf16.gmra.mxu0 %v612
  %v4311 = vpop.f32.mrf.mxu0
  %v4312 = vadd.f32 %v3959, %v4311
  %v4313 = vpop.f32.mrf.mxu0
  %v4314 = vadd.f32 %v3961, %v4313
  %v4315 = vpop.f32.mrf.mxu0
  %v4316 = vadd.f32 %v3963, %v4315
  %v4317 = vpop.f32.mrf.mxu0
  %v4318 = vadd.f32 %v3965, %v4317
  %4319 = vmatprep.mubr.bf16.mxu0 %v620
  %4320 = vmatmul.mubr.bf16.gmra.mxu0 %v619
  %v4321 = vpop.f32.mrf.mxu0
  %v4322 = vadd.f32 %v3969, %v4321
  %v4323 = vpop.f32.mrf.mxu0
  %v4324 = vadd.f32 %v3971, %v4323
  %v4325 = vpop.f32.mrf.mxu0
  %v4326 = vadd.f32 %v3973, %v4325
  %v4327 = vpop.f32.mrf.mxu0
  %v4328 = vadd.f32 %v3975, %v4327
  %4329 = vmatprep.mubr.bf16.mxu0 %v627
  %4330 = vmatmul.mubr.bf16.gmra.mxu0 %v626
  %v4331 = vpop.f32.mrf.mxu0
  %v4332 = vadd.f32 %v3979, %v4331
  %v4333 = vpop.f32.mrf.mxu0
  %v4334 = vadd.f32 %v3981, %v4333
  %v4335 = vpop.f32.mrf.mxu0
  %v4336 = vadd.f32 %v3983, %v4335
  %v4337 = vpop.f32.mrf.mxu0
  %v4338 = vadd.f32 %v3985, %v4337
  %4339 = vmatprep.mubr.bf16.mxu0 %v634
  %4340 = vmatmul.mubr.bf16.gmra.mxu0 %v633
  %v4341 = vpop.f32.mrf.mxu0
  %v4342 = vadd.f32 %v3989, %v4341
  %v4343 = vpop.f32.mrf.mxu0
  %v4344 = vadd.f32 %v3991, %v4343
  %v4345 = vpop.f32.mrf.mxu0
  %v4346 = vadd.f32 %v3993, %v4345
  %v4347 = vpop.f32.mrf.mxu0
  %v4348 = vadd.f32 %v3995, %v4347
  %4349 = vmatprep.mubr.bf16.mxu0 %v641
  %4350 = vmatmul.mubr.bf16.gmra.mxu0 %v640
  %v4351 = vpop.f32.mrf.mxu0
  %v4352 = vadd.f32 %v3999, %v4351
  %v4353 = vpop.f32.mrf.mxu0
  %v4354 = vadd.f32 %v4001, %v4353
  %v4355 = vpop.f32.mrf.mxu0
  %v4356 = vadd.f32 %v4003, %v4355
  %v4357 = vpop.f32.mrf.mxu0
  %v4358 = vadd.f32 %v4005, %v4357
  %4359 = vmatprep.mubr.bf16.mxu0 %v648
  %4360 = vmatmul.mubr.bf16.gmra.mxu0 %v647
  %v4361 = vpop.f32.mrf.mxu0
  %v4362 = vadd.f32 %v4009, %v4361
  %v4363 = vpop.f32.mrf.mxu0
  %v4364 = vadd.f32 %v4011, %v4363
  %v4365 = vpop.f32.mrf.mxu0
  %v4366 = vadd.f32 %v4013, %v4365
  %v4367 = vpop.f32.mrf.mxu0
  %v4368 = vadd.f32 %v4015, %v4367
  %4369 = vmatprep.mubr.bf16.mxu0 %v655
  %4370 = vmatmul.mubr.bf16.gmra.mxu0 %v654
  %v4371 = vpop.f32.mrf.mxu0
  %v4372 = vadd.f32 %v4019, %v4371
  %v4373 = vpop.f32.mrf.mxu0
  %v4374 = vadd.f32 %v4021, %v4373
  %v4375 = vpop.f32.mrf.mxu0
  %v4376 = vadd.f32 %v4023, %v4375
  %v4377 = vpop.f32.mrf.mxu0
  %v4378 = vadd.f32 %v4025, %v4377
  %4379 = vmatprep.mubr.bf16.mxu0 %v662
  %4380 = vmatmul.mubr.bf16.gmra.mxu0 %v661
  %v4381 = vpop.f32.mrf.mxu0
  %v4382 = vadd.f32 %v4029, %v4381
  %v4383 = vpop.f32.mrf.mxu0
  %v4384 = vadd.f32 %v4031, %v4383
  %v4385 = vpop.f32.mrf.mxu0
  %v4386 = vadd.f32 %v4033, %v4385
  %v4387 = vpop.f32.mrf.mxu0
  %v4388 = vadd.f32 %v4035, %v4387
  %4389 = vmatprep.mubr.bf16.mxu0 %v669
  %4390 = vmatmul.mubr.bf16.gmra.mxu0 %v668
  %v4391 = vpop.f32.mrf.mxu0
  %v4392 = vadd.f32 %v4039, %v4391
  %v4393 = vpop.f32.mrf.mxu0
  %v4394 = vadd.f32 %v4041, %v4393
  %v4395 = vpop.f32.mrf.mxu0
  %v4396 = vadd.f32 %v4043, %v4395
  %v4397 = vpop.f32.mrf.mxu0
  %v4398 = vadd.f32 %v4045, %v4397
  %4399 = vmatprep.mubr.bf16.mxu0 %v676
  %4400 = vmatmul.mubr.bf16.gmra.mxu0 %v675
  %v4401 = vpop.f32.mrf.mxu0
  %v4402 = vadd.f32 %v4049, %v4401
  %v4403 = vpop.f32.mrf.mxu0
  %v4404 = vadd.f32 %v4051, %v4403
  %v4405 = vpop.f32.mrf.mxu0
  %v4406 = vadd.f32 %v4053, %v4405
  %v4407 = vpop.f32.mrf.mxu0
  %v4408 = vadd.f32 %v4055, %v4407
  %4409 = vmatprep.mubr.bf16.mxu0 %v683
  %4410 = vmatmul.mubr.bf16.gmra.mxu0 %v682
  %v4411 = vpop.f32.mrf.mxu0
  %v4412 = vadd.f32 %v4059, %v4411
  %v4413 = vpop.f32.mrf.mxu0
  %v4414 = vadd.f32 %v4061, %v4413
  %v4415 = vpop.f32.mrf.mxu0
  %v4416 = vadd.f32 %v4063, %v4415
  %v4417 = vpop.f32.mrf.mxu0
  %v4418 = vadd.f32 %v4065, %v4417
  %4419 = vmatprep.mubr.bf16.mxu0 %v690
  %4420 = vmatmul.mubr.bf16.gmra.mxu0 %v689
  %v4421 = vpop.f32.mrf.mxu0
  %v4422 = vadd.f32 %v4069, %v4421
  %v4423 = vpop.f32.mrf.mxu0
  %v4424 = vadd.f32 %v4071, %v4423
  %v4425 = vpop.f32.mrf.mxu0
  %v4426 = vadd.f32 %v4073, %v4425
  %v4427 = vpop.f32.mrf.mxu0
  %v4428 = vadd.f32 %v4075, %v4427
  %4429 = vmatprep.mubr.bf16.mxu0 %v697
  %4430 = vmatmul.mubr.bf16.gmra.mxu0 %v696
  %v4431 = vpop.f32.mrf.mxu0
  %v4432 = vadd.f32 %v4079, %v4431
  %v4433 = vpop.f32.mrf.mxu0
  %v4434 = vadd.f32 %v4081, %v4433
  %v4435 = vpop.f32.mrf.mxu0
  %v4436 = vadd.f32 %v4083, %v4435
  %v4437 = vpop.f32.mrf.mxu0
  %v4438 = vadd.f32 %v4085, %v4437
  %4439 = vmatprep.mubr.bf16.mxu0 %v704
  %4440 = vmatmul.mubr.bf16.gmra.mxu0 %v703
  %v4441 = vpop.f32.mrf.mxu0
  %v4442 = vadd.f32 %v4089, %v4441
  %v4443 = vpop.f32.mrf.mxu0
  %v4444 = vadd.f32 %v4091, %v4443
  %v4445 = vpop.f32.mrf.mxu0
  %v4446 = vadd.f32 %v4093, %v4445
  %v4447 = vpop.f32.mrf.mxu0
  %v4448 = vadd.f32 %v4095, %v4447
  %4449 = vdwg.mxu0
  %4450 = vmatprep.subr.bf16.mxu0 0
  %4451 = vmatpush1.bf16.msra.mxu0 0
  %4452 = vmatprep.subr.bf16.mxu0 0
  %4453 = vmatpush1.bf16.msra.mxu0 0
  %4454 = vmatprep.subr.bf16.mxu0 0
  %4455 = vmatpush1.bf16.msra.mxu0 0
  %4456 = vmatprep.subr.bf16.mxu0 0
  %4457 = vmatpush1.bf16.msra.mxu0 0
  %4458 = vmatprep.subr.bf16.mxu0 0
  %4459 = vmatpush1.bf16.msra.mxu0 0
  %4460 = vmatprep.subr.bf16.mxu0 0
  %4461 = vmatpush1.bf16.msra.mxu0 0
  %4462 = vmatprep.subr.bf16.mxu0 0
  %4463 = vmatpush1.bf16.msra.mxu0 0
  %4464 = vmatprep.subr.bf16.mxu0 %v1685
  %4465 = vmatpush1.bf16.msra.mxu0 %v1684
  %4466 = vmatprep.subr.bf16.mxu0 0
  %4467 = vmatpush2.bf16.msra.mxu0 0
  %4468 = vmatprep.subr.bf16.mxu0 0
  %4469 = vmatpush2.bf16.msra.mxu0 0
  %4470 = vmatprep.subr.bf16.mxu0 0
  %4471 = vmatpush2.bf16.msra.mxu0 0
  %4472 = vmatprep.subr.bf16.mxu0 0
  %4473 = vmatpush2.bf16.msra.mxu0 0
  %4474 = vmatprep.subr.bf16.mxu0 0
  %4475 = vmatpush2.bf16.msra.mxu0 0
  %4476 = vmatprep.subr.bf16.mxu0 0
  %4477 = vmatpush2.bf16.msra.mxu0 0
  %4478 = vmatprep.subr.bf16.mxu0 0
  %4479 = vmatpush2.bf16.msra.mxu0 0
  %4480 = vmatprep.subr.bf16.mxu0 0
  %4481 = vmatpush2.bf16.msra.mxu0 0
  %4482 = vmatprep.mubr.bf16.mxu0 0
  %4483 = vmatmul.mubr.bf16.gmra.mxu0 %v1884
  %v4484 = vpop.f32.mrf.mxu0
  %v4485 = vadd.f32 %v4132, %v4484
  %v4486 = vpop.f32.mrf.mxu0
  %v4487 = vadd.f32 %v4134, %v4486
  %v4488 = vpop.f32.mrf.mxu0
  %v4489 = vadd.f32 %v4136, %v4488
  %v4490 = vpop.f32.mrf.mxu0
  %v4491 = vadd.f32 %v4138, %v4490
  %4492 = vmatprep.mubr.bf16.mxu0 0
  %4493 = vmatmul.mubr.bf16.gmra.mxu0 %v1887
  %v4494 = vpop.f32.mrf.mxu0
  %v4495 = vadd.f32 %v4142, %v4494
  %v4496 = vpop.f32.mrf.mxu0
  %v4497 = vadd.f32 %v4144, %v4496
  %v4498 = vpop.f32.mrf.mxu0
  %v4499 = vadd.f32 %v4146, %v4498
  %v4500 = vpop.f32.mrf.mxu0
  %v4501 = vadd.f32 %v4148, %v4500
  %4502 = vmatprep.mubr.bf16.mxu0 0
  %4503 = vmatmul.mubr.bf16.gmra.mxu0 %v1890
  %v4504 = vpop.f32.mrf.mxu0
  %v4505 = vadd.f32 %v4152, %v4504
  %v4506 = vpop.f32.mrf.mxu0
  %v4507 = vadd.f32 %v4154, %v4506
  %v4508 = vpop.f32.mrf.mxu0
  %v4509 = vadd.f32 %v4156, %v4508
  %v4510 = vpop.f32.mrf.mxu0
  %v4511 = vadd.f32 %v4158, %v4510
  %4512 = vmatprep.mubr.bf16.mxu0 0
  %4513 = vmatmul.mubr.bf16.gmra.mxu0 %v1893
  %v4514 = vpop.f32.mrf.mxu0
  %v4515 = vadd.f32 %v4162, %v4514
  %v4516 = vpop.f32.mrf.mxu0
  %v4517 = vadd.f32 %v4164, %v4516
  %v4518 = vpop.f32.mrf.mxu0
  %v4519 = vadd.f32 %v4166, %v4518
  %v4520 = vpop.f32.mrf.mxu0
  %v4521 = vadd.f32 %v4168, %v4520
  %4522 = vmatprep.mubr.bf16.mxu0 0
  %4523 = vmatmul.mubr.bf16.gmra.mxu0 %v1896
  %v4524 = vpop.f32.mrf.mxu0
  %v4525 = vadd.f32 %v4172, %v4524
  %v4526 = vpop.f32.mrf.mxu0
  %v4527 = vadd.f32 %v4174, %v4526
  %v4528 = vpop.f32.mrf.mxu0
  %v4529 = vadd.f32 %v4176, %v4528
  %v4530 = vpop.f32.mrf.mxu0
  %v4531 = vadd.f32 %v4178, %v4530
  %4532 = vmatprep.mubr.bf16.mxu0 0
  %4533 = vmatmul.mubr.bf16.gmra.mxu0 %v1899
  %v4534 = vpop.f32.mrf.mxu0
  %v4535 = vadd.f32 %v4182, %v4534
  %v4536 = vpop.f32.mrf.mxu0
  %v4537 = vadd.f32 %v4184, %v4536
  %v4538 = vpop.f32.mrf.mxu0
  %v4539 = vadd.f32 %v4186, %v4538
  %v4540 = vpop.f32.mrf.mxu0
  %v4541 = vadd.f32 %v4188, %v4540
  %4542 = vmatprep.mubr.bf16.mxu0 0
  %4543 = vmatmul.mubr.bf16.gmra.mxu0 %v1902
  %v4544 = vpop.f32.mrf.mxu0
  %v4545 = vadd.f32 %v4192, %v4544
  %v4546 = vpop.f32.mrf.mxu0
  %v4547 = vadd.f32 %v4194, %v4546
  %v4548 = vpop.f32.mrf.mxu0
  %v4549 = vadd.f32 %v4196, %v4548
  %v4550 = vpop.f32.mrf.mxu0
  %v4551 = vadd.f32 %v4198, %v4550
  %4552 = vmatprep.mubr.bf16.mxu0 0
  %4553 = vmatmul.mubr.bf16.gmra.mxu0 %v1905
  %v4554 = vpop.f32.mrf.mxu0
  %v4555 = vadd.f32 %v4202, %v4554
  %v4556 = vpop.f32.mrf.mxu0
  %v4557 = vadd.f32 %v4204, %v4556
  %v4558 = vpop.f32.mrf.mxu0
  %v4559 = vadd.f32 %v4206, %v4558
  %v4560 = vpop.f32.mrf.mxu0
  %v4561 = vadd.f32 %v4208, %v4560
  %4562 = vmatprep.mubr.bf16.mxu0 0
  %4563 = vmatmul.mubr.bf16.gmra.mxu0 %v1908
  %v4564 = vpop.f32.mrf.mxu0
  %v4565 = vadd.f32 %v4212, %v4564
  %v4566 = vpop.f32.mrf.mxu0
  %v4567 = vadd.f32 %v4214, %v4566
  %v4568 = vpop.f32.mrf.mxu0
  %v4569 = vadd.f32 %v4216, %v4568
  %v4570 = vpop.f32.mrf.mxu0
  %v4571 = vadd.f32 %v4218, %v4570
  %4572 = vmatprep.mubr.bf16.mxu0 0
  %4573 = vmatmul.mubr.bf16.gmra.mxu0 %v1911
  %v4574 = vpop.f32.mrf.mxu0
  %v4575 = vadd.f32 %v4222, %v4574
  %v4576 = vpop.f32.mrf.mxu0
  %v4577 = vadd.f32 %v4224, %v4576
  %v4578 = vpop.f32.mrf.mxu0
  %v4579 = vadd.f32 %v4226, %v4578
  %v4580 = vpop.f32.mrf.mxu0
  %v4581 = vadd.f32 %v4228, %v4580
  %4582 = vmatprep.mubr.bf16.mxu0 0
  %4583 = vmatmul.mubr.bf16.gmra.mxu0 %v1914
  %v4584 = vpop.f32.mrf.mxu0
  %v4585 = vadd.f32 %v4232, %v4584
  %v4586 = vpop.f32.mrf.mxu0
  %v4587 = vadd.f32 %v4234, %v4586
  %v4588 = vpop.f32.mrf.mxu0
  %v4589 = vadd.f32 %v4236, %v4588
  %v4590 = vpop.f32.mrf.mxu0
  %v4591 = vadd.f32 %v4238, %v4590
  %4592 = vmatprep.mubr.bf16.mxu0 0
  %4593 = vmatmul.mubr.bf16.gmra.mxu0 %v1917
  %v4594 = vpop.f32.mrf.mxu0
  %v4595 = vadd.f32 %v4242, %v4594
  %v4596 = vpop.f32.mrf.mxu0
  %v4597 = vadd.f32 %v4244, %v4596
  %v4598 = vpop.f32.mrf.mxu0
  %v4599 = vadd.f32 %v4246, %v4598
  %v4600 = vpop.f32.mrf.mxu0
  %v4601 = vadd.f32 %v4248, %v4600
  %4602 = vmatprep.mubr.bf16.mxu0 0
  %4603 = vmatmul.mubr.bf16.gmra.mxu0 %v1920
  %v4604 = vpop.f32.mrf.mxu0
  %v4605 = vadd.f32 %v4252, %v4604
  %v4606 = vpop.f32.mrf.mxu0
  %v4607 = vadd.f32 %v4254, %v4606
  %v4608 = vpop.f32.mrf.mxu0
  %v4609 = vadd.f32 %v4256, %v4608
  %v4610 = vpop.f32.mrf.mxu0
  %v4611 = vadd.f32 %v4258, %v4610
  %4612 = vmatprep.mubr.bf16.mxu0 0
  %4613 = vmatmul.mubr.bf16.gmra.mxu0 %v1923
  %v4614 = vpop.f32.mrf.mxu0
  %v4615 = vadd.f32 %v4262, %v4614
  %v4616 = vpop.f32.mrf.mxu0
  %v4617 = vadd.f32 %v4264, %v4616
  %v4618 = vpop.f32.mrf.mxu0
  %v4619 = vadd.f32 %v4266, %v4618
  %v4620 = vpop.f32.mrf.mxu0
  %v4621 = vadd.f32 %v4268, %v4620
  %4622 = vmatprep.mubr.bf16.mxu0 0
  %4623 = vmatmul.mubr.bf16.gmra.mxu0 %v1926
  %v4624 = vpop.f32.mrf.mxu0
  %v4625 = vadd.f32 %v4272, %v4624
  %v4626 = vpop.f32.mrf.mxu0
  %v4627 = vadd.f32 %v4274, %v4626
  %v4628 = vpop.f32.mrf.mxu0
  %v4629 = vadd.f32 %v4276, %v4628
  %v4630 = vpop.f32.mrf.mxu0
  %v4631 = vadd.f32 %v4278, %v4630
  %4632 = vmatprep.mubr.bf16.mxu0 0
  %4633 = vmatmul.mubr.bf16.gmra.mxu0 %v1929
  %v4634 = vpop.f32.mrf.mxu0
  %v4635 = vadd.f32 %v4282, %v4634
  %v4636 = vpop.f32.mrf.mxu0
  %v4637 = vadd.f32 %v4284, %v4636
  %v4638 = vpop.f32.mrf.mxu0
  %v4639 = vadd.f32 %v4286, %v4638
  %v4640 = vpop.f32.mrf.mxu0
  %v4641 = vadd.f32 %v4288, %v4640
  %4642 = vmatprep.mubr.bf16.mxu0 0
  %4643 = vmatmul.mubr.bf16.gmra.mxu0 %v1932
  %v4644 = vpop.f32.mrf.mxu0
  %v4645 = vadd.f32 %v4292, %v4644
  %v4646 = vpop.f32.mrf.mxu0
  %v4647 = vadd.f32 %v4294, %v4646
  %v4648 = vpop.f32.mrf.mxu0
  %v4649 = vadd.f32 %v4296, %v4648
  %v4650 = vpop.f32.mrf.mxu0
  %v4651 = vadd.f32 %v4298, %v4650
  %4652 = vmatprep.mubr.bf16.mxu0 0
  %4653 = vmatmul.mubr.bf16.gmra.mxu0 %v1935
  %v4654 = vpop.f32.mrf.mxu0
  %v4655 = vadd.f32 %v4302, %v4654
  %v4656 = vpop.f32.mrf.mxu0
  %v4657 = vadd.f32 %v4304, %v4656
  %v4658 = vpop.f32.mrf.mxu0
  %v4659 = vadd.f32 %v4306, %v4658
  %v4660 = vpop.f32.mrf.mxu0
  %v4661 = vadd.f32 %v4308, %v4660
  %4662 = vmatprep.mubr.bf16.mxu0 0
  %4663 = vmatmul.mubr.bf16.gmra.mxu0 %v1938
  %v4664 = vpop.f32.mrf.mxu0
  %v4665 = vadd.f32 %v4312, %v4664
  %v4666 = vpop.f32.mrf.mxu0
  %v4667 = vadd.f32 %v4314, %v4666
  %v4668 = vpop.f32.mrf.mxu0
  %v4669 = vadd.f32 %v4316, %v4668
  %v4670 = vpop.f32.mrf.mxu0
  %v4671 = vadd.f32 %v4318, %v4670
  %4672 = vmatprep.mubr.bf16.mxu0 0
  %4673 = vmatmul.mubr.bf16.gmra.mxu0 %v1941
  %v4674 = vpop.f32.mrf.mxu0
  %v4675 = vadd.f32 %v4322, %v4674
  %v4676 = vpop.f32.mrf.mxu0
  %v4677 = vadd.f32 %v4324, %v4676
  %v4678 = vpop.f32.mrf.mxu0
  %v4679 = vadd.f32 %v4326, %v4678
  %v4680 = vpop.f32.mrf.mxu0
  %v4681 = vadd.f32 %v4328, %v4680
  %4682 = vmatprep.mubr.bf16.mxu0 0
  %4683 = vmatmul.mubr.bf16.gmra.mxu0 %v1944
  %v4684 = vpop.f32.mrf.mxu0
  %v4685 = vadd.f32 %v4332, %v4684
  %v4686 = vpop.f32.mrf.mxu0
  %v4687 = vadd.f32 %v4334, %v4686
  %v4688 = vpop.f32.mrf.mxu0
  %v4689 = vadd.f32 %v4336, %v4688
  %v4690 = vpop.f32.mrf.mxu0
  %v4691 = vadd.f32 %v4338, %v4690
  %4692 = vmatprep.mubr.bf16.mxu0 0
  %4693 = vmatmul.mubr.bf16.gmra.mxu0 %v1947
  %v4694 = vpop.f32.mrf.mxu0
  %v4695 = vadd.f32 %v4342, %v4694
  %v4696 = vpop.f32.mrf.mxu0
  %v4697 = vadd.f32 %v4344, %v4696
  %v4698 = vpop.f32.mrf.mxu0
  %v4699 = vadd.f32 %v4346, %v4698
  %v4700 = vpop.f32.mrf.mxu0
  %v4701 = vadd.f32 %v4348, %v4700
  %4702 = vmatprep.mubr.bf16.mxu0 0
  %4703 = vmatmul.mubr.bf16.gmra.mxu0 %v1950
  %v4704 = vpop.f32.mrf.mxu0
  %v4705 = vadd.f32 %v4352, %v4704
  %v4706 = vpop.f32.mrf.mxu0
  %v4707 = vadd.f32 %v4354, %v4706
  %v4708 = vpop.f32.mrf.mxu0
  %v4709 = vadd.f32 %v4356, %v4708
  %v4710 = vpop.f32.mrf.mxu0
  %v4711 = vadd.f32 %v4358, %v4710
  %4712 = vmatprep.mubr.bf16.mxu0 0
  %4713 = vmatmul.mubr.bf16.gmra.mxu0 %v1953
  %v4714 = vpop.f32.mrf.mxu0
  %v4715 = vadd.f32 %v4362, %v4714
  %v4716 = vpop.f32.mrf.mxu0
  %v4717 = vadd.f32 %v4364, %v4716
  %v4718 = vpop.f32.mrf.mxu0
  %v4719 = vadd.f32 %v4366, %v4718
  %v4720 = vpop.f32.mrf.mxu0
  %v4721 = vadd.f32 %v4368, %v4720
  %4722 = vmatprep.mubr.bf16.mxu0 0
  %4723 = vmatmul.mubr.bf16.gmra.mxu0 %v1956
  %v4724 = vpop.f32.mrf.mxu0
  %v4725 = vadd.f32 %v4372, %v4724
  %v4726 = vpop.f32.mrf.mxu0
  %v4727 = vadd.f32 %v4374, %v4726
  %v4728 = vpop.f32.mrf.mxu0
  %v4729 = vadd.f32 %v4376, %v4728
  %v4730 = vpop.f32.mrf.mxu0
  %v4731 = vadd.f32 %v4378, %v4730
  %4732 = vmatprep.mubr.bf16.mxu0 0
  %4733 = vmatmul.mubr.bf16.gmra.mxu0 %v1959
  %v4734 = vpop.f32.mrf.mxu0
  %v4735 = vadd.f32 %v4382, %v4734
  %v4736 = vpop.f32.mrf.mxu0
  %v4737 = vadd.f32 %v4384, %v4736
  %v4738 = vpop.f32.mrf.mxu0
  %v4739 = vadd.f32 %v4386, %v4738
  %v4740 = vpop.f32.mrf.mxu0
  %v4741 = vadd.f32 %v4388, %v4740
  %4742 = vmatprep.mubr.bf16.mxu0 0
  %4743 = vmatmul.mubr.bf16.gmra.mxu0 %v1962
  %v4744 = vpop.f32.mrf.mxu0
  %v4745 = vadd.f32 %v4392, %v4744
  %v4746 = vpop.f32.mrf.mxu0
  %v4747 = vadd.f32 %v4394, %v4746
  %v4748 = vpop.f32.mrf.mxu0
  %v4749 = vadd.f32 %v4396, %v4748
  %v4750 = vpop.f32.mrf.mxu0
  %v4751 = vadd.f32 %v4398, %v4750
  %4752 = vmatprep.mubr.bf16.mxu0 0
  %4753 = vmatmul.mubr.bf16.gmra.mxu0 %v1965
  %v4754 = vpop.f32.mrf.mxu0
  %v4755 = vadd.f32 %v4402, %v4754
  %v4756 = vpop.f32.mrf.mxu0
  %v4757 = vadd.f32 %v4404, %v4756
  %v4758 = vpop.f32.mrf.mxu0
  %v4759 = vadd.f32 %v4406, %v4758
  %v4760 = vpop.f32.mrf.mxu0
  %v4761 = vadd.f32 %v4408, %v4760
  %4762 = vmatprep.mubr.bf16.mxu0 0
  %4763 = vmatmul.mubr.bf16.gmra.mxu0 %v1968
  %v4764 = vpop.f32.mrf.mxu0
  %v4765 = vadd.f32 %v4412, %v4764
  %v4766 = vpop.f32.mrf.mxu0
  %v4767 = vadd.f32 %v4414, %v4766
  %v4768 = vpop.f32.mrf.mxu0
  %v4769 = vadd.f32 %v4416, %v4768
  %v4770 = vpop.f32.mrf.mxu0
  %v4771 = vadd.f32 %v4418, %v4770
  %4772 = vmatprep.mubr.bf16.mxu0 0
  %4773 = vmatmul.mubr.bf16.gmra.mxu0 %v1971
  %v4774 = vpop.f32.mrf.mxu0
  %v4775 = vadd.f32 %v4422, %v4774
  %v4776 = vpop.f32.mrf.mxu0
  %v4777 = vadd.f32 %v4424, %v4776
  %v4778 = vpop.f32.mrf.mxu0
  %v4779 = vadd.f32 %v4426, %v4778
  %v4780 = vpop.f32.mrf.mxu0
  %v4781 = vadd.f32 %v4428, %v4780
  %4782 = vmatprep.mubr.bf16.mxu0 0
  %4783 = vmatmul.mubr.bf16.gmra.mxu0 %v1974
  %v4784 = vpop.f32.mrf.mxu0
  %v4785 = vadd.f32 %v4432, %v4784
  %v4786 = vpop.f32.mrf.mxu0
  %v4787 = vadd.f32 %v4434, %v4786
  %v4788 = vpop.f32.mrf.mxu0
  %v4789 = vadd.f32 %v4436, %v4788
  %v4790 = vpop.f32.mrf.mxu0
  %v4791 = vadd.f32 %v4438, %v4790
  %4792 = vmatprep.mubr.bf16.mxu0 0
  %4793 = vmatmul.mubr.bf16.gmra.mxu0 %v1977
  %v4794 = vpop.f32.mrf.mxu0
  %v4795 = vadd.f32 %v4442, %v4794
  %v4796 = vpop.f32.mrf.mxu0
  %v4797 = vadd.f32 %v4444, %v4796
  %v4798 = vpop.f32.mrf.mxu0
  %v4799 = vadd.f32 %v4446, %v4798
  %v4800 = vpop.f32.mrf.mxu0
  %v4801 = vadd.f32 %v4448, %v4800
  %4802 = vdwg.mxu0
  %v4803 = vpack.c.bf16 %v3077, %v3073
  %v4804 = vpack.c.bf16 %v3079, %v3075
  %v4805 = vpack.c.bf16 %v4489, %v4485
  %v4806 = vpack.c.bf16 %v4491, %v4487
  %v4807 = vpack.c.bf16 %v3087, %v3083
  %v4808 = vpack.c.bf16 %v3089, %v3085
  %v4809 = vpack.c.bf16 %v4499, %v4495
  %v4810 = vpack.c.bf16 %v4501, %v4497
  %v4811 = vpack.c.bf16 %v3097, %v3093
  %v4812 = vpack.c.bf16 %v3099, %v3095
  %v4813 = vpack.c.bf16 %v4509, %v4505
  %v4814 = vpack.c.bf16 %v4511, %v4507
  %v4815 = vpack.c.bf16 %v3107, %v3103
  %v4816 = vpack.c.bf16 %v3109, %v3105
  %v4817 = vpack.c.bf16 %v4519, %v4515
  %v4818 = vpack.c.bf16 %v4521, %v4517
  %v4819 = vpack.c.bf16 %v3117, %v3113
  %v4820 = vpack.c.bf16 %v3119, %v3115
  %v4821 = vpack.c.bf16 %v4529, %v4525
  %v4822 = vpack.c.bf16 %v4531, %v4527
  %v4823 = vpack.c.bf16 %v3127, %v3123
  %v4824 = vpack.c.bf16 %v3129, %v3125
  %v4825 = vpack.c.bf16 %v4539, %v4535
  %v4826 = vpack.c.bf16 %v4541, %v4537
  %v4827 = vpack.c.bf16 %v3137, %v3133
  %v4828 = vpack.c.bf16 %v3139, %v3135
  %v4829 = vpack.c.bf16 %v4549, %v4545
  %v4830 = vpack.c.bf16 %v4551, %v4547
  %v4831 = vpack.c.bf16 %v3147, %v3143
  %v4832 = vpack.c.bf16 %v3149, %v3145
  %v4833 = vpack.c.bf16 %v4559, %v4555
  %v4834 = vpack.c.bf16 %v4561, %v4557
  %v4835 = vpack.c.bf16 %v3157, %v3153
  %v4836 = vpack.c.bf16 %v3159, %v3155
  %v4837 = vpack.c.bf16 %v4569, %v4565
  %v4838 = vpack.c.bf16 %v4571, %v4567
  %v4839 = vpack.c.bf16 %v3167, %v3163
  %v4840 = vpack.c.bf16 %v3169, %v3165
  %v4841 = vpack.c.bf16 %v4579, %v4575
  %v4842 = vpack.c.bf16 %v4581, %v4577
  %v4843 = vpack.c.bf16 %v3177, %v3173
  %v4844 = vpack.c.bf16 %v3179, %v3175
  %v4845 = vpack.c.bf16 %v4589, %v4585
  %v4846 = vpack.c.bf16 %v4591, %v4587
  %v4847 = vpack.c.bf16 %v3187, %v3183
  %v4848 = vpack.c.bf16 %v3189, %v3185
  %v4849 = vpack.c.bf16 %v4599, %v4595
  %v4850 = vpack.c.bf16 %v4601, %v4597
  %v4851 = vpack.c.bf16 %v3197, %v3193
  %v4852 = vpack.c.bf16 %v3199, %v3195
  %v4853 = vpack.c.bf16 %v4609, %v4605
  %v4854 = vpack.c.bf16 %v4611, %v4607
  %v4855 = vpack.c.bf16 %v3207, %v3203
  %v4856 = vpack.c.bf16 %v3209, %v3205
  %v4857 = vpack.c.bf16 %v4619, %v4615
  %v4858 = vpack.c.bf16 %v4621, %v4617
  %v4859 = vpack.c.bf16 %v3217, %v3213
  %v4860 = vpack.c.bf16 %v3219, %v3215
  %v4861 = vpack.c.bf16 %v4629, %v4625
  %v4862 = vpack.c.bf16 %v4631, %v4627
  %v4863 = vpack.c.bf16 %v3227, %v3223
  %v4864 = vpack.c.bf16 %v3229, %v3225
  %v4865 = vpack.c.bf16 %v4639, %v4635
  %v4866 = vpack.c.bf16 %v4641, %v4637
  %v4867 = vpack.c.bf16 %v3237, %v3233
  %v4868 = vpack.c.bf16 %v3239, %v3235
  %v4869 = vpack.c.bf16 %v4649, %v4645
  %v4870 = vpack.c.bf16 %v4651, %v4647
  %v4871 = vpack.c.bf16 %v3247, %v3243
  %v4872 = vpack.c.bf16 %v3249, %v3245
  %v4873 = vpack.c.bf16 %v4659, %v4655
  %v4874 = vpack.c.bf16 %v4661, %v4657
  %v4875 = vpack.c.bf16 %v3257, %v3253
  %v4876 = vpack.c.bf16 %v3259, %v3255
  %v4877 = vpack.c.bf16 %v4669, %v4665
  %v4878 = vpack.c.bf16 %v4671, %v4667
  %v4879 = vpack.c.bf16 %v3267, %v3263
  %v4880 = vpack.c.bf16 %v3269, %v3265
  %v4881 = vpack.c.bf16 %v4679, %v4675
  %v4882 = vpack.c.bf16 %v4681, %v4677
  %v4883 = vpack.c.bf16 %v3277, %v3273
  %v4884 = vpack.c.bf16 %v3279, %v3275
  %v4885 = vpack.c.bf16 %v4689, %v4685
  %v4886 = vpack.c.bf16 %v4691, %v4687
  %v4887 = vpack.c.bf16 %v3287, %v3283
  %v4888 = vpack.c.bf16 %v3289, %v3285
  %v4889 = vpack.c.bf16 %v4699, %v4695
  %v4890 = vpack.c.bf16 %v4701, %v4697
  %v4891 = vpack.c.bf16 %v3297, %v3293
  %v4892 = vpack.c.bf16 %v3299, %v3295
  %v4893 = vpack.c.bf16 %v4709, %v4705
  %v4894 = vpack.c.bf16 %v4711, %v4707
  %v4895 = vpack.c.bf16 %v3307, %v3303
  %v4896 = vpack.c.bf16 %v3309, %v3305
  %v4897 = vpack.c.bf16 %v4719, %v4715
  %v4898 = vpack.c.bf16 %v4721, %v4717
  %v4899 = vpack.c.bf16 %v3317, %v3313
  %v4900 = vpack.c.bf16 %v3319, %v3315
  %v4901 = vpack.c.bf16 %v4729, %v4725
  %v4902 = vpack.c.bf16 %v4731, %v4727
  %v4903 = vpack.c.bf16 %v3327, %v3323
  %v4904 = vpack.c.bf16 %v3329, %v3325
  %v4905 = vpack.c.bf16 %v4739, %v4735
  %v4906 = vpack.c.bf16 %v4741, %v4737
  %v4907 = vpack.c.bf16 %v3337, %v3333
  %v4908 = vpack.c.bf16 %v3339, %v3335
  %v4909 = vpack.c.bf16 %v4749, %v4745
  %v4910 = vpack.c.bf16 %v4751, %v4747
  %v4911 = vpack.c.bf16 %v3347, %v3343
  %v4912 = vpack.c.bf16 %v3349, %v3345
  %v4913 = vpack.c.bf16 %v4759, %v4755
  %v4914 = vpack.c.bf16 %v4761, %v4757
  %v4915 = vpack.c.bf16 %v3357, %v3353
  %v4916 = vpack.c.bf16 %v3359, %v3355
  %v4917 = vpack.c.bf16 %v4769, %v4765
  %v4918 = vpack.c.bf16 %v4771, %v4767
  %v4919 = vpack.c.bf16 %v3367, %v3363
  %v4920 = vpack.c.bf16 %v3369, %v3365
  %v4921 = vpack.c.bf16 %v4779, %v4775
  %v4922 = vpack.c.bf16 %v4781, %v4777
  %v4923 = vpack.c.bf16 %v3377, %v3373
  %v4924 = vpack.c.bf16 %v3379, %v3375
  %v4925 = vpack.c.bf16 %v4789, %v4785
  %v4926 = vpack.c.bf16 %v4791, %v4787
  %v4927 = vpack.c.bf16 %v3387, %v3383
  %v4928 = vpack.c.bf16 %v3389, %v3385
  %v4929 = vpack.c.bf16 %v4799, %v4795
  %v4930 = vpack.c.bf16 %v4801, %v4797
  %v4931 = vld [vmem:[%s2] sm:$0xf]
  %v4934 = vunpack.c.l.s4 1966171168
  %v4935 = vunpack.c.0.s8 %v4934
  %v4936 = vlaneseq
  %v4937 = vshrl.u32 %v4936, 7
  %v4938 = vsub.s32 %v4935, %v4937
  %v4939 = vrot.slane %v4931, %v4938
  %v4940 = vcombine.high %v4939, %v4939
  %v4942 = vunpack.c.l.s4 1966171168
  %v4943 = vunpack.c.0.s8 %v4942
  %v4944 = vlaneseq
  %v4945 = vshrl.u32 %v4944, 7
  %v4946 = vsub.s32 %v4943, %v4945
  %v4947 = vrot.slane %v4939, %v4946
  %v4949 = vunpack.c.l.s4 1966171168
  %v4950 = vunpack.c.0.s8 %v4949
  %v4951 = vlaneseq
  %v4952 = vshrl.u32 %v4951, 7
  %v4953 = vsub.s32 %v4950, %v4952
  %v4954 = vrot.slane %v4940, %v4953
  %v4955 = vcombine.high %v4947, %v4947
  %v4956 = vcombine.high %v4954, %v4954
  %v4958 = vpack.i.b16 %v4947, %v4947
  %v4960 = vlaneseq
  %v4961 = vshrl.u32 %v4960, 7
  %v4962 = vsub.s32 0, %v4961
  %v4963 = vrot.slane %v4958, %v4962
  %v4965 = vpack.i.b16 %v4954, %v4954
  %v4967 = vlaneseq
  %v4968 = vshrl.u32 %v4967, 7
  %v4969 = vsub.s32 0, %v4968
  %v4970 = vrot.slane %v4965, %v4969
  %v4972 = vpack.i.b16 %v4955, %v4955
  %v4974 = vlaneseq
  %v4975 = vshrl.u32 %v4974, 7
  %v4976 = vsub.s32 0, %v4975
  %v4977 = vrot.slane %v4972, %v4976
  %v4979 = vpack.i.b16 %v4956, %v4956
  %v4981 = vlaneseq
  %v4982 = vshrl.u32 %v4981, 7
  %v4983 = vsub.s32 0, %v4982
  %v4984 = vrot.slane %v4979, %v4983
  %v4985 = vadd.bf16 %v4803, %v4963
  %v4986 = vadd.bf16 %v4804, %v4970
  %v4987 = vadd.bf16 %v4805, %v4977
  %v4988 = vadd.bf16 %v4806, %v4984
  %v4989 = vadd.bf16 %v4807, %v4963
  %v4990 = vadd.bf16 %v4808, %v4970
  %v4991 = vadd.bf16 %v4809, %v4977
  %v4992 = vadd.bf16 %v4810, %v4984
  %v4993 = vadd.bf16 %v4811, %v4963
  %v4994 = vadd.bf16 %v4812, %v4970
  %v4995 = vadd.bf16 %v4813, %v4977
  %v4996 = vadd.bf16 %v4814, %v4984
  %v4997 = vadd.bf16 %v4815, %v4963
  %v4998 = vadd.bf16 %v4816, %v4970
  %v4999 = vadd.bf16 %v4817, %v4977
  %v5000 = vadd.bf16 %v4818, %v4984
  %v5001 = vadd.bf16 %v4819, %v4963
  %v5002 = vadd.bf16 %v4820, %v4970
  %v5003 = vadd.bf16 %v4821, %v4977
  %v5004 = vadd.bf16 %v4822, %v4984
  %v5005 = vadd.bf16 %v4823, %v4963
  %v5006 = vadd.bf16 %v4824, %v4970
  %v5007 = vadd.bf16 %v4825, %v4977
  %v5008 = vadd.bf16 %v4826, %v4984
  %v5009 = vadd.bf16 %v4827, %v4963
  %v5010 = vadd.bf16 %v4828, %v4970
  %v5011 = vadd.bf16 %v4829, %v4977
  %v5012 = vadd.bf16 %v4830, %v4984
  %v5013 = vadd.bf16 %v4831, %v4963
  %v5014 = vadd.bf16 %v4832, %v4970
  %v5015 = vadd.bf16 %v4833, %v4977
  %v5016 = vadd.bf16 %v4834, %v4984
  %v5017 = vadd.bf16 %v4835, %v4963
  %v5018 = vadd.bf16 %v4836, %v4970
  %v5019 = vadd.bf16 %v4837, %v4977
  %v5020 = vadd.bf16 %v4838, %v4984
  %v5021 = vadd.bf16 %v4839, %v4963
  %v5022 = vadd.bf16 %v4840, %v4970
  %v5023 = vadd.bf16 %v4841, %v4977
  %v5024 = vadd.bf16 %v4842, %v4984
  %v5025 = vadd.bf16 %v4843, %v4963
  %v5026 = vadd.bf16 %v4844, %v4970
  %v5027 = vadd.bf16 %v4845, %v4977
  %v5028 = vadd.bf16 %v4846, %v4984
  %v5029 = vadd.bf16 %v4847, %v4963
  %v5030 = vadd.bf16 %v4848, %v4970
  %v5031 = vadd.bf16 %v4849, %v4977
  %v5032 = vadd.bf16 %v4850, %v4984
  %v5033 = vadd.bf16 %v4851, %v4963
  %v5034 = vadd.bf16 %v4852, %v4970
  %v5035 = vadd.bf16 %v4853, %v4977
  %v5036 = vadd.bf16 %v4854, %v4984
  %v5037 = vadd.bf16 %v4855, %v4963
  %v5038 = vadd.bf16 %v4856, %v4970
  %v5039 = vadd.bf16 %v4857, %v4977
  %v5040 = vadd.bf16 %v4858, %v4984
  %v5041 = vadd.bf16 %v4859, %v4963
  %v5042 = vadd.bf16 %v4860, %v4970
  %v5043 = vadd.bf16 %v4861, %v4977
  %v5044 = vadd.bf16 %v4862, %v4984
  %v5045 = vadd.bf16 %v4863, %v4963
  %v5046 = vadd.bf16 %v4864, %v4970
  %v5047 = vadd.bf16 %v4865, %v4977
  %v5048 = vadd.bf16 %v4866, %v4984
  %v5049 = vadd.bf16 %v4867, %v4963
  %v5050 = vadd.bf16 %v4868, %v4970
  %v5051 = vadd.bf16 %v4869, %v4977
  %v5052 = vadd.bf16 %v4870, %v4984
  %v5053 = vadd.bf16 %v4871, %v4963
  %v5054 = vadd.bf16 %v4872, %v4970
  %v5055 = vadd.bf16 %v4873, %v4977
  %v5056 = vadd.bf16 %v4874, %v4984
  %v5057 = vadd.bf16 %v4875, %v4963
  %v5058 = vadd.bf16 %v4876, %v4970
  %v5059 = vadd.bf16 %v4877, %v4977
  %v5060 = vadd.bf16 %v4878, %v4984
  %v5061 = vadd.bf16 %v4879, %v4963
  %v5062 = vadd.bf16 %v4880, %v4970
  %v5063 = vadd.bf16 %v4881, %v4977
  %v5064 = vadd.bf16 %v4882, %v4984
  %v5065 = vadd.bf16 %v4883, %v4963
  %v5066 = vadd.bf16 %v4884, %v4970
  %v5067 = vadd.bf16 %v4885, %v4977
  %v5068 = vadd.bf16 %v4886, %v4984
  %v5069 = vadd.bf16 %v4887, %v4963
  %v5070 = vadd.bf16 %v4888, %v4970
  %v5071 = vadd.bf16 %v4889, %v4977
  %v5072 = vadd.bf16 %v4890, %v4984
  %v5073 = vadd.bf16 %v4891, %v4963
  %v5074 = vadd.bf16 %v4892, %v4970
  %v5075 = vadd.bf16 %v4893, %v4977
  %v5076 = vadd.bf16 %v4894, %v4984
  %v5077 = vadd.bf16 %v4895, %v4963
  %v5078 = vadd.bf16 %v4896, %v4970
  %v5079 = vadd.bf16 %v4897, %v4977
  %v5080 = vadd.bf16 %v4898, %v4984
  %v5081 = vadd.bf16 %v4899, %v4963
  %v5082 = vadd.bf16 %v4900, %v4970
  %v5083 = vadd.bf16 %v4901, %v4977
  %v5084 = vadd.bf16 %v4902, %v4984
  %v5085 = vadd.bf16 %v4903, %v4963
  %v5086 = vadd.bf16 %v4904, %v4970
  %v5087 = vadd.bf16 %v4905, %v4977
  %v5088 = vadd.bf16 %v4906, %v4984
  %v5089 = vadd.bf16 %v4907, %v4963
  %v5090 = vadd.bf16 %v4908, %v4970
  %v5091 = vadd.bf16 %v4909, %v4977
  %v5092 = vadd.bf16 %v4910, %v4984
  %v5093 = vadd.bf16 %v4911, %v4963
  %v5094 = vadd.bf16 %v4912, %v4970
  %v5095 = vadd.bf16 %v4913, %v4977
  %v5096 = vadd.bf16 %v4914, %v4984
  %v5097 = vadd.bf16 %v4915, %v4963
  %v5098 = vadd.bf16 %v4916, %v4970
  %v5099 = vadd.bf16 %v4917, %v4977
  %v5100 = vadd.bf16 %v4918, %v4984
  %v5101 = vadd.bf16 %v4919, %v4963
  %v5102 = vadd.bf16 %v4920, %v4970
  %v5103 = vadd.bf16 %v4921, %v4977
  %v5104 = vadd.bf16 %v4922, %v4984
  %v5105 = vadd.bf16 %v4923, %v4963
  %v5106 = vadd.bf16 %v4924, %v4970
  %v5107 = vadd.bf16 %v4925, %v4977
  %v5108 = vadd.bf16 %v4926, %v4984
  %v5109 = vadd.bf16 %v4927, %v4963
  %v5110 = vadd.bf16 %v4928, %v4970
  %v5111 = vadd.bf16 %v4929, %v4977
  %v5112 = vadd.bf16 %v4930, %v4984
  %v5113 = vmul.bf16 %v4985, 1045249613
  %v5114 = vmul.bf16 %v4986, 1045249613
  %v5115 = vmul.bf16 %v4987, 1045249613
  %v5116 = vmul.bf16 %v4988, 1045249613
  %v5117 = vmul.bf16 %v4989, 1045249613
  %v5118 = vmul.bf16 %v4990, 1045249613
  %v5119 = vmul.bf16 %v4991, 1045249613
  %v5120 = vmul.bf16 %v4992, 1045249613
  %v5121 = vmul.bf16 %v4993, 1045249613
  %v5122 = vmul.bf16 %v4994, 1045249613
  %v5123 = vmul.bf16 %v4995, 1045249613
  %v5124 = vmul.bf16 %v4996, 1045249613
  %v5125 = vmul.bf16 %v4997, 1045249613
  %v5126 = vmul.bf16 %v4998, 1045249613
  %v5127 = vmul.bf16 %v4999, 1045249613
  %v5128 = vmul.bf16 %v5000, 1045249613
  %v5129 = vmul.bf16 %v5001, 1045249613
  %v5130 = vmul.bf16 %v5002, 1045249613
  %v5131 = vmul.bf16 %v5003, 1045249613
  %v5132 = vmul.bf16 %v5004, 1045249613
  %v5133 = vmul.bf16 %v5005, 1045249613
  %v5134 = vmul.bf16 %v5006, 1045249613
  %v5135 = vmul.bf16 %v5007, 1045249613
  %v5136 = vmul.bf16 %v5008, 1045249613
  %v5137 = vmul.bf16 %v5009, 1045249613
  %v5138 = vmul.bf16 %v5010, 1045249613
  %v5139 = vmul.bf16 %v5011, 1045249613
  %v5140 = vmul.bf16 %v5012, 1045249613
  %v5141 = vmul.bf16 %v5013, 1045249613
  %v5142 = vmul.bf16 %v5014, 1045249613
  %v5143 = vmul.bf16 %v5015, 1045249613
  %v5144 = vmul.bf16 %v5016, 1045249613
  %v5145 = vmul.bf16 %v5017, 1045249613
  %v5146 = vmul.bf16 %v5018, 1045249613
  %v5147 = vmul.bf16 %v5019, 1045249613
  %v5148 = vmul.bf16 %v5020, 1045249613
  %v5149 = vmul.bf16 %v5021, 1045249613
  %v5150 = vmul.bf16 %v5022, 1045249613
  %v5151 = vmul.bf16 %v5023, 1045249613
  %v5152 = vmul.bf16 %v5024, 1045249613
  %v5153 = vmul.bf16 %v5025, 1045249613
  %v5154 = vmul.bf16 %v5026, 1045249613
  %v5155 = vmul.bf16 %v5027, 1045249613
  %v5156 = vmul.bf16 %v5028, 1045249613
  %v5157 = vmul.bf16 %v5029, 1045249613
  %v5158 = vmul.bf16 %v5030, 1045249613
  %v5159 = vmul.bf16 %v5031, 1045249613
  %v5160 = vmul.bf16 %v5032, 1045249613
  %v5161 = vmul.bf16 %v5033, 1045249613
  %v5162 = vmul.bf16 %v5034, 1045249613
  %v5163 = vmul.bf16 %v5035, 1045249613
  %v5164 = vmul.bf16 %v5036, 1045249613
  %v5165 = vmul.bf16 %v5037, 1045249613
  %v5166 = vmul.bf16 %v5038, 1045249613
  %v5167 = vmul.bf16 %v5039, 1045249613
  %v5168 = vmul.bf16 %v5040, 1045249613
  %v5169 = vmul.bf16 %v5041, 1045249613
  %v5170 = vmul.bf16 %v5042, 1045249613
  %v5171 = vmul.bf16 %v5043, 1045249613
  %v5172 = vmul.bf16 %v5044, 1045249613
  %v5173 = vmul.bf16 %v5045, 1045249613
  %v5174 = vmul.bf16 %v5046, 1045249613
  %v5175 = vmul.bf16 %v5047, 1045249613
  %v5176 = vmul.bf16 %v5048, 1045249613
  %v5177 = vmul.bf16 %v5049, 1045249613
  %v5178 = vmul.bf16 %v5050, 1045249613
  %v5179 = vmul.bf16 %v5051, 1045249613
  %v5180 = vmul.bf16 %v5052, 1045249613
  %v5181 = vmul.bf16 %v5053, 1045249613
  %v5182 = vmul.bf16 %v5054, 1045249613
  %v5183 = vmul.bf16 %v5055, 1045249613
  %v5184 = vmul.bf16 %v5056, 1045249613
  %v5185 = vmul.bf16 %v5057, 1045249613
  %v5186 = vmul.bf16 %v5058, 1045249613
  %v5187 = vmul.bf16 %v5059, 1045249613
  %v5188 = vmul.bf16 %v5060, 1045249613
  %v5189 = vmul.bf16 %v5061, 1045249613
  %v5190 = vmul.bf16 %v5062, 1045249613
  %v5191 = vmul.bf16 %v5063, 1045249613
  %v5192 = vmul.bf16 %v5064, 1045249613
  %v5193 = vmul.bf16 %v5065, 1045249613
  %v5194 = vmul.bf16 %v5066, 1045249613
  %v5195 = vmul.bf16 %v5067, 1045249613
  %v5196 = vmul.bf16 %v5068, 1045249613
  %v5197 = vmul.bf16 %v5069, 1045249613
  %v5198 = vmul.bf16 %v5070, 1045249613
  %v5199 = vmul.bf16 %v5071, 1045249613
  %v5200 = vmul.bf16 %v5072, 1045249613
  %v5201 = vmul.bf16 %v5073, 1045249613
  %v5202 = vmul.bf16 %v5074, 1045249613
  %v5203 = vmul.bf16 %v5075, 1045249613
  %v5204 = vmul.bf16 %v5076, 1045249613
  %v5205 = vmul.bf16 %v5077, 1045249613
  %v5206 = vmul.bf16 %v5078, 1045249613
  %v5207 = vmul.bf16 %v5079, 1045249613
  %v5208 = vmul.bf16 %v5080, 1045249613
  %v5209 = vmul.bf16 %v5081, 1045249613
  %v5210 = vmul.bf16 %v5082, 1045249613
  %v5211 = vmul.bf16 %v5083, 1045249613
  %v5212 = vmul.bf16 %v5084, 1045249613
  %v5213 = vmul.bf16 %v5085, 1045249613
  %v5214 = vmul.bf16 %v5086, 1045249613
  %v5215 = vmul.bf16 %v5087, 1045249613
  %v5216 = vmul.bf16 %v5088, 1045249613
  %v5217 = vmul.bf16 %v5089, 1045249613
  %v5218 = vmul.bf16 %v5090, 1045249613
  %v5219 = vmul.bf16 %v5091, 1045249613
  %v5220 = vmul.bf16 %v5092, 1045249613
  %v5221 = vmul.bf16 %v5093, 1045249613
  %v5222 = vmul.bf16 %v5094, 1045249613
  %v5223 = vmul.bf16 %v5095, 1045249613
  %v5224 = vmul.bf16 %v5096, 1045249613
  %v5225 = vmul.bf16 %v5097, 1045249613
  %v5226 = vmul.bf16 %v5098, 1045249613
  %v5227 = vmul.bf16 %v5099, 1045249613
  %v5228 = vmul.bf16 %v5100, 1045249613
  %v5229 = vmul.bf16 %v5101, 1045249613
  %v5230 = vmul.bf16 %v5102, 1045249613
  %v5231 = vmul.bf16 %v5103, 1045249613
  %v5232 = vmul.bf16 %v5104, 1045249613
  %v5233 = vmul.bf16 %v5105, 1045249613
  %v5234 = vmul.bf16 %v5106, 1045249613
  %v5235 = vmul.bf16 %v5107, 1045249613
  %v5236 = vmul.bf16 %v5108, 1045249613
  %v5237 = vmul.bf16 %v5109, 1045249613
  %v5238 = vmul.bf16 %v5110, 1045249613
  %v5239 = vmul.bf16 %v5111, 1045249613
  %v5240 = vmul.bf16 %v5112, 1045249613
  %v5241 = vmax.bf16 %v4985, %v5113
  %v5242 = vmax.bf16 %v4986, %v5114
  %v5243 = vmax.bf16 %v4987, %v5115
  %v5244 = vmax.bf16 %v4988, %v5116
  %v5245 = vmax.bf16 %v4989, %v5117
  %v5246 = vmax.bf16 %v4990, %v5118
  %v5247 = vmax.bf16 %v4991, %v5119
  %v5248 = vmax.bf16 %v4992, %v5120
  %v5249 = vmax.bf16 %v4993, %v5121
  %v5250 = vmax.bf16 %v4994, %v5122
  %v5251 = vmax.bf16 %v4995, %v5123
  %v5252 = vmax.bf16 %v4996, %v5124
  %v5253 = vmax.bf16 %v4997, %v5125
  %v5254 = vmax.bf16 %v4998, %v5126
  %v5255 = vmax.bf16 %v4999, %v5127
  %v5256 = vmax.bf16 %v5000, %v5128
  %v5257 = vmax.bf16 %v5001, %v5129
  %v5258 = vmax.bf16 %v5002, %v5130
  %v5259 = vmax.bf16 %v5003, %v5131
  %v5260 = vmax.bf16 %v5004, %v5132
  %v5261 = vmax.bf16 %v5005, %v5133
  %v5262 = vmax.bf16 %v5006, %v5134
  %v5263 = vmax.bf16 %v5007, %v5135
  %v5264 = vmax.bf16 %v5008, %v5136
  %v5265 = vmax.bf16 %v5009, %v5137
  %v5266 = vmax.bf16 %v5010, %v5138
  %v5267 = vmax.bf16 %v5011, %v5139
  %v5268 = vmax.bf16 %v5012, %v5140
  %v5269 = vmax.bf16 %v5013, %v5141
  %v5270 = vmax.bf16 %v5014, %v5142
  %v5271 = vmax.bf16 %v5015, %v5143
  %v5272 = vmax.bf16 %v5016, %v5144
  %v5273 = vmax.bf16 %v5017, %v5145
  %v5274 = vmax.bf16 %v5018, %v5146
  %v5275 = vmax.bf16 %v5019, %v5147
  %v5276 = vmax.bf16 %v5020, %v5148
  %v5277 = vmax.bf16 %v5021, %v5149
  %v5278 = vmax.bf16 %v5022, %v5150
  %v5279 = vmax.bf16 %v5023, %v5151
  %v5280 = vmax.bf16 %v5024, %v5152
  %v5281 = vmax.bf16 %v5025, %v5153
  %v5282 = vmax.bf16 %v5026, %v5154
  %v5283 = vmax.bf16 %v5027, %v5155
  %v5284 = vmax.bf16 %v5028, %v5156
  %v5285 = vmax.bf16 %v5029, %v5157
  %v5286 = vmax.bf16 %v5030, %v5158
  %v5287 = vmax.bf16 %v5031, %v5159
  %v5288 = vmax.bf16 %v5032, %v5160
  %v5289 = vmax.bf16 %v5033, %v5161
  %v5290 = vmax.bf16 %v5034, %v5162
  %v5291 = vmax.bf16 %v5035, %v5163
  %v5292 = vmax.bf16 %v5036, %v5164
  %v5293 = vmax.bf16 %v5037, %v5165
  %v5294 = vmax.bf16 %v5038, %v5166
  %v5295 = vmax.bf16 %v5039, %v5167
  %v5296 = vmax.bf16 %v5040, %v5168
  %v5297 = vmax.bf16 %v5041, %v5169
  %v5298 = vmax.bf16 %v5042, %v5170
  %v5299 = vmax.bf16 %v5043, %v5171
  %v5300 = vmax.bf16 %v5044, %v5172
  %v5301 = vmax.bf16 %v5045, %v5173
  %v5302 = vmax.bf16 %v5046, %v5174
  %v5303 = vmax.bf16 %v5047, %v5175
  %v5304 = vmax.bf16 %v5048, %v5176
  %v5305 = vmax.bf16 %v5049, %v5177
  %v5306 = vmax.bf16 %v5050, %v5178
  %v5307 = vmax.bf16 %v5051, %v5179
  %v5308 = vmax.bf16 %v5052, %v5180
  %v5309 = vmax.bf16 %v5053, %v5181
  %v5310 = vmax.bf16 %v5054, %v5182
  %v5311 = vmax.bf16 %v5055, %v5183
  %v5312 = vmax.bf16 %v5056, %v5184
  %v5313 = vmax.bf16 %v5057, %v5185
  %v5314 = vmax.bf16 %v5058, %v5186
  %v5315 = vmax.bf16 %v5059, %v5187
  %v5316 = vmax.bf16 %v5060, %v5188
  %v5317 = vmax.bf16 %v5061, %v5189
  %v5318 = vmax.bf16 %v5062, %v5190
  %v5319 = vmax.bf16 %v5063, %v5191
  %v5320 = vmax.bf16 %v5064, %v5192
  %v5321 = vmax.bf16 %v5065, %v5193
  %v5322 = vmax.bf16 %v5066, %v5194
  %v5323 = vmax.bf16 %v5067, %v5195
  %v5324 = vmax.bf16 %v5068, %v5196
  %v5325 = vmax.bf16 %v5069, %v5197
  %v5326 = vmax.bf16 %v5070, %v5198
  %v5327 = vmax.bf16 %v5071, %v5199
  %v5328 = vmax.bf16 %v5072, %v5200
  %v5329 = vmax.bf16 %v5073, %v5201
  %v5330 = vmax.bf16 %v5074, %v5202
  %v5331 = vmax.bf16 %v5075, %v5203
  %v5332 = vmax.bf16 %v5076, %v5204
  %v5333 = vmax.bf16 %v5077, %v5205
  %v5334 = vmax.bf16 %v5078, %v5206
  %v5335 = vmax.bf16 %v5079, %v5207
  %v5336 = vmax.bf16 %v5080, %v5208
  %v5337 = vmax.bf16 %v5081, %v5209
  %v5338 = vmax.bf16 %v5082, %v5210
  %v5339 = vmax.bf16 %v5083, %v5211
  %v5340 = vmax.bf16 %v5084, %v5212
  %v5341 = vmax.bf16 %v5085, %v5213
  %v5342 = vmax.bf16 %v5086, %v5214
  %v5343 = vmax.bf16 %v5087, %v5215
  %v5344 = vmax.bf16 %v5088, %v5216
  %v5345 = vmax.bf16 %v5089, %v5217
  %v5346 = vmax.bf16 %v5090, %v5218
  %v5347 = vmax.bf16 %v5091, %v5219
  %v5348 = vmax.bf16 %v5092, %v5220
  %v5349 = vmax.bf16 %v5093, %v5221
  %v5350 = vmax.bf16 %v5094, %v5222
  %v5351 = vmax.bf16 %v5095, %v5223
  %v5352 = vmax.bf16 %v5096, %v5224
  %v5353 = vmax.bf16 %v5097, %v5225
  %v5354 = vmax.bf16 %v5098, %v5226
  %v5355 = vmax.bf16 %v5099, %v5227
  %v5356 = vmax.bf16 %v5100, %v5228
  %v5357 = vmax.bf16 %v5101, %v5229
  %v5358 = vmax.bf16 %v5102, %v5230
  %v5359 = vmax.bf16 %v5103, %v5231
  %v5360 = vmax.bf16 %v5104, %v5232
  %v5361 = vmax.bf16 %v5105, %v5233
  %v5362 = vmax.bf16 %v5106, %v5234
  %v5363 = vmax.bf16 %v5107, %v5235
  %v5364 = vmax.bf16 %v5108, %v5236
  %v5365 = vmax.bf16 %v5109, %v5237
  %v5366 = vmax.bf16 %v5110, %v5238
  %v5367 = vmax.bf16 %v5111, %v5239
  %v5368 = vmax.bf16 %v5112, %v5240
  %v5369 = vld [vmem:[%s3] sm:$0xff]
  %v5370 = vld [vmem:[%s3 + $0x8] sm:$0xff]
  %v5371 = vld [vmem:[%s3 + $0x10] sm:$0xff]
  %v5372 = vld [vmem:[%s3 + $0x18] sm:$0xff]
  %v5373 = vld [vmem:[%s3 + $0x20] sm:$0xff]
  %v5374 = vld [vmem:[%s3 + $0x28] sm:$0xff]
  %v5375 = vld [vmem:[%s3 + $0x30] sm:$0xff]
  %v5376 = vld [vmem:[%s3 + $0x38] sm:$0xff]
  %v5377 = vld [vmem:[%s3 + $0x40] sm:$0xff]
  %v5378 = vld [vmem:[%s3 + $0x48] sm:$0xff]
  %v5379 = vld [vmem:[%s3 + $0x50] sm:$0xff]
  %v5380 = vld [vmem:[%s3 + $0x58] sm:$0xff]
  %v5381 = vld [vmem:[%s3 + $0x60] sm:$0xff]
  %v5382 = vld [vmem:[%s3 + $0x68] sm:$0xff]
  %v5383 = vld [vmem:[%s3 + $0x70] sm:$0xff]
  %v5384 = vld [vmem:[%s3 + $0x78] sm:$0xff]
  %v5385 = vld [vmem:[%s3 + $0x80] sm:$0xff]
  %v5386 = vld [vmem:[%s3 + $0x88] sm:$0xff]
  %v5387 = vld [vmem:[%s3 + $0x90] sm:$0xff]
  %v5388 = vld [vmem:[%s3 + $0x98] sm:$0xff]
  %v5389 = vld [vmem:[%s3 + $0xa0] sm:$0xff]
  %v5390 = vld [vmem:[%s3 + $0xa8] sm:$0xff]
  %v5391 = vld [vmem:[%s3 + $0xb0] sm:$0xff]
  %v5392 = vld [vmem:[%s3 + $0xb8] sm:$0xff]
  %v5393 = vld [vmem:[%s3 + $0xc0] sm:$0xff]
  %v5394 = vld [vmem:[%s3 + $0xc8] sm:$0xff]
  %v5395 = vld [vmem:[%s3 + $0xd0] sm:$0xff]
  %v5396 = vld [vmem:[%s3 + $0xd8] sm:$0xff]
  %v5397 = vld [vmem:[%s3 + $0xe0] sm:$0xff]
  %v5398 = vld [vmem:[%s3 + $0xe8] sm:$0xff]
  %v5399 = vld [vmem:[%s3 + $0xf0] sm:$0xff]
  %v5400 = vld [vmem:[%s3 + $0xf8] sm:$0xff]
  %v5401 = vld [vmem:[%s3 + $0x100] sm:$0xff]
  %v5402 = vld [vmem:[%s3 + $0x108] sm:$0xff]
  %v5403 = vld [vmem:[%s3 + $0x110] sm:$0xff]
  %v5404 = vld [vmem:[%s3 + $0x118] sm:$0xff]
  %v5405 = vld [vmem:[%s3 + $0x120] sm:$0xff]
  %v5406 = vld [vmem:[%s3 + $0x128] sm:$0xff]
  %v5407 = vld [vmem:[%s3 + $0x130] sm:$0xff]
  %v5408 = vld [vmem:[%s3 + $0x138] sm:$0xff]
  %v5409 = vld [vmem:[%s3 + $0x140] sm:$0xff]
  %v5410 = vld [vmem:[%s3 + $0x148] sm:$0xff]
  %v5411 = vld [vmem:[%s3 + $0x150] sm:$0xff]
  %v5412 = vld [vmem:[%s3 + $0x158] sm:$0xff]
  %v5413 = vld [vmem:[%s3 + $0x160] sm:$0xff]
  %v5414 = vld [vmem:[%s3 + $0x168] sm:$0xff]
  %v5415 = vld [vmem:[%s3 + $0x170] sm:$0xff]
  %v5416 = vld [vmem:[%s3 + $0x178] sm:$0xff]
  %v5417 = vld [vmem:[%s3 + $0x180] sm:$0xff]
  %v5418 = vld [vmem:[%s3 + $0x188] sm:$0xff]
  %v5419 = vld [vmem:[%s3 + $0x190] sm:$0xff]
  %v5420 = vld [vmem:[%s3 + $0x198] sm:$0xff]
  %v5421 = vld [vmem:[%s3 + $0x1a0] sm:$0xff]
  %v5422 = vld [vmem:[%s3 + $0x1a8] sm:$0xff]
  %v5423 = vld [vmem:[%s3 + $0x1b0] sm:$0xff]
  %v5424 = vld [vmem:[%s3 + $0x1b8] sm:$0xff]
  %v5425 = vld [vmem:[%s3 + $0x1c0] sm:$0xff]
  %v5426 = vld [vmem:[%s3 + $0x1c8] sm:$0xff]
  %v5427 = vld [vmem:[%s3 + $0x1d0] sm:$0xff]
  %v5428 = vld [vmem:[%s3 + $0x1d8] sm:$0xff]
  %v5429 = vld [vmem:[%s3 + $0x1e0] sm:$0xff]
  %v5430 = vld [vmem:[%s3 + $0x1e8] sm:$0xff]
  %v5431 = vld [vmem:[%s3 + $0x1f0] sm:$0xff]
  %v5432 = vld [vmem:[%s3 + $0x1f8] sm:$0xff]
  %v5497 = vunpack.c.l.b16 %v5369
  %v5498 = vunpack.c.h.b16 %v5369
  %v5499 = vunpack.c.l.b16 %v5370
  %v5500 = vunpack.c.h.b16 %v5370
  %v5501 = vunpack.c.l.b16 %v5371
  %v5502 = vunpack.c.h.b16 %v5371
  %v5503 = vunpack.c.l.b16 %v5372
  %v5504 = vunpack.c.h.b16 %v5372
  %v5505 = vunpack.c.l.b16 %v5373
  %v5506 = vunpack.c.h.b16 %v5373
  %v5507 = vunpack.c.l.b16 %v5374
  %v5508 = vunpack.c.h.b16 %v5374
  %v5509 = vunpack.c.l.b16 %v5375
  %v5510 = vunpack.c.h.b16 %v5375
  %v5511 = vunpack.c.l.b16 %v5376
  %v5512 = vunpack.c.h.b16 %v5376
  %v5513 = vunpack.c.l.b16 %v5377
  %v5514 = vunpack.c.h.b16 %v5377
  %v5515 = vunpack.c.l.b16 %v5378
  %v5516 = vunpack.c.h.b16 %v5378
  %v5517 = vunpack.c.l.b16 %v5379
  %v5518 = vunpack.c.h.b16 %v5379
  %v5519 = vunpack.c.l.b16 %v5380
  %v5520 = vunpack.c.h.b16 %v5380
  %v5521 = vunpack.c.l.b16 %v5381
  %v5522 = vunpack.c.h.b16 %v5381
  %v5523 = vunpack.c.l.b16 %v5382
  %v5524 = vunpack.c.h.b16 %v5382
  %v5525 = vunpack.c.l.b16 %v5383
  %v5526 = vunpack.c.h.b16 %v5383
  %v5527 = vunpack.c.l.b16 %v5384
  %v5528 = vunpack.c.h.b16 %v5384
  %v5529 = vunpack.c.l.b16 %v5385
  %v5530 = vunpack.c.h.b16 %v5385
  %v5531 = vunpack.c.l.b16 %v5386
  %v5532 = vunpack.c.h.b16 %v5386
  %v5533 = vunpack.c.l.b16 %v5387
  %v5534 = vunpack.c.h.b16 %v5387
  %v5535 = vunpack.c.l.b16 %v5388
  %v5536 = vunpack.c.h.b16 %v5388
  %v5537 = vunpack.c.l.b16 %v5389
  %v5538 = vunpack.c.h.b16 %v5389
  %v5539 = vunpack.c.l.b16 %v5390
  %v5540 = vunpack.c.h.b16 %v5390
  %v5541 = vunpack.c.l.b16 %v5391
  %v5542 = vunpack.c.h.b16 %v5391
  %v5543 = vunpack.c.l.b16 %v5392
  %v5544 = vunpack.c.h.b16 %v5392
  %v5545 = vunpack.c.l.b16 %v5393
  %v5546 = vunpack.c.h.b16 %v5393
  %v5547 = vunpack.c.l.b16 %v5394
  %v5548 = vunpack.c.h.b16 %v5394
  %v5549 = vunpack.c.l.b16 %v5395
  %v5550 = vunpack.c.h.b16 %v5395
  %v5551 = vunpack.c.l.b16 %v5396
  %v5552 = vunpack.c.h.b16 %v5396
  %v5553 = vunpack.c.l.b16 %v5397
  %v5554 = vunpack.c.h.b16 %v5397
  %v5555 = vunpack.c.l.b16 %v5398
  %v5556 = vunpack.c.h.b16 %v5398
  %v5557 = vunpack.c.l.b16 %v5399
  %v5558 = vunpack.c.h.b16 %v5399
  %v5559 = vunpack.c.l.b16 %v5400
  %v5560 = vunpack.c.h.b16 %v5400
  %v5561 = vunpack.c.l.b16 %v5401
  %v5562 = vunpack.c.h.b16 %v5401
  %v5563 = vunpack.c.l.b16 %v5402
  %v5564 = vunpack.c.h.b16 %v5402
  %v5565 = vunpack.c.l.b16 %v5403
  %v5566 = vunpack.c.h.b16 %v5403
  %v5567 = vunpack.c.l.b16 %v5404
  %v5568 = vunpack.c.h.b16 %v5404
  %v5569 = vunpack.c.l.b16 %v5405
  %v5570 = vunpack.c.h.b16 %v5405
  %v5571 = vunpack.c.l.b16 %v5406
  %v5572 = vunpack.c.h.b16 %v5406
  %v5573 = vunpack.c.l.b16 %v5407
  %v5574 = vunpack.c.h.b16 %v5407
  %v5575 = vunpack.c.l.b16 %v5408
  %v5576 = vunpack.c.h.b16 %v5408
  %v5577 = vunpack.c.l.b16 %v5409
  %v5578 = vunpack.c.h.b16 %v5409
  %v5579 = vunpack.c.l.b16 %v5410
  %v5580 = vunpack.c.h.b16 %v5410
  %v5581 = vunpack.c.l.b16 %v5411
  %v5582 = vunpack.c.h.b16 %v5411
  %v5583 = vunpack.c.l.b16 %v5412
  %v5584 = vunpack.c.h.b16 %v5412
  %v5585 = vunpack.c.l.b16 %v5413
  %v5586 = vunpack.c.h.b16 %v5413
  %v5587 = vunpack.c.l.b16 %v5414
  %v5588 = vunpack.c.h.b16 %v5414
  %v5589 = vunpack.c.l.b16 %v5415
  %v5590 = vunpack.c.h.b16 %v5415
  %v5591 = vunpack.c.l.b16 %v5416
  %v5592 = vunpack.c.h.b16 %v5416
  %v5593 = vunpack.c.l.b16 %v5417
  %v5594 = vunpack.c.h.b16 %v5417
  %v5595 = vunpack.c.l.b16 %v5418
  %v5596 = vunpack.c.h.b16 %v5418
  %v5597 = vunpack.c.l.b16 %v5419
  %v5598 = vunpack.c.h.b16 %v5419
  %v5599 = vunpack.c.l.b16 %v5420
  %v5600 = vunpack.c.h.b16 %v5420
  %v5601 = vunpack.c.l.b16 %v5421
  %v5602 = vunpack.c.h.b16 %v5421
  %v5603 = vunpack.c.l.b16 %v5422
  %v5604 = vunpack.c.h.b16 %v5422
  %v5605 = vunpack.c.l.b16 %v5423
  %v5606 = vunpack.c.h.b16 %v5423
  %v5607 = vunpack.c.l.b16 %v5424
  %v5608 = vunpack.c.h.b16 %v5424
  %v5609 = vunpack.c.l.b16 %v5425
  %v5610 = vunpack.c.h.b16 %v5425
  %v5611 = vunpack.c.l.b16 %v5426
  %v5612 = vunpack.c.h.b16 %v5426
  %v5613 = vunpack.c.l.b16 %v5427
  %v5614 = vunpack.c.h.b16 %v5427
  %v5615 = vunpack.c.l.b16 %v5428
  %v5616 = vunpack.c.h.b16 %v5428
  %v5617 = vunpack.c.l.b16 %v5429
  %v5618 = vunpack.c.h.b16 %v5429
  %v5619 = vunpack.c.l.b16 %v5430
  %v5620 = vunpack.c.h.b16 %v5430
  %v5621 = vunpack.c.l.b16 %v5431
  %v5622 = vunpack.c.h.b16 %v5431
  %v5623 = vunpack.c.l.b16 %v5432
  %v5624 = vunpack.c.h.b16 %v5432
  %v5625 = vpack.c.b16 %v5499, %v5497
  %v5626 = vpack.c.b16 %v5500, %v5498
  %v5627 = vpack.c.b16 %v5503, %v5501
  %v5628 = vpack.c.b16 %v5504, %v5502
  %v5629 = vpack.c.b16 %v5507, %v5505
  %v5630 = vpack.c.b16 %v5508, %v5506
  %v5631 = vpack.c.b16 %v5511, %v5509
  %v5632 = vpack.c.b16 %v5512, %v5510
  %v5633 = vpack.c.b16 %v5515, %v5513
  %v5634 = vpack.c.b16 %v5516, %v5514
  %v5635 = vpack.c.b16 %v5519, %v5517
  %v5636 = vpack.c.b16 %v5520, %v5518
  %v5637 = vpack.c.b16 %v5523, %v5521
  %v5638 = vpack.c.b16 %v5524, %v5522
  %v5639 = vpack.c.b16 %v5527, %v5525
  %v5640 = vpack.c.b16 %v5528, %v5526
  %v5641 = vpack.c.b16 %v5531, %v5529
  %v5642 = vpack.c.b16 %v5532, %v5530
  %v5643 = vpack.c.b16 %v5535, %v5533
  %v5644 = vpack.c.b16 %v5536, %v5534
  %v5645 = vpack.c.b16 %v5539, %v5537
  %v5646 = vpack.c.b16 %v5540, %v5538
  %v5647 = vpack.c.b16 %v5543, %v5541
  %v5648 = vpack.c.b16 %v5544, %v5542
  %v5649 = vpack.c.b16 %v5547, %v5545
  %v5650 = vpack.c.b16 %v5548, %v5546
  %v5651 = vpack.c.b16 %v5551, %v5549
  %v5652 = vpack.c.b16 %v5552, %v5550
  %v5653 = vpack.c.b16 %v5555, %v5553
  %v5654 = vpack.c.b16 %v5556, %v5554
  %v5655 = vpack.c.b16 %v5559, %v5557
  %v5656 = vpack.c.b16 %v5560, %v5558
  %v5657 = vpack.c.b16 %v5563, %v5561
  %v5658 = vpack.c.b16 %v5564, %v5562
  %v5659 = vpack.c.b16 %v5567, %v5565
  %v5660 = vpack.c.b16 %v5568, %v5566
  %v5661 = vpack.c.b16 %v5571, %v5569
  %v5662 = vpack.c.b16 %v5572, %v5570
  %v5663 = vpack.c.b16 %v5575, %v5573
  %v5664 = vpack.c.b16 %v5576, %v5574
  %v5665 = vpack.c.b16 %v5579, %v5577
  %v5666 = vpack.c.b16 %v5580, %v5578
  %v5667 = vpack.c.b16 %v5583, %v5581
  %v5668 = vpack.c.b16 %v5584, %v5582
  %v5669 = vpack.c.b16 %v5587, %v5585
  %v5670 = vpack.c.b16 %v5588, %v5586
  %v5671 = vpack.c.b16 %v5591, %v5589
  %v5672 = vpack.c.b16 %v5592, %v5590
  %v5673 = vpack.c.b16 %v5595, %v5593
  %v5674 = vpack.c.b16 %v5596, %v5594
  %v5675 = vpack.c.b16 %v5599, %v5597
  %v5676 = vpack.c.b16 %v5600, %v5598
  %v5677 = vpack.c.b16 %v5603, %v5601
  %v5678 = vpack.c.b16 %v5604, %v5602
  %v5679 = vpack.c.b16 %v5607, %v5605
  %v5680 = vpack.c.b16 %v5608, %v5606
  %v5681 = vpack.c.b16 %v5611, %v5609
  %v5682 = vpack.c.b16 %v5612, %v5610
  %v5683 = vpack.c.b16 %v5615, %v5613
  %v5684 = vpack.c.b16 %v5616, %v5614
  %v5685 = vpack.c.b16 %v5619, %v5617
  %v5686 = vpack.c.b16 %v5620, %v5618
  %v5687 = vpack.c.b16 %v5623, %v5621
  %v5688 = vpack.c.b16 %v5624, %v5622
  %5753 = vmatprep.subr.bf16.mxu0 %v5640
  %5754 = vmatpush1.bf16.msra.mxu0 %v5639
  %5755 = vmatprep.subr.bf16.mxu0 %v5638
  %5756 = vmatpush1.bf16.msra.mxu0 %v5637
  %5757 = vmatprep.subr.bf16.mxu0 %v5636
  %5758 = vmatpush1.bf16.msra.mxu0 %v5635
  %5759 = vmatprep.subr.bf16.mxu0 %v5634
  %5760 = vmatpush1.bf16.msra.mxu0 %v5633
  %5761 = vmatprep.subr.bf16.mxu0 %v5632
  %5762 = vmatpush1.bf16.msra.mxu0 %v5631
  %5763 = vmatprep.subr.bf16.mxu0 %v5630
  %5764 = vmatpush1.bf16.msra.mxu0 %v5629
  %5765 = vmatprep.subr.bf16.mxu0 %v5628
  %5766 = vmatpush1.bf16.msra.mxu0 %v5627
  %5767 = vmatprep.subr.bf16.mxu0 %v5626
  %5768 = vmatpush1.bf16.msra.mxu0 %v5625
  %5769 = vmatprep.subr.bf16.mxu0 %v5656
  %5770 = vmatpush2.bf16.msra.mxu0 %v5655
  %5771 = vmatprep.subr.bf16.mxu0 %v5654
  %5772 = vmatpush2.bf16.msra.mxu0 %v5653
  %5773 = vmatprep.subr.bf16.mxu0 %v5652
  %5774 = vmatpush2.bf16.msra.mxu0 %v5651
  %5775 = vmatprep.subr.bf16.mxu0 %v5650
  %5776 = vmatpush2.bf16.msra.mxu0 %v5649
  %5777 = vmatprep.subr.bf16.mxu0 %v5648
  %5778 = vmatpush2.bf16.msra.mxu0 %v5647
  %5779 = vmatprep.subr.bf16.mxu0 %v5646
  %5780 = vmatpush2.bf16.msra.mxu0 %v5645
  %5781 = vmatprep.subr.bf16.mxu0 %v5644
  %5782 = vmatpush2.bf16.msra.mxu0 %v5643
  %5783 = vmatprep.subr.bf16.mxu0 %v5642
  %5784 = vmatpush2.bf16.msra.mxu0 %v5641
  %5785 = vmatprep.mubr.bf16.mxu0 %v5242
  %5786 = vmatmul.mubr.bf16.gmra.mxu0 %v5241
  %v5787 = vpop.f32.mrf.mxu0
  %v5788 = vadd.f32 0.0, %v5787
  %v5789 = vpop.f32.mrf.mxu0
  %v5790 = vadd.f32 0.0, %v5789
  %v5791 = vpop.f32.mrf.mxu0
  %v5792 = vadd.f32 0.0, %v5791
  %v5793 = vpop.f32.mrf.mxu0
  %v5794 = vadd.f32 0.0, %v5793
  %5795 = vmatprep.mubr.bf16.mxu0 %v5246
  %5796 = vmatmul.mubr.bf16.gmra.mxu0 %v5245
  %v5797 = vpop.f32.mrf.mxu0
  %v5798 = vadd.f32 0.0, %v5797
  %v5799 = vpop.f32.mrf.mxu0
  %v5800 = vadd.f32 0.0, %v5799
  %v5801 = vpop.f32.mrf.mxu0
  %v5802 = vadd.f32 0.0, %v5801
  %v5803 = vpop.f32.mrf.mxu0
  %v5804 = vadd.f32 0.0, %v5803
  %5805 = vmatprep.mubr.bf16.mxu0 %v5250
  %5806 = vmatmul.mubr.bf16.gmra.mxu0 %v5249
  %v5807 = vpop.f32.mrf.mxu0
  %v5808 = vadd.f32 0.0, %v5807
  %v5809 = vpop.f32.mrf.mxu0
  %v5810 = vadd.f32 0.0, %v5809
  %v5811 = vpop.f32.mrf.mxu0
  %v5812 = vadd.f32 0.0, %v5811
  %v5813 = vpop.f32.mrf.mxu0
  %v5814 = vadd.f32 0.0, %v5813
  %5815 = vmatprep.mubr.bf16.mxu0 %v5254
  %5816 = vmatmul.mubr.bf16.gmra.mxu0 %v5253
  %v5817 = vpop.f32.mrf.mxu0
  %v5818 = vadd.f32 0.0, %v5817
  %v5819 = vpop.f32.mrf.mxu0
  %v5820 = vadd.f32 0.0, %v5819
  %v5821 = vpop.f32.mrf.mxu0
  %v5822 = vadd.f32 0.0, %v5821
  %v5823 = vpop.f32.mrf.mxu0
  %v5824 = vadd.f32 0.0, %v5823
  %5825 = vmatprep.mubr.bf16.mxu0 %v5258
  %5826 = vmatmul.mubr.bf16.gmra.mxu0 %v5257
  %v5827 = vpop.f32.mrf.mxu0
  %v5828 = vadd.f32 0.0, %v5827
  %v5829 = vpop.f32.mrf.mxu0
  %v5830 = vadd.f32 0.0, %v5829
  %v5831 = vpop.f32.mrf.mxu0
  %v5832 = vadd.f32 0.0, %v5831
  %v5833 = vpop.f32.mrf.mxu0
  %v5834 = vadd.f32 0.0, %v5833
  %5835 = vmatprep.mubr.bf16.mxu0 %v5262
  %5836 = vmatmul.mubr.bf16.gmra.mxu0 %v5261
  %v5837 = vpop.f32.mrf.mxu0
  %v5838 = vadd.f32 0.0, %v5837
  %v5839 = vpop.f32.mrf.mxu0
  %v5840 = vadd.f32 0.0, %v5839
  %v5841 = vpop.f32.mrf.mxu0
  %v5842 = vadd.f32 0.0, %v5841
  %v5843 = vpop.f32.mrf.mxu0
  %v5844 = vadd.f32 0.0, %v5843
  %5845 = vmatprep.mubr.bf16.mxu0 %v5266
  %5846 = vmatmul.mubr.bf16.gmra.mxu0 %v5265
  %v5847 = vpop.f32.mrf.mxu0
  %v5848 = vadd.f32 0.0, %v5847
  %v5849 = vpop.f32.mrf.mxu0
  %v5850 = vadd.f32 0.0, %v5849
  %v5851 = vpop.f32.mrf.mxu0
  %v5852 = vadd.f32 0.0, %v5851
  %v5853 = vpop.f32.mrf.mxu0
  %v5854 = vadd.f32 0.0, %v5853
  %5855 = vmatprep.mubr.bf16.mxu0 %v5270
  %5856 = vmatmul.mubr.bf16.gmra.mxu0 %v5269
  %v5857 = vpop.f32.mrf.mxu0
  %v5858 = vadd.f32 0.0, %v5857
  %v5859 = vpop.f32.mrf.mxu0
  %v5860 = vadd.f32 0.0, %v5859
  %v5861 = vpop.f32.mrf.mxu0
  %v5862 = vadd.f32 0.0, %v5861
  %v5863 = vpop.f32.mrf.mxu0
  %v5864 = vadd.f32 0.0, %v5863
  %5865 = vmatprep.mubr.bf16.mxu0 %v5274
  %5866 = vmatmul.mubr.bf16.gmra.mxu0 %v5273
  %v5867 = vpop.f32.mrf.mxu0
  %v5868 = vadd.f32 0.0, %v5867
  %v5869 = vpop.f32.mrf.mxu0
  %v5870 = vadd.f32 0.0, %v5869
  %v5871 = vpop.f32.mrf.mxu0
  %v5872 = vadd.f32 0.0, %v5871
  %v5873 = vpop.f32.mrf.mxu0
  %v5874 = vadd.f32 0.0, %v5873
  %5875 = vmatprep.mubr.bf16.mxu0 %v5278
  %5876 = vmatmul.mubr.bf16.gmra.mxu0 %v5277
  %v5877 = vpop.f32.mrf.mxu0
  %v5878 = vadd.f32 0.0, %v5877
  %v5879 = vpop.f32.mrf.mxu0
  %v5880 = vadd.f32 0.0, %v5879
  %v5881 = vpop.f32.mrf.mxu0
  %v5882 = vadd.f32 0.0, %v5881
  %v5883 = vpop.f32.mrf.mxu0
  %v5884 = vadd.f32 0.0, %v5883
  %5885 = vmatprep.mubr.bf16.mxu0 %v5282
  %5886 = vmatmul.mubr.bf16.gmra.mxu0 %v5281
  %v5887 = vpop.f32.mrf.mxu0
  %v5888 = vadd.f32 0.0, %v5887
  %v5889 = vpop.f32.mrf.mxu0
  %v5890 = vadd.f32 0.0, %v5889
  %v5891 = vpop.f32.mrf.mxu0
  %v5892 = vadd.f32 0.0, %v5891
  %v5893 = vpop.f32.mrf.mxu0
  %v5894 = vadd.f32 0.0, %v5893
  %5895 = vmatprep.mubr.bf16.mxu0 %v5286
  %5896 = vmatmul.mubr.bf16.gmra.mxu0 %v5285
  %v5897 = vpop.f32.mrf.mxu0
  %v5898 = vadd.f32 0.0, %v5897
  %v5899 = vpop.f32.mrf.mxu0
  %v5900 = vadd.f32 0.0, %v5899
  %v5901 = vpop.f32.mrf.mxu0
  %v5902 = vadd.f32 0.0, %v5901
  %v5903 = vpop.f32.mrf.mxu0
  %v5904 = vadd.f32 0.0, %v5903
  %5905 = vmatprep.mubr.bf16.mxu0 %v5290
  %5906 = vmatmul.mubr.bf16.gmra.mxu0 %v5289
  %v5907 = vpop.f32.mrf.mxu0
  %v5908 = vadd.f32 0.0, %v5907
  %v5909 = vpop.f32.mrf.mxu0
  %v5910 = vadd.f32 0.0, %v5909
  %v5911 = vpop.f32.mrf.mxu0
  %v5912 = vadd.f32 0.0, %v5911
  %v5913 = vpop.f32.mrf.mxu0
  %v5914 = vadd.f32 0.0, %v5913
  %5915 = vmatprep.mubr.bf16.mxu0 %v5294
  %5916 = vmatmul.mubr.bf16.gmra.mxu0 %v5293
  %v5917 = vpop.f32.mrf.mxu0
  %v5918 = vadd.f32 0.0, %v5917
  %v5919 = vpop.f32.mrf.mxu0
  %v5920 = vadd.f32 0.0, %v5919
  %v5921 = vpop.f32.mrf.mxu0
  %v5922 = vadd.f32 0.0, %v5921
  %v5923 = vpop.f32.mrf.mxu0
  %v5924 = vadd.f32 0.0, %v5923
  %5925 = vmatprep.mubr.bf16.mxu0 %v5298
  %5926 = vmatmul.mubr.bf16.gmra.mxu0 %v5297
  %v5927 = vpop.f32.mrf.mxu0
  %v5928 = vadd.f32 0.0, %v5927
  %v5929 = vpop.f32.mrf.mxu0
  %v5930 = vadd.f32 0.0, %v5929
  %v5931 = vpop.f32.mrf.mxu0
  %v5932 = vadd.f32 0.0, %v5931
  %v5933 = vpop.f32.mrf.mxu0
  %v5934 = vadd.f32 0.0, %v5933
  %5935 = vmatprep.mubr.bf16.mxu0 %v5302
  %5936 = vmatmul.mubr.bf16.gmra.mxu0 %v5301
  %v5937 = vpop.f32.mrf.mxu0
  %v5938 = vadd.f32 0.0, %v5937
  %v5939 = vpop.f32.mrf.mxu0
  %v5940 = vadd.f32 0.0, %v5939
  %v5941 = vpop.f32.mrf.mxu0
  %v5942 = vadd.f32 0.0, %v5941
  %v5943 = vpop.f32.mrf.mxu0
  %v5944 = vadd.f32 0.0, %v5943
  %5945 = vmatprep.mubr.bf16.mxu0 %v5306
  %5946 = vmatmul.mubr.bf16.gmra.mxu0 %v5305
  %v5947 = vpop.f32.mrf.mxu0
  %v5948 = vadd.f32 0.0, %v5947
  %v5949 = vpop.f32.mrf.mxu0
  %v5950 = vadd.f32 0.0, %v5949
  %v5951 = vpop.f32.mrf.mxu0
  %v5952 = vadd.f32 0.0, %v5951
  %v5953 = vpop.f32.mrf.mxu0
  %v5954 = vadd.f32 0.0, %v5953
  %5955 = vmatprep.mubr.bf16.mxu0 %v5310
  %5956 = vmatmul.mubr.bf16.gmra.mxu0 %v5309
  %v5957 = vpop.f32.mrf.mxu0
  %v5958 = vadd.f32 0.0, %v5957
  %v5959 = vpop.f32.mrf.mxu0
  %v5960 = vadd.f32 0.0, %v5959
  %v5961 = vpop.f32.mrf.mxu0
  %v5962 = vadd.f32 0.0, %v5961
  %v5963 = vpop.f32.mrf.mxu0
  %v5964 = vadd.f32 0.0, %v5963
  %5965 = vmatprep.mubr.bf16.mxu0 %v5314
  %5966 = vmatmul.mubr.bf16.gmra.mxu0 %v5313
  %v5967 = vpop.f32.mrf.mxu0
  %v5968 = vadd.f32 0.0, %v5967
  %v5969 = vpop.f32.mrf.mxu0
  %v5970 = vadd.f32 0.0, %v5969
  %v5971 = vpop.f32.mrf.mxu0
  %v5972 = vadd.f32 0.0, %v5971
  %v5973 = vpop.f32.mrf.mxu0
  %v5974 = vadd.f32 0.0, %v5973
  %5975 = vmatprep.mubr.bf16.mxu0 %v5318
  %5976 = vmatmul.mubr.bf16.gmra.mxu0 %v5317
  %v5977 = vpop.f32.mrf.mxu0
  %v5978 = vadd.f32 0.0, %v5977
  %v5979 = vpop.f32.mrf.mxu0
  %v5980 = vadd.f32 0.0, %v5979
  %v5981 = vpop.f32.mrf.mxu0
  %v5982 = vadd.f32 0.0, %v5981
  %v5983 = vpop.f32.mrf.mxu0
  %v5984 = vadd.f32 0.0, %v5983
  %5985 = vmatprep.mubr.bf16.mxu0 %v5322
  %5986 = vmatmul.mubr.bf16.gmra.mxu0 %v5321
  %v5987 = vpop.f32.mrf.mxu0
  %v5988 = vadd.f32 0.0, %v5987
  %v5989 = vpop.f32.mrf.mxu0
  %v5990 = vadd.f32 0.0, %v5989
  %v5991 = vpop.f32.mrf.mxu0
  %v5992 = vadd.f32 0.0, %v5991
  %v5993 = vpop.f32.mrf.mxu0
  %v5994 = vadd.f32 0.0, %v5993
  %5995 = vmatprep.mubr.bf16.mxu0 %v5326
  %5996 = vmatmul.mubr.bf16.gmra.mxu0 %v5325
  %v5997 = vpop.f32.mrf.mxu0
  %v5998 = vadd.f32 0.0, %v5997
  %v5999 = vpop.f32.mrf.mxu0
  %v6000 = vadd.f32 0.0, %v5999
  %v6001 = vpop.f32.mrf.mxu0
  %v6002 = vadd.f32 0.0, %v6001
  %v6003 = vpop.f32.mrf.mxu0
  %v6004 = vadd.f32 0.0, %v6003
  %6005 = vmatprep.mubr.bf16.mxu0 %v5330
  %6006 = vmatmul.mubr.bf16.gmra.mxu0 %v5329
  %v6007 = vpop.f32.mrf.mxu0
  %v6008 = vadd.f32 0.0, %v6007
  %v6009 = vpop.f32.mrf.mxu0
  %v6010 = vadd.f32 0.0, %v6009
  %v6011 = vpop.f32.mrf.mxu0
  %v6012 = vadd.f32 0.0, %v6011
  %v6013 = vpop.f32.mrf.mxu0
  %v6014 = vadd.f32 0.0, %v6013
  %6015 = vmatprep.mubr.bf16.mxu0 %v5334
  %6016 = vmatmul.mubr.bf16.gmra.mxu0 %v5333
  %v6017 = vpop.f32.mrf.mxu0
  %v6018 = vadd.f32 0.0, %v6017
  %v6019 = vpop.f32.mrf.mxu0
  %v6020 = vadd.f32 0.0, %v6019
  %v6021 = vpop.f32.mrf.mxu0
  %v6022 = vadd.f32 0.0, %v6021
  %v6023 = vpop.f32.mrf.mxu0
  %v6024 = vadd.f32 0.0, %v6023
  %6025 = vmatprep.mubr.bf16.mxu0 %v5338
  %6026 = vmatmul.mubr.bf16.gmra.mxu0 %v5337
  %v6027 = vpop.f32.mrf.mxu0
  %v6028 = vadd.f32 0.0, %v6027
  %v6029 = vpop.f32.mrf.mxu0
  %v6030 = vadd.f32 0.0, %v6029
  %v6031 = vpop.f32.mrf.mxu0
  %v6032 = vadd.f32 0.0, %v6031
  %v6033 = vpop.f32.mrf.mxu0
  %v6034 = vadd.f32 0.0, %v6033
  %6035 = vmatprep.mubr.bf16.mxu0 %v5342
  %6036 = vmatmul.mubr.bf16.gmra.mxu0 %v5341
  %v6037 = vpop.f32.mrf.mxu0
  %v6038 = vadd.f32 0.0, %v6037
  %v6039 = vpop.f32.mrf.mxu0
  %v6040 = vadd.f32 0.0, %v6039
  %v6041 = vpop.f32.mrf.mxu0
  %v6042 = vadd.f32 0.0, %v6041
  %v6043 = vpop.f32.mrf.mxu0
  %v6044 = vadd.f32 0.0, %v6043
  %6045 = vmatprep.mubr.bf16.mxu0 %v5346
  %6046 = vmatmul.mubr.bf16.gmra.mxu0 %v5345
  %v6047 = vpop.f32.mrf.mxu0
  %v6048 = vadd.f32 0.0, %v6047
  %v6049 = vpop.f32.mrf.mxu0
  %v6050 = vadd.f32 0.0, %v6049
  %v6051 = vpop.f32.mrf.mxu0
  %v6052 = vadd.f32 0.0, %v6051
  %v6053 = vpop.f32.mrf.mxu0
  %v6054 = vadd.f32 0.0, %v6053
  %6055 = vmatprep.mubr.bf16.mxu0 %v5350
  %6056 = vmatmul.mubr.bf16.gmra.mxu0 %v5349
  %v6057 = vpop.f32.mrf.mxu0
  %v6058 = vadd.f32 0.0, %v6057
  %v6059 = vpop.f32.mrf.mxu0
  %v6060 = vadd.f32 0.0, %v6059
  %v6061 = vpop.f32.mrf.mxu0
  %v6062 = vadd.f32 0.0, %v6061
  %v6063 = vpop.f32.mrf.mxu0
  %v6064 = vadd.f32 0.0, %v6063
  %6065 = vmatprep.mubr.bf16.mxu0 %v5354
  %6066 = vmatmul.mubr.bf16.gmra.mxu0 %v5353
  %v6067 = vpop.f32.mrf.mxu0
  %v6068 = vadd.f32 0.0, %v6067
  %v6069 = vpop.f32.mrf.mxu0
  %v6070 = vadd.f32 0.0, %v6069
  %v6071 = vpop.f32.mrf.mxu0
  %v6072 = vadd.f32 0.0, %v6071
  %v6073 = vpop.f32.mrf.mxu0
  %v6074 = vadd.f32 0.0, %v6073
  %6075 = vmatprep.mubr.bf16.mxu0 %v5358
  %6076 = vmatmul.mubr.bf16.gmra.mxu0 %v5357
  %v6077 = vpop.f32.mrf.mxu0
  %v6078 = vadd.f32 0.0, %v6077
  %v6079 = vpop.f32.mrf.mxu0
  %v6080 = vadd.f32 0.0, %v6079
  %v6081 = vpop.f32.mrf.mxu0
  %v6082 = vadd.f32 0.0, %v6081
  %v6083 = vpop.f32.mrf.mxu0
  %v6084 = vadd.f32 0.0, %v6083
  %6085 = vmatprep.mubr.bf16.mxu0 %v5362
  %6086 = vmatmul.mubr.bf16.gmra.mxu0 %v5361
  %v6087 = vpop.f32.mrf.mxu0
  %v6088 = vadd.f32 0.0, %v6087
  %v6089 = vpop.f32.mrf.mxu0
  %v6090 = vadd.f32 0.0, %v6089
  %v6091 = vpop.f32.mrf.mxu0
  %v6092 = vadd.f32 0.0, %v6091
  %v6093 = vpop.f32.mrf.mxu0
  %v6094 = vadd.f32 0.0, %v6093
  %6095 = vmatprep.mubr.bf16.mxu0 %v5366
  %6096 = vmatmul.mubr.bf16.gmra.mxu0 %v5365
  %v6097 = vpop.f32.mrf.mxu0
  %v6098 = vadd.f32 0.0, %v6097
  %v6099 = vpop.f32.mrf.mxu0
  %v6100 = vadd.f32 0.0, %v6099
  %v6101 = vpop.f32.mrf.mxu0
  %v6102 = vadd.f32 0.0, %v6101
  %v6103 = vpop.f32.mrf.mxu0
  %v6104 = vadd.f32 0.0, %v6103
  %6105 = vdwg.mxu0
  %6106 = vmatprep.subr.bf16.mxu0 %v5672
  %6107 = vmatpush1.bf16.msra.mxu0 %v5671
  %6108 = vmatprep.subr.bf16.mxu0 %v5670
  %6109 = vmatpush1.bf16.msra.mxu0 %v5669
  %6110 = vmatprep.subr.bf16.mxu0 %v5668
  %6111 = vmatpush1.bf16.msra.mxu0 %v5667
  %6112 = vmatprep.subr.bf16.mxu0 %v5666
  %6113 = vmatpush1.bf16.msra.mxu0 %v5665
  %6114 = vmatprep.subr.bf16.mxu0 %v5664
  %6115 = vmatpush1.bf16.msra.mxu0 %v5663
  %6116 = vmatprep.subr.bf16.mxu0 %v5662
  %6117 = vmatpush1.bf16.msra.mxu0 %v5661
  %6118 = vmatprep.subr.bf16.mxu0 %v5660
  %6119 = vmatpush1.bf16.msra.mxu0 %v5659
  %6120 = vmatprep.subr.bf16.mxu0 %v5658
  %6121 = vmatpush1.bf16.msra.mxu0 %v5657
  %6122 = vmatprep.subr.bf16.mxu0 %v5688
  %6123 = vmatpush2.bf16.msra.mxu0 %v5687
  %6124 = vmatprep.subr.bf16.mxu0 %v5686
  %6125 = vmatpush2.bf16.msra.mxu0 %v5685
  %6126 = vmatprep.subr.bf16.mxu0 %v5684
  %6127 = vmatpush2.bf16.msra.mxu0 %v5683
  %6128 = vmatprep.subr.bf16.mxu0 %v5682
  %6129 = vmatpush2.bf16.msra.mxu0 %v5681
  %6130 = vmatprep.subr.bf16.mxu0 %v5680
  %6131 = vmatpush2.bf16.msra.mxu0 %v5679
  %6132 = vmatprep.subr.bf16.mxu0 %v5678
  %6133 = vmatpush2.bf16.msra.mxu0 %v5677
  %6134 = vmatprep.subr.bf16.mxu0 %v5676
  %6135 = vmatpush2.bf16.msra.mxu0 %v5675
  %6136 = vmatprep.subr.bf16.mxu0 %v5674
  %6137 = vmatpush2.bf16.msra.mxu0 %v5673
  %6138 = vmatprep.mubr.bf16.mxu0 %v5244
  %6139 = vmatmul.mubr.bf16.gmra.mxu0 %v5243
  %v6140 = vpop.f32.mrf.mxu0
  %v6141 = vadd.f32 %v5788, %v6140
  %v6142 = vpop.f32.mrf.mxu0
  %v6143 = vadd.f32 %v5790, %v6142
  %v6144 = vpop.f32.mrf.mxu0
  %v6145 = vadd.f32 %v5792, %v6144
  %v6146 = vpop.f32.mrf.mxu0
  %v6147 = vadd.f32 %v5794, %v6146
  %6148 = vmatprep.mubr.bf16.mxu0 %v5248
  %6149 = vmatmul.mubr.bf16.gmra.mxu0 %v5247
  %v6150 = vpop.f32.mrf.mxu0
  %v6151 = vadd.f32 %v5798, %v6150
  %v6152 = vpop.f32.mrf.mxu0
  %v6153 = vadd.f32 %v5800, %v6152
  %v6154 = vpop.f32.mrf.mxu0
  %v6155 = vadd.f32 %v5802, %v6154
  %v6156 = vpop.f32.mrf.mxu0
  %v6157 = vadd.f32 %v5804, %v6156
  %6158 = vmatprep.mubr.bf16.mxu0 %v5252
  %6159 = vmatmul.mubr.bf16.gmra.mxu0 %v5251
  %v6160 = vpop.f32.mrf.mxu0
  %v6161 = vadd.f32 %v5808, %v6160
  %v6162 = vpop.f32.mrf.mxu0
  %v6163 = vadd.f32 %v5810, %v6162
  %v6164 = vpop.f32.mrf.mxu0
  %v6165 = vadd.f32 %v5812, %v6164
  %v6166 = vpop.f32.mrf.mxu0
  %v6167 = vadd.f32 %v5814, %v6166
  %6168 = vmatprep.mubr.bf16.mxu0 %v5256
  %6169 = vmatmul.mubr.bf16.gmra.mxu0 %v5255
  %v6170 = vpop.f32.mrf.mxu0
  %v6171 = vadd.f32 %v5818, %v6170
  %v6172 = vpop.f32.mrf.mxu0
  %v6173 = vadd.f32 %v5820, %v6172
  %v6174 = vpop.f32.mrf.mxu0
  %v6175 = vadd.f32 %v5822, %v6174
  %v6176 = vpop.f32.mrf.mxu0
  %v6177 = vadd.f32 %v5824, %v6176
  %6178 = vmatprep.mubr.bf16.mxu0 %v5260
  %6179 = vmatmul.mubr.bf16.gmra.mxu0 %v5259
  %v6180 = vpop.f32.mrf.mxu0
  %v6181 = vadd.f32 %v5828, %v6180
  %v6182 = vpop.f32.mrf.mxu0
  %v6183 = vadd.f32 %v5830, %v6182
  %v6184 = vpop.f32.mrf.mxu0
  %v6185 = vadd.f32 %v5832, %v6184
  %v6186 = vpop.f32.mrf.mxu0
  %v6187 = vadd.f32 %v5834, %v6186
  %6188 = vmatprep.mubr.bf16.mxu0 %v5264
  %6189 = vmatmul.mubr.bf16.gmra.mxu0 %v5263
  %v6190 = vpop.f32.mrf.mxu0
  %v6191 = vadd.f32 %v5838, %v6190
  %v6192 = vpop.f32.mrf.mxu0
  %v6193 = vadd.f32 %v5840, %v6192
  %v6194 = vpop.f32.mrf.mxu0
  %v6195 = vadd.f32 %v5842, %v6194
  %v6196 = vpop.f32.mrf.mxu0
  %v6197 = vadd.f32 %v5844, %v6196
  %6198 = vmatprep.mubr.bf16.mxu0 %v5268
  %6199 = vmatmul.mubr.bf16.gmra.mxu0 %v5267
  %v6200 = vpop.f32.mrf.mxu0
  %v6201 = vadd.f32 %v5848, %v6200
  %v6202 = vpop.f32.mrf.mxu0
  %v6203 = vadd.f32 %v5850, %v6202
  %v6204 = vpop.f32.mrf.mxu0
  %v6205 = vadd.f32 %v5852, %v6204
  %v6206 = vpop.f32.mrf.mxu0
  %v6207 = vadd.f32 %v5854, %v6206
  %6208 = vmatprep.mubr.bf16.mxu0 %v5272
  %6209 = vmatmul.mubr.bf16.gmra.mxu0 %v5271
  %v6210 = vpop.f32.mrf.mxu0
  %v6211 = vadd.f32 %v5858, %v6210
  %v6212 = vpop.f32.mrf.mxu0
  %v6213 = vadd.f32 %v5860, %v6212
  %v6214 = vpop.f32.mrf.mxu0
  %v6215 = vadd.f32 %v5862, %v6214
  %v6216 = vpop.f32.mrf.mxu0
  %v6217 = vadd.f32 %v5864, %v6216
  %6218 = vmatprep.mubr.bf16.mxu0 %v5276
  %6219 = vmatmul.mubr.bf16.gmra.mxu0 %v5275
  %v6220 = vpop.f32.mrf.mxu0
  %v6221 = vadd.f32 %v5868, %v6220
  %v6222 = vpop.f32.mrf.mxu0
  %v6223 = vadd.f32 %v5870, %v6222
  %v6224 = vpop.f32.mrf.mxu0
  %v6225 = vadd.f32 %v5872, %v6224
  %v6226 = vpop.f32.mrf.mxu0
  %v6227 = vadd.f32 %v5874, %v6226
  %6228 = vmatprep.mubr.bf16.mxu0 %v5280
  %6229 = vmatmul.mubr.bf16.gmra.mxu0 %v5279
  %v6230 = vpop.f32.mrf.mxu0
  %v6231 = vadd.f32 %v5878, %v6230
  %v6232 = vpop.f32.mrf.mxu0
  %v6233 = vadd.f32 %v5880, %v6232
  %v6234 = vpop.f32.mrf.mxu0
  %v6235 = vadd.f32 %v5882, %v6234
  %v6236 = vpop.f32.mrf.mxu0
  %v6237 = vadd.f32 %v5884, %v6236
  %6238 = vmatprep.mubr.bf16.mxu0 %v5284
  %6239 = vmatmul.mubr.bf16.gmra.mxu0 %v5283
  %v6240 = vpop.f32.mrf.mxu0
  %v6241 = vadd.f32 %v5888, %v6240
  %v6242 = vpop.f32.mrf.mxu0
  %v6243 = vadd.f32 %v5890, %v6242
  %v6244 = vpop.f32.mrf.mxu0
  %v6245 = vadd.f32 %v5892, %v6244
  %v6246 = vpop.f32.mrf.mxu0
  %v6247 = vadd.f32 %v5894, %v6246
  %6248 = vmatprep.mubr.bf16.mxu0 %v5288
  %6249 = vmatmul.mubr.bf16.gmra.mxu0 %v5287
  %v6250 = vpop.f32.mrf.mxu0
  %v6251 = vadd.f32 %v5898, %v6250
  %v6252 = vpop.f32.mrf.mxu0
  %v6253 = vadd.f32 %v5900, %v6252
  %v6254 = vpop.f32.mrf.mxu0
  %v6255 = vadd.f32 %v5902, %v6254
  %v6256 = vpop.f32.mrf.mxu0
  %v6257 = vadd.f32 %v5904, %v6256
  %6258 = vmatprep.mubr.bf16.mxu0 %v5292
  %6259 = vmatmul.mubr.bf16.gmra.mxu0 %v5291
  %v6260 = vpop.f32.mrf.mxu0
  %v6261 = vadd.f32 %v5908, %v6260
  %v6262 = vpop.f32.mrf.mxu0
  %v6263 = vadd.f32 %v5910, %v6262
  %v6264 = vpop.f32.mrf.mxu0
  %v6265 = vadd.f32 %v5912, %v6264
  %v6266 = vpop.f32.mrf.mxu0
  %v6267 = vadd.f32 %v5914, %v6266
  %6268 = vmatprep.mubr.bf16.mxu0 %v5296
  %6269 = vmatmul.mubr.bf16.gmra.mxu0 %v5295
  %v6270 = vpop.f32.mrf.mxu0
  %v6271 = vadd.f32 %v5918, %v6270
  %v6272 = vpop.f32.mrf.mxu0
  %v6273 = vadd.f32 %v5920, %v6272
  %v6274 = vpop.f32.mrf.mxu0
  %v6275 = vadd.f32 %v5922, %v6274
  %v6276 = vpop.f32.mrf.mxu0
  %v6277 = vadd.f32 %v5924, %v6276
  %6278 = vmatprep.mubr.bf16.mxu0 %v5300
  %6279 = vmatmul.mubr.bf16.gmra.mxu0 %v5299
  %v6280 = vpop.f32.mrf.mxu0
  %v6281 = vadd.f32 %v5928, %v6280
  %v6282 = vpop.f32.mrf.mxu0
  %v6283 = vadd.f32 %v5930, %v6282
  %v6284 = vpop.f32.mrf.mxu0
  %v6285 = vadd.f32 %v5932, %v6284
  %v6286 = vpop.f32.mrf.mxu0
  %v6287 = vadd.f32 %v5934, %v6286
  %6288 = vmatprep.mubr.bf16.mxu0 %v5304
  %6289 = vmatmul.mubr.bf16.gmra.mxu0 %v5303
  %v6290 = vpop.f32.mrf.mxu0
  %v6291 = vadd.f32 %v5938, %v6290
  %v6292 = vpop.f32.mrf.mxu0
  %v6293 = vadd.f32 %v5940, %v6292
  %v6294 = vpop.f32.mrf.mxu0
  %v6295 = vadd.f32 %v5942, %v6294
  %v6296 = vpop.f32.mrf.mxu0
  %v6297 = vadd.f32 %v5944, %v6296
  %6298 = vmatprep.mubr.bf16.mxu0 %v5308
  %6299 = vmatmul.mubr.bf16.gmra.mxu0 %v5307
  %v6300 = vpop.f32.mrf.mxu0
  %v6301 = vadd.f32 %v5948, %v6300
  %v6302 = vpop.f32.mrf.mxu0
  %v6303 = vadd.f32 %v5950, %v6302
  %v6304 = vpop.f32.mrf.mxu0
  %v6305 = vadd.f32 %v5952, %v6304
  %v6306 = vpop.f32.mrf.mxu0
  %v6307 = vadd.f32 %v5954, %v6306
  %6308 = vmatprep.mubr.bf16.mxu0 %v5312
  %6309 = vmatmul.mubr.bf16.gmra.mxu0 %v5311
  %v6310 = vpop.f32.mrf.mxu0
  %v6311 = vadd.f32 %v5958, %v6310
  %v6312 = vpop.f32.mrf.mxu0
  %v6313 = vadd.f32 %v5960, %v6312
  %v6314 = vpop.f32.mrf.mxu0
  %v6315 = vadd.f32 %v5962, %v6314
  %v6316 = vpop.f32.mrf.mxu0
  %v6317 = vadd.f32 %v5964, %v6316
  %6318 = vmatprep.mubr.bf16.mxu0 %v5316
  %6319 = vmatmul.mubr.bf16.gmra.mxu0 %v5315
  %v6320 = vpop.f32.mrf.mxu0
  %v6321 = vadd.f32 %v5968, %v6320
  %v6322 = vpop.f32.mrf.mxu0
  %v6323 = vadd.f32 %v5970, %v6322
  %v6324 = vpop.f32.mrf.mxu0
  %v6325 = vadd.f32 %v5972, %v6324
  %v6326 = vpop.f32.mrf.mxu0
  %v6327 = vadd.f32 %v5974, %v6326
  %6328 = vmatprep.mubr.bf16.mxu0 %v5320
  %6329 = vmatmul.mubr.bf16.gmra.mxu0 %v5319
  %v6330 = vpop.f32.mrf.mxu0
  %v6331 = vadd.f32 %v5978, %v6330
  %v6332 = vpop.f32.mrf.mxu0
  %v6333 = vadd.f32 %v5980, %v6332
  %v6334 = vpop.f32.mrf.mxu0
  %v6335 = vadd.f32 %v5982, %v6334
  %v6336 = vpop.f32.mrf.mxu0
  %v6337 = vadd.f32 %v5984, %v6336
  %6338 = vmatprep.mubr.bf16.mxu0 %v5324
  %6339 = vmatmul.mubr.bf16.gmra.mxu0 %v5323
  %v6340 = vpop.f32.mrf.mxu0
  %v6341 = vadd.f32 %v5988, %v6340
  %v6342 = vpop.f32.mrf.mxu0
  %v6343 = vadd.f32 %v5990, %v6342
  %v6344 = vpop.f32.mrf.mxu0
  %v6345 = vadd.f32 %v5992, %v6344
  %v6346 = vpop.f32.mrf.mxu0
  %v6347 = vadd.f32 %v5994, %v6346
  %6348 = vmatprep.mubr.bf16.mxu0 %v5328
  %6349 = vmatmul.mubr.bf16.gmra.mxu0 %v5327
  %v6350 = vpop.f32.mrf.mxu0
  %v6351 = vadd.f32 %v5998, %v6350
  %v6352 = vpop.f32.mrf.mxu0
  %v6353 = vadd.f32 %v6000, %v6352
  %v6354 = vpop.f32.mrf.mxu0
  %v6355 = vadd.f32 %v6002, %v6354
  %v6356 = vpop.f32.mrf.mxu0
  %v6357 = vadd.f32 %v6004, %v6356
  %6358 = vmatprep.mubr.bf16.mxu0 %v5332
  %6359 = vmatmul.mubr.bf16.gmra.mxu0 %v5331
  %v6360 = vpop.f32.mrf.mxu0
  %v6361 = vadd.f32 %v6008, %v6360
  %v6362 = vpop.f32.mrf.mxu0
  %v6363 = vadd.f32 %v6010, %v6362
  %v6364 = vpop.f32.mrf.mxu0
  %v6365 = vadd.f32 %v6012, %v6364
  %v6366 = vpop.f32.mrf.mxu0
  %v6367 = vadd.f32 %v6014, %v6366
  %6368 = vmatprep.mubr.bf16.mxu0 %v5336
  %6369 = vmatmul.mubr.bf16.gmra.mxu0 %v5335
  %v6370 = vpop.f32.mrf.mxu0
  %v6371 = vadd.f32 %v6018, %v6370
  %v6372 = vpop.f32.mrf.mxu0
  %v6373 = vadd.f32 %v6020, %v6372
  %v6374 = vpop.f32.mrf.mxu0
  %v6375 = vadd.f32 %v6022, %v6374
  %v6376 = vpop.f32.mrf.mxu0
  %v6377 = vadd.f32 %v6024, %v6376
  %6378 = vmatprep.mubr.bf16.mxu0 %v5340
  %6379 = vmatmul.mubr.bf16.gmra.mxu0 %v5339
  %v6380 = vpop.f32.mrf.mxu0
  %v6381 = vadd.f32 %v6028, %v6380
  %v6382 = vpop.f32.mrf.mxu0
  %v6383 = vadd.f32 %v6030, %v6382
  %v6384 = vpop.f32.mrf.mxu0
  %v6385 = vadd.f32 %v6032, %v6384
  %v6386 = vpop.f32.mrf.mxu0
  %v6387 = vadd.f32 %v6034, %v6386
  %6388 = vmatprep.mubr.bf16.mxu0 %v5344
  %6389 = vmatmul.mubr.bf16.gmra.mxu0 %v5343
  %v6390 = vpop.f32.mrf.mxu0
  %v6391 = vadd.f32 %v6038, %v6390
  %v6392 = vpop.f32.mrf.mxu0
  %v6393 = vadd.f32 %v6040, %v6392
  %v6394 = vpop.f32.mrf.mxu0
  %v6395 = vadd.f32 %v6042, %v6394
  %v6396 = vpop.f32.mrf.mxu0
  %v6397 = vadd.f32 %v6044, %v6396
  %6398 = vmatprep.mubr.bf16.mxu0 %v5348
  %6399 = vmatmul.mubr.bf16.gmra.mxu0 %v5347
  %v6400 = vpop.f32.mrf.mxu0
  %v6401 = vadd.f32 %v6048, %v6400
  %v6402 = vpop.f32.mrf.mxu0
  %v6403 = vadd.f32 %v6050, %v6402
  %v6404 = vpop.f32.mrf.mxu0
  %v6405 = vadd.f32 %v6052, %v6404
  %v6406 = vpop.f32.mrf.mxu0
  %v6407 = vadd.f32 %v6054, %v6406
  %6408 = vmatprep.mubr.bf16.mxu0 %v5352
  %6409 = vmatmul.mubr.bf16.gmra.mxu0 %v5351
  %v6410 = vpop.f32.mrf.mxu0
  %v6411 = vadd.f32 %v6058, %v6410
  %v6412 = vpop.f32.mrf.mxu0
  %v6413 = vadd.f32 %v6060, %v6412
  %v6414 = vpop.f32.mrf.mxu0
  %v6415 = vadd.f32 %v6062, %v6414
  %v6416 = vpop.f32.mrf.mxu0
  %v6417 = vadd.f32 %v6064, %v6416
  %6418 = vmatprep.mubr.bf16.mxu0 %v5356
  %6419 = vmatmul.mubr.bf16.gmra.mxu0 %v5355
  %v6420 = vpop.f32.mrf.mxu0
  %v6421 = vadd.f32 %v6068, %v6420
  %v6422 = vpop.f32.mrf.mxu0
  %v6423 = vadd.f32 %v6070, %v6422
  %v6424 = vpop.f32.mrf.mxu0
  %v6425 = vadd.f32 %v6072, %v6424
  %v6426 = vpop.f32.mrf.mxu0
  %v6427 = vadd.f32 %v6074, %v6426
  %6428 = vmatprep.mubr.bf16.mxu0 %v5360
  %6429 = vmatmul.mubr.bf16.gmra.mxu0 %v5359
  %v6430 = vpop.f32.mrf.mxu0
  %v6431 = vadd.f32 %v6078, %v6430
  %v6432 = vpop.f32.mrf.mxu0
  %v6433 = vadd.f32 %v6080, %v6432
  %v6434 = vpop.f32.mrf.mxu0
  %v6435 = vadd.f32 %v6082, %v6434
  %v6436 = vpop.f32.mrf.mxu0
  %v6437 = vadd.f32 %v6084, %v6436
  %6438 = vmatprep.mubr.bf16.mxu0 %v5364
  %6439 = vmatmul.mubr.bf16.gmra.mxu0 %v5363
  %v6440 = vpop.f32.mrf.mxu0
  %v6441 = vadd.f32 %v6088, %v6440
  %v6442 = vpop.f32.mrf.mxu0
  %v6443 = vadd.f32 %v6090, %v6442
  %v6444 = vpop.f32.mrf.mxu0
  %v6445 = vadd.f32 %v6092, %v6444
  %v6446 = vpop.f32.mrf.mxu0
  %v6447 = vadd.f32 %v6094, %v6446
  %6448 = vmatprep.mubr.bf16.mxu0 %v5368
  %6449 = vmatmul.mubr.bf16.gmra.mxu0 %v5367
  %v6450 = vpop.f32.mrf.mxu0
  %v6451 = vadd.f32 %v6098, %v6450
  %v6452 = vpop.f32.mrf.mxu0
  %v6453 = vadd.f32 %v6100, %v6452
  %v6454 = vpop.f32.mrf.mxu0
  %v6455 = vadd.f32 %v6102, %v6454
  %v6456 = vpop.f32.mrf.mxu0
  %v6457 = vadd.f32 %v6104, %v6456
  %6458 = vdwg.mxu0
  %v6459 = vpack.c.bf16 %v6145, %v6141
  %v6460 = vpack.c.bf16 %v6147, %v6143
  %v6461 = vpack.c.bf16 %v6155, %v6151
  %v6462 = vpack.c.bf16 %v6157, %v6153
  %v6463 = vpack.c.bf16 %v6165, %v6161
  %v6464 = vpack.c.bf16 %v6167, %v6163
  %v6465 = vpack.c.bf16 %v6175, %v6171
  %v6466 = vpack.c.bf16 %v6177, %v6173
  %v6467 = vpack.c.bf16 %v6185, %v6181
  %v6468 = vpack.c.bf16 %v6187, %v6183
  %v6469 = vpack.c.bf16 %v6195, %v6191
  %v6470 = vpack.c.bf16 %v6197, %v6193
  %v6471 = vpack.c.bf16 %v6205, %v6201
  %v6472 = vpack.c.bf16 %v6207, %v6203
  %v6473 = vpack.c.bf16 %v6215, %v6211
  %v6474 = vpack.c.bf16 %v6217, %v6213
  %v6475 = vpack.c.bf16 %v6225, %v6221
  %v6476 = vpack.c.bf16 %v6227, %v6223
  %v6477 = vpack.c.bf16 %v6235, %v6231
  %v6478 = vpack.c.bf16 %v6237, %v6233
  %v6479 = vpack.c.bf16 %v6245, %v6241
  %v6480 = vpack.c.bf16 %v6247, %v6243
  %v6481 = vpack.c.bf16 %v6255, %v6251
  %v6482 = vpack.c.bf16 %v6257, %v6253
  %v6483 = vpack.c.bf16 %v6265, %v6261
  %v6484 = vpack.c.bf16 %v6267, %v6263
  %v6485 = vpack.c.bf16 %v6275, %v6271
  %v6486 = vpack.c.bf16 %v6277, %v6273
  %v6487 = vpack.c.bf16 %v6285, %v6281
  %v6488 = vpack.c.bf16 %v6287, %v6283
  %v6489 = vpack.c.bf16 %v6295, %v6291
  %v6490 = vpack.c.bf16 %v6297, %v6293
  %v6491 = vpack.c.bf16 %v6305, %v6301
  %v6492 = vpack.c.bf16 %v6307, %v6303
  %v6493 = vpack.c.bf16 %v6315, %v6311
  %v6494 = vpack.c.bf16 %v6317, %v6313
  %v6495 = vpack.c.bf16 %v6325, %v6321
  %v6496 = vpack.c.bf16 %v6327, %v6323
  %v6497 = vpack.c.bf16 %v6335, %v6331
  %v6498 = vpack.c.bf16 %v6337, %v6333
  %v6499 = vpack.c.bf16 %v6345, %v6341
  %v6500 = vpack.c.bf16 %v6347, %v6343
  %v6501 = vpack.c.bf16 %v6355, %v6351
  %v6502 = vpack.c.bf16 %v6357, %v6353
  %v6503 = vpack.c.bf16 %v6365, %v6361
  %v6504 = vpack.c.bf16 %v6367, %v6363
  %v6505 = vpack.c.bf16 %v6375, %v6371
  %v6506 = vpack.c.bf16 %v6377, %v6373
  %v6507 = vpack.c.bf16 %v6385, %v6381
  %v6508 = vpack.c.bf16 %v6387, %v6383
  %v6509 = vpack.c.bf16 %v6395, %v6391
  %v6510 = vpack.c.bf16 %v6397, %v6393
  %v6511 = vpack.c.bf16 %v6405, %v6401
  %v6512 = vpack.c.bf16 %v6407, %v6403
  %v6513 = vpack.c.bf16 %v6415, %v6411
  %v6514 = vpack.c.bf16 %v6417, %v6413
  %v6515 = vpack.c.bf16 %v6425, %v6421
  %v6516 = vpack.c.bf16 %v6427, %v6423
  %v6517 = vpack.c.bf16 %v6435, %v6431
  %v6518 = vpack.c.bf16 %v6437, %v6433
  %v6519 = vpack.c.bf16 %v6445, %v6441
  %v6520 = vpack.c.bf16 %v6447, %v6443
  %v6521 = vpack.c.bf16 %v6455, %v6451
  %v6522 = vpack.c.bf16 %v6457, %v6453
  %v6523 = vld [vmem:[%s4] sm:$0x3]
  %v6526 = vunpack.c.l.s4 1966171168
  %v6527 = vunpack.c.0.s8 %v6526
  %v6528 = vlaneseq
  %v6529 = vshrl.u32 %v6528, 7
  %v6530 = vsub.s32 %v6527, %v6529
  %v6531 = vrot.slane %v6523, %v6530
  %v6532 = vcombine.high %v6531, %v6531
  %v6534 = vunpack.c.l.s4 1966171168
  %v6535 = vunpack.c.0.s8 %v6534
  %v6536 = vlaneseq
  %v6537 = vshrl.u32 %v6536, 7
  %v6538 = vsub.s32 %v6535, %v6537
  %v6539 = vrot.slane %v6531, %v6538
  %v6541 = vunpack.c.l.s4 1966171168
  %v6542 = vunpack.c.0.s8 %v6541
  %v6543 = vlaneseq
  %v6544 = vshrl.u32 %v6543, 7
  %v6545 = vsub.s32 %v6542, %v6544
  %v6546 = vrot.slane %v6532, %v6545
  %v6548 = vpack.i.b16 %v6539, %v6539
  %v6550 = vlaneseq
  %v6551 = vshrl.u32 %v6550, 7
  %v6552 = vsub.s32 0, %v6551
  %v6553 = vrot.slane %v6548, %v6552
  %v6555 = vpack.i.b16 %v6546, %v6546
  %v6557 = vlaneseq
  %v6558 = vshrl.u32 %v6557, 7
  %v6559 = vsub.s32 0, %v6558
  %v6560 = vrot.slane %v6555, %v6559
  %v6561 = vadd.bf16 %v6459, %v6553
  %v6562 = vadd.bf16 %v6460, %v6560
  %v6563 = vadd.bf16 %v6461, %v6553
  %v6564 = vadd.bf16 %v6462, %v6560
  %v6565 = vadd.bf16 %v6463, %v6553
  %v6566 = vadd.bf16 %v6464, %v6560
  %v6567 = vadd.bf16 %v6465, %v6553
  %v6568 = vadd.bf16 %v6466, %v6560
  %v6569 = vadd.bf16 %v6467, %v6553
  %v6570 = vadd.bf16 %v6468, %v6560
  %v6571 = vadd.bf16 %v6469, %v6553
  %v6572 = vadd.bf16 %v6470, %v6560
  %v6573 = vadd.bf16 %v6471, %v6553
  %v6574 = vadd.bf16 %v6472, %v6560
  %v6575 = vadd.bf16 %v6473, %v6553
  %v6576 = vadd.bf16 %v6474, %v6560
  %v6577 = vadd.bf16 %v6475, %v6553
  %v6578 = vadd.bf16 %v6476, %v6560
  %v6579 = vadd.bf16 %v6477, %v6553
  %v6580 = vadd.bf16 %v6478, %v6560
  %v6581 = vadd.bf16 %v6479, %v6553
  %v6582 = vadd.bf16 %v6480, %v6560
  %v6583 = vadd.bf16 %v6481, %v6553
  %v6584 = vadd.bf16 %v6482, %v6560
  %v6585 = vadd.bf16 %v6483, %v6553
  %v6586 = vadd.bf16 %v6484, %v6560
  %v6587 = vadd.bf16 %v6485, %v6553
  %v6588 = vadd.bf16 %v6486, %v6560
  %v6589 = vadd.bf16 %v6487, %v6553
  %v6590 = vadd.bf16 %v6488, %v6560
  %v6591 = vadd.bf16 %v6489, %v6553
  %v6592 = vadd.bf16 %v6490, %v6560
  %v6593 = vadd.bf16 %v6491, %v6553
  %v6594 = vadd.bf16 %v6492, %v6560
  %v6595 = vadd.bf16 %v6493, %v6553
  %v6596 = vadd.bf16 %v6494, %v6560
  %v6597 = vadd.bf16 %v6495, %v6553
  %v6598 = vadd.bf16 %v6496, %v6560
  %v6599 = vadd.bf16 %v6497, %v6553
  %v6600 = vadd.bf16 %v6498, %v6560
  %v6601 = vadd.bf16 %v6499, %v6553
  %v6602 = vadd.bf16 %v6500, %v6560
  %v6603 = vadd.bf16 %v6501, %v6553
  %v6604 = vadd.bf16 %v6502, %v6560
  %v6605 = vadd.bf16 %v6503, %v6553
  %v6606 = vadd.bf16 %v6504, %v6560
  %v6607 = vadd.bf16 %v6505, %v6553
  %v6608 = vadd.bf16 %v6506, %v6560
  %v6609 = vadd.bf16 %v6507, %v6553
  %v6610 = vadd.bf16 %v6508, %v6560
  %v6611 = vadd.bf16 %v6509, %v6553
  %v6612 = vadd.bf16 %v6510, %v6560
  %v6613 = vadd.bf16 %v6511, %v6553
  %v6614 = vadd.bf16 %v6512, %v6560
  %v6615 = vadd.bf16 %v6513, %v6553
  %v6616 = vadd.bf16 %v6514, %v6560
  %v6617 = vadd.bf16 %v6515, %v6553
  %v6618 = vadd.bf16 %v6516, %v6560
  %v6619 = vadd.bf16 %v6517, %v6553
  %v6620 = vadd.bf16 %v6518, %v6560
  %v6621 = vadd.bf16 %v6519, %v6553
  %v6622 = vadd.bf16 %v6520, %v6560
  %v6623 = vadd.bf16 %v6521, %v6553
  %v6624 = vadd.bf16 %v6522, %v6560
  %v6625 = vmul.bf16 %v6561, 1045249613
  %v6626 = vmul.bf16 %v6562, 1045249613
  %v6627 = vmul.bf16 %v6563, 1045249613
  %v6628 = vmul.bf16 %v6564, 1045249613
  %v6629 = vmul.bf16 %v6565, 1045249613
  %v6630 = vmul.bf16 %v6566, 1045249613
  %v6631 = vmul.bf16 %v6567, 1045249613
  %v6632 = vmul.bf16 %v6568, 1045249613
  %v6633 = vmul.bf16 %v6569, 1045249613
  %v6634 = vmul.bf16 %v6570, 1045249613
  %v6635 = vmul.bf16 %v6571, 1045249613
  %v6636 = vmul.bf16 %v6572, 1045249613
  %v6637 = vmul.bf16 %v6573, 1045249613
  %v6638 = vmul.bf16 %v6574, 1045249613
  %v6639 = vmul.bf16 %v6575, 1045249613
  %v6640 = vmul.bf16 %v6576, 1045249613
  %v6641 = vmul.bf16 %v6577, 1045249613
  %v6642 = vmul.bf16 %v6578, 1045249613
  %v6643 = vmul.bf16 %v6579, 1045249613
  %v6644 = vmul.bf16 %v6580, 1045249613
  %v6645 = vmul.bf16 %v6581, 1045249613
  %v6646 = vmul.bf16 %v6582, 1045249613
  %v6647 = vmul.bf16 %v6583, 1045249613
  %v6648 = vmul.bf16 %v6584, 1045249613
  %v6649 = vmul.bf16 %v6585, 1045249613
  %v6650 = vmul.bf16 %v6586, 1045249613
  %v6651 = vmul.bf16 %v6587, 1045249613
  %v6652 = vmul.bf16 %v6588, 1045249613
  %v6653 = vmul.bf16 %v6589, 1045249613
  %v6654 = vmul.bf16 %v6590, 1045249613
  %v6655 = vmul.bf16 %v6591, 1045249613
  %v6656 = vmul.bf16 %v6592, 1045249613
  %v6657 = vmul.bf16 %v6593, 1045249613
  %v6658 = vmul.bf16 %v6594, 1045249613
  %v6659 = vmul.bf16 %v6595, 1045249613
  %v6660 = vmul.bf16 %v6596, 1045249613
  %v6661 = vmul.bf16 %v6597, 1045249613
  %v6662 = vmul.bf16 %v6598, 1045249613
  %v6663 = vmul.bf16 %v6599, 1045249613
  %v6664 = vmul.bf16 %v6600, 1045249613
  %v6665 = vmul.bf16 %v6601, 1045249613
  %v6666 = vmul.bf16 %v6602, 1045249613
  %v6667 = vmul.bf16 %v6603, 1045249613
  %v6668 = vmul.bf16 %v6604, 1045249613
  %v6669 = vmul.bf16 %v6605, 1045249613
  %v6670 = vmul.bf16 %v6606, 1045249613
  %v6671 = vmul.bf16 %v6607, 1045249613
  %v6672 = vmul.bf16 %v6608, 1045249613
  %v6673 = vmul.bf16 %v6609, 1045249613
  %v6674 = vmul.bf16 %v6610, 1045249613
  %v6675 = vmul.bf16 %v6611, 1045249613
  %v6676 = vmul.bf16 %v6612, 1045249613
  %v6677 = vmul.bf16 %v6613, 1045249613
  %v6678 = vmul.bf16 %v6614, 1045249613
  %v6679 = vmul.bf16 %v6615, 1045249613
  %v6680 = vmul.bf16 %v6616, 1045249613
  %v6681 = vmul.bf16 %v6617, 1045249613
  %v6682 = vmul.bf16 %v6618, 1045249613
  %v6683 = vmul.bf16 %v6619, 1045249613
  %v6684 = vmul.bf16 %v6620, 1045249613
  %v6685 = vmul.bf16 %v6621, 1045249613
  %v6686 = vmul.bf16 %v6622, 1045249613
  %v6687 = vmul.bf16 %v6623, 1045249613
  %v6688 = vmul.bf16 %v6624, 1045249613
  %v6689 = vmax.bf16 %v6561, %v6625
  %v6690 = vmax.bf16 %v6562, %v6626
  %v6691 = vmax.bf16 %v6563, %v6627
  %v6692 = vmax.bf16 %v6564, %v6628
  %v6693 = vmax.bf16 %v6565, %v6629
  %v6694 = vmax.bf16 %v6566, %v6630
  %v6695 = vmax.bf16 %v6567, %v6631
  %v6696 = vmax.bf16 %v6568, %v6632
  %v6697 = vmax.bf16 %v6569, %v6633
  %v6698 = vmax.bf16 %v6570, %v6634
  %v6699 = vmax.bf16 %v6571, %v6635
  %v6700 = vmax.bf16 %v6572, %v6636
  %v6701 = vmax.bf16 %v6573, %v6637
  %v6702 = vmax.bf16 %v6574, %v6638
  %v6703 = vmax.bf16 %v6575, %v6639
  %v6704 = vmax.bf16 %v6576, %v6640
  %v6705 = vmax.bf16 %v6577, %v6641
  %v6706 = vmax.bf16 %v6578, %v6642
  %v6707 = vmax.bf16 %v6579, %v6643
  %v6708 = vmax.bf16 %v6580, %v6644
  %v6709 = vmax.bf16 %v6581, %v6645
  %v6710 = vmax.bf16 %v6582, %v6646
  %v6711 = vmax.bf16 %v6583, %v6647
  %v6712 = vmax.bf16 %v6584, %v6648
  %v6713 = vmax.bf16 %v6585, %v6649
  %v6714 = vmax.bf16 %v6586, %v6650
  %v6715 = vmax.bf16 %v6587, %v6651
  %v6716 = vmax.bf16 %v6588, %v6652
  %v6717 = vmax.bf16 %v6589, %v6653
  %v6718 = vmax.bf16 %v6590, %v6654
  %v6719 = vmax.bf16 %v6591, %v6655
  %v6720 = vmax.bf16 %v6592, %v6656
  %v6721 = vmax.bf16 %v6593, %v6657
  %v6722 = vmax.bf16 %v6594, %v6658
  %v6723 = vmax.bf16 %v6595, %v6659
  %v6724 = vmax.bf16 %v6596, %v6660
  %v6725 = vmax.bf16 %v6597, %v6661
  %v6726 = vmax.bf16 %v6598, %v6662
  %v6727 = vmax.bf16 %v6599, %v6663
  %v6728 = vmax.bf16 %v6600, %v6664
  %v6729 = vmax.bf16 %v6601, %v6665
  %v6730 = vmax.bf16 %v6602, %v6666
  %v6731 = vmax.bf16 %v6603, %v6667
  %v6732 = vmax.bf16 %v6604, %v6668
  %v6733 = vmax.bf16 %v6605, %v6669
  %v6734 = vmax.bf16 %v6606, %v6670
  %v6735 = vmax.bf16 %v6607, %v6671
  %v6736 = vmax.bf16 %v6608, %v6672
  %v6737 = vmax.bf16 %v6609, %v6673
  %v6738 = vmax.bf16 %v6610, %v6674
  %v6739 = vmax.bf16 %v6611, %v6675
  %v6740 = vmax.bf16 %v6612, %v6676
  %v6741 = vmax.bf16 %v6613, %v6677
  %v6742 = vmax.bf16 %v6614, %v6678
  %v6743 = vmax.bf16 %v6615, %v6679
  %v6744 = vmax.bf16 %v6616, %v6680
  %v6745 = vmax.bf16 %v6617, %v6681
  %v6746 = vmax.bf16 %v6618, %v6682
  %v6747 = vmax.bf16 %v6619, %v6683
  %v6748 = vmax.bf16 %v6620, %v6684
  %v6749 = vmax.bf16 %v6621, %v6685
  %v6750 = vmax.bf16 %v6622, %v6686
  %v6751 = vmax.bf16 %v6623, %v6687
  %v6752 = vmax.bf16 %v6624, %v6688
  %v6753 = vld [vmem:[%s5] sm:$0xf]
  %v6754 = vld [vmem:[%s5 + $0x4] sm:$0xf]
  %v6755 = vld [vmem:[%s5 + $0x8] sm:$0xf]
  %v6756 = vld [vmem:[%s5 + $0xc] sm:$0xf]
  %v6757 = vld [vmem:[%s5 + $0x10] sm:$0xf]
  %v6758 = vld [vmem:[%s5 + $0x14] sm:$0xf]
  %v6759 = vld [vmem:[%s5 + $0x18] sm:$0xf]
  %v6760 = vld [vmem:[%s5 + $0x1c] sm:$0xf]
  %v6761 = vld [vmem:[%s5 + $0x20] sm:$0xf]
  %v6762 = vld [vmem:[%s5 + $0x24] sm:$0xf]
  %v6763 = vld [vmem:[%s5 + $0x28] sm:$0xf]
  %v6764 = vld [vmem:[%s5 + $0x2c] sm:$0xf]
  %v6765 = vld [vmem:[%s5 + $0x30] sm:$0xf]
  %v6766 = vld [vmem:[%s5 + $0x34] sm:$0xf]
  %v6767 = vld [vmem:[%s5 + $0x38] sm:$0xf]
  %v6768 = vld [vmem:[%s5 + $0x3c] sm:$0xf]
  %v6769 = vld [vmem:[%s5 + $0x40] sm:$0xf]
  %v6770 = vld [vmem:[%s5 + $0x44] sm:$0xf]
  %v6771 = vld [vmem:[%s5 + $0x48] sm:$0xf]
  %v6772 = vld [vmem:[%s5 + $0x4c] sm:$0xf]
  %v6773 = vld [vmem:[%s5 + $0x50] sm:$0xf]
  %v6774 = vld [vmem:[%s5 + $0x54] sm:$0xf]
  %v6775 = vld [vmem:[%s5 + $0x58] sm:$0xf]
  %v6776 = vld [vmem:[%s5 + $0x5c] sm:$0xf]
  %v6777 = vld [vmem:[%s5 + $0x60] sm:$0xf]
  %v6778 = vld [vmem:[%s5 + $0x64] sm:$0xf]
  %v6779 = vld [vmem:[%s5 + $0x68] sm:$0xf]
  %v6780 = vld [vmem:[%s5 + $0x6c] sm:$0xf]
  %v6781 = vld [vmem:[%s5 + $0x70] sm:$0xf]
  %v6782 = vld [vmem:[%s5 + $0x74] sm:$0xf]
  %v6783 = vld [vmem:[%s5 + $0x78] sm:$0xf]
  %v6784 = vld [vmem:[%s5 + $0x7c] sm:$0xf]
  %v6817 = vunpack.c.l.b16 %v6753
  %v6818 = vunpack.c.l.b16 %v6754
  %v6819 = vunpack.c.l.b16 %v6755
  %v6820 = vunpack.c.l.b16 %v6756
  %v6821 = vunpack.c.l.b16 %v6757
  %v6822 = vunpack.c.l.b16 %v6758
  %v6823 = vunpack.c.l.b16 %v6759
  %v6824 = vunpack.c.l.b16 %v6760
  %v6825 = vunpack.c.l.b16 %v6761
  %v6826 = vunpack.c.l.b16 %v6762
  %v6827 = vunpack.c.l.b16 %v6763
  %v6828 = vunpack.c.l.b16 %v6764
  %v6829 = vunpack.c.l.b16 %v6765
  %v6830 = vunpack.c.l.b16 %v6766
  %v6831 = vunpack.c.l.b16 %v6767
  %v6832 = vunpack.c.l.b16 %v6768
  %v6833 = vunpack.c.l.b16 %v6769
  %v6834 = vunpack.c.l.b16 %v6770
  %v6835 = vunpack.c.l.b16 %v6771
  %v6836 = vunpack.c.l.b16 %v6772
  %v6837 = vunpack.c.l.b16 %v6773
  %v6838 = vunpack.c.l.b16 %v6774
  %v6839 = vunpack.c.l.b16 %v6775
  %v6840 = vunpack.c.l.b16 %v6776
  %v6841 = vunpack.c.l.b16 %v6777
  %v6842 = vunpack.c.l.b16 %v6778
  %v6843 = vunpack.c.l.b16 %v6779
  %v6844 = vunpack.c.l.b16 %v6780
  %v6845 = vunpack.c.l.b16 %v6781
  %v6846 = vunpack.c.l.b16 %v6782
  %v6847 = vunpack.c.l.b16 %v6783
  %v6848 = vunpack.c.l.b16 %v6784
  %v6849 = vpack.c.b16 %v6818, %v6817
  %v6850 = vpack.c.b16 %v6820, %v6819
  %v6851 = vpack.c.b16 %v6822, %v6821
  %v6852 = vpack.c.b16 %v6824, %v6823
  %v6853 = vpack.c.b16 %v6826, %v6825
  %v6854 = vpack.c.b16 %v6828, %v6827
  %v6855 = vpack.c.b16 %v6830, %v6829
  %v6856 = vpack.c.b16 %v6832, %v6831
  %v6857 = vpack.c.b16 %v6834, %v6833
  %v6858 = vpack.c.b16 %v6836, %v6835
  %v6859 = vpack.c.b16 %v6838, %v6837
  %v6860 = vpack.c.b16 %v6840, %v6839
  %v6861 = vpack.c.b16 %v6842, %v6841
  %v6862 = vpack.c.b16 %v6844, %v6843
  %v6863 = vpack.c.b16 %v6846, %v6845
  %v6864 = vpack.c.b16 %v6848, %v6847
  %6881 = vmatprep.subr.bf16.mxu0 0
  %6882 = vmatpush1.bf16.msra.mxu0 %v6856
  %6883 = vmatprep.subr.bf16.mxu0 0
  %6884 = vmatpush1.bf16.msra.mxu0 %v6855
  %6885 = vmatprep.subr.bf16.mxu0 0
  %6886 = vmatpush1.bf16.msra.mxu0 %v6854
  %6887 = vmatprep.subr.bf16.mxu0 0
  %6888 = vmatpush1.bf16.msra.mxu0 %v6853
  %6889 = vmatprep.subr.bf16.mxu0 0
  %6890 = vmatpush1.bf16.msra.mxu0 %v6852
  %6891 = vmatprep.subr.bf16.mxu0 0
  %6892 = vmatpush1.bf16.msra.mxu0 %v6851
  %6893 = vmatprep.subr.bf16.mxu0 0
  %6894 = vmatpush1.bf16.msra.mxu0 %v6850
  %6895 = vmatprep.subr.bf16.mxu0 0
  %6896 = vmatpush1.bf16.msra.mxu0 %v6849
  %6897 = vmatprep.subr.bf16.mxu0 0
  %6898 = vmatpush2.bf16.msra.mxu0 %v6864
  %6899 = vmatprep.subr.bf16.mxu0 0
  %6900 = vmatpush2.bf16.msra.mxu0 %v6863
  %6901 = vmatprep.subr.bf16.mxu0 0
  %6902 = vmatpush2.bf16.msra.mxu0 %v6862
  %6903 = vmatprep.subr.bf16.mxu0 0
  %6904 = vmatpush2.bf16.msra.mxu0 %v6861
  %6905 = vmatprep.subr.bf16.mxu0 0
  %6906 = vmatpush2.bf16.msra.mxu0 %v6860
  %6907 = vmatprep.subr.bf16.mxu0 0
  %6908 = vmatpush2.bf16.msra.mxu0 %v6859
  %6909 = vmatprep.subr.bf16.mxu0 0
  %6910 = vmatpush2.bf16.msra.mxu0 %v6858
  %6911 = vmatprep.subr.bf16.mxu0 0
  %6912 = vmatpush2.bf16.msra.mxu0 %v6857
  %6913 = vmatprep.mubr.bf16.mxu0 %v6690
  %6914 = vmatmul.mubr.bf16.gmra.mxu0 %v6689
  %v6915 = vpop.f32.mrf.mxu0
  %v6916 = vadd.f32 0.0, %v6915
  %v6917 = vpop.f32.mrf.mxu0
  %v6918 = vpop.f32.mrf.mxu0
  %v6919 = vadd.f32 0.0, %v6918
  %v6920 = vpop.f32.mrf.mxu0
  %6921 = vmatprep.mubr.bf16.mxu0 %v6692
  %6922 = vmatmul.mubr.bf16.gmra.mxu0 %v6691
  %v6923 = vpop.f32.mrf.mxu0
  %v6924 = vadd.f32 0.0, %v6923
  %v6925 = vpop.f32.mrf.mxu0
  %v6926 = vpop.f32.mrf.mxu0
  %v6927 = vadd.f32 0.0, %v6926
  %v6928 = vpop.f32.mrf.mxu0
  %6929 = vmatprep.mubr.bf16.mxu0 %v6694
  %6930 = vmatmul.mubr.bf16.gmra.mxu0 %v6693
  %v6931 = vpop.f32.mrf.mxu0
  %v6932 = vadd.f32 0.0, %v6931
  %v6933 = vpop.f32.mrf.mxu0
  %v6934 = vpop.f32.mrf.mxu0
  %v6935 = vadd.f32 0.0, %v6934
  %v6936 = vpop.f32.mrf.mxu0
  %6937 = vmatprep.mubr.bf16.mxu0 %v6696
  %6938 = vmatmul.mubr.bf16.gmra.mxu0 %v6695
  %v6939 = vpop.f32.mrf.mxu0
  %v6940 = vadd.f32 0.0, %v6939
  %v6941 = vpop.f32.mrf.mxu0
  %v6942 = vpop.f32.mrf.mxu0
  %v6943 = vadd.f32 0.0, %v6942
  %v6944 = vpop.f32.mrf.mxu0
  %6945 = vmatprep.mubr.bf16.mxu0 %v6698
  %6946 = vmatmul.mubr.bf16.gmra.mxu0 %v6697
  %v6947 = vpop.f32.mrf.mxu0
  %v6948 = vadd.f32 0.0, %v6947
  %v6949 = vpop.f32.mrf.mxu0
  %v6950 = vpop.f32.mrf.mxu0
  %v6951 = vadd.f32 0.0, %v6950
  %v6952 = vpop.f32.mrf.mxu0
  %6953 = vmatprep.mubr.bf16.mxu0 %v6700
  %6954 = vmatmul.mubr.bf16.gmra.mxu0 %v6699
  %v6955 = vpop.f32.mrf.mxu0
  %v6956 = vadd.f32 0.0, %v6955
  %v6957 = vpop.f32.mrf.mxu0
  %v6958 = vpop.f32.mrf.mxu0
  %v6959 = vadd.f32 0.0, %v6958
  %v6960 = vpop.f32.mrf.mxu0
  %6961 = vmatprep.mubr.bf16.mxu0 %v6702
  %6962 = vmatmul.mubr.bf16.gmra.mxu0 %v6701
  %v6963 = vpop.f32.mrf.mxu0
  %v6964 = vadd.f32 0.0, %v6963
  %v6965 = vpop.f32.mrf.mxu0
  %v6966 = vpop.f32.mrf.mxu0
  %v6967 = vadd.f32 0.0, %v6966
  %v6968 = vpop.f32.mrf.mxu0
  %6969 = vmatprep.mubr.bf16.mxu0 %v6704
  %6970 = vmatmul.mubr.bf16.gmra.mxu0 %v6703
  %v6971 = vpop.f32.mrf.mxu0
  %v6972 = vadd.f32 0.0, %v6971
  %v6973 = vpop.f32.mrf.mxu0
  %v6974 = vpop.f32.mrf.mxu0
  %v6975 = vadd.f32 0.0, %v6974
  %v6976 = vpop.f32.mrf.mxu0
  %6977 = vmatprep.mubr.bf16.mxu0 %v6706
  %6978 = vmatmul.mubr.bf16.gmra.mxu0 %v6705
  %v6979 = vpop.f32.mrf.mxu0
  %v6980 = vadd.f32 0.0, %v6979
  %v6981 = vpop.f32.mrf.mxu0
  %v6982 = vpop.f32.mrf.mxu0
  %v6983 = vadd.f32 0.0, %v6982
  %v6984 = vpop.f32.mrf.mxu0
  %6985 = vmatprep.mubr.bf16.mxu0 %v6708
  %6986 = vmatmul.mubr.bf16.gmra.mxu0 %v6707
  %v6987 = vpop.f32.mrf.mxu0
  %v6988 = vadd.f32 0.0, %v6987
  %v6989 = vpop.f32.mrf.mxu0
  %v6990 = vpop.f32.mrf.mxu0
  %v6991 = vadd.f32 0.0, %v6990
  %v6992 = vpop.f32.mrf.mxu0
  %6993 = vmatprep.mubr.bf16.mxu0 %v6710
  %6994 = vmatmul.mubr.bf16.gmra.mxu0 %v6709
  %v6995 = vpop.f32.mrf.mxu0
  %v6996 = vadd.f32 0.0, %v6995
  %v6997 = vpop.f32.mrf.mxu0
  %v6998 = vpop.f32.mrf.mxu0
  %v6999 = vadd.f32 0.0, %v6998
  %v7000 = vpop.f32.mrf.mxu0
  %7001 = vmatprep.mubr.bf16.mxu0 %v6712
  %7002 = vmatmul.mubr.bf16.gmra.mxu0 %v6711
  %v7003 = vpop.f32.mrf.mxu0
  %v7004 = vadd.f32 0.0, %v7003
  %v7005 = vpop.f32.mrf.mxu0
  %v7006 = vpop.f32.mrf.mxu0
  %v7007 = vadd.f32 0.0, %v7006
  %v7008 = vpop.f32.mrf.mxu0
  %7009 = vmatprep.mubr.bf16.mxu0 %v6714
  %7010 = vmatmul.mubr.bf16.gmra.mxu0 %v6713
  %v7011 = vpop.f32.mrf.mxu0
  %v7012 = vadd.f32 0.0, %v7011
  %v7013 = vpop.f32.mrf.mxu0
  %v7014 = vpop.f32.mrf.mxu0
  %v7015 = vadd.f32 0.0, %v7014
  %v7016 = vpop.f32.mrf.mxu0
  %7017 = vmatprep.mubr.bf16.mxu0 %v6716
  %7018 = vmatmul.mubr.bf16.gmra.mxu0 %v6715
  %v7019 = vpop.f32.mrf.mxu0
  %v7020 = vadd.f32 0.0, %v7019
  %v7021 = vpop.f32.mrf.mxu0
  %v7022 = vpop.f32.mrf.mxu0
  %v7023 = vadd.f32 0.0, %v7022
  %v7024 = vpop.f32.mrf.mxu0
  %7025 = vmatprep.mubr.bf16.mxu0 %v6718
  %7026 = vmatmul.mubr.bf16.gmra.mxu0 %v6717
  %v7027 = vpop.f32.mrf.mxu0
  %v7028 = vadd.f32 0.0, %v7027
  %v7029 = vpop.f32.mrf.mxu0
  %v7030 = vpop.f32.mrf.mxu0
  %v7031 = vadd.f32 0.0, %v7030
  %v7032 = vpop.f32.mrf.mxu0
  %7033 = vmatprep.mubr.bf16.mxu0 %v6720
  %7034 = vmatmul.mubr.bf16.gmra.mxu0 %v6719
  %v7035 = vpop.f32.mrf.mxu0
  %v7036 = vadd.f32 0.0, %v7035
  %v7037 = vpop.f32.mrf.mxu0
  %v7038 = vpop.f32.mrf.mxu0
  %v7039 = vadd.f32 0.0, %v7038
  %v7040 = vpop.f32.mrf.mxu0
  %7041 = vmatprep.mubr.bf16.mxu0 %v6722
  %7042 = vmatmul.mubr.bf16.gmra.mxu0 %v6721
  %v7043 = vpop.f32.mrf.mxu0
  %v7044 = vadd.f32 0.0, %v7043
  %v7045 = vpop.f32.mrf.mxu0
  %v7046 = vpop.f32.mrf.mxu0
  %v7047 = vadd.f32 0.0, %v7046
  %v7048 = vpop.f32.mrf.mxu0
  %7049 = vmatprep.mubr.bf16.mxu0 %v6724
  %7050 = vmatmul.mubr.bf16.gmra.mxu0 %v6723
  %v7051 = vpop.f32.mrf.mxu0
  %v7052 = vadd.f32 0.0, %v7051
  %v7053 = vpop.f32.mrf.mxu0
  %v7054 = vpop.f32.mrf.mxu0
  %v7055 = vadd.f32 0.0, %v7054
  %v7056 = vpop.f32.mrf.mxu0
  %7057 = vmatprep.mubr.bf16.mxu0 %v6726
  %7058 = vmatmul.mubr.bf16.gmra.mxu0 %v6725
  %v7059 = vpop.f32.mrf.mxu0
  %v7060 = vadd.f32 0.0, %v7059
  %v7061 = vpop.f32.mrf.mxu0
  %v7062 = vpop.f32.mrf.mxu0
  %v7063 = vadd.f32 0.0, %v7062
  %v7064 = vpop.f32.mrf.mxu0
  %7065 = vmatprep.mubr.bf16.mxu0 %v6728
  %7066 = vmatmul.mubr.bf16.gmra.mxu0 %v6727
  %v7067 = vpop.f32.mrf.mxu0
  %v7068 = vadd.f32 0.0, %v7067
  %v7069 = vpop.f32.mrf.mxu0
  %v7070 = vpop.f32.mrf.mxu0
  %v7071 = vadd.f32 0.0, %v7070
  %v7072 = vpop.f32.mrf.mxu0
  %7073 = vmatprep.mubr.bf16.mxu0 %v6730
  %7074 = vmatmul.mubr.bf16.gmra.mxu0 %v6729
  %v7075 = vpop.f32.mrf.mxu0
  %v7076 = vadd.f32 0.0, %v7075
  %v7077 = vpop.f32.mrf.mxu0
  %v7078 = vpop.f32.mrf.mxu0
  %v7079 = vadd.f32 0.0, %v7078
  %v7080 = vpop.f32.mrf.mxu0
  %7081 = vmatprep.mubr.bf16.mxu0 %v6732
  %7082 = vmatmul.mubr.bf16.gmra.mxu0 %v6731
  %v7083 = vpop.f32.mrf.mxu0
  %v7084 = vadd.f32 0.0, %v7083
  %v7085 = vpop.f32.mrf.mxu0
  %v7086 = vpop.f32.mrf.mxu0
  %v7087 = vadd.f32 0.0, %v7086
  %v7088 = vpop.f32.mrf.mxu0
  %7089 = vmatprep.mubr.bf16.mxu0 %v6734
  %7090 = vmatmul.mubr.bf16.gmra.mxu0 %v6733
  %v7091 = vpop.f32.mrf.mxu0
  %v7092 = vadd.f32 0.0, %v7091
  %v7093 = vpop.f32.mrf.mxu0
  %v7094 = vpop.f32.mrf.mxu0
  %v7095 = vadd.f32 0.0, %v7094
  %v7096 = vpop.f32.mrf.mxu0
  %7097 = vmatprep.mubr.bf16.mxu0 %v6736
  %7098 = vmatmul.mubr.bf16.gmra.mxu0 %v6735
  %v7099 = vpop.f32.mrf.mxu0
  %v7100 = vadd.f32 0.0, %v7099
  %v7101 = vpop.f32.mrf.mxu0
  %v7102 = vpop.f32.mrf.mxu0
  %v7103 = vadd.f32 0.0, %v7102
  %v7104 = vpop.f32.mrf.mxu0
  %7105 = vmatprep.mubr.bf16.mxu0 %v6738
  %7106 = vmatmul.mubr.bf16.gmra.mxu0 %v6737
  %v7107 = vpop.f32.mrf.mxu0
  %v7108 = vadd.f32 0.0, %v7107
  %v7109 = vpop.f32.mrf.mxu0
  %v7110 = vpop.f32.mrf.mxu0
  %v7111 = vadd.f32 0.0, %v7110
  %v7112 = vpop.f32.mrf.mxu0
  %7113 = vmatprep.mubr.bf16.mxu0 %v6740
  %7114 = vmatmul.mubr.bf16.gmra.mxu0 %v6739
  %v7115 = vpop.f32.mrf.mxu0
  %v7116 = vadd.f32 0.0, %v7115
  %v7117 = vpop.f32.mrf.mxu0
  %v7118 = vpop.f32.mrf.mxu0
  %v7119 = vadd.f32 0.0, %v7118
  %v7120 = vpop.f32.mrf.mxu0
  %7121 = vmatprep.mubr.bf16.mxu0 %v6742
  %7122 = vmatmul.mubr.bf16.gmra.mxu0 %v6741
  %v7123 = vpop.f32.mrf.mxu0
  %v7124 = vadd.f32 0.0, %v7123
  %v7125 = vpop.f32.mrf.mxu0
  %v7126 = vpop.f32.mrf.mxu0
  %v7127 = vadd.f32 0.0, %v7126
  %v7128 = vpop.f32.mrf.mxu0
  %7129 = vmatprep.mubr.bf16.mxu0 %v6744
  %7130 = vmatmul.mubr.bf16.gmra.mxu0 %v6743
  %v7131 = vpop.f32.mrf.mxu0
  %v7132 = vadd.f32 0.0, %v7131
  %v7133 = vpop.f32.mrf.mxu0
  %v7134 = vpop.f32.mrf.mxu0
  %v7135 = vadd.f32 0.0, %v7134
  %v7136 = vpop.f32.mrf.mxu0
  %7137 = vmatprep.mubr.bf16.mxu0 %v6746
  %7138 = vmatmul.mubr.bf16.gmra.mxu0 %v6745
  %v7139 = vpop.f32.mrf.mxu0
  %v7140 = vadd.f32 0.0, %v7139
  %v7141 = vpop.f32.mrf.mxu0
  %v7142 = vpop.f32.mrf.mxu0
  %v7143 = vadd.f32 0.0, %v7142
  %v7144 = vpop.f32.mrf.mxu0
  %7145 = vmatprep.mubr.bf16.mxu0 %v6748
  %7146 = vmatmul.mubr.bf16.gmra.mxu0 %v6747
  %v7147 = vpop.f32.mrf.mxu0
  %v7148 = vadd.f32 0.0, %v7147
  %v7149 = vpop.f32.mrf.mxu0
  %v7150 = vpop.f32.mrf.mxu0
  %v7151 = vadd.f32 0.0, %v7150
  %v7152 = vpop.f32.mrf.mxu0
  %7153 = vmatprep.mubr.bf16.mxu0 %v6750
  %7154 = vmatmul.mubr.bf16.gmra.mxu0 %v6749
  %v7155 = vpop.f32.mrf.mxu0
  %v7156 = vadd.f32 0.0, %v7155
  %v7157 = vpop.f32.mrf.mxu0
  %v7158 = vpop.f32.mrf.mxu0
  %v7159 = vadd.f32 0.0, %v7158
  %v7160 = vpop.f32.mrf.mxu0
  %7161 = vmatprep.mubr.bf16.mxu0 %v6752
  %7162 = vmatmul.mubr.bf16.gmra.mxu0 %v6751
  %v7163 = vpop.f32.mrf.mxu0
  %v7164 = vadd.f32 0.0, %v7163
  %v7165 = vpop.f32.mrf.mxu0
  %v7166 = vpop.f32.mrf.mxu0
  %v7167 = vadd.f32 0.0, %v7166
  %v7168 = vpop.f32.mrf.mxu0
  %7169 = vdwg.mxu0
  %v7170 = vpack.c.bf16 %v6919, %v6916
  %v7171 = vpack.c.bf16 %v6927, %v6924
  %v7172 = vpack.c.bf16 %v6935, %v6932
  %v7173 = vpack.c.bf16 %v6943, %v6940
  %v7174 = vpack.c.bf16 %v6951, %v6948
  %v7175 = vpack.c.bf16 %v6959, %v6956
  %v7176 = vpack.c.bf16 %v6967, %v6964
  %v7177 = vpack.c.bf16 %v6975, %v6972
  %v7178 = vpack.c.bf16 %v6983, %v6980
  %v7179 = vpack.c.bf16 %v6991, %v6988
  %v7180 = vpack.c.bf16 %v6999, %v6996
  %v7181 = vpack.c.bf16 %v7007, %v7004
  %v7182 = vpack.c.bf16 %v7015, %v7012
  %v7183 = vpack.c.bf16 %v7023, %v7020
  %v7184 = vpack.c.bf16 %v7031, %v7028
  %v7185 = vpack.c.bf16 %v7039, %v7036
  %v7186 = vpack.c.bf16 %v7047, %v7044
  %v7187 = vpack.c.bf16 %v7055, %v7052
  %v7188 = vpack.c.bf16 %v7063, %v7060
  %v7189 = vpack.c.bf16 %v7071, %v7068
  %v7190 = vpack.c.bf16 %v7079, %v7076
  %v7191 = vpack.c.bf16 %v7087, %v7084
  %v7192 = vpack.c.bf16 %v7095, %v7092
  %v7193 = vpack.c.bf16 %v7103, %v7100
  %v7194 = vpack.c.bf16 %v7111, %v7108
  %v7195 = vpack.c.bf16 %v7119, %v7116
  %v7196 = vpack.c.bf16 %v7127, %v7124
  %v7197 = vpack.c.bf16 %v7135, %v7132
  %v7198 = vpack.c.bf16 %v7143, %v7140
  %v7199 = vpack.c.bf16 %v7151, %v7148
  %v7200 = vpack.c.bf16 %v7159, %v7156
  %v7201 = vpack.c.bf16 %v7167, %v7164
  %v7202 = vld [vmem:[%s6] sm:$0x1]
  %v7204 = vpack.i.b16 %v7202, %v7202
  %v7206 = vlaneseq
  %v7207 = vshrl.u32 %v7206, 7
  %v7208 = vsub.s32 0, %v7207
  %v7209 = vrot.slane %v7204, %v7208
  %v7210 = vadd.bf16 %v7170, %v7209
  %v7211 = vadd.bf16 %v7171, %v7209
  %v7212 = vadd.bf16 %v7172, %v7209
  %v7213 = vadd.bf16 %v7173, %v7209
  %v7214 = vadd.bf16 %v7174, %v7209
  %v7215 = vadd.bf16 %v7175, %v7209
  %v7216 = vadd.bf16 %v7176, %v7209
  %v7217 = vadd.bf16 %v7177, %v7209
  %v7218 = vadd.bf16 %v7178, %v7209
  %v7219 = vadd.bf16 %v7179, %v7209
  %v7220 = vadd.bf16 %v7180, %v7209
  %v7221 = vadd.bf16 %v7181, %v7209
  %v7222 = vadd.bf16 %v7182, %v7209
  %v7223 = vadd.bf16 %v7183, %v7209
  %v7224 = vadd.bf16 %v7184, %v7209
  %v7225 = vadd.bf16 %v7185, %v7209
  %v7226 = vadd.bf16 %v7186, %v7209
  %v7227 = vadd.bf16 %v7187, %v7209
  %v7228 = vadd.bf16 %v7188, %v7209
  %v7229 = vadd.bf16 %v7189, %v7209
  %v7230 = vadd.bf16 %v7190, %v7209
  %v7231 = vadd.bf16 %v7191, %v7209
  %v7232 = vadd.bf16 %v7192, %v7209
  %v7233 = vadd.bf16 %v7193, %v7209
  %v7234 = vadd.bf16 %v7194, %v7209
  %v7235 = vadd.bf16 %v7195, %v7209
  %v7236 = vadd.bf16 %v7196, %v7209
  %v7237 = vadd.bf16 %v7197, %v7209
  %v7238 = vadd.bf16 %v7198, %v7209
  %v7239 = vadd.bf16 %v7199, %v7209
  %v7240 = vadd.bf16 %v7200, %v7209
  %v7241 = vadd.bf16 %v7201, %v7209
  %v7242 = vmul.bf16 %v7210, 1045249613
  %v7243 = vmul.bf16 %v7211, 1045249613
  %v7244 = vmul.bf16 %v7212, 1045249613
  %v7245 = vmul.bf16 %v7213, 1045249613
  %v7246 = vmul.bf16 %v7214, 1045249613
  %v7247 = vmul.bf16 %v7215, 1045249613
  %v7248 = vmul.bf16 %v7216, 1045249613
  %v7249 = vmul.bf16 %v7217, 1045249613
  %v7250 = vmul.bf16 %v7218, 1045249613
  %v7251 = vmul.bf16 %v7219, 1045249613
  %v7252 = vmul.bf16 %v7220, 1045249613
  %v7253 = vmul.bf16 %v7221, 1045249613
  %v7254 = vmul.bf16 %v7222, 1045249613
  %v7255 = vmul.bf16 %v7223, 1045249613
  %v7256 = vmul.bf16 %v7224, 1045249613
  %v7257 = vmul.bf16 %v7225, 1045249613
  %v7258 = vmul.bf16 %v7226, 1045249613
  %v7259 = vmul.bf16 %v7227, 1045249613
  %v7260 = vmul.bf16 %v7228, 1045249613
  %v7261 = vmul.bf16 %v7229, 1045249613
  %v7262 = vmul.bf16 %v7230, 1045249613
  %v7263 = vmul.bf16 %v7231, 1045249613
  %v7264 = vmul.bf16 %v7232, 1045249613
  %v7265 = vmul.bf16 %v7233, 1045249613
  %v7266 = vmul.bf16 %v7234, 1045249613
  %v7267 = vmul.bf16 %v7235, 1045249613
  %v7268 = vmul.bf16 %v7236, 1045249613
  %v7269 = vmul.bf16 %v7237, 1045249613
  %v7270 = vmul.bf16 %v7238, 1045249613
  %v7271 = vmul.bf16 %v7239, 1045249613
  %v7272 = vmul.bf16 %v7240, 1045249613
  %v7273 = vmul.bf16 %v7241, 1045249613
  %v7274 = vmax.bf16 %v7210, %v7242
  %v7275 = vmax.bf16 %v7211, %v7243
  %v7276 = vmax.bf16 %v7212, %v7244
  %v7277 = vmax.bf16 %v7213, %v7245
  %v7278 = vmax.bf16 %v7214, %v7246
  %v7279 = vmax.bf16 %v7215, %v7247
  %v7280 = vmax.bf16 %v7216, %v7248
  %v7281 = vmax.bf16 %v7217, %v7249
  %v7282 = vmax.bf16 %v7218, %v7250
  %v7283 = vmax.bf16 %v7219, %v7251
  %v7284 = vmax.bf16 %v7220, %v7252
  %v7285 = vmax.bf16 %v7221, %v7253
  %v7286 = vmax.bf16 %v7222, %v7254
  %v7287 = vmax.bf16 %v7223, %v7255
  %v7288 = vmax.bf16 %v7224, %v7256
  %v7289 = vmax.bf16 %v7225, %v7257
  %v7290 = vmax.bf16 %v7226, %v7258
  %v7291 = vmax.bf16 %v7227, %v7259
  %v7292 = vmax.bf16 %v7228, %v7260
  %v7293 = vmax.bf16 %v7229, %v7261
  %v7294 = vmax.bf16 %v7230, %v7262
  %v7295 = vmax.bf16 %v7231, %v7263
  %v7296 = vmax.bf16 %v7232, %v7264
  %v7297 = vmax.bf16 %v7233, %v7265
  %v7298 = vmax.bf16 %v7234, %v7266
  %v7299 = vmax.bf16 %v7235, %v7267
  %v7300 = vmax.bf16 %v7236, %v7268
  %v7301 = vmax.bf16 %v7237, %v7269
  %v7302 = vmax.bf16 %v7238, %v7270
  %v7303 = vmax.bf16 %v7239, %v7271
  %v7304 = vmax.bf16 %v7240, %v7272
  %v7305 = vmax.bf16 %v7241, %v7273
  %v7306 = vld [vmem:[%s7] sm:$0xf]
  %v7307 = vld [vmem:[%s7 + $0x4] sm:$0xf]
  %v7308 = vld [vmem:[%s7 + $0x8] sm:$0xf]
  %v7309 = vld [vmem:[%s7 + $0xc] sm:$0xf]
  %v7310 = vld [vmem:[%s7 + $0x10] sm:$0xf]
  %v7311 = vld [vmem:[%s7 + $0x14] sm:$0xf]
  %v7312 = vld [vmem:[%s7 + $0x18] sm:$0xf]
  %v7313 = vld [vmem:[%s7 + $0x1c] sm:$0xf]
  %v7314 = vld [vmem:[%s7 + $0x20] sm:$0xf]
  %v7315 = vld [vmem:[%s7 + $0x24] sm:$0xf]
  %v7316 = vld [vmem:[%s7 + $0x28] sm:$0xf]
  %v7317 = vld [vmem:[%s7 + $0x2c] sm:$0xf]
  %v7318 = vld [vmem:[%s7 + $0x30] sm:$0xf]
  %v7319 = vld [vmem:[%s7 + $0x34] sm:$0xf]
  %v7320 = vld [vmem:[%s7 + $0x38] sm:$0xf]
  %v7321 = vld [vmem:[%s7 + $0x3c] sm:$0xf]
  %v7322 = vld [vmem:[%s8] sm:$0x1]
  %v7324 = vlaneseq
  %v7325 = vshrl.u32 %v7324, 7
  %v7326 = vsub.s32 0, %v7325
  %v7327 = vrot.slane %v7322, %v7326
  %v7345 = vunpack.c.l.b16 %v7306
  %v7346 = vunpack.c.l.b16 %v7307
  %v7347 = vunpack.c.l.b16 %v7308
  %v7348 = vunpack.c.l.b16 %v7309
  %v7349 = vunpack.c.l.b16 %v7310
  %v7350 = vunpack.c.l.b16 %v7311
  %v7351 = vunpack.c.l.b16 %v7312
  %v7352 = vunpack.c.l.b16 %v7313
  %v7353 = vunpack.c.l.b16 %v7314
  %v7354 = vunpack.c.l.b16 %v7315
  %v7355 = vunpack.c.l.b16 %v7316
  %v7356 = vunpack.c.l.b16 %v7317
  %v7357 = vunpack.c.l.b16 %v7318
  %v7358 = vunpack.c.l.b16 %v7319
  %v7359 = vunpack.c.l.b16 %v7320
  %v7360 = vunpack.c.l.b16 %v7321
  %v7361 = vpack.c.b16 %v7346, %v7345
  %v7362 = vpack.c.b16 %v7348, %v7347
  %v7363 = vpack.c.b16 %v7350, %v7349
  %v7364 = vpack.c.b16 %v7352, %v7351
  %v7365 = vpack.c.b16 %v7354, %v7353
  %v7366 = vpack.c.b16 %v7356, %v7355
  %v7367 = vpack.c.b16 %v7358, %v7357
  %v7368 = vpack.c.b16 %v7360, %v7359
  %7377 = vmatprep.subr.bf16.mxu0 0
  %7378 = vmatpush1.bf16.msra.mxu0 %v7368
  %7379 = vmatprep.subr.bf16.mxu0 0
  %7380 = vmatpush1.bf16.msra.mxu0 %v7367
  %7381 = vmatprep.subr.bf16.mxu0 0
  %7382 = vmatpush1.bf16.msra.mxu0 %v7366
  %7383 = vmatprep.subr.bf16.mxu0 0
  %7384 = vmatpush1.bf16.msra.mxu0 %v7365
  %7385 = vmatprep.subr.bf16.mxu0 0
  %7386 = vmatpush1.bf16.msra.mxu0 %v7364
  %7387 = vmatprep.subr.bf16.mxu0 0
  %7388 = vmatpush1.bf16.msra.mxu0 %v7363
  %7389 = vmatprep.subr.bf16.mxu0 0
  %7390 = vmatpush1.bf16.msra.mxu0 %v7362
  %7391 = vmatprep.subr.bf16.mxu0 0
  %7392 = vmatpush1.bf16.msra.mxu0 %v7361
  %7393 = vmatprep.subr.bf16.mxu0 0
  %7394 = vmatpush2.bf16.msra.mxu0 0
  %7395 = vmatprep.subr.bf16.mxu0 0
  %7396 = vmatpush2.bf16.msra.mxu0 0
  %7397 = vmatprep.subr.bf16.mxu0 0
  %7398 = vmatpush2.bf16.msra.mxu0 0
  %7399 = vmatprep.subr.bf16.mxu0 0
  %7400 = vmatpush2.bf16.msra.mxu0 0
  %7401 = vmatprep.subr.bf16.mxu0 0
  %7402 = vmatpush2.bf16.msra.mxu0 0
  %7403 = vmatprep.subr.bf16.mxu0 0
  %7404 = vmatpush2.bf16.msra.mxu0 0
  %7405 = vmatprep.subr.bf16.mxu0 0
  %7406 = vmatpush2.bf16.msra.mxu0 0
  %7407 = vmatprep.subr.bf16.mxu0 0
  %7408 = vmatpush2.bf16.msra.mxu0 0
  %7409 = vmatprep.mubr.bf16.mxu0 0
  %7410 = vmatmul.mubr.bf16.gmra.mxu0 %v7274
  %v7411 = vpop.f32.mrf.mxu0
  %v7412 = vadd.f32 %v7327, %v7411
  %v7413 = vpop.f32.mrf.mxu0
  %v7414 = vpop.f32.mrf.mxu0
  %v7415 = vadd.f32 %v7327, %v7414
  %v7416 = vpop.f32.mrf.mxu0
  %7417 = vmatprep.mubr.bf16.mxu0 0
  %7418 = vmatmul.mubr.bf16.gmra.mxu0 %v7275
  %v7419 = vpop.f32.mrf.mxu0
  %v7420 = vadd.f32 %v7327, %v7419
  %v7421 = vpop.f32.mrf.mxu0
  %v7422 = vpop.f32.mrf.mxu0
  %v7423 = vadd.f32 %v7327, %v7422
  %v7424 = vpop.f32.mrf.mxu0
  %7425 = vmatprep.mubr.bf16.mxu0 0
  %7426 = vmatmul.mubr.bf16.gmra.mxu0 %v7276
  %v7427 = vpop.f32.mrf.mxu0
  %v7428 = vadd.f32 %v7327, %v7427
  %v7429 = vpop.f32.mrf.mxu0
  %v7430 = vpop.f32.mrf.mxu0
  %v7431 = vadd.f32 %v7327, %v7430
  %v7432 = vpop.f32.mrf.mxu0
  %7433 = vmatprep.mubr.bf16.mxu0 0
  %7434 = vmatmul.mubr.bf16.gmra.mxu0 %v7277
  %v7435 = vpop.f32.mrf.mxu0
  %v7436 = vadd.f32 %v7327, %v7435
  %v7437 = vpop.f32.mrf.mxu0
  %v7438 = vpop.f32.mrf.mxu0
  %v7439 = vadd.f32 %v7327, %v7438
  %v7440 = vpop.f32.mrf.mxu0
  %7441 = vmatprep.mubr.bf16.mxu0 0
  %7442 = vmatmul.mubr.bf16.gmra.mxu0 %v7278
  %v7443 = vpop.f32.mrf.mxu0
  %v7444 = vadd.f32 %v7327, %v7443
  %v7445 = vpop.f32.mrf.mxu0
  %v7446 = vpop.f32.mrf.mxu0
  %v7447 = vadd.f32 %v7327, %v7446
  %v7448 = vpop.f32.mrf.mxu0
  %7449 = vmatprep.mubr.bf16.mxu0 0
  %7450 = vmatmul.mubr.bf16.gmra.mxu0 %v7279
  %v7451 = vpop.f32.mrf.mxu0
  %v7452 = vadd.f32 %v7327, %v7451
  %v7453 = vpop.f32.mrf.mxu0
  %v7454 = vpop.f32.mrf.mxu0
  %v7455 = vadd.f32 %v7327, %v7454
  %v7456 = vpop.f32.mrf.mxu0
  %7457 = vmatprep.mubr.bf16.mxu0 0
  %7458 = vmatmul.mubr.bf16.gmra.mxu0 %v7280
  %v7459 = vpop.f32.mrf.mxu0
  %v7460 = vadd.f32 %v7327, %v7459
  %v7461 = vpop.f32.mrf.mxu0
  %v7462 = vpop.f32.mrf.mxu0
  %v7463 = vadd.f32 %v7327, %v7462
  %v7464 = vpop.f32.mrf.mxu0
  %7465 = vmatprep.mubr.bf16.mxu0 0
  %7466 = vmatmul.mubr.bf16.gmra.mxu0 %v7281
  %v7467 = vpop.f32.mrf.mxu0
  %v7468 = vadd.f32 %v7327, %v7467
  %v7469 = vpop.f32.mrf.mxu0
  %v7470 = vpop.f32.mrf.mxu0
  %v7471 = vadd.f32 %v7327, %v7470
  %v7472 = vpop.f32.mrf.mxu0
  %7473 = vmatprep.mubr.bf16.mxu0 0
  %7474 = vmatmul.mubr.bf16.gmra.mxu0 %v7282
  %v7475 = vpop.f32.mrf.mxu0
  %v7476 = vadd.f32 %v7327, %v7475
  %v7477 = vpop.f32.mrf.mxu0
  %v7478 = vpop.f32.mrf.mxu0
  %v7479 = vadd.f32 %v7327, %v7478
  %v7480 = vpop.f32.mrf.mxu0
  %7481 = vmatprep.mubr.bf16.mxu0 0
  %7482 = vmatmul.mubr.bf16.gmra.mxu0 %v7283
  %v7483 = vpop.f32.mrf.mxu0
  %v7484 = vadd.f32 %v7327, %v7483
  %v7485 = vpop.f32.mrf.mxu0
  %v7486 = vpop.f32.mrf.mxu0
  %v7487 = vadd.f32 %v7327, %v7486
  %v7488 = vpop.f32.mrf.mxu0
  %7489 = vmatprep.mubr.bf16.mxu0 0
  %7490 = vmatmul.mubr.bf16.gmra.mxu0 %v7284
  %v7491 = vpop.f32.mrf.mxu0
  %v7492 = vadd.f32 %v7327, %v7491
  %v7493 = vpop.f32.mrf.mxu0
  %v7494 = vpop.f32.mrf.mxu0
  %v7495 = vadd.f32 %v7327, %v7494
  %v7496 = vpop.f32.mrf.mxu0
  %7497 = vmatprep.mubr.bf16.mxu0 0
  %7498 = vmatmul.mubr.bf16.gmra.mxu0 %v7285
  %v7499 = vpop.f32.mrf.mxu0
  %v7500 = vadd.f32 %v7327, %v7499
  %v7501 = vpop.f32.mrf.mxu0
  %v7502 = vpop.f32.mrf.mxu0
  %v7503 = vadd.f32 %v7327, %v7502
  %v7504 = vpop.f32.mrf.mxu0
  %7505 = vmatprep.mubr.bf16.mxu0 0
  %7506 = vmatmul.mubr.bf16.gmra.mxu0 %v7286
  %v7507 = vpop.f32.mrf.mxu0
  %v7508 = vadd.f32 %v7327, %v7507
  %v7509 = vpop.f32.mrf.mxu0
  %v7510 = vpop.f32.mrf.mxu0
  %v7511 = vadd.f32 %v7327, %v7510
  %v7512 = vpop.f32.mrf.mxu0
  %7513 = vmatprep.mubr.bf16.mxu0 0
  %7514 = vmatmul.mubr.bf16.gmra.mxu0 %v7287
  %v7515 = vpop.f32.mrf.mxu0
  %v7516 = vadd.f32 %v7327, %v7515
  %v7517 = vpop.f32.mrf.mxu0
  %v7518 = vpop.f32.mrf.mxu0
  %v7519 = vadd.f32 %v7327, %v7518
  %v7520 = vpop.f32.mrf.mxu0
  %7521 = vmatprep.mubr.bf16.mxu0 0
  %7522 = vmatmul.mubr.bf16.gmra.mxu0 %v7288
  %v7523 = vpop.f32.mrf.mxu0
  %v7524 = vadd.f32 %v7327, %v7523
  %v7525 = vpop.f32.mrf.mxu0
  %v7526 = vpop.f32.mrf.mxu0
  %v7527 = vadd.f32 %v7327, %v7526
  %v7528 = vpop.f32.mrf.mxu0
  %7529 = vmatprep.mubr.bf16.mxu0 0
  %7530 = vmatmul.mubr.bf16.gmra.mxu0 %v7289
  %v7531 = vpop.f32.mrf.mxu0
  %v7532 = vadd.f32 %v7327, %v7531
  %v7533 = vpop.f32.mrf.mxu0
  %v7534 = vpop.f32.mrf.mxu0
  %v7535 = vadd.f32 %v7327, %v7534
  %v7536 = vpop.f32.mrf.mxu0
  %7537 = vmatprep.mubr.bf16.mxu0 0
  %7538 = vmatmul.mubr.bf16.gmra.mxu0 %v7290
  %v7539 = vpop.f32.mrf.mxu0
  %v7540 = vadd.f32 %v7327, %v7539
  %v7541 = vpop.f32.mrf.mxu0
  %v7542 = vpop.f32.mrf.mxu0
  %v7543 = vadd.f32 %v7327, %v7542
  %v7544 = vpop.f32.mrf.mxu0
  %7545 = vmatprep.mubr.bf16.mxu0 0
  %7546 = vmatmul.mubr.bf16.gmra.mxu0 %v7291
  %v7547 = vpop.f32.mrf.mxu0
  %v7548 = vadd.f32 %v7327, %v7547
  %v7549 = vpop.f32.mrf.mxu0
  %v7550 = vpop.f32.mrf.mxu0
  %v7551 = vadd.f32 %v7327, %v7550
  %v7552 = vpop.f32.mrf.mxu0
  %7553 = vmatprep.mubr.bf16.mxu0 0
  %7554 = vmatmul.mubr.bf16.gmra.mxu0 %v7292
  %v7555 = vpop.f32.mrf.mxu0
  %v7556 = vadd.f32 %v7327, %v7555
  %v7557 = vpop.f32.mrf.mxu0
  %v7558 = vpop.f32.mrf.mxu0
  %v7559 = vadd.f32 %v7327, %v7558
  %v7560 = vpop.f32.mrf.mxu0
  %7561 = vmatprep.mubr.bf16.mxu0 0
  %7562 = vmatmul.mubr.bf16.gmra.mxu0 %v7293
  %v7563 = vpop.f32.mrf.mxu0
  %v7564 = vadd.f32 %v7327, %v7563
  %v7565 = vpop.f32.mrf.mxu0
  %v7566 = vpop.f32.mrf.mxu0
  %v7567 = vadd.f32 %v7327, %v7566
  %v7568 = vpop.f32.mrf.mxu0
  %7569 = vmatprep.mubr.bf16.mxu0 0
  %7570 = vmatmul.mubr.bf16.gmra.mxu0 %v7294
  %v7571 = vpop.f32.mrf.mxu0
  %v7572 = vadd.f32 %v7327, %v7571
  %v7573 = vpop.f32.mrf.mxu0
  %v7574 = vpop.f32.mrf.mxu0
  %v7575 = vadd.f32 %v7327, %v7574
  %v7576 = vpop.f32.mrf.mxu0
  %7577 = vmatprep.mubr.bf16.mxu0 0
  %7578 = vmatmul.mubr.bf16.gmra.mxu0 %v7295
  %v7579 = vpop.f32.mrf.mxu0
  %v7580 = vadd.f32 %v7327, %v7579
  %v7581 = vpop.f32.mrf.mxu0
  %v7582 = vpop.f32.mrf.mxu0
  %v7583 = vadd.f32 %v7327, %v7582
  %v7584 = vpop.f32.mrf.mxu0
  %7585 = vmatprep.mubr.bf16.mxu0 0
  %7586 = vmatmul.mubr.bf16.gmra.mxu0 %v7296
  %v7587 = vpop.f32.mrf.mxu0
  %v7588 = vadd.f32 %v7327, %v7587
  %v7589 = vpop.f32.mrf.mxu0
  %v7590 = vpop.f32.mrf.mxu0
  %v7591 = vadd.f32 %v7327, %v7590
  %v7592 = vpop.f32.mrf.mxu0
  %7593 = vmatprep.mubr.bf16.mxu0 0
  %7594 = vmatmul.mubr.bf16.gmra.mxu0 %v7297
  %v7595 = vpop.f32.mrf.mxu0
  %v7596 = vadd.f32 %v7327, %v7595
  %v7597 = vpop.f32.mrf.mxu0
  %v7598 = vpop.f32.mrf.mxu0
  %v7599 = vadd.f32 %v7327, %v7598
  %v7600 = vpop.f32.mrf.mxu0
  %7601 = vmatprep.mubr.bf16.mxu0 0
  %7602 = vmatmul.mubr.bf16.gmra.mxu0 %v7298
  %v7603 = vpop.f32.mrf.mxu0
  %v7604 = vadd.f32 %v7327, %v7603
  %v7605 = vpop.f32.mrf.mxu0
  %v7606 = vpop.f32.mrf.mxu0
  %v7607 = vadd.f32 %v7327, %v7606
  %v7608 = vpop.f32.mrf.mxu0
  %7609 = vmatprep.mubr.bf16.mxu0 0
  %7610 = vmatmul.mubr.bf16.gmra.mxu0 %v7299
  %v7611 = vpop.f32.mrf.mxu0
  %v7612 = vadd.f32 %v7327, %v7611
  %v7613 = vpop.f32.mrf.mxu0
  %v7614 = vpop.f32.mrf.mxu0
  %v7615 = vadd.f32 %v7327, %v7614
  %v7616 = vpop.f32.mrf.mxu0
  %7617 = vmatprep.mubr.bf16.mxu0 0
  %7618 = vmatmul.mubr.bf16.gmra.mxu0 %v7300
  %v7619 = vpop.f32.mrf.mxu0
  %v7620 = vadd.f32 %v7327, %v7619
  %v7621 = vpop.f32.mrf.mxu0
  %v7622 = vpop.f32.mrf.mxu0
  %v7623 = vadd.f32 %v7327, %v7622
  %v7624 = vpop.f32.mrf.mxu0
  %7625 = vmatprep.mubr.bf16.mxu0 0
  %7626 = vmatmul.mubr.bf16.gmra.mxu0 %v7301
  %v7627 = vpop.f32.mrf.mxu0
  %v7628 = vadd.f32 %v7327, %v7627
  %v7629 = vpop.f32.mrf.mxu0
  %v7630 = vpop.f32.mrf.mxu0
  %v7631 = vadd.f32 %v7327, %v7630
  %v7632 = vpop.f32.mrf.mxu0
  %7633 = vmatprep.mubr.bf16.mxu0 0
  %7634 = vmatmul.mubr.bf16.gmra.mxu0 %v7302
  %v7635 = vpop.f32.mrf.mxu0
  %v7636 = vadd.f32 %v7327, %v7635
  %v7637 = vpop.f32.mrf.mxu0
  %v7638 = vpop.f32.mrf.mxu0
  %v7639 = vadd.f32 %v7327, %v7638
  %v7640 = vpop.f32.mrf.mxu0
  %7641 = vmatprep.mubr.bf16.mxu0 0
  %7642 = vmatmul.mubr.bf16.gmra.mxu0 %v7303
  %v7643 = vpop.f32.mrf.mxu0
  %v7644 = vadd.f32 %v7327, %v7643
  %v7645 = vpop.f32.mrf.mxu0
  %v7646 = vpop.f32.mrf.mxu0
  %v7647 = vadd.f32 %v7327, %v7646
  %v7648 = vpop.f32.mrf.mxu0
  %7649 = vmatprep.mubr.bf16.mxu0 0
  %7650 = vmatmul.mubr.bf16.gmra.mxu0 %v7304
  %v7651 = vpop.f32.mrf.mxu0
  %v7652 = vadd.f32 %v7327, %v7651
  %v7653 = vpop.f32.mrf.mxu0
  %v7654 = vpop.f32.mrf.mxu0
  %v7655 = vadd.f32 %v7327, %v7654
  %v7656 = vpop.f32.mrf.mxu0
  %7657 = vmatprep.mubr.bf16.mxu0 0
  %7658 = vmatmul.mubr.bf16.gmra.mxu0 %v7305
  %v7659 = vpop.f32.mrf.mxu0
  %v7660 = vadd.f32 %v7327, %v7659
  %v7661 = vpop.f32.mrf.mxu0
  %v7662 = vpop.f32.mrf.mxu0
  %v7663 = vadd.f32 %v7327, %v7662
  %v7664 = vpop.f32.mrf.mxu0
  %7665 = vdwg.mxu0
  %7666 = vst [vmem:[%s9] sm:$0xff] %v7412
  %7667 = vst [vmem:[%s9 + $0x8] sm:$0xff] %v7415
  %7668 = vst [vmem:[%s9 + $0x10] sm:$0xff] %v7420
  %7669 = vst [vmem:[%s9 + $0x18] sm:$0xff] %v7423
  %7670 = vst [vmem:[%s9 + $0x20] sm:$0xff] %v7428
  %7671 = vst [vmem:[%s9 + $0x28] sm:$0xff] %v7431
  %7672 = vst [vmem:[%s9 + $0x30] sm:$0xff] %v7436
  %7673 = vst [vmem:[%s9 + $0x38] sm:$0xff] %v7439
  %7674 = vst [vmem:[%s9 + $0x40] sm:$0xff] %v7444
  %7675 = vst [vmem:[%s9 + $0x48] sm:$0xff] %v7447
  %7676 = vst [vmem:[%s9 + $0x50] sm:$0xff] %v7452
  %7677 = vst [vmem:[%s9 + $0x58] sm:$0xff] %v7455
  %7678 = vst [vmem:[%s9 + $0x60] sm:$0xff] %v7460
  %7679 = vst [vmem:[%s9 + $0x68] sm:$0xff] %v7463
  %7680 = vst [vmem:[%s9 + $0x70] sm:$0xff] %v7468
  %7681 = vst [vmem:[%s9 + $0x78] sm:$0xff] %v7471
  %7682 = vst [vmem:[%s9 + $0x80] sm:$0xff] %v7476
  %7683 = vst [vmem:[%s9 + $0x88] sm:$0xff] %v7479
  %7684 = vst [vmem:[%s9 + $0x90] sm:$0xff] %v7484
  %7685 = vst [vmem:[%s9 + $0x98] sm:$0xff] %v7487
  %7686 = vst [vmem:[%s9 + $0xa0] sm:$0xff] %v7492
  %7687 = vst [vmem:[%s9 + $0xa8] sm:$0xff] %v7495
  %7688 = vst [vmem:[%s9 + $0xb0] sm:$0xff] %v7500
  %7689 = vst [vmem:[%s9 + $0xb8] sm:$0xff] %v7503
  %7690 = vst [vmem:[%s9 + $0xc0] sm:$0xff] %v7508
  %7691 = vst [vmem:[%s9 + $0xc8] sm:$0xff] %v7511
  %7692 = vst [vmem:[%s9 + $0xd0] sm:$0xff] %v7516
  %7693 = vst [vmem:[%s9 + $0xd8] sm:$0xff] %v7519
  %7694 = vst [vmem:[%s9 + $0xe0] sm:$0xff] %v7524
  %7695 = vst [vmem:[%s9 + $0xe8] sm:$0xff] %v7527
  %7696 = vst [vmem:[%s9 + $0xf0] sm:$0xff] %v7532
  %7697 = vst [vmem:[%s9 + $0xf8] sm:$0xff] %v7535
  %7698 = vst [vmem:[%s9 + $0x100] sm:$0xff] %v7540
  %7699 = vst [vmem:[%s9 + $0x108] sm:$0xff] %v7543
  %7700 = vst [vmem:[%s9 + $0x110] sm:$0xff] %v7548
  %7701 = vst [vmem:[%s9 + $0x118] sm:$0xff] %v7551
  %7702 = vst [vmem:[%s9 + $0x120] sm:$0xff] %v7556
  %7703 = vst [vmem:[%s9 + $0x128] sm:$0xff] %v7559
  %7704 = vst [vmem:[%s9 + $0x130] sm:$0xff] %v7564
  %7705 = vst [vmem:[%s9 + $0x138] sm:$0xff] %v7567
  %7706 = vst [vmem:[%s9 + $0x140] sm:$0xff] %v7572
  %7707 = vst [vmem:[%s9 + $0x148] sm:$0xff] %v7575
  %7708 = vst [vmem:[%s9 + $0x150] sm:$0xff] %v7580
  %7709 = vst [vmem:[%s9 + $0x158] sm:$0xff] %v7583
  %7710 = vst [vmem:[%s9 + $0x160] sm:$0xff] %v7588
  %7711 = vst [vmem:[%s9 + $0x168] sm:$0xff] %v7591
  %7712 = vst [vmem:[%s9 + $0x170] sm:$0xff] %v7596
  %7713 = vst [vmem:[%s9 + $0x178] sm:$0xff] %v7599
  %7714 = vst [vmem:[%s9 + $0x180] sm:$0xff] %v7604
  %7715 = vst [vmem:[%s9 + $0x188] sm:$0xff] %v7607
  %7716 = vst [vmem:[%s9 + $0x190] sm:$0xff] %v7612
  %7717 = vst [vmem:[%s9 + $0x198] sm:$0xff] %v7615
  %7718 = vst [vmem:[%s9 + $0x1a0] sm:$0xff] %v7620
  %7719 = vst [vmem:[%s9 + $0x1a8] sm:$0xff] %v7623
  %7720 = vst [vmem:[%s9 + $0x1b0] sm:$0xff] %v7628
  %7721 = vst [vmem:[%s9 + $0x1b8] sm:$0xff] %v7631
  %7722 = vst [vmem:[%s9 + $0x1c0] sm:$0xff] %v7636
  %7723 = vst [vmem:[%s9 + $0x1c8] sm:$0xff] %v7639
  %7724 = vst [vmem:[%s9 + $0x1d0] sm:$0xff] %v7644
  %7725 = vst [vmem:[%s9 + $0x1d8] sm:$0xff] %v7647
  %7726 = vst [vmem:[%s9 + $0x1e0] sm:$0xff] %v7652
  %7727 = vst [vmem:[%s9 + $0x1e8] sm:$0xff] %v7655
  %7728 = vst [vmem:[%s9 + $0x1f0] sm:$0xff] %v7660
  %7729 = vst [vmem:[%s9 + $0x1f8] sm:$0xff] %v7663
  // Predicated region
  $region38: #{discriminator_forward.1} parent=0 // pred_check
    _
  $region39: #{discriminator_forward.1} parent=0 // pred_check_branch
    %7731 = sbr.rel (0) target = $region41
  $region40: #{discriminator_forward.1} parent=0 // pred_region
    _
  $region41: #{discriminator_forward.1} parent=0 // pred_fallthru
    _
  // Predicated region
  $region42: #{discriminator_forward.1} parent=0 // pred_check
    _
  $region43: #{discriminator_forward.1} parent=0 // pred_check_branch
    %7733 = sbr.rel (0) target = $region45
  $region44: #{discriminator_forward.1} parent=0 // pred_region
    _
  $region45: #{discriminator_forward.1} parent=0 // pred_fallthru
    _

</llo_original>
